<compile_context>
chip_gen: v7x
topology: tpu7x:2x2x1
jax: 0.10.0
libtpu: 0.0.40
codegen_flags: <defaults>
</compile_context>

<pallas_src>
import functools

import jax
import jax.numpy as jnp
from jax.experimental import pallas as pl
from jax.experimental.pallas import tpu as pltpu


def _const_spec(shape):
    zero = (0,) * len(shape)
    return pl.BlockSpec(shape, lambda i, _z=zero: _z)


_ARB = pltpu.CompilerParams(dimension_semantics=("arbitrary",))


# --------------------------- kernel 1: embeddings ---------------------------

def _embed_kernel(xp_ref, wp_ref, bp_ref, xf_ref, wf_ref, bf_ref, op_ref, of_ref):
    # wp is stored bf16 (half the HBM bytes); bf16 x bf16 with f32 accumulate is
    # the native MXU path and matches default-precision f32 matmul numerics.
    xp16 = xp_ref[...].astype(jnp.bfloat16)
    op_ref[...] = (jnp.dot(xp16, wp_ref[...],
                           preferred_element_type=jnp.float32) + bp_ref[...])
    of_ref[...] = (jnp.dot(xf_ref[...], wf_ref[...],
                           preferred_element_type=jnp.float32) + bf_ref[...])


def embed(x_p_flat, wp_bf16, bp, x_f_flat, wf, bf):
    B = x_p_flat.shape[0]
    n_p, n_f = wp_bf16.shape[1], wf.shape[1]
    ops = [x_p_flat, wp_bf16, bp, x_f_flat, wf, bf]
    return pl.pallas_call(
        _embed_kernel,
        out_shape=(jax.ShapeDtypeStruct((B, n_p), jnp.float32),
                   jax.ShapeDtypeStruct((B, n_f), jnp.float32)),
        grid=(1,),
        in_specs=[_const_spec(o.shape) for o in ops],
        out_specs=(_const_spec((B, n_p)), _const_spec((B, n_f))),
        compiler_params=_ARB,
    )(*ops)


# ------------------------ kernel 2: fused GCN stack -------------------------

def _gcn_kernel(*refs, num_layers):
    xp_ref, xf_ref, af_ref, ab_ref = refs[:4]
    o_ref = refs[-1]
    prm = refs[4:-1]
    sage_prm = prm[:6 * num_layers]   # per layer: wl1, bl1, wr1, wl2, bl2, wr2
    ln_prm = prm[6 * num_layers:]     # per (layer-1): gamma, beta

    def layer_norm(x, g, b, eps=1e-5):
        mu = jnp.mean(x, axis=-1, keepdims=True)
        var = jnp.mean(jnp.square(x - mu), axis=-1, keepdims=True)
        return (x - mu) * jax.lax.rsqrt(var + eps) * g + b

    xp = xp_ref[...]
    xf = xf_ref[...]
    af = af_ref[...]
    ab = ab_ref[...]
    for i in range(num_layers):
        wl1, bl1, wr1, wl2, bl2, wr2 = (r[...] for r in sage_prm[6 * i:6 * i + 6])

        # p-side SAGE (512-row direction), right-associated:
        #   relu( adj_fwd @ (x_f @ W_l) + b_l + x_p @ W_r )
        # -> only one wide (num_p-row) MXU stream for the aggregation term.
        t = jnp.dot(xf, wl1, preferred_element_type=jnp.float32)          # (n_f, gd)
        xp = jnp.maximum(
            jnp.dot(af, t, preferred_element_type=jnp.float32) + bl1
            + jnp.dot(xp, wr1, preferred_element_type=jnp.float32), 0.0)  # dropout: identity

        # f-side SAGE (32-row direction), left-associated (cheaper this way):
        agg = jnp.dot(ab, xp, preferred_element_type=jnp.float32)         # (n_f, gd)
        xf = jnp.maximum(
            jnp.dot(agg, wl2, preferred_element_type=jnp.float32) + bl2
            + jnp.dot(xf, wr2, preferred_element_type=jnp.float32), 0.0)

        if i != num_layers - 1:
            # one shared LayerNorm instance per layer (applied to both node sets)
            g, b = ln_prm[2 * i][...], ln_prm[2 * i + 1][...]
            xp = layer_norm(xp, g, b)
            xf = layer_norm(xf, g, b)
    o_ref[...] = xp


def gcn_stack(x_p, x_f, a_fwd, a_bwd, sage_flat, ln_flat, gcn_dim):
    num_layers = len(sage_flat) // 6
    n_dst = x_p.shape[0]
    ops = [x_p, x_f, a_fwd, a_bwd] + list(sage_flat) + list(ln_flat)
    return pl.pallas_call(
        functools.partial(_gcn_kernel, num_layers=num_layers),
        out_shape=jax.ShapeDtypeStruct((n_dst, gcn_dim), jnp.float32),
        grid=(1,),
        in_specs=[_const_spec(o.shape) for o in ops],
        out_specs=_const_spec((n_dst, gcn_dim)),
        compiler_params=_ARB,
    )(*ops)


# --------------- kernel 3: fused Conv1d stack + FC head + softmax -----------

def _conv_fc_kernel(*refs, ks, louts, cd, num_conv):
    xc_ref = refs[0]                            # (1, Cin, L) -- this sample's slab
    conv_refs = refs[1:1 + 2 * num_conv]
    (d1w_ref, d1b_ref, other_ref, d2wh_ref, d2wo_ref,
     d2b_ref, d3w_ref, d3b_ref) = refs[1 + 2 * num_conv:-1]
    o_ref = refs[-1]

    y = xc_ref[0]                               # (Cin, L), f32
    for li in range(num_conv):
        w_ref = conv_refs[2 * li]               # (ks, Cout, Cin)
        bias = conv_refs[2 * li + 1][...]       # (Cout, 1)
        lo = louts[li]
        acc = jnp.zeros((cd, lo), jnp.float32)
        for k in range(ks):                     # small static unroll over taps
            acc = acc + jnp.dot(w_ref[k], y[:, k:k + lo],
                                preferred_element_type=jnp.float32)
        y = jnp.maximum(acc + bias, 0.0)        # (Cout, lo)

    # d1 on the torch channel-major flatten: sum_c y[c, :] @ d1_w[c*L:(c+1)*L, :]
    # d1_w is stored bf16 (halves its DMA); accumulate in f32.
    h = d1b_ref[...]                            # (1, fc)
    for c in range(cd):
        h = h + jnp.dot(y[c:c + 1, :].astype(jnp.bfloat16), d1w_ref[c],
                        preferred_element_type=jnp.float32)
    h = jnp.maximum(h, 0.0)                     # (1, fc)

    # d2 on concat([h, other]) expressed as a split matmul (no lane concat)
    of_row = other_ref[0]                       # (1, other_dim)
    z = jnp.maximum(jnp.dot(h, d2wh_ref[...], preferred_element_type=jnp.float32)
                    + jnp.dot(of_row, d2wo_ref[...], preferred_element_type=jnp.float32)
                    + d2b_ref[...], 0.0)        # (1, fc + other_dim)

    logits = (jnp.dot(z, d3w_ref[...], preferred_element_type=jnp.float32)
              + d3b_ref[...])
    m = jnp.max(logits, axis=-1, keepdims=True)
    e = jnp.exp(logits - m)
    o_ref[0] = e / jnp.sum(e, axis=-1, keepdims=True)


def conv_fc_head(xc, conv_flat, d1_w, d1_b, other3, d2_wh, d2_wo, d2_b, d3_w, d3_b, cfg):
    B, cin, L = xc.shape
    cd = cfg["cnn_dim"]
    ks = cfg["cnn_kernel_size"]
    num_conv = cfg["cnn_layer_num"]
    labels = cfg["label_num"]
    od = cfg["other_feature_dim"]
    louts = tuple(L - (ks - 1) * (i + 1) for i in range(num_conv))

    ops = [xc] + list(conv_flat) + [d1_w, d1_b, other3,
                                    d2_wh, d2_wo, d2_b, d3_w, d3_b]
    in_specs = [pl.BlockSpec((1, cin, L), lambda b: (b, 0, 0))]
    in_specs += [_const_spec(o.shape) for o in conv_flat]
    in_specs += [_const_spec(d1_w.shape), _const_spec(d1_b.shape),
                 pl.BlockSpec((1, 1, od), lambda b: (b, 0, 0)),
                 _const_spec(d2_wh.shape), _const_spec(d2_wo.shape),
                 _const_spec(d2_b.shape),
                 _const_spec(d3_w.shape), _const_spec(d3_b.shape)]

    out = pl.pallas_call(
        functools.partial(_conv_fc_kernel, ks=ks, louts=louts,
                          cd=cd, num_conv=num_conv),
        out_shape=jax.ShapeDtypeStruct((B, 1, labels), jnp.float32),
        grid=(B,),
        in_specs=in_specs,
        out_specs=pl.BlockSpec((1, 1, labels), lambda b: (b, 0, 0)),
        compiler_params=pltpu.CompilerParams(dimension_semantics=("parallel",)),
    )(*ops)
    return out.reshape(B, labels)


# ------------------------------- Model glue --------------------------------

CFG = dict(
    batch=2, label_num=3, other_feature_dim=5,
    K=2, pnode_dim=3, node_hidden_dim=4,
    gcn_dim=32, gcn_layer_num=2,
    cnn_dim=16, cnn_layer_num=2, cnn_kernel_size=4,
    fc_dim=32,
)
CFG["pnode_num"] = 4 ** (2 * CFG["K"])   # 256
CFG["fnode_num"] = 4 ** CFG["K"]         # 16


def init_params(key, cfg):
    keys = iter(jax.random.split(key, 128))

    def u(shape, fan_in):
        bound = 1.0 / (fan_in ** 0.5)
        return jax.random.uniform(next(keys), shape, jnp.float32, -bound, bound)

    def lin_init(din, dout):
        return u((din, dout), din), u((dout,), din)

    p = {}
    p["pnode_d_w"], p["pnode_d_b"] = lin_init(cfg["pnode_num"] * cfg["pnode_dim"],
                                              cfg["pnode_num"] * cfg["node_hidden_dim"])
    p["fnode_d_w"], p["fnode_d_b"] = lin_init(cfg["fnode_num"],
                                              cfg["fnode_num"] * cfg["node_hidden_dim"])

    hid, gd = cfg["node_hidden_dim"], cfg["gcn_dim"]
    p["gconvs_1"], p["gconvs_2"] = [], []
    for l in range(cfg["gcn_layer_num"]):
        if l == 0:
            s1, d1_ = hid, hid      # gconvs_1[0]: (x_f hid, x_p hid) -> gcn_dim
            s2, d2_ = gd, hid       # gconvs_2[0]: (x_p gcn, x_f hid) -> gcn_dim
        else:
            s1, d1_ = gd, gd
            s2, d2_ = gd, gd
        p["gconvs_1"].append(dict(wl=u((s1, gd), s1), bl=u((gd,), s1), wr=u((d1_, gd), d1_)))
        p["gconvs_2"].append(dict(wl=u((s2, gd), s2), bl=u((gd,), s2), wr=u((d2_, gd), d2_)))

    p["lns"] = [dict(g=jnp.ones((gd,), jnp.float32), b=jnp.zeros((gd,), jnp.float32))
                for _ in range(cfg["gcn_layer_num"] - 1)]

    ks, cd = cfg["cnn_kernel_size"], cfg["cnn_dim"]
    p["convs"] = []
    for l in range(cfg["cnn_layer_num"]):
        cin = gd if l == 0 else cd
        fan = cin * ks
        p["convs"].append(dict(w=u((cd, cin, ks), fan), b=u((cd,), fan)))

    l_final = cfg["pnode_num"] - (ks - 1) * cfg["cnn_layer_num"]
    p["d1_w"], p["d1_b"] = lin_init(l_final * cd, cfg["fc_dim"])
    fd = cfg["fc_dim"] + cfg["other_feature_dim"]
    p["d2_w"], p["d2_b"] = lin_init(fd, fd)
    p["d3_w"], p["d3_b"] = lin_init(fd, cfg["label_num"])
    return p


def prepare_params(p, cfg):
    """One-time (outside jit) weight layout / dtype prep for the kernels."""
    gd, cd = cfg["gcn_dim"], cfg["cnn_dim"]
    ks, fc = cfg["cnn_kernel_size"], cfg["fc_dim"]
    od, labels = cfg["other_feature_dim"], cfg["label_num"]
    l_final = cfg["pnode_num"] - (ks - 1) * cfg["cnn_layer_num"]
    fd = fc + od

    q = {}
    # big weights in bf16: halves the dominant HBM->VMEM DMA of kernels 1 & 3
    q["pnode_d_w"] = p["pnode_d_w"].astype(jnp.bfloat16)
    q["pnode_d_b"] = p["pnode_d_b"].reshape(1, -1)
    q["fnode_d_w"] = p["fnode_d_w"]
    q["fnode_d_b"] = p["fnode_d_b"].reshape(1, -1)

    sage_flat = []
    for g1, g2 in zip(p["gconvs_1"], p["gconvs_2"]):
        sage_flat += [g1["wl"], g1["bl"].reshape(1, gd), g1["wr"],
                      g2["wl"], g2["bl"].reshape(1, gd), g2["wr"]]
    q["sage_flat"] = tuple(sage_flat)
    ln_flat = []
    for ln in p["lns"]:
        ln_flat += [ln["g"].reshape(1, gd), ln["b"].reshape(1, gd)]
    q["ln_flat"] = tuple(ln_flat)

    conv_flat = []
    for c in p["convs"]:
        # torch layout (Cout, Cin, ks) -> per-tap tiles (ks, Cout, Cin)
        conv_flat += [jnp.transpose(c["w"], (2, 0, 1)), c["b"].reshape(cd, 1)]
    q["conv_flat"] = tuple(conv_flat)

    q["d1_w"] = p["d1_w"].reshape(cd, l_final, fc).astype(jnp.bfloat16)
    q["d1_b"] = p["d1_b"].reshape(1, fc)
    q["d2_wh"] = p["d2_w"][:fc, :]           # split so no in-kernel lane concat
    q["d2_wo"] = p["d2_w"][fc:, :]
    q["d2_b"] = p["d2_b"].reshape(1, fd)
    q["d3_w"] = p["d3_w"]
    q["d3_b"] = p["d3_b"].reshape(1, labels)
    return q


def build_mean_adj(dst_idx, src_idx, num_dst, num_src):
    # dense row-normalized adjacency: A[d, s] = multiplicity(s->d) / in_deg(d)
    a = jnp.zeros((num_dst, num_src), jnp.float32)
    a = a.at[dst_idx, src_idx].add(1.0)
    deg = jnp.sum(a, axis=1, keepdims=True)
    return a / jnp.maximum(deg, 1.0)


def model_forward(q, x_src, x_dst, a_fwd, a_bwd, other_feature, cfg):
    hid = cfg["node_hidden_dim"]

    x_p_flat = x_dst.reshape(-1, cfg["pnode_num"] * cfg["pnode_dim"])
    x_f_flat = x_src.reshape(-1, cfg["fnode_num"])

    # kernel 1: node-embedding linears (pnode_nn = fnode_nn = True path)
    x_p_emb, x_f_emb = embed(x_p_flat, q["pnode_d_w"], q["pnode_d_b"],
                             x_f_flat, q["fnode_d_w"], q["fnode_d_b"])
    x_p = x_p_emb.reshape(-1, hid)    # torch.reshape semantics: (B*pnode_num, hid)
    x_f = x_f_emb.reshape(-1, hid)    # (B*fnode_num, hid)

    # kernel 2: fused SAGEConv/ReLU/LayerNorm stack (dropout = identity at inference)
    x_p = gcn_stack(x_p, x_f, a_fwd, a_bwd, q["sage_flat"], q["ln_flat"],
                    cfg["gcn_dim"])

    # exact torch.reshape semantics: reinterpret flat memory as (B, gcn_dim, pnode_num)
    xc = x_p.reshape(-1, cfg["gcn_dim"], cfg["pnode_num"])

    # kernel 3: fused Conv1d stack + flatten + d1 + concat(other) + d2 + d3 + softmax
    other3 = other_feature.reshape(-1, 1, cfg["other_feature_dim"])
    return conv_fc_head(xc, q["conv_flat"], q["d1_w"], q["d1_b"], other3,
                        q["d2_wh"], q["d2_wo"], q["d2_b"],
                        q["d3_w"], q["d3_b"], cfg)


# ------------------------- pure-JAX reference check -------------------------

def reference_forward(params, x_src, x_dst, a_fwd, a_bwd, other_feature, cfg):
    hp = jax.lax.Precision.HIGHEST
    mm = lambda a, b: jnp.dot(a, b, precision=hp)
    relu = lambda v: jnp.maximum(v, 0.0)

    def ln(v, g, b, eps=1e-5):
        mu = v.mean(-1, keepdims=True)
        var = ((v - mu) ** 2).mean(-1, keepdims=True)
        return (v - mu) / jnp.sqrt(var + eps) * g + b

    def sage(a, xs, xd, qd):
        return relu(mm(mm(a, xs), qd["wl"]) + qd["bl"] + mm(xd, qd["wr"]))

    def conv1d(v, w, b):
        Bc, Cin, L = v.shape
        Cout, _, ks = w.shape
        Lout = L - ks + 1
        o = jnp.zeros((Bc, Cout, Lout), jnp.float32)
        for k in range(ks):
            o = o + jnp.einsum("oc,bcl->bol", w[:, :, k], v[:, :, k:k + Lout],
                               precision=hp)
        return relu(o + b[None, :, None])

    B = cfg["batch"]
    x_p = x_dst.reshape(-1, cfg["pnode_num"] * cfg["pnode_dim"])
    x_p = (mm(x_p, params["pnode_d_w"]) + params["pnode_d_b"]).reshape(-1, cfg["node_hidden_dim"])
    x_f = x_src.reshape(-1, cfg["fnode_num"])
    x_f = (mm(x_f, params["fnode_d_w"]) + params["fnode_d_b"]).reshape(-1, cfg["node_hidden_dim"])
    for i in range(cfg["gcn_layer_num"]):
        x_p = sage(a_fwd, x_f, x_p, params["gconvs_1"][i])
        x_f = sage(a_bwd, x_p, x_f, params["gconvs_2"][i])
        if i != cfg["gcn_layer_num"] - 1:
            x_p = ln(x_p, params["lns"][i]["g"], params["lns"][i]["b"])
            x_f = ln(x_f, params["lns"][i]["g"], params["lns"][i]["b"])
    x = x_p.reshape(-1, cfg["gcn_dim"], cfg["pnode_num"])
    for i in range(cfg["cnn_layer_num"]):
        x = conv1d(x, params["convs"][i]["w"], params["convs"][i]["b"])
    x = x.reshape(B, -1)
    x = relu(mm(x, params["d1_w"]) + params["d1_b"])
    x = jnp.concatenate([x, other_feature.reshape(-1, cfg["other_feature_dim"])], axis=1)
    x = relu(mm(x, params["d2_w"]) + params["d2_b"])
    x = mm(x, params["d3_w"]) + params["d3_b"]
    return jax.nn.softmax(x, axis=1)


# ----------------------------------- main -----------------------------------

if __name__ == "__main__":
    cfg = CFG
    key = jax.random.PRNGKey(0)
    k_par, k_xf, k_xp, k_of, k_e0, k_e1 = jax.random.split(key, 6)

    params = init_params(k_par, cfg)
    # The two big weights are served to the kernels in bf16; round-trip them so
    # the f32 reference uses the exact same (quantized) weight values.
    params["pnode_d_w"] = params["pnode_d_w"].astype(jnp.bfloat16).astype(jnp.float32)
    params["d1_w"] = params["d1_w"].astype(jnp.bfloat16).astype(jnp.float32)

    prepped = prepare_params(params, cfg)   # one-time layout/dtype prep (outside jit)

    B = cfg["batch"]
    num_f = B * cfg["fnode_num"]   # 32 batched f-nodes
    num_p = B * cfg["pnode_num"]   # 512 batched p-nodes

    x_src = jax.random.normal(k_xf, (B, cfg["fnode_num"]), jnp.float32)
    x_dst = jax.random.normal(k_xp, (B, cfg["pnode_num"], cfg["pnode_dim"]), jnp.float32)
    other_feature = jax.random.normal(k_of, (B, cfg["other_feature_dim"]), jnp.float32)

    # synthetic batched bipartite edge_index: row0 -> f-node idx, row1 -> p-node idx
    E = 1024
    edge_index = jnp.stack([
        jax.random.randint(k_e0, (E,), 0, num_f),
        jax.random.randint(k_e1, (E,), 0, num_p),
    ])
    # forward (f -> p) edges: even columns; backward (p -> f) edges: odd columns, rows swapped
    f_fwd, p_fwd = edge_index[0, ::2], edge_index[1, ::2]
    p_bwd, f_bwd = edge_index[1, 1::2], edge_index[0, 1::2]
    a_fwd = build_mean_adj(p_fwd, f_fwd, num_p, num_f)   # (512, 32)
    a_bwd = build_mean_adj(f_bwd, p_bwd, num_f, num_p)   # (32, 512)

    fwd = jax.jit(functools.partial(model_forward, cfg=cfg))
    out = fwd(prepped, x_src, x_dst, a_fwd, a_bwd, other_feature)
    out = jax.block_until_ready(out)

    ref = reference_forward(params, x_src, x_dst, a_fwd, a_bwd, other_feature, cfg)
    ref = jax.block_until_ready(ref)

    assert out.shape == (B, cfg["label_num"])
    assert bool(jnp.all(jnp.isfinite(out)))
    assert bool(jnp.allclose(jnp.sum(out, axis=1), 1.0, atol=1e-3))
    max_diff = float(jnp.max(jnp.abs(out - ref)))
    assert max_diff < 5e-2, f"kernel/reference mismatch: {max_diff}"

    print("KERNEL_OK")
</pallas_src>

<mosaic_0001>
module attributes {stable_mosaic.version = 11 : i64} {
  func.func @_embed_kernel(%arg0: i32, %arg1: memref<2x768xf32, #tpu.memory_space<vmem>>, %arg2: memref<768x1024xbf16, #tpu.memory_space<vmem>>, %arg3: memref<1x1024xf32, #tpu.memory_space<vmem>>, %arg4: memref<2x16xf32, #tpu.memory_space<vmem>>, %arg5: memref<16x64xf32, #tpu.memory_space<vmem>>, %arg6: memref<1x64xf32, #tpu.memory_space<vmem>>, %arg7: memref<2x1024xf32, #tpu.memory_space<vmem>>, %arg8: memref<2x64xf32, #tpu.memory_space<vmem>>) attributes {dimension_semantics = [#tpu.dimension_semantics<arbitrary>], iteration_bounds = array<i64: 1>, scalar_prefetch = 0 : i64, scratch_operands = 0 : i64, tpu.core_type = #tpu.core_type<tc>, window_params = [{pipeline_mode = #tpu.pipeline_mode<synchronous>, transform_indices = @transform_0, window_bounds = array<i64: 2, 768>}, {pipeline_mode = #tpu.pipeline_mode<synchronous>, transform_indices = @transform_1, window_bounds = array<i64: 768, 1024>}, {pipeline_mode = #tpu.pipeline_mode<synchronous>, transform_indices = @transform_2, window_bounds = array<i64: 1, 1024>}, {pipeline_mode = #tpu.pipeline_mode<synchronous>, transform_indices = @transform_3, window_bounds = array<i64: 2, 16>}, {pipeline_mode = #tpu.pipeline_mode<synchronous>, transform_indices = @transform_4, window_bounds = array<i64: 16, 64>}, {pipeline_mode = #tpu.pipeline_mode<synchronous>, transform_indices = @transform_5, window_bounds = array<i64: 1, 64>}, {pipeline_mode = #tpu.pipeline_mode<synchronous>, transform_indices = @transform_6, window_bounds = array<i64: 2, 1024>}, {pipeline_mode = #tpu.pipeline_mode<synchronous>, transform_indices = @transform_7, window_bounds = array<i64: 2, 64>}]} {
    %c0 = arith.constant 0 : index
    %c0_0 = arith.constant 0 : index
    %0 = vector.load %arg1[%c0, %c0_0] : memref<2x768xf32, #tpu.memory_space<vmem>>, vector<2x768xf32>
    %1 = arith.truncf %0 : vector<2x768xf32> to vector<2x768xbf16>
    %c0_1 = arith.constant 0 : index
    %c0_2 = arith.constant 0 : index
    %2 = vector.load %arg2[%c0_1, %c0_2] : memref<768x1024xbf16, #tpu.memory_space<vmem>>, vector<768x1024xbf16>
    %cst = arith.constant dense<0.000000e+00> : vector<2x1024xf32>
    %3 = tpu.matmul %1, %2, %cst {dimension_numbers = #tpu.dot_dimension_numbers<[1], [0], [0], [1], [0, 0, 1, 1], [], []>} : vector<2x768xbf16>, vector<768x1024xbf16>, vector<2x1024xf32> -> vector<2x1024xf32>
    %c0_3 = arith.constant 0 : index
    %c0_4 = arith.constant 0 : index
    %4 = vector.load %arg3[%c0_3, %c0_4] : memref<1x1024xf32, #tpu.memory_space<vmem>>, vector<1x1024xf32>
    %5 = vector.broadcast %4 : vector<1x1024xf32> to vector<2x1024xf32>
    %6 = arith.addf %3, %5 : vector<2x1024xf32>
    %c0_5 = arith.constant 0 : index
    %c0_6 = arith.constant 0 : index
    %7 = vector.load %arg7[%c0_5, %c0_6] : memref<2x1024xf32, #tpu.memory_space<vmem>>, vector<2x1024xf32>
    tpu.vector_store %arg7[%c0_5, %c0_6], %6 {strides = array<i32>} : memref<2x1024xf32, #tpu.memory_space<vmem>>, vector<2x1024xf32>,
    %c0_7 = arith.constant 0 : index
    %c0_8 = arith.constant 0 : index
    %8 = vector.load %arg4[%c0_7, %c0_8] : memref<2x16xf32, #tpu.memory_space<vmem>>, vector<2x16xf32>
    %c0_9 = arith.constant 0 : index
    %c0_10 = arith.constant 0 : index
    %9 = vector.load %arg5[%c0_9, %c0_10] : memref<16x64xf32, #tpu.memory_space<vmem>>, vector<16x64xf32>
    %cst_11 = arith.constant dense<0.000000e+00> : vector<2x64xf32>
    %10 = tpu.matmul %8, %9, %cst_11 {dimension_numbers = #tpu.dot_dimension_numbers<[1], [0], [0], [1], [0, 0, 1, 1], [], []>} : vector<2x16xf32>, vector<16x64xf32>, vector<2x64xf32> -> vector<2x64xf32>
    %c0_12 = arith.constant 0 : index
    %c0_13 = arith.constant 0 : index
    %11 = vector.load %arg6[%c0_12, %c0_13] : memref<1x64xf32, #tpu.memory_space<vmem>>, vector<1x64xf32>
    %12 = vector.broadcast %11 : vector<1x64xf32> to vector<2x64xf32>
    %13 = arith.addf %10, %12 : vector<2x64xf32>
    %c0_14 = arith.constant 0 : index
    %c0_15 = arith.constant 0 : index
    %14 = vector.load %arg8[%c0_14, %c0_15] : memref<2x64xf32, #tpu.memory_space<vmem>>, vector<2x64xf32>
    tpu.vector_store %arg8[%c0_14, %c0_15], %13 {strides = array<i32>} : memref<2x64xf32, #tpu.memory_space<vmem>>, vector<2x64xf32>,
    return
  }
  func.func @transform_0(%arg0: i32) -> (i32, i32) {
    %c0_i32 = arith.constant 0 : i32
    %c0_i32_0 = arith.constant 0 : i32
    %c0_i32_1 = arith.constant 0 : i32
    return %c0_i32, %c0_i32_0 : i32, i32
  }
  func.func @transform_1(%arg0: i32) -> (i32, i32) {
    %c0_i32 = arith.constant 0 : i32
    %c0_i32_0 = arith.constant 0 : i32
    %c0_i32_1 = arith.constant 0 : i32
    return %c0_i32, %c0_i32_0 : i32, i32
  }
  func.func @transform_2(%arg0: i32) -> (i32, i32) {
    %c0_i32 = arith.constant 0 : i32
    %c0_i32_0 = arith.constant 0 : i32
    %c0_i32_1 = arith.constant 0 : i32
    return %c0_i32, %c0_i32_0 : i32, i32
  }
  func.func @transform_3(%arg0: i32) -> (i32, i32) {
    %c0_i32 = arith.constant 0 : i32
    %c0_i32_0 = arith.constant 0 : i32
    %c0_i32_1 = arith.constant 0 : i32
    return %c0_i32, %c0_i32_0 : i32, i32
  }
  func.func @transform_4(%arg0: i32) -> (i32, i32) {
    %c0_i32 = arith.constant 0 : i32
    %c0_i32_0 = arith.constant 0 : i32
    %c0_i32_1 = arith.constant 0 : i32
    return %c0_i32, %c0_i32_0 : i32, i32
  }
  func.func @transform_5(%arg0: i32) -> (i32, i32) {
    %c0_i32 = arith.constant 0 : i32
    %c0_i32_0 = arith.constant 0 : i32
    %c0_i32_1 = arith.constant 0 : i32
    return %c0_i32, %c0_i32_0 : i32, i32
  }
  func.func @transform_6(%arg0: i32) -> (i32, i32) {
    %c0_i32 = arith.constant 0 : i32
    %c0_i32_0 = arith.constant 0 : i32
    %c0_i32_1 = arith.constant 0 : i32
    return %c0_i32, %c0_i32_0 : i32, i32
  }
  func.func @transform_7(%arg0: i32) -> (i32, i32) {
    %c0_i32 = arith.constant 0 : i32
    %c0_i32_0 = arith.constant 0 : i32
    %c0_i32_1 = arith.constant 0 : i32
    return %c0_i32, %c0_i32_0 : i32, i32
  }
}

module attributes {stable_mosaic.version = 11 : i64} {
  func.func @_gcn_kernel(%arg0: i32, %arg1: memref<512x4xf32, #tpu.memory_space<vmem>>, %arg2: memref<32x4xf32, #tpu.memory_space<vmem>>, %arg3: memref<512x32xf32, #tpu.memory_space<vmem>>, %arg4: memref<32x512xf32, #tpu.memory_space<vmem>>, %arg5: memref<4x32xf32, #tpu.memory_space<vmem>>, %arg6: memref<1x32xf32, #tpu.memory_space<vmem>>, %arg7: memref<4x32xf32, #tpu.memory_space<vmem>>, %arg8: memref<32x32xf32, #tpu.memory_space<vmem>>, %arg9: memref<1x32xf32, #tpu.memory_space<vmem>>, %arg10: memref<4x32xf32, #tpu.memory_space<vmem>>, %arg11: memref<32x32xf32, #tpu.memory_space<vmem>>, %arg12: memref<1x32xf32, #tpu.memory_space<vmem>>, %arg13: memref<32x32xf32, #tpu.memory_space<vmem>>, %arg14: memref<32x32xf32, #tpu.memory_space<vmem>>, %arg15: memref<1x32xf32, #tpu.memory_space<vmem>>, %arg16: memref<32x32xf32, #tpu.memory_space<vmem>>, %arg17: memref<1x32xf32, #tpu.memory_space<vmem>>, %arg18: memref<1x32xf32, #tpu.memory_space<vmem>>, %arg19: memref<512x32xf32, #tpu.memory_space<vmem>>) attributes {dimension_semantics = [#tpu.dimension_semantics<arbitrary>], iteration_bounds = array<i64: 1>, scalar_prefetch = 0 : i64, scratch_operands = 0 : i64, tpu.core_type = #tpu.core_type<tc>, window_params = [{pipeline_mode = #tpu.pipeline_mode<synchronous>, transform_indices = @transform_0, window_bounds = array<i64: 512, 4>}, {pipeline_mode = #tpu.pipeline_mode<synchronous>, transform_indices = @transform_1, window_bounds = array<i64: 32, 4>}, {pipeline_mode = #tpu.pipeline_mode<synchronous>, transform_indices = @transform_2, window_bounds = array<i64: 512, 32>}, {pipeline_mode = #tpu.pipeline_mode<synchronous>, transform_indices = @transform_3, window_bounds = array<i64: 32, 512>}, {pipeline_mode = #tpu.pipeline_mode<synchronous>, transform_indices = @transform_4, window_bounds = array<i64: 4, 32>}, {pipeline_mode = #tpu.pipeline_mode<synchronous>, transform_indices = @transform_5, window_bounds = array<i64: 1, 32>}, {pipeline_mode = #tpu.pipeline_mode<synchronous>, transform_indices = @transform_6, window_bounds = array<i64: 4, 32>}, {pipeline_mode = #tpu.pipeline_mode<synchronous>, transform_indices = @transform_7, window_bounds = array<i64: 32, 32>}, {pipeline_mode = #tpu.pipeline_mode<synchronous>, transform_indices = @transform_8, window_bounds = array<i64: 1, 32>}, {pipeline_mode = #tpu.pipeline_mode<synchronous>, transform_indices = @transform_9, window_bounds = array<i64: 4, 32>}, {pipeline_mode = #tpu.pipeline_mode<synchronous>, transform_indices = @transform_10, window_bounds = array<i64: 32, 32>}, {pipeline_mode = #tpu.pipeline_mode<synchronous>, transform_indices = @transform_11, window_bounds = array<i64: 1, 32>}, {pipeline_mode = #tpu.pipeline_mode<synchronous>, transform_indices = @transform_12, window_bounds = array<i64: 32, 32>}, {pipeline_mode = #tpu.pipeline_mode<synchronous>, transform_indices = @transform_13, window_bounds = array<i64: 32, 32>}, {pipeline_mode = #tpu.pipeline_mode<synchronous>, transform_indices = @transform_14, window_bounds = array<i64: 1, 32>}, {pipeline_mode = #tpu.pipeline_mode<synchronous>, transform_indices = @transform_15, window_bounds = array<i64: 32, 32>}, {pipeline_mode = #tpu.pipeline_mode<synchronous>, transform_indices = @transform_16, window_bounds = array<i64: 1, 32>}, {pipeline_mode = #tpu.pipeline_mode<synchronous>, transform_indices = @transform_17, window_bounds = array<i64: 1, 32>}, {pipeline_mode = #tpu.pipeline_mode<synchronous>, transform_indices = @transform_18, window_bounds = array<i64: 512, 32>}]} {
    %c0 = arith.constant 0 : index
    %c0_0 = arith.constant 0 : index
    %0 = vector.load %arg1[%c0, %c0_0] : memref<512x4xf32, #tpu.memory_space<vmem>>, vector<512x4xf32>
    %c0_1 = arith.constant 0 : index
    %c0_2 = arith.constant 0 : index
    %1 = vector.load %arg2[%c0_1, %c0_2] : memref<32x4xf32, #tpu.memory_space<vmem>>, vector<32x4xf32>
    %c0_3 = arith.constant 0 : index
    %c0_4 = arith.constant 0 : index
    %2 = vector.load %arg3[%c0_3, %c0_4] : memref<512x32xf32, #tpu.memory_space<vmem>>, vector<512x32xf32>
    %c0_5 = arith.constant 0 : index
    %c0_6 = arith.constant 0 : index
    %3 = vector.load %arg4[%c0_5, %c0_6] : memref<32x512xf32, #tpu.memory_space<vmem>>, vector<32x512xf32>
    %c0_7 = arith.constant 0 : index
    %c0_8 = arith.constant 0 : index
    %4 = vector.load %arg5[%c0_7, %c0_8] : memref<4x32xf32, #tpu.memory_space<vmem>>, vector<4x32xf32>
    %c0_9 = arith.constant 0 : index
    %c0_10 = arith.constant 0 : index
    %5 = vector.load %arg6[%c0_9, %c0_10] : memref<1x32xf32, #tpu.memory_space<vmem>>, vector<1x32xf32>
    %c0_11 = arith.constant 0 : index
    %c0_12 = arith.constant 0 : index
    %6 = vector.load %arg7[%c0_11, %c0_12] : memref<4x32xf32, #tpu.memory_space<vmem>>, vector<4x32xf32>
    %c0_13 = arith.constant 0 : index
    %c0_14 = arith.constant 0 : index
    %7 = vector.load %arg8[%c0_13, %c0_14] : memref<32x32xf32, #tpu.memory_space<vmem>>, vector<32x32xf32>
    %c0_15 = arith.constant 0 : index
    %c0_16 = arith.constant 0 : index
    %8 = vector.load %arg9[%c0_15, %c0_16] : memref<1x32xf32, #tpu.memory_space<vmem>>, vector<1x32xf32>
    %c0_17 = arith.constant 0 : index
    %c0_18 = arith.constant 0 : index
    %9 = vector.load %arg10[%c0_17, %c0_18] : memref<4x32xf32, #tpu.memory_space<vmem>>, vector<4x32xf32>
    %cst = arith.constant dense<0.000000e+00> : vector<32x32xf32>
    %10 = tpu.matmul %1, %4, %cst {dimension_numbers = #tpu.dot_dimension_numbers<[1], [0], [0], [1], [0, 0, 1, 1], [], []>} : vector<32x4xf32>, vector<4x32xf32>, vector<32x32xf32> -> vector<32x32xf32>
    %cst_19 = arith.constant dense<0.000000e+00> : vector<512x32xf32>
    %11 = tpu.matmul %2, %10, %cst_19 {dimension_numbers = #tpu.dot_dimension_numbers<[1], [0], [0], [1], [0, 0, 1, 1], [], []>} : vector<512x32xf32>, vector<32x32xf32>, vector<512x32xf32> -> vector<512x32xf32>
    %12 = vector.broadcast %5 : vector<1x32xf32> to vector<512x32xf32>
    %13 = arith.addf %11, %12 : vector<512x32xf32>
    %cst_20 = arith.constant dense<0.000000e+00> : vector<512x32xf32>
    %14 = tpu.matmul %0, %6, %cst_20 {dimension_numbers = #tpu.dot_dimension_numbers<[1], [0], [0], [1], [0, 0, 1, 1], [], []>} : vector<512x4xf32>, vector<4x32xf32>, vector<512x32xf32> -> vector<512x32xf32>
    %15 = arith.addf %13, %14 : vector<512x32xf32>
    %cst_21 = arith.constant 0.000000e+00 : f32
    %16 = vector.broadcast %cst_21 : f32 to vector<512x32xf32>
    %17 = arith.maximumf %15, %16 : vector<512x32xf32>
    %cst_22 = arith.constant dense<0.000000e+00> : vector<32x32xf32>
    %18 = tpu.matmul %3, %17, %cst_22 {dimension_numbers = #tpu.dot_dimension_numbers<[1], [0], [0], [1], [0, 0, 1, 1], [], []>} : vector<32x512xf32>, vector<512x32xf32>, vector<32x32xf32> -> vector<32x32xf32>
    %cst_23 = arith.constant dense<0.000000e+00> : vector<32x32xf32>
    %19 = tpu.matmul %18, %7, %cst_23 {dimension_numbers = #tpu.dot_dimension_numbers<[1], [0], [0], [1], [0, 0, 1, 1], [], []>} : vector<32x32xf32>, vector<32x32xf32>, vector<32x32xf32> -> vector<32x32xf32>
    %20 = vector.broadcast %8 : vector<1x32xf32> to vector<32x32xf32>
    %21 = arith.addf %19, %20 : vector<32x32xf32>
    %cst_24 = arith.constant dense<0.000000e+00> : vector<32x32xf32>
    %22 = tpu.matmul %1, %9, %cst_24 {dimension_numbers = #tpu.dot_dimension_numbers<[1], [0], [0], [1], [0, 0, 1, 1], [], []>} : vector<32x4xf32>, vector<4x32xf32>, vector<32x32xf32> -> vector<32x32xf32>
    %23 = arith.addf %21, %22 : vector<32x32xf32>
    %cst_25 = arith.constant 0.000000e+00 : f32
    %24 = vector.broadcast %cst_25 : f32 to vector<32x32xf32>
    %25 = arith.maximumf %23, %24 : vector<32x32xf32>
    %c0_26 = arith.constant 0 : index
    %c0_27 = arith.constant 0 : index
    %26 = vector.load %arg17[%c0_26, %c0_27] : memref<1x32xf32, #tpu.memory_space<vmem>>, vector<1x32xf32>
    %c0_28 = arith.constant 0 : index
    %c0_29 = arith.constant 0 : index
    %27 = vector.load %arg18[%c0_28, %c0_29] : memref<1x32xf32, #tpu.memory_space<vmem>>, vector<1x32xf32>
    %cst_30 = arith.constant dense<0.000000e+00> : vector<512xf32>
    %28 = vector.multi_reduction <add>, %17, %cst_30 [1] : vector<512x32xf32> to vector<512xf32>
    %29 = vector.shape_cast %28 : vector<512xf32> to vector<512x1xf32>
    %cst_31 = arith.constant 3.200000e+01 : f32
    %30 = vector.broadcast %cst_31 : f32 to vector<512x1xf32>
    %31 = arith.divf %29, %30 : vector<512x1xf32>
    %32 = vector.broadcast %31 : vector<512x1xf32> to vector<512x32xf32>
    %33 = arith.subf %17, %32 : vector<512x32xf32>
    %34 = arith.mulf %33, %33 : vector<512x32xf32>
    %cst_32 = arith.constant dense<0.000000e+00> : vector<512xf32>
    %35 = vector.multi_reduction <add>, %34, %cst_32 [1] : vector<512x32xf32> to vector<512xf32>
    %36 = vector.shape_cast %35 : vector<512xf32> to vector<512x1xf32>
    %cst_33 = arith.constant 3.200000e+01 : f32
    %37 = vector.broadcast %cst_33 : f32 to vector<512x1xf32>
    %38 = arith.divf %36, %37 : vector<512x1xf32>
    %39 = vector.broadcast %31 : vector<512x1xf32> to vector<512x32xf32>
    %40 = arith.subf %17, %39 : vector<512x32xf32>
    %cst_34 = arith.constant 9.99999974E-6 : f32
    %41 = vector.broadcast %cst_34 : f32 to vector<512x1xf32>
    %42 = arith.addf %38, %41 : vector<512x1xf32>
    %43 = math.rsqrt %42 : vector<512x1xf32>
    %44 = vector.broadcast %43 : vector<512x1xf32> to vector<512x32xf32>
    %45 = arith.mulf %40, %44 : vector<512x32xf32>
    %46 = vector.broadcast %26 : vector<1x32xf32> to vector<512x32xf32>
    %47 = arith.mulf %45, %46 : vector<512x32xf32>
    %48 = vector.broadcast %27 : vector<1x32xf32> to vector<512x32xf32>
    %49 = arith.addf %47, %48 : vector<512x32xf32>
    %cst_35 = arith.constant dense<0.000000e+00> : vector<32xf32>
    %50 = vector.multi_reduction <add>, %25, %cst_35 [1] : vector<32x32xf32> to vector<32xf32>
    %51 = vector.shape_cast %50 : vector<32xf32> to vector<32x1xf32>
    %cst_36 = arith.constant 3.200000e+01 : f32
    %52 = vector.broadcast %cst_36 : f32 to vector<32x1xf32>
    %53 = arith.divf %51, %52 : vector<32x1xf32>
    %54 = vector.broadcast %53 : vector<32x1xf32> to vector<32x32xf32>
    %55 = arith.subf %25, %54 : vector<32x32xf32>
    %56 = arith.mulf %55, %55 : vector<32x32xf32>
    %cst_37 = arith.constant dense<0.000000e+00> : vector<32xf32>
    %57 = vector.multi_reduction <add>, %56, %cst_37 [1] : vector<32x32xf32> to vector<32xf32>
    %58 = vector.shape_cast %57 : vector<32xf32> to vector<32x1xf32>
    %cst_38 = arith.constant 3.200000e+01 : f32
    %59 = vector.broadcast %cst_38 : f32 to vector<32x1xf32>
    %60 = arith.divf %58, %59 : vector<32x1xf32>
    %61 = vector.broadcast %53 : vector<32x1xf32> to vector<32x32xf32>
    %62 = arith.subf %25, %61 : vector<32x32xf32>
    %cst_39 = arith.constant 9.99999974E-6 : f32
    %63 = vector.broadcast %cst_39 : f32 to vector<32x1xf32>
    %64 = arith.addf %60, %63 : vector<32x1xf32>
    %65 = math.rsqrt %64 : vector<32x1xf32>
    %66 = vector.broadcast %65 : vector<32x1xf32> to vector<32x32xf32>
    %67 = arith.mulf %62, %66 : vector<32x32xf32>
    %68 = vector.broadcast %26 : vector<1x32xf32> to vector<32x32xf32>
    %69 = arith.mulf %67, %68 : vector<32x32xf32>
    %70 = vector.broadcast %27 : vector<1x32xf32> to vector<32x32xf32>
    %71 = arith.addf %69, %70 : vector<32x32xf32>
    %c0_40 = arith.constant 0 : index
    %c0_41 = arith.constant 0 : index
    %72 = vector.load %arg11[%c0_40, %c0_41] : memref<32x32xf32, #tpu.memory_space<vmem>>, vector<32x32xf32>
    %c0_42 = arith.constant 0 : index
    %c0_43 = arith.constant 0 : index
    %73 = vector.load %arg12[%c0_42, %c0_43] : memref<1x32xf32, #tpu.memory_space<vmem>>, vector<1x32xf32>
    %c0_44 = arith.constant 0 : index
    %c0_45 = arith.constant 0 : index
    %74 = vector.load %arg13[%c0_44, %c0_45] : memref<32x32xf32, #tpu.memory_space<vmem>>, vector<32x32xf32>
    %cst_46 = arith.constant dense<0.000000e+00> : vector<32x32xf32>
    %75 = tpu.matmul %71, %72, %cst_46 {dimension_numbers = #tpu.dot_dimension_numbers<[1], [0], [0], [1], [0, 0, 1, 1], [], []>} : vector<32x32xf32>, vector<32x32xf32>, vector<32x32xf32> -> vector<32x32xf32>
    %cst_47 = arith.constant dense<0.000000e+00> : vector<512x32xf32>
    %76 = tpu.matmul %2, %75, %cst_47 {dimension_numbers = #tpu.dot_dimension_numbers<[1], [0], [0], [1], [0, 0, 1, 1], [], []>} : vector<512x32xf32>, vector<32x32xf32>, vector<512x32xf32> -> vector<512x32xf32>
    %77 = vector.broadcast %73 : vector<1x32xf32> to vector<512x32xf32>
    %78 = arith.addf %76, %77 : vector<512x32xf32>
    %cst_48 = arith.constant dense<0.000000e+00> : vector<512x32xf32>
    %79 = tpu.matmul %49, %74, %cst_48 {dimension_numbers = #tpu.dot_dimension_numbers<[1], [0], [0], [1], [0, 0, 1, 1], [], []>} : vector<512x32xf32>, vector<32x32xf32>, vector<512x32xf32> -> vector<512x32xf32>
    %80 = arith.addf %78, %79 : vector<512x32xf32>
    %cst_49 = arith.constant 0.000000e+00 : f32
    %81 = vector.broadcast %cst_49 : f32 to vector<512x32xf32>
    %82 = arith.maximumf %80, %81 : vector<512x32xf32>
    %c0_50 = arith.constant 0 : index
    %c0_51 = arith.constant 0 : index
    %83 = vector.load %arg19[%c0_50, %c0_51] : memref<512x32xf32, #tpu.memory_space<vmem>>, vector<512x32xf32>
    tpu.vector_store %arg19[%c0_50, %c0_51], %82 {strides = array<i32>} : memref<512x32xf32, #tpu.memory_space<vmem>>, vector<512x32xf32>,
    return
  }
  func.func @transform_0(%arg0: i32) -> (i32, i32) {
    %c0_i32 = arith.constant 0 : i32
    %c0_i32_0 = arith.constant 0 : i32
    %c0_i32_1 = arith.constant 0 : i32
    return %c0_i32, %c0_i32_0 : i32, i32
  }
  func.func @transform_1(%arg0: i32) -> (i32, i32) {
    %c0_i32 = arith.constant 0 : i32
    %c0_i32_0 = arith.constant 0 : i32
    %c0_i32_1 = arith.constant 0 : i32
    return %c0_i32, %c0_i32_0 : i32, i32
  }
  func.func @transform_2(%arg0: i32) -> (i32, i32) {
    %c0_i32 = arith.constant 0 : i32
    %c0_i32_0 = arith.constant 0 : i32
    %c0_i32_1 = arith.constant 0 : i32
    return %c0_i32, %c0_i32_0 : i32, i32
  }
  func.func @transform_3(%arg0: i32) -> (i32, i32) {
    %c0_i32 = arith.constant 0 : i32
    %c0_i32_0 = arith.constant 0 : i32
    %c0_i32_1 = arith.constant 0 : i32
    return %c0_i32, %c0_i32_0 : i32, i32
  }
  func.func @transform_4(%arg0: i32) -> (i32, i32) {
    %c0_i32 = arith.constant 0 : i32
    %c0_i32_0 = arith.constant 0 : i32
    %c0_i32_1 = arith.constant 0 : i32
    return %c0_i32, %c0_i32_0 : i32, i32
  }
  func.func @transform_5(%arg0: i32) -> (i32, i32) {
    %c0_i32 = arith.constant 0 : i32
    %c0_i32_0 = arith.constant 0 : i32
    %c0_i32_1 = arith.constant 0 : i32
    return %c0_i32, %c0_i32_0 : i32, i32
  }
  func.func @transform_6(%arg0: i32) -> (i32, i32) {
    %c0_i32 = arith.constant 0 : i32
    %c0_i32_0 = arith.constant 0 : i32
    %c0_i32_1 = arith.constant 0 : i32
    return %c0_i32, %c0_i32_0 : i32, i32
  }
  func.func @transform_7(%arg0: i32) -> (i32, i32) {
    %c0_i32 = arith.constant 0 : i32
    %c0_i32_0 = arith.constant 0 : i32
    %c0_i32_1 = arith.constant 0 : i32
    return %c0_i32, %c0_i32_0 : i32, i32
  }
  func.func @transform_8(%arg0: i32) -> (i32, i32) {
    %c0_i32 = arith.constant 0 : i32
    %c0_i32_0 = arith.constant 0 : i32
    %c0_i32_1 = arith.constant 0 : i32
    return %c0_i32, %c0_i32_0 : i32, i32
  }
  func.func @transform_9(%arg0: i32) -> (i32, i32) {
    %c0_i32 = arith.constant 0 : i32
    %c0_i32_0 = arith.constant 0 : i32
    %c0_i32_1 = arith.constant 0 : i32
    return %c0_i32, %c0_i32_0 : i32, i32
  }
  func.func @transform_10(%arg0: i32) -> (i32, i32) {
    %c0_i32 = arith.constant 0 : i32
    %c0_i32_0 = arith.constant 0 : i32
    %c0_i32_1 = arith.constant 0 : i32
    return %c0_i32, %c0_i32_0 : i32, i32
  }
  func.func @transform_11(%arg0: i32) -> (i32, i32) {
    %c0_i32 = arith.constant 0 : i32
    %c0_i32_0 = arith.constant 0 : i32
    %c0_i32_1 = arith.constant 0 : i32
    return %c0_i32, %c0_i32_0 : i32, i32
  }
  func.func @transform_12(%arg0: i32) -> (i32, i32) {
    %c0_i32 = arith.constant 0 : i32
    %c0_i32_0 = arith.constant 0 : i32
    %c0_i32_1 = arith.constant 0 : i32
    return %c0_i32, %c0_i32_0 : i32, i32
  }
  func.func @transform_13(%arg0: i32) -> (i32, i32) {
    %c0_i32 = arith.constant 0 : i32
    %c0_i32_0 = arith.constant 0 : i32
    %c0_i32_1 = arith.constant 0 : i32
    return %c0_i32, %c0_i32_0 : i32, i32
  }
  func.func @transform_14(%arg0: i32) -> (i32, i32) {
    %c0_i32 = arith.constant 0 : i32
    %c0_i32_0 = arith.constant 0 : i32
    %c0_i32_1 = arith.constant 0 : i32
    return %c0_i32, %c0_i32_0 : i32, i32
  }
  func.func @transform_15(%arg0: i32) -> (i32, i32) {
    %c0_i32 = arith.constant 0 : i32
    %c0_i32_0 = arith.constant 0 : i32
    %c0_i32_1 = arith.constant 0 : i32
    return %c0_i32, %c0_i32_0 : i32, i32
  }
  func.func @transform_16(%arg0: i32) -> (i32, i32) {
    %c0_i32 = arith.constant 0 : i32
    %c0_i32_0 = arith.constant 0 : i32
    %c0_i32_1 = arith.constant 0 : i32
    return %c0_i32, %c0_i32_0 : i32, i32
  }
  func.func @transform_17(%arg0: i32) -> (i32, i32) {
    %c0_i32 = arith.constant 0 : i32
    %c0_i32_0 = arith.constant 0 : i32
    %c0_i32_1 = arith.constant 0 : i32
    return %c0_i32, %c0_i32_0 : i32, i32
  }
  func.func @transform_18(%arg0: i32) -> (i32, i32) {
    %c0_i32 = arith.constant 0 : i32
    %c0_i32_0 = arith.constant 0 : i32
    %c0_i32_1 = arith.constant 0 : i32
    return %c0_i32, %c0_i32_0 : i32, i32
  }
}

module attributes {stable_mosaic.version = 11 : i64} {
  func.func @_conv_fc_kernel(%arg0: i32, %arg1: memref<1x32x256xf32, #tpu.memory_space<vmem>>, %arg2: memref<4x16x32xf32, #tpu.memory_space<vmem>>, %arg3: memref<16x1xf32, #tpu.memory_space<vmem>>, %arg4: memref<4x16x16xf32, #tpu.memory_space<vmem>>, %arg5: memref<16x1xf32, #tpu.memory_space<vmem>>, %arg6: memref<16x250x32xbf16, #tpu.memory_space<vmem>>, %arg7: memref<1x32xf32, #tpu.memory_space<vmem>>, %arg8: memref<1x1x5xf32, #tpu.memory_space<vmem>>, %arg9: memref<32x37xf32, #tpu.memory_space<vmem>>, %arg10: memref<5x37xf32, #tpu.memory_space<vmem>>, %arg11: memref<1x37xf32, #tpu.memory_space<vmem>>, %arg12: memref<37x3xf32, #tpu.memory_space<vmem>>, %arg13: memref<1x3xf32, #tpu.memory_space<vmem>>, %arg14: memref<1x1x3xf32, #tpu.memory_space<vmem>>) attributes {dimension_semantics = [#tpu.dimension_semantics<parallel>], iteration_bounds = array<i64: 2>, scalar_prefetch = 0 : i64, scratch_operands = 0 : i64, tpu.core_type = #tpu.core_type<tc>, window_params = [{transform_indices = @transform_0, window_bounds = array<i64: 1, 32, 256>}, {pipeline_mode = #tpu.pipeline_mode<synchronous>, transform_indices = @transform_1, window_bounds = array<i64: 4, 16, 32>}, {pipeline_mode = #tpu.pipeline_mode<synchronous>, transform_indices = @transform_2, window_bounds = array<i64: 16, 1>}, {pipeline_mode = #tpu.pipeline_mode<synchronous>, transform_indices = @transform_3, window_bounds = array<i64: 4, 16, 16>}, {pipeline_mode = #tpu.pipeline_mode<synchronous>, transform_indices = @transform_4, window_bounds = array<i64: 16, 1>}, {pipeline_mode = #tpu.pipeline_mode<synchronous>, transform_indices = @transform_5, window_bounds = array<i64: 16, 250, 32>}, {pipeline_mode = #tpu.pipeline_mode<synchronous>, transform_indices = @transform_6, window_bounds = array<i64: 1, 32>}, {transform_indices = @transform_7, window_bounds = array<i64: 1, 1, 5>}, {pipeline_mode = #tpu.pipeline_mode<synchronous>, transform_indices = @transform_8, window_bounds = array<i64: 32, 37>}, {pipeline_mode = #tpu.pipeline_mode<synchronous>, transform_indices = @transform_9, window_bounds = array<i64: 5, 37>}, {pipeline_mode = #tpu.pipeline_mode<synchronous>, transform_indices = @transform_10, window_bounds = array<i64: 1, 37>}, {pipeline_mode = #tpu.pipeline_mode<synchronous>, transform_indices = @transform_11, window_bounds = array<i64: 37, 3>}, {pipeline_mode = #tpu.pipeline_mode<synchronous>, transform_indices = @transform_12, window_bounds = array<i64: 1, 3>}, {transform_indices = @transform_13, window_bounds = array<i64: 1, 1, 3>}]} {
    %c0 = arith.constant 0 : index
    %c0_0 = arith.constant 0 : index
    %c0_1 = arith.constant 0 : index
    %0 = vector.load %arg1[%c0, %c0_0, %c0_1] : memref<1x32x256xf32, #tpu.memory_space<vmem>>, vector<1x32x256xf32>
    %1 = vector.shape_cast %0 : vector<1x32x256xf32> to vector<32x256xf32>
    %c0_2 = arith.constant 0 : index
    %c0_3 = arith.constant 0 : index
    %2 = vector.load %arg3[%c0_2, %c0_3] : memref<16x1xf32, #tpu.memory_space<vmem>>, vector<16x1xf32>
    %cst = arith.constant 0.000000e+00 : f32
    %3 = vector.broadcast %cst : f32 to vector<16x253xf32>
    %c0_4 = arith.constant 0 : index
    %c0_5 = arith.constant 0 : index
    %c0_6 = arith.constant 0 : index
    %4 = vector.load %arg2[%c0_4, %c0_5, %c0_6] : memref<4x16x32xf32, #tpu.memory_space<vmem>>, vector<1x16x32xf32>
    %5 = vector.shape_cast %4 : vector<1x16x32xf32> to vector<16x32xf32>
    %6 = vector.extract_strided_slice %1 {offsets = [0, 0], sizes = [32, 253], strides = [1, 1]} : vector<32x256xf32> to vector<32x253xf32>
    %cst_7 = arith.constant dense<0.000000e+00> : vector<16x253xf32>
    %7 = tpu.matmul %5, %6, %cst_7 {dimension_numbers = #tpu.dot_dimension_numbers<[1], [0], [0], [1], [0, 0, 1, 1], [], []>} : vector<16x32xf32>, vector<32x253xf32>, vector<16x253xf32> -> vector<16x253xf32>
    %8 = arith.addf %3, %7 : vector<16x253xf32>
    %c1 = arith.constant 1 : index
    %c0_8 = arith.constant 0 : index
    %c0_9 = arith.constant 0 : index
    %9 = vector.load %arg2[%c1, %c0_8, %c0_9] : memref<4x16x32xf32, #tpu.memory_space<vmem>>, vector<1x16x32xf32>
    %10 = vector.shape_cast %9 : vector<1x16x32xf32> to vector<16x32xf32>
    %11 = vector.extract_strided_slice %1 {offsets = [0, 1], sizes = [32, 253], strides = [1, 1]} : vector<32x256xf32> to vector<32x253xf32>
    %cst_10 = arith.constant dense<0.000000e+00> : vector<16x253xf32>
    %12 = tpu.matmul %10, %11, %cst_10 {dimension_numbers = #tpu.dot_dimension_numbers<[1], [0], [0], [1], [0, 0, 1, 1], [], []>} : vector<16x32xf32>, vector<32x253xf32>, vector<16x253xf32> -> vector<16x253xf32>
    %13 = arith.addf %8, %12 : vector<16x253xf32>
    %c2 = arith.constant 2 : index
    %c0_11 = arith.constant 0 : index
    %c0_12 = arith.constant 0 : index
    %14 = vector.load %arg2[%c2, %c0_11, %c0_12] : memref<4x16x32xf32, #tpu.memory_space<vmem>>, vector<1x16x32xf32>
    %15 = vector.shape_cast %14 : vector<1x16x32xf32> to vector<16x32xf32>
    %16 = vector.extract_strided_slice %1 {offsets = [0, 2], sizes = [32, 253], strides = [1, 1]} : vector<32x256xf32> to vector<32x253xf32>
    %cst_13 = arith.constant dense<0.000000e+00> : vector<16x253xf32>
    %17 = tpu.matmul %15, %16, %cst_13 {dimension_numbers = #tpu.dot_dimension_numbers<[1], [0], [0], [1], [0, 0, 1, 1], [], []>} : vector<16x32xf32>, vector<32x253xf32>, vector<16x253xf32> -> vector<16x253xf32>
    %18 = arith.addf %13, %17 : vector<16x253xf32>
    %c3 = arith.constant 3 : index
    %c0_14 = arith.constant 0 : index
    %c0_15 = arith.constant 0 : index
    %19 = vector.load %arg2[%c3, %c0_14, %c0_15] : memref<4x16x32xf32, #tpu.memory_space<vmem>>, vector<1x16x32xf32>
    %20 = vector.shape_cast %19 : vector<1x16x32xf32> to vector<16x32xf32>
    %21 = vector.extract_strided_slice %1 {offsets = [0, 3], sizes = [32, 253], strides = [1, 1]} : vector<32x256xf32> to vector<32x253xf32>
    %cst_16 = arith.constant dense<0.000000e+00> : vector<16x253xf32>
    %22 = tpu.matmul %20, %21, %cst_16 {dimension_numbers = #tpu.dot_dimension_numbers<[1], [0], [0], [1], [0, 0, 1, 1], [], []>} : vector<16x32xf32>, vector<32x253xf32>, vector<16x253xf32> -> vector<16x253xf32>
    %23 = arith.addf %18, %22 : vector<16x253xf32>
    %24 = vector.broadcast %2 : vector<16x1xf32> to vector<16x253xf32>
    %25 = arith.addf %23, %24 : vector<16x253xf32>
    %cst_17 = arith.constant 0.000000e+00 : f32
    %26 = vector.broadcast %cst_17 : f32 to vector<16x253xf32>
    %27 = arith.maximumf %25, %26 : vector<16x253xf32>
    %c0_18 = arith.constant 0 : index
    %c0_19 = arith.constant 0 : index
    %28 = vector.load %arg5[%c0_18, %c0_19] : memref<16x1xf32, #tpu.memory_space<vmem>>, vector<16x1xf32>
    %cst_20 = arith.constant 0.000000e+00 : f32
    %29 = vector.broadcast %cst_20 : f32 to vector<16x250xf32>
    %c0_21 = arith.constant 0 : index
    %c0_22 = arith.constant 0 : index
    %c0_23 = arith.constant 0 : index
    %30 = vector.load %arg4[%c0_21, %c0_22, %c0_23] : memref<4x16x16xf32, #tpu.memory_space<vmem>>, vector<1x16x16xf32>
    %31 = vector.shape_cast %30 : vector<1x16x16xf32> to vector<16x16xf32>
    %32 = vector.extract_strided_slice %27 {offsets = [0, 0], sizes = [16, 250], strides = [1, 1]} : vector<16x253xf32> to vector<16x250xf32>
    %cst_24 = arith.constant dense<0.000000e+00> : vector<16x250xf32>
    %33 = tpu.matmul %31, %32, %cst_24 {dimension_numbers = #tpu.dot_dimension_numbers<[1], [0], [0], [1], [0, 0, 1, 1], [], []>} : vector<16x16xf32>, vector<16x250xf32>, vector<16x250xf32> -> vector<16x250xf32>
    %34 = arith.addf %29, %33 : vector<16x250xf32>
    %c1_25 = arith.constant 1 : index
    %c0_26 = arith.constant 0 : index
    %c0_27 = arith.constant 0 : index
    %35 = vector.load %arg4[%c1_25, %c0_26, %c0_27] : memref<4x16x16xf32, #tpu.memory_space<vmem>>, vector<1x16x16xf32>
    %36 = vector.shape_cast %35 : vector<1x16x16xf32> to vector<16x16xf32>
    %37 = vector.extract_strided_slice %27 {offsets = [0, 1], sizes = [16, 250], strides = [1, 1]} : vector<16x253xf32> to vector<16x250xf32>
    %cst_28 = arith.constant dense<0.000000e+00> : vector<16x250xf32>
    %38 = tpu.matmul %36, %37, %cst_28 {dimension_numbers = #tpu.dot_dimension_numbers<[1], [0], [0], [1], [0, 0, 1, 1], [], []>} : vector<16x16xf32>, vector<16x250xf32>, vector<16x250xf32> -> vector<16x250xf32>
    %39 = arith.addf %34, %38 : vector<16x250xf32>
    %c2_29 = arith.constant 2 : index
    %c0_30 = arith.constant 0 : index
    %c0_31 = arith.constant 0 : index
    %40 = vector.load %arg4[%c2_29, %c0_30, %c0_31] : memref<4x16x16xf32, #tpu.memory_space<vmem>>, vector<1x16x16xf32>
    %41 = vector.shape_cast %40 : vector<1x16x16xf32> to vector<16x16xf32>
    %42 = vector.extract_strided_slice %27 {offsets = [0, 2], sizes = [16, 250], strides = [1, 1]} : vector<16x253xf32> to vector<16x250xf32>
    %cst_32 = arith.constant dense<0.000000e+00> : vector<16x250xf32>
    %43 = tpu.matmul %41, %42, %cst_32 {dimension_numbers = #tpu.dot_dimension_numbers<[1], [0], [0], [1], [0, 0, 1, 1], [], []>} : vector<16x16xf32>, vector<16x250xf32>, vector<16x250xf32> -> vector<16x250xf32>
    %44 = arith.addf %39, %43 : vector<16x250xf32>
    %c3_33 = arith.constant 3 : index
    %c0_34 = arith.constant 0 : index
    %c0_35 = arith.constant 0 : index
    %45 = vector.load %arg4[%c3_33, %c0_34, %c0_35] : memref<4x16x16xf32, #tpu.memory_space<vmem>>, vector<1x16x16xf32>
    %46 = vector.shape_cast %45 : vector<1x16x16xf32> to vector<16x16xf32>
    %47 = vector.extract_strided_slice %27 {offsets = [0, 3], sizes = [16, 250], strides = [1, 1]} : vector<16x253xf32> to vector<16x250xf32>
    %cst_36 = arith.constant dense<0.000000e+00> : vector<16x250xf32>
    %48 = tpu.matmul %46, %47, %cst_36 {dimension_numbers = #tpu.dot_dimension_numbers<[1], [0], [0], [1], [0, 0, 1, 1], [], []>} : vector<16x16xf32>, vector<16x250xf32>, vector<16x250xf32> -> vector<16x250xf32>
    %49 = arith.addf %44, %48 : vector<16x250xf32>
    %50 = vector.broadcast %28 : vector<16x1xf32> to vector<16x250xf32>
    %51 = arith.addf %49, %50 : vector<16x250xf32>
    %cst_37 = arith.constant 0.000000e+00 : f32
    %52 = vector.broadcast %cst_37 : f32 to vector<16x250xf32>
    %53 = arith.maximumf %51, %52 : vector<16x250xf32>
    %c0_38 = arith.constant 0 : index
    %c0_39 = arith.constant 0 : index
    %54 = vector.load %arg7[%c0_38, %c0_39] : memref<1x32xf32, #tpu.memory_space<vmem>>, vector<1x32xf32>
    %55 = vector.extract_strided_slice %53 {offsets = [0, 0], sizes = [1, 250], strides = [1, 1]} : vector<16x250xf32> to vector<1x250xf32>
    %56 = arith.truncf %55 : vector<1x250xf32> to vector<1x250xbf16>
    %c0_40 = arith.constant 0 : index
    %c0_41 = arith.constant 0 : index
    %c0_42 = arith.constant 0 : index
    %57 = vector.load %arg6[%c0_40, %c0_41, %c0_42] : memref<16x250x32xbf16, #tpu.memory_space<vmem>>, vector<1x250x32xbf16>
    %58 = vector.shape_cast %57 : vector<1x250x32xbf16> to vector<250x32xbf16>
    %cst_43 = arith.constant dense<0.000000e+00> : vector<1x32xf32>
    %59 = tpu.matmul %56, %58, %cst_43 {dimension_numbers = #tpu.dot_dimension_numbers<[1], [0], [0], [1], [0, 0, 1, 1], [], []>} : vector<1x250xbf16>, vector<250x32xbf16>, vector<1x32xf32> -> vector<1x32xf32>
    %60 = arith.addf %54, %59 : vector<1x32xf32>
    %61 = vector.extract_strided_slice %53 {offsets = [1, 0], sizes = [1, 250], strides = [1, 1]} : vector<16x250xf32> to vector<1x250xf32>
    %62 = arith.truncf %61 : vector<1x250xf32> to vector<1x250xbf16>
    %c1_44 = arith.constant 1 : index
    %c0_45 = arith.constant 0 : index
    %c0_46 = arith.constant 0 : index
    %63 = vector.load %arg6[%c1_44, %c0_45, %c0_46] : memref<16x250x32xbf16, #tpu.memory_space<vmem>>, vector<1x250x32xbf16>
    %64 = vector.shape_cast %63 : vector<1x250x32xbf16> to vector<250x32xbf16>
    %cst_47 = arith.constant dense<0.000000e+00> : vector<1x32xf32>
    %65 = tpu.matmul %62, %64, %cst_47 {dimension_numbers = #tpu.dot_dimension_numbers<[1], [0], [0], [1], [0, 0, 1, 1], [], []>} : vector<1x250xbf16>, vector<250x32xbf16>, vector<1x32xf32> -> vector<1x32xf32>
    %66 = arith.addf %60, %65 : vector<1x32xf32>
    %67 = vector.extract_strided_slice %53 {offsets = [2, 0], sizes = [1, 250], strides = [1, 1]} : vector<16x250xf32> to vector<1x250xf32>
    %68 = arith.truncf %67 : vector<1x250xf32> to vector<1x250xbf16>
    %c2_48 = arith.constant 2 : index
    %c0_49 = arith.constant 0 : index
    %c0_50 = arith.constant 0 : index
    %69 = vector.load %arg6[%c2_48, %c0_49, %c0_50] : memref<16x250x32xbf16, #tpu.memory_space<vmem>>, vector<1x250x32xbf16>
    %70 = vector.shape_cast %69 : vector<1x250x32xbf16> to vector<250x32xbf16>
    %cst_51 = arith.constant dense<0.000000e+00> : vector<1x32xf32>
    %71 = tpu.matmul %68, %70, %cst_51 {dimension_numbers = #tpu.dot_dimension_numbers<[1], [0], [0], [1], [0, 0, 1, 1], [], []>} : vector<1x250xbf16>, vector<250x32xbf16>, vector<1x32xf32> -> vector<1x32xf32>
    %72 = arith.addf %66, %71 : vector<1x32xf32>
    %73 = vector.extract_strided_slice %53 {offsets = [3, 0], sizes = [1, 250], strides = [1, 1]} : vector<16x250xf32> to vector<1x250xf32>
    %74 = arith.truncf %73 : vector<1x250xf32> to vector<1x250xbf16>
    %c3_52 = arith.constant 3 : index
    %c0_53 = arith.constant 0 : index
    %c0_54 = arith.constant 0 : index
    %75 = vector.load %arg6[%c3_52, %c0_53, %c0_54] : memref<16x250x32xbf16, #tpu.memory_space<vmem>>, vector<1x250x32xbf16>
    %76 = vector.shape_cast %75 : vector<1x250x32xbf16> to vector<250x32xbf16>
    %cst_55 = arith.constant dense<0.000000e+00> : vector<1x32xf32>
    %77 = tpu.matmul %74, %76, %cst_55 {dimension_numbers = #tpu.dot_dimension_numbers<[1], [0], [0], [1], [0, 0, 1, 1], [], []>} : vector<1x250xbf16>, vector<250x32xbf16>, vector<1x32xf32> -> vector<1x32xf32>
    %78 = arith.addf %72, %77 : vector<1x32xf32>
    %79 = vector.extract_strided_slice %53 {offsets = [4, 0], sizes = [1, 250], strides = [1, 1]} : vector<16x250xf32> to vector<1x250xf32>
    %80 = arith.truncf %79 : vector<1x250xf32> to vector<1x250xbf16>
    %c4 = arith.constant 4 : index
    %c0_56 = arith.constant 0 : index
    %c0_57 = arith.constant 0 : index
    %81 = vector.load %arg6[%c4, %c0_56, %c0_57] : memref<16x250x32xbf16, #tpu.memory_space<vmem>>, vector<1x250x32xbf16>
    %82 = vector.shape_cast %81 : vector<1x250x32xbf16> to vector<250x32xbf16>
    %cst_58 = arith.constant dense<0.000000e+00> : vector<1x32xf32>
    %83 = tpu.matmul %80, %82, %cst_58 {dimension_numbers = #tpu.dot_dimension_numbers<[1], [0], [0], [1], [0, 0, 1, 1], [], []>} : vector<1x250xbf16>, vector<250x32xbf16>, vector<1x32xf32> -> vector<1x32xf32>
    %84 = arith.addf %78, %83 : vector<1x32xf32>
    %85 = vector.extract_strided_slice %53 {offsets = [5, 0], sizes = [1, 250], strides = [1, 1]} : vector<16x250xf32> to vector<1x250xf32>
    %86 = arith.truncf %85 : vector<1x250xf32> to vector<1x250xbf16>
    %c5 = arith.constant 5 : index
    %c0_59 = arith.constant 0 : index
    %c0_60 = arith.constant 0 : index
    %87 = vector.load %arg6[%c5, %c0_59, %c0_60] : memref<16x250x32xbf16, #tpu.memory_space<vmem>>, vector<1x250x32xbf16>
    %88 = vector.shape_cast %87 : vector<1x250x32xbf16> to vector<250x32xbf16>
    %cst_61 = arith.constant dense<0.000000e+00> : vector<1x32xf32>
    %89 = tpu.matmul %86, %88, %cst_61 {dimension_numbers = #tpu.dot_dimension_numbers<[1], [0], [0], [1], [0, 0, 1, 1], [], []>} : vector<1x250xbf16>, vector<250x32xbf16>, vector<1x32xf32> -> vector<1x32xf32>
    %90 = arith.addf %84, %89 : vector<1x32xf32>
    %91 = vector.extract_strided_slice %53 {offsets = [6, 0], sizes = [1, 250], strides = [1, 1]} : vector<16x250xf32> to vector<1x250xf32>
    %92 = arith.truncf %91 : vector<1x250xf32> to vector<1x250xbf16>
    %c6 = arith.constant 6 : index
    %c0_62 = arith.constant 0 : index
    %c0_63 = arith.constant 0 : index
    %93 = vector.load %arg6[%c6, %c0_62, %c0_63] : memref<16x250x32xbf16, #tpu.memory_space<vmem>>, vector<1x250x32xbf16>
    %94 = vector.shape_cast %93 : vector<1x250x32xbf16> to vector<250x32xbf16>
    %cst_64 = arith.constant dense<0.000000e+00> : vector<1x32xf32>
    %95 = tpu.matmul %92, %94, %cst_64 {dimension_numbers = #tpu.dot_dimension_numbers<[1], [0], [0], [1], [0, 0, 1, 1], [], []>} : vector<1x250xbf16>, vector<250x32xbf16>, vector<1x32xf32> -> vector<1x32xf32>
    %96 = arith.addf %90, %95 : vector<1x32xf32>
    %97 = vector.extract_strided_slice %53 {offsets = [7, 0], sizes = [1, 250], strides = [1, 1]} : vector<16x250xf32> to vector<1x250xf32>
    %98 = arith.truncf %97 : vector<1x250xf32> to vector<1x250xbf16>
    %c7 = arith.constant 7 : index
    %c0_65 = arith.constant 0 : index
    %c0_66 = arith.constant 0 : index
    %99 = vector.load %arg6[%c7, %c0_65, %c0_66] : memref<16x250x32xbf16, #tpu.memory_space<vmem>>, vector<1x250x32xbf16>
    %100 = vector.shape_cast %99 : vector<1x250x32xbf16> to vector<250x32xbf16>
    %cst_67 = arith.constant dense<0.000000e+00> : vector<1x32xf32>
    %101 = tpu.matmul %98, %100, %cst_67 {dimension_numbers = #tpu.dot_dimension_numbers<[1], [0], [0], [1], [0, 0, 1, 1], [], []>} : vector<1x250xbf16>, vector<250x32xbf16>, vector<1x32xf32> -> vector<1x32xf32>
    %102 = arith.addf %96, %101 : vector<1x32xf32>
    %103 = vector.extract_strided_slice %53 {offsets = [8, 0], sizes = [1, 250], strides = [1, 1]} : vector<16x250xf32> to vector<1x250xf32>
    %104 = arith.truncf %103 : vector<1x250xf32> to vector<1x250xbf16>
    %c8 = arith.constant 8 : index
    %c0_68 = arith.constant 0 : index
    %c0_69 = arith.constant 0 : index
    %105 = vector.load %arg6[%c8, %c0_68, %c0_69] : memref<16x250x32xbf16, #tpu.memory_space<vmem>>, vector<1x250x32xbf16>
    %106 = vector.shape_cast %105 : vector<1x250x32xbf16> to vector<250x32xbf16>
    %cst_70 = arith.constant dense<0.000000e+00> : vector<1x32xf32>
    %107 = tpu.matmul %104, %106, %cst_70 {dimension_numbers = #tpu.dot_dimension_numbers<[1], [0], [0], [1], [0, 0, 1, 1], [], []>} : vector<1x250xbf16>, vector<250x32xbf16>, vector<1x32xf32> -> vector<1x32xf32>
    %108 = arith.addf %102, %107 : vector<1x32xf32>
    %109 = vector.extract_strided_slice %53 {offsets = [9, 0], sizes = [1, 250], strides = [1, 1]} : vector<16x250xf32> to vector<1x250xf32>
    %110 = arith.truncf %109 : vector<1x250xf32> to vector<1x250xbf16>
    %c9 = arith.constant 9 : index
    %c0_71 = arith.constant 0 : index
    %c0_72 = arith.constant 0 : index
    %111 = vector.load %arg6[%c9, %c0_71, %c0_72] : memref<16x250x32xbf16, #tpu.memory_space<vmem>>, vector<1x250x32xbf16>
    %112 = vector.shape_cast %111 : vector<1x250x32xbf16> to vector<250x32xbf16>
    %cst_73 = arith.constant dense<0.000000e+00> : vector<1x32xf32>
    %113 = tpu.matmul %110, %112, %cst_73 {dimension_numbers = #tpu.dot_dimension_numbers<[1], [0], [0], [1], [0, 0, 1, 1], [], []>} : vector<1x250xbf16>, vector<250x32xbf16>, vector<1x32xf32> -> vector<1x32xf32>
    %114 = arith.addf %108, %113 : vector<1x32xf32>
    %115 = vector.extract_strided_slice %53 {offsets = [10, 0], sizes = [1, 250], strides = [1, 1]} : vector<16x250xf32> to vector<1x250xf32>
    %116 = arith.truncf %115 : vector<1x250xf32> to vector<1x250xbf16>
    %c10 = arith.constant 10 : index
    %c0_74 = arith.constant 0 : index
    %c0_75 = arith.constant 0 : index
    %117 = vector.load %arg6[%c10, %c0_74, %c0_75] : memref<16x250x32xbf16, #tpu.memory_space<vmem>>, vector<1x250x32xbf16>
    %118 = vector.shape_cast %117 : vector<1x250x32xbf16> to vector<250x32xbf16>
    %cst_76 = arith.constant dense<0.000000e+00> : vector<1x32xf32>
    %119 = tpu.matmul %116, %118, %cst_76 {dimension_numbers = #tpu.dot_dimension_numbers<[1], [0], [0], [1], [0, 0, 1, 1], [], []>} : vector<1x250xbf16>, vector<250x32xbf16>, vector<1x32xf32> -> vector<1x32xf32>
    %120 = arith.addf %114, %119 : vector<1x32xf32>
    %121 = vector.extract_strided_slice %53 {offsets = [11, 0], sizes = [1, 250], strides = [1, 1]} : vector<16x250xf32> to vector<1x250xf32>
    %122 = arith.truncf %121 : vector<1x250xf32> to vector<1x250xbf16>
    %c11 = arith.constant 11 : index
    %c0_77 = arith.constant 0 : index
    %c0_78 = arith.constant 0 : index
    %123 = vector.load %arg6[%c11, %c0_77, %c0_78] : memref<16x250x32xbf16, #tpu.memory_space<vmem>>, vector<1x250x32xbf16>
    %124 = vector.shape_cast %123 : vector<1x250x32xbf16> to vector<250x32xbf16>
    %cst_79 = arith.constant dense<0.000000e+00> : vector<1x32xf32>
    %125 = tpu.matmul %122, %124, %cst_79 {dimension_numbers = #tpu.dot_dimension_numbers<[1], [0], [0], [1], [0, 0, 1, 1], [], []>} : vector<1x250xbf16>, vector<250x32xbf16>, vector<1x32xf32> -> vector<1x32xf32>
    %126 = arith.addf %120, %125 : vector<1x32xf32>
    %127 = vector.extract_strided_slice %53 {offsets = [12, 0], sizes = [1, 250], strides = [1, 1]} : vector<16x250xf32> to vector<1x250xf32>
    %128 = arith.truncf %127 : vector<1x250xf32> to vector<1x250xbf16>
    %c12 = arith.constant 12 : index
    %c0_80 = arith.constant 0 : index
    %c0_81 = arith.constant 0 : index
    %129 = vector.load %arg6[%c12, %c0_80, %c0_81] : memref<16x250x32xbf16, #tpu.memory_space<vmem>>, vector<1x250x32xbf16>
    %130 = vector.shape_cast %129 : vector<1x250x32xbf16> to vector<250x32xbf16>
    %cst_82 = arith.constant dense<0.000000e+00> : vector<1x32xf32>
    %131 = tpu.matmul %128, %130, %cst_82 {dimension_numbers = #tpu.dot_dimension_numbers<[1], [0], [0], [1], [0, 0, 1, 1], [], []>} : vector<1x250xbf16>, vector<250x32xbf16>, vector<1x32xf32> -> vector<1x32xf32>
    %132 = arith.addf %126, %131 : vector<1x32xf32>
    %133 = vector.extract_strided_slice %53 {offsets = [13, 0], sizes = [1, 250], strides = [1, 1]} : vector<16x250xf32> to vector<1x250xf32>
    %134 = arith.truncf %133 : vector<1x250xf32> to vector<1x250xbf16>
    %c13 = arith.constant 13 : index
    %c0_83 = arith.constant 0 : index
    %c0_84 = arith.constant 0 : index
    %135 = vector.load %arg6[%c13, %c0_83, %c0_84] : memref<16x250x32xbf16, #tpu.memory_space<vmem>>, vector<1x250x32xbf16>
    %136 = vector.shape_cast %135 : vector<1x250x32xbf16> to vector<250x32xbf16>
    %cst_85 = arith.constant dense<0.000000e+00> : vector<1x32xf32>
    %137 = tpu.matmul %134, %136, %cst_85 {dimension_numbers = #tpu.dot_dimension_numbers<[1], [0], [0], [1], [0, 0, 1, 1], [], []>} : vector<1x250xbf16>, vector<250x32xbf16>, vector<1x32xf32> -> vector<1x32xf32>
    %138 = arith.addf %132, %137 : vector<1x32xf32>
    %139 = vector.extract_strided_slice %53 {offsets = [14, 0], sizes = [1, 250], strides = [1, 1]} : vector<16x250xf32> to vector<1x250xf32>
    %140 = arith.truncf %139 : vector<1x250xf32> to vector<1x250xbf16>
    %c14 = arith.constant 14 : index
    %c0_86 = arith.constant 0 : index
    %c0_87 = arith.constant 0 : index
    %141 = vector.load %arg6[%c14, %c0_86, %c0_87] : memref<16x250x32xbf16, #tpu.memory_space<vmem>>, vector<1x250x32xbf16>
    %142 = vector.shape_cast %141 : vector<1x250x32xbf16> to vector<250x32xbf16>
    %cst_88 = arith.constant dense<0.000000e+00> : vector<1x32xf32>
    %143 = tpu.matmul %140, %142, %cst_88 {dimension_numbers = #tpu.dot_dimension_numbers<[1], [0], [0], [1], [0, 0, 1, 1], [], []>} : vector<1x250xbf16>, vector<250x32xbf16>, vector<1x32xf32> -> vector<1x32xf32>
    %144 = arith.addf %138, %143 : vector<1x32xf32>
    %145 = vector.extract_strided_slice %53 {offsets = [15, 0], sizes = [1, 250], strides = [1, 1]} : vector<16x250xf32> to vector<1x250xf32>
    %146 = arith.truncf %145 : vector<1x250xf32> to vector<1x250xbf16>
    %c15 = arith.constant 15 : index
    %c0_89 = arith.constant 0 : index
    %c0_90 = arith.constant 0 : index
    %147 = vector.load %arg6[%c15, %c0_89, %c0_90] : memref<16x250x32xbf16, #tpu.memory_space<vmem>>, vector<1x250x32xbf16>
    %148 = vector.shape_cast %147 : vector<1x250x32xbf16> to vector<250x32xbf16>
    %cst_91 = arith.constant dense<0.000000e+00> : vector<1x32xf32>
    %149 = tpu.matmul %146, %148, %cst_91 {dimension_numbers = #tpu.dot_dimension_numbers<[1], [0], [0], [1], [0, 0, 1, 1], [], []>} : vector<1x250xbf16>, vector<250x32xbf16>, vector<1x32xf32> -> vector<1x32xf32>
    %150 = arith.addf %144, %149 : vector<1x32xf32>
    %cst_92 = arith.constant 0.000000e+00 : f32
    %151 = vector.broadcast %cst_92 : f32 to vector<1x32xf32>
    %152 = arith.maximumf %150, %151 : vector<1x32xf32>
    %c0_93 = arith.constant 0 : index
    %c0_94 = arith.constant 0 : index
    %c0_95 = arith.constant 0 : index
    %153 = vector.load %arg8[%c0_93, %c0_94, %c0_95] : memref<1x1x5xf32, #tpu.memory_space<vmem>>, vector<1x1x5xf32>
    %154 = vector.shape_cast %153 : vector<1x1x5xf32> to vector<1x5xf32>
    %c0_96 = arith.constant 0 : index
    %c0_97 = arith.constant 0 : index
    %155 = vector.load %arg9[%c0_96, %c0_97] : memref<32x37xf32, #tpu.memory_space<vmem>>, vector<32x37xf32>
    %cst_98 = arith.constant dense<0.000000e+00> : vector<1x37xf32>
    %156 = tpu.matmul %152, %155, %cst_98 {dimension_numbers = #tpu.dot_dimension_numbers<[1], [0], [0], [1], [0, 0, 1, 1], [], []>} : vector<1x32xf32>, vector<32x37xf32>, vector<1x37xf32> -> vector<1x37xf32>
    %c0_99 = arith.constant 0 : index
    %c0_100 = arith.constant 0 : index
    %157 = vector.load %arg10[%c0_99, %c0_100] : memref<5x37xf32, #tpu.memory_space<vmem>>, vector<5x37xf32>
    %cst_101 = arith.constant dense<0.000000e+00> : vector<1x37xf32>
    %158 = tpu.matmul %154, %157, %cst_101 {dimension_numbers = #tpu.dot_dimension_numbers<[1], [0], [0], [1], [0, 0, 1, 1], [], []>} : vector<1x5xf32>, vector<5x37xf32>, vector<1x37xf32> -> vector<1x37xf32>
    %159 = arith.addf %156, %158 : vector<1x37xf32>
    %c0_102 = arith.constant 0 : index
    %c0_103 = arith.constant 0 : index
    %160 = vector.load %arg11[%c0_102, %c0_103] : memref<1x37xf32, #tpu.memory_space<vmem>>, vector<1x37xf32>
    %161 = arith.addf %159, %160 : vector<1x37xf32>
    %cst_104 = arith.constant 0.000000e+00 : f32
    %162 = vector.broadcast %cst_104 : f32 to vector<1x37xf32>
    %163 = arith.maximumf %161, %162 : vector<1x37xf32>
    %c0_105 = arith.constant 0 : index
    %c0_106 = arith.constant 0 : index
    %164 = vector.load %arg12[%c0_105, %c0_106] : memref<37x3xf32, #tpu.memory_space<vmem>>, vector<37x3xf32>
    %cst_107 = arith.constant dense<0.000000e+00> : vector<1x3xf32>
    %165 = tpu.matmul %163, %164, %cst_107 {dimension_numbers = #tpu.dot_dimension_numbers<[1], [0], [0], [1], [0, 0, 1, 1], [], []>} : vector<1x37xf32>, vector<37x3xf32>, vector<1x3xf32> -> vector<1x3xf32>
    %c0_108 = arith.constant 0 : index
    %c0_109 = arith.constant 0 : index
    %166 = vector.load %arg13[%c0_108, %c0_109] : memref<1x3xf32, #tpu.memory_space<vmem>>, vector<1x3xf32>
    %167 = arith.addf %165, %166 : vector<1x3xf32>
    %cst_110 = arith.constant dense<0xFF800000> : vector<1xf32>
    %168 = vector.multi_reduction <maximumf>, %167, %cst_110 [1] : vector<1x3xf32> to vector<1xf32>
    %169 = vector.shape_cast %168 : vector<1xf32> to vector<1x1xf32>
    %170 = vector.broadcast %169 : vector<1x1xf32> to vector<1x3xf32>
    %171 = arith.subf %167, %170 : vector<1x3xf32>
    %172 = math.exp %171 : vector<1x3xf32>
    %cst_111 = arith.constant dense<0.000000e+00> : vector<1xf32>
    %173 = vector.multi_reduction <add>, %172, %cst_111 [1] : vector<1x3xf32> to vector<1xf32>
    %174 = vector.shape_cast %173 : vector<1xf32> to vector<1x1xf32>
    %175 = vector.broadcast %174 : vector<1x1xf32> to vector<1x3xf32>
    %176 = arith.divf %172, %175 : vector<1x3xf32>
    %c0_112 = arith.constant 0 : index
    %c0_113 = arith.constant 0 : index
    %c0_114 = arith.constant 0 : index
    %177 = vector.load %arg14[%c0_112, %c0_113, %c0_114] : memref<1x1x3xf32, #tpu.memory_space<vmem>>, vector<1x1x3xf32>
    %178 = vector.shape_cast %177 : vector<1x1x3xf32> to vector<1x3xf32>
    %179 = vector.shape_cast %176 : vector<1x3xf32> to vector<1x1x3xf32>
    tpu.vector_store %arg14[%c0_112, %c0_113, %c0_114], %179 {strides = array<i32>} : memref<1x1x3xf32, #tpu.memory_space<vmem>>, vector<1x1x3xf32>,
    return
  }
  func.func @transform_0(%arg0: i32) -> (i32, i32, i32) {
    %c0_i32 = arith.constant 0 : i32
    %c0_i32_0 = arith.constant 0 : i32
    %c0_i32_1 = arith.constant 0 : i32
    return %arg0, %c0_i32, %c0_i32_0 : i32, i32, i32
  }
  func.func @transform_1(%arg0: i32) -> (i32, i32, i32) {
    %c0_i32 = arith.constant 0 : i32
    %c0_i32_0 = arith.constant 0 : i32
    %c0_i32_1 = arith.constant 0 : i32
    %c0_i32_2 = arith.constant 0 : i32
    return %c0_i32, %c0_i32_0, %c0_i32_1 : i32, i32, i32
  }
  func.func @transform_2(%arg0: i32) -> (i32, i32) {
    %c0_i32 = arith.constant 0 : i32
    %c0_i32_0 = arith.constant 0 : i32
    %c0_i32_1 = arith.constant 0 : i32
    return %c0_i32, %c0_i32_0 : i32, i32
  }
  func.func @transform_3(%arg0: i32) -> (i32, i32, i32) {
    %c0_i32 = arith.constant 0 : i32
    %c0_i32_0 = arith.constant 0 : i32
    %c0_i32_1 = arith.constant 0 : i32
    %c0_i32_2 = arith.constant 0 : i32
    return %c0_i32, %c0_i32_0, %c0_i32_1 : i32, i32, i32
  }
  func.func @transform_4(%arg0: i32) -> (i32, i32) {
    %c0_i32 = arith.constant 0 : i32
    %c0_i32_0 = arith.constant 0 : i32
    %c0_i32_1 = arith.constant 0 : i32
    return %c0_i32, %c0_i32_0 : i32, i32
  }
  func.func @transform_5(%arg0: i32) -> (i32, i32, i32) {
    %c0_i32 = arith.constant 0 : i32
    %c0_i32_0 = arith.constant 0 : i32
    %c0_i32_1 = arith.constant 0 : i32
    %c0_i32_2 = arith.constant 0 : i32
    return %c0_i32, %c0_i32_0, %c0_i32_1 : i32, i32, i32
  }
  func.func @transform_6(%arg0: i32) -> (i32, i32) {
    %c0_i32 = arith.constant 0 : i32
    %c0_i32_0 = arith.constant 0 : i32
    %c0_i32_1 = arith.constant 0 : i32
    return %c0_i32, %c0_i32_0 : i32, i32
  }
  func.func @transform_7(%arg0: i32) -> (i32, i32, i32) {
    %c0_i32 = arith.constant 0 : i32
    %c0_i32_0 = arith.constant 0 : i32
    %c0_i32_1 = arith.constant 0 : i32
    return %arg0, %c0_i32, %c0_i32_0 : i32, i32, i32
  }
  func.func @transform_8(%arg0: i32) -> (i32, i32) {
    %c0_i32 = arith.constant 0 : i32
    %c0_i32_0 = arith.constant 0 : i32
    %c0_i32_1 = arith.constant 0 : i32
    return %c0_i32, %c0_i32_0 : i32, i32
  }
  func.func @transform_9(%arg0: i32) -> (i32, i32) {
    %c0_i32 = arith.constant 0 : i32
    %c0_i32_0 = arith.constant 0 : i32
    %c0_i32_1 = arith.constant 0 : i32
    return %c0_i32, %c0_i32_0 : i32, i32
  }
  func.func @transform_10(%arg0: i32) -> (i32, i32) {
    %c0_i32 = arith.constant 0 : i32
    %c0_i32_0 = arith.constant 0 : i32
    %c0_i32_1 = arith.constant 0 : i32
    return %c0_i32, %c0_i32_0 : i32, i32
  }
  func.func @transform_11(%arg0: i32) -> (i32, i32) {
    %c0_i32 = arith.constant 0 : i32
    %c0_i32_0 = arith.constant 0 : i32
    %c0_i32_1 = arith.constant 0 : i32
    return %c0_i32, %c0_i32_0 : i32, i32
  }
  func.func @transform_12(%arg0: i32) -> (i32, i32) {
    %c0_i32 = arith.constant 0 : i32
    %c0_i32_0 = arith.constant 0 : i32
    %c0_i32_1 = arith.constant 0 : i32
    return %c0_i32, %c0_i32_0 : i32, i32
  }
  func.func @transform_13(%arg0: i32) -> (i32, i32, i32) {
    %c0_i32 = arith.constant 0 : i32
    %c0_i32_0 = arith.constant 0 : i32
    %c0_i32_1 = arith.constant 0 : i32
    return %arg0, %c0_i32, %c0_i32_0 : i32, i32, i32
  }
}

</mosaic_0001>

<llo_original>
// kernel: model_forward.3
$region0: #{model_forward.3}
  #allocation0 [shape = 'u32[]', space=smem, size = 0x4, offset = 0x4, fixed_abs, tag = 'smem constant byte address 0x4 - core index']
  #allocation1 [shape = 'u32[144,128]{1,0:T(1,128)}', space=vmem, size = 0x12000, scoped, tag = 'internal scratch']
  %s0 = inlined_call_operand.vmem [shape: f32[2,768], index: 0, kind: input, shape index: {}]
  %s1 = inlined_call_operand.hbm [shape: bf16[768,1024], index: 1, kind: input, shape index: {}]
  %s2 = inlined_call_operand.hbm [shape: f32[1,1024], index: 2, kind: input, shape index: {}]
  %s3 = inlined_call_operand.hbm [shape: f32[2,16], index: 3, kind: input, shape index: {}]
  %s4 = inlined_call_operand.hbm [shape: f32[16,64], index: 4, kind: input, shape index: {}]
  %s5 = inlined_call_operand.hbm [shape: f32[1,64], index: 5, kind: input, shape index: {}]
  %s6 = inlined_call_operand.vmem [shape: f32[2,1024], index: 6, kind: output, shape index: {0}]
  %s7 = inlined_call_operand.vmem [shape: f32[2,64], index: 7, kind: output, shape index: {1}]
  %8 = xla_tuple %s6, %s7
  %s9 = sld [smem:[#allocation0]]
  $region62: #{model_forward.3} parent=0
    _
  %s11 = ssub.s32 1, %s9
  %s12 = scalar_select 0, %s11, %s9
  $region1: #{model_forward.3} parent=0
    #allocation2 [shape = 'u8[1572864]{0}', space=vmem, size = 0x180000, scoped, tag = 'input window, operand 1, single buffered']
    #allocation3 [shape = 's32[1]{0}', space=sflag, size = 0x4, scoped, tag = 'scoped memory for model_forward.3']
    #allocation4 [shape = 'u8[4096]{0}', space=vmem, size = 0x1000, scoped, tag = 'input window, operand 2, single buffered']
    #allocation5 [shape = 's32[1]{0}', space=sflag, size = 0x4, scoped, tag = 'scoped memory for model_forward.3']
    #allocation6 [shape = 'u8[1024]{0}', space=vmem, size = 0x400, scoped, tag = 'input window, operand 3, single buffered']
    #allocation7 [shape = 'u8[8192]{0}', space=vmem, size = 0x2000, scoped, tag = 'input window, operand 4, single buffered']
    #allocation8 [shape = 's32[1]{0}', space=sflag, size = 0x4, scoped, tag = 'scoped memory for model_forward.3']
    #allocation9 [shape = 'u8[512]{0}', space=vmem, size = 0x400, scoped, tag = 'input window, operand 5, single buffered']
    %13 = vsyncpa [#allocation3], 0
    %14 = vsyncpa [#allocation5], 0
    %15 = vsyncpa [#allocation8], 0
    // Predicated region
    $region2: #{model_forward.3} parent=1 // pred_check
      _
    $region3: #{model_forward.3} parent=1 // pred_check_branch
      %17 = sbr.rel (0) target = $region5
    $region4: #{model_forward.3} parent=1 // pred_region
      _
    $region5: #{model_forward.3} parent=1 // pred_fallthru
      _
    // Predicated region
    $region6: #{model_forward.3} parent=1 // pred_check
      _
    $region7: #{model_forward.3} parent=1 // pred_check_branch
      %19 = sbr.rel (0) target = $region9
    $region8: #{model_forward.3} parent=1 // pred_region
      %s21 = ssub.s32 49152, 49152
      %22 = vsyncadd [#allocation3], %s21
      %s23 = sshll.u32 [#allocation2], 4
      %s24 = int_to_ptr.vmem [resolvable:$true] %s23
      %29 = dma.hbm_to_vmem [thread:$0]  %s1, 49152, %s24, [#allocation3], 512, 512, 32
    $region9: #{model_forward.3} parent=1 // pred_fallthru
      _
    // Predicated region
    $region10: #{model_forward.3} parent=1 // pred_check
      _
    $region11: #{model_forward.3} parent=1 // pred_check_branch
      %31 = sbr.rel (0) target = $region13
    $region12: #{model_forward.3} parent=1 // pred_region
      %s33 = ssub.s32 128, 128
      %34 = vsyncadd [#allocation5], %s33
      %s36 = sshll.u32 [#allocation4], 4
      %s37 = int_to_ptr.vmem [resolvable:$true] %s36
      %39 = dma.hbm_to_vmem [thread:$0]  %s2, 128, %s37, [#allocation5]
    $region13: #{model_forward.3} parent=1 // pred_fallthru
      _
    // Predicated region
    $region14: #{model_forward.3} parent=1 // pred_check
      _
    $region15: #{model_forward.3} parent=1 // pred_check_branch
      %41 = sbr.rel (0) target = $region17
    $region16: #{model_forward.3} parent=1 // pred_region
      %s43 = ssub.s32 32, 32
      %44 = vsyncadd [#allocation5], %s43
      %s46 = sshll.u32 [#allocation6], 4
      %s47 = int_to_ptr.vmem [resolvable:$true] %s46
      %49 = dma.hbm_to_vmem [thread:$0]  %s3, 32, %s47, [#allocation5]
    $region17: #{model_forward.3} parent=1 // pred_fallthru
      _
    // Predicated region
    $region18: #{model_forward.3} parent=1 // pred_check
      _
    $region19: #{model_forward.3} parent=1 // pred_check_branch
      %51 = sbr.rel (0) target = $region21
    $region20: #{model_forward.3} parent=1 // pred_region
      %s53 = ssub.s32 256, 256
      %54 = vsyncadd [#allocation8], %s53
      %s55 = sshll.u32 [#allocation7], 4
      %s56 = int_to_ptr.vmem [resolvable:$true] %s55
      %61 = dma.hbm_to_vmem [thread:$0]  %s4, 256, %s56, [#allocation8], 128, 128, 8
    $region21: #{model_forward.3} parent=1 // pred_fallthru
      _
    // Predicated region
    $region22: #{model_forward.3} parent=1 // pred_check
      _
    $region23: #{model_forward.3} parent=1 // pred_check_branch
      %63 = sbr.rel (0) target = $region25
    $region24: #{model_forward.3} parent=1 // pred_region
      %s65 = ssub.s32 16, 16
      %66 = vsyncadd [#allocation8], %s65
      %s68 = sshll.u32 [#allocation9], 4
      %s69 = int_to_ptr.vmem [resolvable:$true] %s68
      %71 = dma.hbm_to_vmem [thread:$0]  %s5, 16, %s69, [#allocation8]
    $region25: #{model_forward.3} parent=1 // pred_fallthru
      _
    // Predicated region
    $region26: #{model_forward.3} parent=1 // pred_check
      _
    $region27: #{model_forward.3} parent=1 // pred_check_branch
      %73 = sbr.rel (0) target = $region29
    $region28: #{model_forward.3} parent=1 // pred_region
      %74 = dma.done [#allocation3], 49152
    $region29: #{model_forward.3} parent=1 // pred_fallthru
      _
    // Predicated region
    $region30: #{model_forward.3} parent=1 // pred_check
      _
    $region31: #{model_forward.3} parent=1 // pred_check_branch
      %76 = sbr.rel (0) target = $region33
    $region32: #{model_forward.3} parent=1 // pred_region
      %77 = dma.done [#allocation5], 128
    $region33: #{model_forward.3} parent=1 // pred_fallthru
      _
    // Predicated region
    $region34: #{model_forward.3} parent=1 // pred_check
      _
    $region35: #{model_forward.3} parent=1 // pred_check_branch
      %79 = sbr.rel (0) target = $region37
    $region36: #{model_forward.3} parent=1 // pred_region
      %80 = dma.done [#allocation5], 32
    $region37: #{model_forward.3} parent=1 // pred_fallthru
      _
    // Predicated region
    $region38: #{model_forward.3} parent=1 // pred_check
      _
    $region39: #{model_forward.3} parent=1 // pred_check_branch
      %82 = sbr.rel (0) target = $region41
    $region40: #{model_forward.3} parent=1 // pred_region
      %83 = dma.done [#allocation8], 256
    $region41: #{model_forward.3} parent=1 // pred_fallthru
      _
    // Predicated region
    $region42: #{model_forward.3} parent=1 // pred_check
      _
    $region43: #{model_forward.3} parent=1 // pred_check_branch
      %85 = sbr.rel (0) target = $region45
    $region44: #{model_forward.3} parent=1 // pred_region
      %86 = dma.done [#allocation8], 16
    $region45: #{model_forward.3} parent=1 // pred_fallthru
      _
    %v87 = vld [vmem:[%s0] sm:$0xff]
    %v88 = vld [vmem:[%s0 + $0x8] sm:$0xf]
    %v91 = vcombine.high %v87, %v87
    %v93 = vunpack.c.l.s4 1983009808
    %v94 = vunpack.c.0.s8 %v93
    %v95 = vlaneseq
    %v96 = vshrl.u32 %v95, 7
    %v97 = vsub.s32 %v94, %v96
    %v98 = vrot.slane %v87, %v97
    %v100 = vunpack.c.l.s4 1983009808
    %v101 = vunpack.c.0.s8 %v100
    %v102 = vlaneseq
    %v103 = vshrl.u32 %v102, 7
    %v104 = vsub.s32 %v101, %v103
    %v105 = vrot.slane %v91, %v104
    %v106 = vcombine.high %v98, %v98
    %v107 = vcombine.high %v105, %v105
    %v109 = vunpack.c.l.s4 1983009808
    %v110 = vunpack.c.0.s8 %v109
    %v111 = vlaneseq
    %v112 = vshrl.u32 %v111, 7
    %v113 = vsub.s32 %v110, %v112
    %v114 = vrot.slane %v88, %v113
    %v115 = vcombine.high %v114, %v114
    %v122 = vpack.c.bf16 %v98, %v98
    %v123 = vpack.c.bf16 %v106, %v106
    %v124 = vpack.c.bf16 %v105, %v105
    %v125 = vpack.c.bf16 %v107, %v107
    %v126 = vpack.c.bf16 %v114, %v114
    %v127 = vpack.c.bf16 %v115, %v115
    %v128 = vld [vmem:[#allocation2] sm:$0xff]
    %v129 = vld [vmem:[#allocation2 + $0x8] sm:$0xff]
    %v130 = vld [vmem:[#allocation2 + $0x10] sm:$0xff]
    %v131 = vld [vmem:[#allocation2 + $0x18] sm:$0xff]
    %v132 = vld [vmem:[#allocation2 + $0x20] sm:$0xff]
    %v133 = vld [vmem:[#allocation2 + $0x28] sm:$0xff]
    %v134 = vld [vmem:[#allocation2 + $0x30] sm:$0xff]
    %v135 = vld [vmem:[#allocation2 + $0x38] sm:$0xff]
    %v136 = vld [vmem:[#allocation2 + $0x40] sm:$0xff]
    %v137 = vld [vmem:[#allocation2 + $0x48] sm:$0xff]
    %v138 = vld [vmem:[#allocation2 + $0x50] sm:$0xff]
    %v139 = vld [vmem:[#allocation2 + $0x58] sm:$0xff]
    %v140 = vld [vmem:[#allocation2 + $0x60] sm:$0xff]
    %v141 = vld [vmem:[#allocation2 + $0x68] sm:$0xff]
    %v142 = vld [vmem:[#allocation2 + $0x70] sm:$0xff]
    %v143 = vld [vmem:[#allocation2 + $0x78] sm:$0xff]
    %v144 = vld [vmem:[#allocation2 + $0x80] sm:$0xff]
    %v145 = vld [vmem:[#allocation2 + $0x88] sm:$0xff]
    %v146 = vld [vmem:[#allocation2 + $0x90] sm:$0xff]
    %v147 = vld [vmem:[#allocation2 + $0x98] sm:$0xff]
    %v148 = vld [vmem:[#allocation2 + $0xa0] sm:$0xff]
    %v149 = vld [vmem:[#allocation2 + $0xa8] sm:$0xff]
    %v150 = vld [vmem:[#allocation2 + $0xb0] sm:$0xff]
    %v151 = vld [vmem:[#allocation2 + $0xb8] sm:$0xff]
    %v152 = vld [vmem:[#allocation2 + $0xc0] sm:$0xff]
    %v153 = vld [vmem:[#allocation2 + $0xc8] sm:$0xff]
    %v154 = vld [vmem:[#allocation2 + $0xd0] sm:$0xff]
    %v155 = vld [vmem:[#allocation2 + $0xd8] sm:$0xff]
    %v156 = vld [vmem:[#allocation2 + $0xe0] sm:$0xff]
    %v157 = vld [vmem:[#allocation2 + $0xe8] sm:$0xff]
    %v158 = vld [vmem:[#allocation2 + $0xf0] sm:$0xff]
    %v159 = vld [vmem:[#allocation2 + $0xf8] sm:$0xff]
    %v160 = vld [vmem:[#allocation2 + $0x100] sm:$0xff]
    %v161 = vld [vmem:[#allocation2 + $0x108] sm:$0xff]
    %v162 = vld [vmem:[#allocation2 + $0x110] sm:$0xff]
    %v163 = vld [vmem:[#allocation2 + $0x118] sm:$0xff]
    %v164 = vld [vmem:[#allocation2 + $0x120] sm:$0xff]
    %v165 = vld [vmem:[#allocation2 + $0x128] sm:$0xff]
    %v166 = vld [vmem:[#allocation2 + $0x130] sm:$0xff]
    %v167 = vld [vmem:[#allocation2 + $0x138] sm:$0xff]
    %v168 = vld [vmem:[#allocation2 + $0x140] sm:$0xff]
    %v169 = vld [vmem:[#allocation2 + $0x148] sm:$0xff]
    %v170 = vld [vmem:[#allocation2 + $0x150] sm:$0xff]
    %v171 = vld [vmem:[#allocation2 + $0x158] sm:$0xff]
    %v172 = vld [vmem:[#allocation2 + $0x160] sm:$0xff]
    %v173 = vld [vmem:[#allocation2 + $0x168] sm:$0xff]
    %v174 = vld [vmem:[#allocation2 + $0x170] sm:$0xff]
    %v175 = vld [vmem:[#allocation2 + $0x178] sm:$0xff]
    %v176 = vld [vmem:[#allocation2 + $0x180] sm:$0xff]
    %v177 = vld [vmem:[#allocation2 + $0x188] sm:$0xff]
    %v178 = vld [vmem:[#allocation2 + $0x190] sm:$0xff]
    %v179 = vld [vmem:[#allocation2 + $0x198] sm:$0xff]
    %v180 = vld [vmem:[#allocation2 + $0x1a0] sm:$0xff]
    %v181 = vld [vmem:[#allocation2 + $0x1a8] sm:$0xff]
    %v182 = vld [vmem:[#allocation2 + $0x1b0] sm:$0xff]
    %v183 = vld [vmem:[#allocation2 + $0x1b8] sm:$0xff]
    %v184 = vld [vmem:[#allocation2 + $0x1c0] sm:$0xff]
    %v185 = vld [vmem:[#allocation2 + $0x1c8] sm:$0xff]
    %v186 = vld [vmem:[#allocation2 + $0x1d0] sm:$0xff]
    %v187 = vld [vmem:[#allocation2 + $0x1d8] sm:$0xff]
    %v188 = vld [vmem:[#allocation2 + $0x1e0] sm:$0xff]
    %v189 = vld [vmem:[#allocation2 + $0x1e8] sm:$0xff]
    %v190 = vld [vmem:[#allocation2 + $0x1f0] sm:$0xff]
    %v191 = vld [vmem:[#allocation2 + $0x1f8] sm:$0xff]
    %v192 = vld [vmem:[#allocation2 + $0x200] sm:$0xff]
    %v193 = vld [vmem:[#allocation2 + $0x208] sm:$0xff]
    %v194 = vld [vmem:[#allocation2 + $0x210] sm:$0xff]
    %v195 = vld [vmem:[#allocation2 + $0x218] sm:$0xff]
    %v196 = vld [vmem:[#allocation2 + $0x220] sm:$0xff]
    %v197 = vld [vmem:[#allocation2 + $0x228] sm:$0xff]
    %v198 = vld [vmem:[#allocation2 + $0x230] sm:$0xff]
    %v199 = vld [vmem:[#allocation2 + $0x238] sm:$0xff]
    %v200 = vld [vmem:[#allocation2 + $0x240] sm:$0xff]
    %v201 = vld [vmem:[#allocation2 + $0x248] sm:$0xff]
    %v202 = vld [vmem:[#allocation2 + $0x250] sm:$0xff]
    %v203 = vld [vmem:[#allocation2 + $0x258] sm:$0xff]
    %v204 = vld [vmem:[#allocation2 + $0x260] sm:$0xff]
    %v205 = vld [vmem:[#allocation2 + $0x268] sm:$0xff]
    %v206 = vld [vmem:[#allocation2 + $0x270] sm:$0xff]
    %v207 = vld [vmem:[#allocation2 + $0x278] sm:$0xff]
    %v208 = vld [vmem:[#allocation2 + $0x280] sm:$0xff]
    %v209 = vld [vmem:[#allocation2 + $0x288] sm:$0xff]
    %v210 = vld [vmem:[#allocation2 + $0x290] sm:$0xff]
    %v211 = vld [vmem:[#allocation2 + $0x298] sm:$0xff]
    %v212 = vld [vmem:[#allocation2 + $0x2a0] sm:$0xff]
    %v213 = vld [vmem:[#allocation2 + $0x2a8] sm:$0xff]
    %v214 = vld [vmem:[#allocation2 + $0x2b0] sm:$0xff]
    %v215 = vld [vmem:[#allocation2 + $0x2b8] sm:$0xff]
    %v216 = vld [vmem:[#allocation2 + $0x2c0] sm:$0xff]
    %v217 = vld [vmem:[#allocation2 + $0x2c8] sm:$0xff]
    %v218 = vld [vmem:[#allocation2 + $0x2d0] sm:$0xff]
    %v219 = vld [vmem:[#allocation2 + $0x2d8] sm:$0xff]
    %v220 = vld [vmem:[#allocation2 + $0x2e0] sm:$0xff]
    %v221 = vld [vmem:[#allocation2 + $0x2e8] sm:$0xff]
    %v222 = vld [vmem:[#allocation2 + $0x2f0] sm:$0xff]
    %v223 = vld [vmem:[#allocation2 + $0x2f8] sm:$0xff]
    %v224 = vld [vmem:[#allocation2 + $0x300] sm:$0xff]
    %v225 = vld [vmem:[#allocation2 + $0x308] sm:$0xff]
    %v226 = vld [vmem:[#allocation2 + $0x310] sm:$0xff]
    %v227 = vld [vmem:[#allocation2 + $0x318] sm:$0xff]
    %v228 = vld [vmem:[#allocation2 + $0x320] sm:$0xff]
    %v229 = vld [vmem:[#allocation2 + $0x328] sm:$0xff]
    %v230 = vld [vmem:[#allocation2 + $0x330] sm:$0xff]
    %v231 = vld [vmem:[#allocation2 + $0x338] sm:$0xff]
    %v232 = vld [vmem:[#allocation2 + $0x340] sm:$0xff]
    %v233 = vld [vmem:[#allocation2 + $0x348] sm:$0xff]
    %v234 = vld [vmem:[#allocation2 + $0x350] sm:$0xff]
    %v235 = vld [vmem:[#allocation2 + $0x358] sm:$0xff]
    %v236 = vld [vmem:[#allocation2 + $0x360] sm:$0xff]
    %v237 = vld [vmem:[#allocation2 + $0x368] sm:$0xff]
    %v238 = vld [vmem:[#allocation2 + $0x370] sm:$0xff]
    %v239 = vld [vmem:[#allocation2 + $0x378] sm:$0xff]
    %v240 = vld [vmem:[#allocation2 + $0x380] sm:$0xff]
    %v241 = vld [vmem:[#allocation2 + $0x388] sm:$0xff]
    %v242 = vld [vmem:[#allocation2 + $0x390] sm:$0xff]
    %v243 = vld [vmem:[#allocation2 + $0x398] sm:$0xff]
    %v244 = vld [vmem:[#allocation2 + $0x3a0] sm:$0xff]
    %v245 = vld [vmem:[#allocation2 + $0x3a8] sm:$0xff]
    %v246 = vld [vmem:[#allocation2 + $0x3b0] sm:$0xff]
    %v247 = vld [vmem:[#allocation2 + $0x3b8] sm:$0xff]
    %v248 = vld [vmem:[#allocation2 + $0x3c0] sm:$0xff]
    %v249 = vld [vmem:[#allocation2 + $0x3c8] sm:$0xff]
    %v250 = vld [vmem:[#allocation2 + $0x3d0] sm:$0xff]
    %v251 = vld [vmem:[#allocation2 + $0x3d8] sm:$0xff]
    %v252 = vld [vmem:[#allocation2 + $0x3e0] sm:$0xff]
    %v253 = vld [vmem:[#allocation2 + $0x3e8] sm:$0xff]
    %v254 = vld [vmem:[#allocation2 + $0x3f0] sm:$0xff]
    %v255 = vld [vmem:[#allocation2 + $0x3f8] sm:$0xff]
    %v256 = vld [vmem:[#allocation2 + $0x400] sm:$0xff]
    %v257 = vld [vmem:[#allocation2 + $0x408] sm:$0xff]
    %v258 = vld [vmem:[#allocation2 + $0x410] sm:$0xff]
    %v259 = vld [vmem:[#allocation2 + $0x418] sm:$0xff]
    %v260 = vld [vmem:[#allocation2 + $0x420] sm:$0xff]
    %v261 = vld [vmem:[#allocation2 + $0x428] sm:$0xff]
    %v262 = vld [vmem:[#allocation2 + $0x430] sm:$0xff]
    %v263 = vld [vmem:[#allocation2 + $0x438] sm:$0xff]
    %v264 = vld [vmem:[#allocation2 + $0x440] sm:$0xff]
    %v265 = vld [vmem:[#allocation2 + $0x448] sm:$0xff]
    %v266 = vld [vmem:[#allocation2 + $0x450] sm:$0xff]
    %v267 = vld [vmem:[#allocation2 + $0x458] sm:$0xff]
    %v268 = vld [vmem:[#allocation2 + $0x460] sm:$0xff]
    %v269 = vld [vmem:[#allocation2 + $0x468] sm:$0xff]
    %v270 = vld [vmem:[#allocation2 + $0x470] sm:$0xff]
    %v271 = vld [vmem:[#allocation2 + $0x478] sm:$0xff]
    %v272 = vld [vmem:[#allocation2 + $0x480] sm:$0xff]
    %v273 = vld [vmem:[#allocation2 + $0x488] sm:$0xff]
    %v274 = vld [vmem:[#allocation2 + $0x490] sm:$0xff]
    %v275 = vld [vmem:[#allocation2 + $0x498] sm:$0xff]
    %v276 = vld [vmem:[#allocation2 + $0x4a0] sm:$0xff]
    %v277 = vld [vmem:[#allocation2 + $0x4a8] sm:$0xff]
    %v278 = vld [vmem:[#allocation2 + $0x4b0] sm:$0xff]
    %v279 = vld [vmem:[#allocation2 + $0x4b8] sm:$0xff]
    %v280 = vld [vmem:[#allocation2 + $0x4c0] sm:$0xff]
    %v281 = vld [vmem:[#allocation2 + $0x4c8] sm:$0xff]
    %v282 = vld [vmem:[#allocation2 + $0x4d0] sm:$0xff]
    %v283 = vld [vmem:[#allocation2 + $0x4d8] sm:$0xff]
    %v284 = vld [vmem:[#allocation2 + $0x4e0] sm:$0xff]
    %v285 = vld [vmem:[#allocation2 + $0x4e8] sm:$0xff]
    %v286 = vld [vmem:[#allocation2 + $0x4f0] sm:$0xff]
    %v287 = vld [vmem:[#allocation2 + $0x4f8] sm:$0xff]
    %v288 = vld [vmem:[#allocation2 + $0x500] sm:$0xff]
    %v289 = vld [vmem:[#allocation2 + $0x508] sm:$0xff]
    %v290 = vld [vmem:[#allocation2 + $0x510] sm:$0xff]
    %v291 = vld [vmem:[#allocation2 + $0x518] sm:$0xff]
    %v292 = vld [vmem:[#allocation2 + $0x520] sm:$0xff]
    %v293 = vld [vmem:[#allocation2 + $0x528] sm:$0xff]
    %v294 = vld [vmem:[#allocation2 + $0x530] sm:$0xff]
    %v295 = vld [vmem:[#allocation2 + $0x538] sm:$0xff]
    %v296 = vld [vmem:[#allocation2 + $0x540] sm:$0xff]
    %v297 = vld [vmem:[#allocation2 + $0x548] sm:$0xff]
    %v298 = vld [vmem:[#allocation2 + $0x550] sm:$0xff]
    %v299 = vld [vmem:[#allocation2 + $0x558] sm:$0xff]
    %v300 = vld [vmem:[#allocation2 + $0x560] sm:$0xff]
    %v301 = vld [vmem:[#allocation2 + $0x568] sm:$0xff]
    %v302 = vld [vmem:[#allocation2 + $0x570] sm:$0xff]
    %v303 = vld [vmem:[#allocation2 + $0x578] sm:$0xff]
    %v304 = vld [vmem:[#allocation2 + $0x580] sm:$0xff]
    %v305 = vld [vmem:[#allocation2 + $0x588] sm:$0xff]
    %v306 = vld [vmem:[#allocation2 + $0x590] sm:$0xff]
    %v307 = vld [vmem:[#allocation2 + $0x598] sm:$0xff]
    %v308 = vld [vmem:[#allocation2 + $0x5a0] sm:$0xff]
    %v309 = vld [vmem:[#allocation2 + $0x5a8] sm:$0xff]
    %v310 = vld [vmem:[#allocation2 + $0x5b0] sm:$0xff]
    %v311 = vld [vmem:[#allocation2 + $0x5b8] sm:$0xff]
    %v312 = vld [vmem:[#allocation2 + $0x5c0] sm:$0xff]
    %v313 = vld [vmem:[#allocation2 + $0x5c8] sm:$0xff]
    %v314 = vld [vmem:[#allocation2 + $0x5d0] sm:$0xff]
    %v315 = vld [vmem:[#allocation2 + $0x5d8] sm:$0xff]
    %v316 = vld [vmem:[#allocation2 + $0x5e0] sm:$0xff]
    %v317 = vld [vmem:[#allocation2 + $0x5e8] sm:$0xff]
    %v318 = vld [vmem:[#allocation2 + $0x5f0] sm:$0xff]
    %v319 = vld [vmem:[#allocation2 + $0x5f8] sm:$0xff]
    %v320 = vld [vmem:[#allocation2 + $0x600] sm:$0xff]
    %v321 = vld [vmem:[#allocation2 + $0x608] sm:$0xff]
    %v322 = vld [vmem:[#allocation2 + $0x610] sm:$0xff]
    %v323 = vld [vmem:[#allocation2 + $0x618] sm:$0xff]
    %v324 = vld [vmem:[#allocation2 + $0x620] sm:$0xff]
    %v325 = vld [vmem:[#allocation2 + $0x628] sm:$0xff]
    %v326 = vld [vmem:[#allocation2 + $0x630] sm:$0xff]
    %v327 = vld [vmem:[#allocation2 + $0x638] sm:$0xff]
    %v328 = vld [vmem:[#allocation2 + $0x640] sm:$0xff]
    %v329 = vld [vmem:[#allocation2 + $0x648] sm:$0xff]
    %v330 = vld [vmem:[#allocation2 + $0x650] sm:$0xff]
    %v331 = vld [vmem:[#allocation2 + $0x658] sm:$0xff]
    %v332 = vld [vmem:[#allocation2 + $0x660] sm:$0xff]
    %v333 = vld [vmem:[#allocation2 + $0x668] sm:$0xff]
    %v334 = vld [vmem:[#allocation2 + $0x670] sm:$0xff]
    %v335 = vld [vmem:[#allocation2 + $0x678] sm:$0xff]
    %v336 = vld [vmem:[#allocation2 + $0x680] sm:$0xff]
    %v337 = vld [vmem:[#allocation2 + $0x688] sm:$0xff]
    %v338 = vld [vmem:[#allocation2 + $0x690] sm:$0xff]
    %v339 = vld [vmem:[#allocation2 + $0x698] sm:$0xff]
    %v340 = vld [vmem:[#allocation2 + $0x6a0] sm:$0xff]
    %v341 = vld [vmem:[#allocation2 + $0x6a8] sm:$0xff]
    %v342 = vld [vmem:[#allocation2 + $0x6b0] sm:$0xff]
    %v343 = vld [vmem:[#allocation2 + $0x6b8] sm:$0xff]
    %v344 = vld [vmem:[#allocation2 + $0x6c0] sm:$0xff]
    %v345 = vld [vmem:[#allocation2 + $0x6c8] sm:$0xff]
    %v346 = vld [vmem:[#allocation2 + $0x6d0] sm:$0xff]
    %v347 = vld [vmem:[#allocation2 + $0x6d8] sm:$0xff]
    %v348 = vld [vmem:[#allocation2 + $0x6e0] sm:$0xff]
    %v349 = vld [vmem:[#allocation2 + $0x6e8] sm:$0xff]
    %v350 = vld [vmem:[#allocation2 + $0x6f0] sm:$0xff]
    %v351 = vld [vmem:[#allocation2 + $0x6f8] sm:$0xff]
    %v352 = vld [vmem:[#allocation2 + $0x700] sm:$0xff]
    %v353 = vld [vmem:[#allocation2 + $0x708] sm:$0xff]
    %v354 = vld [vmem:[#allocation2 + $0x710] sm:$0xff]
    %v355 = vld [vmem:[#allocation2 + $0x718] sm:$0xff]
    %v356 = vld [vmem:[#allocation2 + $0x720] sm:$0xff]
    %v357 = vld [vmem:[#allocation2 + $0x728] sm:$0xff]
    %v358 = vld [vmem:[#allocation2 + $0x730] sm:$0xff]
    %v359 = vld [vmem:[#allocation2 + $0x738] sm:$0xff]
    %v360 = vld [vmem:[#allocation2 + $0x740] sm:$0xff]
    %v361 = vld [vmem:[#allocation2 + $0x748] sm:$0xff]
    %v362 = vld [vmem:[#allocation2 + $0x750] sm:$0xff]
    %v363 = vld [vmem:[#allocation2 + $0x758] sm:$0xff]
    %v364 = vld [vmem:[#allocation2 + $0x760] sm:$0xff]
    %v365 = vld [vmem:[#allocation2 + $0x768] sm:$0xff]
    %v366 = vld [vmem:[#allocation2 + $0x770] sm:$0xff]
    %v367 = vld [vmem:[#allocation2 + $0x778] sm:$0xff]
    %v368 = vld [vmem:[#allocation2 + $0x780] sm:$0xff]
    %v369 = vld [vmem:[#allocation2 + $0x788] sm:$0xff]
    %v370 = vld [vmem:[#allocation2 + $0x790] sm:$0xff]
    %v371 = vld [vmem:[#allocation2 + $0x798] sm:$0xff]
    %v372 = vld [vmem:[#allocation2 + $0x7a0] sm:$0xff]
    %v373 = vld [vmem:[#allocation2 + $0x7a8] sm:$0xff]
    %v374 = vld [vmem:[#allocation2 + $0x7b0] sm:$0xff]
    %v375 = vld [vmem:[#allocation2 + $0x7b8] sm:$0xff]
    %v376 = vld [vmem:[#allocation2 + $0x7c0] sm:$0xff]
    %v377 = vld [vmem:[#allocation2 + $0x7c8] sm:$0xff]
    %v378 = vld [vmem:[#allocation2 + $0x7d0] sm:$0xff]
    %v379 = vld [vmem:[#allocation2 + $0x7d8] sm:$0xff]
    %v380 = vld [vmem:[#allocation2 + $0x7e0] sm:$0xff]
    %v381 = vld [vmem:[#allocation2 + $0x7e8] sm:$0xff]
    %v382 = vld [vmem:[#allocation2 + $0x7f0] sm:$0xff]
    %v383 = vld [vmem:[#allocation2 + $0x7f8] sm:$0xff]
    %v384 = vld [vmem:[#allocation2 + $0x800] sm:$0xff]
    %v385 = vld [vmem:[#allocation2 + $0x808] sm:$0xff]
    %v386 = vld [vmem:[#allocation2 + $0x810] sm:$0xff]
    %v387 = vld [vmem:[#allocation2 + $0x818] sm:$0xff]
    %v388 = vld [vmem:[#allocation2 + $0x820] sm:$0xff]
    %v389 = vld [vmem:[#allocation2 + $0x828] sm:$0xff]
    %v390 = vld [vmem:[#allocation2 + $0x830] sm:$0xff]
    %v391 = vld [vmem:[#allocation2 + $0x838] sm:$0xff]
    %v392 = vld [vmem:[#allocation2 + $0x840] sm:$0xff]
    %v393 = vld [vmem:[#allocation2 + $0x848] sm:$0xff]
    %v394 = vld [vmem:[#allocation2 + $0x850] sm:$0xff]
    %v395 = vld [vmem:[#allocation2 + $0x858] sm:$0xff]
    %v396 = vld [vmem:[#allocation2 + $0x860] sm:$0xff]
    %v397 = vld [vmem:[#allocation2 + $0x868] sm:$0xff]
    %v398 = vld [vmem:[#allocation2 + $0x870] sm:$0xff]
    %v399 = vld [vmem:[#allocation2 + $0x878] sm:$0xff]
    %v400 = vld [vmem:[#allocation2 + $0x880] sm:$0xff]
    %v401 = vld [vmem:[#allocation2 + $0x888] sm:$0xff]
    %v402 = vld [vmem:[#allocation2 + $0x890] sm:$0xff]
    %v403 = vld [vmem:[#allocation2 + $0x898] sm:$0xff]
    %v404 = vld [vmem:[#allocation2 + $0x8a0] sm:$0xff]
    %v405 = vld [vmem:[#allocation2 + $0x8a8] sm:$0xff]
    %v406 = vld [vmem:[#allocation2 + $0x8b0] sm:$0xff]
    %v407 = vld [vmem:[#allocation2 + $0x8b8] sm:$0xff]
    %v408 = vld [vmem:[#allocation2 + $0x8c0] sm:$0xff]
    %v409 = vld [vmem:[#allocation2 + $0x8c8] sm:$0xff]
    %v410 = vld [vmem:[#allocation2 + $0x8d0] sm:$0xff]
    %v411 = vld [vmem:[#allocation2 + $0x8d8] sm:$0xff]
    %v412 = vld [vmem:[#allocation2 + $0x8e0] sm:$0xff]
    %v413 = vld [vmem:[#allocation2 + $0x8e8] sm:$0xff]
    %v414 = vld [vmem:[#allocation2 + $0x8f0] sm:$0xff]
    %v415 = vld [vmem:[#allocation2 + $0x8f8] sm:$0xff]
    %v416 = vld [vmem:[#allocation2 + $0x900] sm:$0xff]
    %v417 = vld [vmem:[#allocation2 + $0x908] sm:$0xff]
    %v418 = vld [vmem:[#allocation2 + $0x910] sm:$0xff]
    %v419 = vld [vmem:[#allocation2 + $0x918] sm:$0xff]
    %v420 = vld [vmem:[#allocation2 + $0x920] sm:$0xff]
    %v421 = vld [vmem:[#allocation2 + $0x928] sm:$0xff]
    %v422 = vld [vmem:[#allocation2 + $0x930] sm:$0xff]
    %v423 = vld [vmem:[#allocation2 + $0x938] sm:$0xff]
    %v424 = vld [vmem:[#allocation2 + $0x940] sm:$0xff]
    %v425 = vld [vmem:[#allocation2 + $0x948] sm:$0xff]
    %v426 = vld [vmem:[#allocation2 + $0x950] sm:$0xff]
    %v427 = vld [vmem:[#allocation2 + $0x958] sm:$0xff]
    %v428 = vld [vmem:[#allocation2 + $0x960] sm:$0xff]
    %v429 = vld [vmem:[#allocation2 + $0x968] sm:$0xff]
    %v430 = vld [vmem:[#allocation2 + $0x970] sm:$0xff]
    %v431 = vld [vmem:[#allocation2 + $0x978] sm:$0xff]
    %v432 = vld [vmem:[#allocation2 + $0x980] sm:$0xff]
    %v433 = vld [vmem:[#allocation2 + $0x988] sm:$0xff]
    %v434 = vld [vmem:[#allocation2 + $0x990] sm:$0xff]
    %v435 = vld [vmem:[#allocation2 + $0x998] sm:$0xff]
    %v436 = vld [vmem:[#allocation2 + $0x9a0] sm:$0xff]
    %v437 = vld [vmem:[#allocation2 + $0x9a8] sm:$0xff]
    %v438 = vld [vmem:[#allocation2 + $0x9b0] sm:$0xff]
    %v439 = vld [vmem:[#allocation2 + $0x9b8] sm:$0xff]
    %v440 = vld [vmem:[#allocation2 + $0x9c0] sm:$0xff]
    %v441 = vld [vmem:[#allocation2 + $0x9c8] sm:$0xff]
    %v442 = vld [vmem:[#allocation2 + $0x9d0] sm:$0xff]
    %v443 = vld [vmem:[#allocation2 + $0x9d8] sm:$0xff]
    %v444 = vld [vmem:[#allocation2 + $0x9e0] sm:$0xff]
    %v445 = vld [vmem:[#allocation2 + $0x9e8] sm:$0xff]
    %v446 = vld [vmem:[#allocation2 + $0x9f0] sm:$0xff]
    %v447 = vld [vmem:[#allocation2 + $0x9f8] sm:$0xff]
    %v448 = vld [vmem:[#allocation2 + $0xa00] sm:$0xff]
    %v449 = vld [vmem:[#allocation2 + $0xa08] sm:$0xff]
    %v450 = vld [vmem:[#allocation2 + $0xa10] sm:$0xff]
    %v451 = vld [vmem:[#allocation2 + $0xa18] sm:$0xff]
    %v452 = vld [vmem:[#allocation2 + $0xa20] sm:$0xff]
    %v453 = vld [vmem:[#allocation2 + $0xa28] sm:$0xff]
    %v454 = vld [vmem:[#allocation2 + $0xa30] sm:$0xff]
    %v455 = vld [vmem:[#allocation2 + $0xa38] sm:$0xff]
    %v456 = vld [vmem:[#allocation2 + $0xa40] sm:$0xff]
    %v457 = vld [vmem:[#allocation2 + $0xa48] sm:$0xff]
    %v458 = vld [vmem:[#allocation2 + $0xa50] sm:$0xff]
    %v459 = vld [vmem:[#allocation2 + $0xa58] sm:$0xff]
    %v460 = vld [vmem:[#allocation2 + $0xa60] sm:$0xff]
    %v461 = vld [vmem:[#allocation2 + $0xa68] sm:$0xff]
    %v462 = vld [vmem:[#allocation2 + $0xa70] sm:$0xff]
    %v463 = vld [vmem:[#allocation2 + $0xa78] sm:$0xff]
    %v464 = vld [vmem:[#allocation2 + $0xa80] sm:$0xff]
    %v465 = vld [vmem:[#allocation2 + $0xa88] sm:$0xff]
    %v466 = vld [vmem:[#allocation2 + $0xa90] sm:$0xff]
    %v467 = vld [vmem:[#allocation2 + $0xa98] sm:$0xff]
    %v468 = vld [vmem:[#allocation2 + $0xaa0] sm:$0xff]
    %v469 = vld [vmem:[#allocation2 + $0xaa8] sm:$0xff]
    %v470 = vld [vmem:[#allocation2 + $0xab0] sm:$0xff]
    %v471 = vld [vmem:[#allocation2 + $0xab8] sm:$0xff]
    %v472 = vld [vmem:[#allocation2 + $0xac0] sm:$0xff]
    %v473 = vld [vmem:[#allocation2 + $0xac8] sm:$0xff]
    %v474 = vld [vmem:[#allocation2 + $0xad0] sm:$0xff]
    %v475 = vld [vmem:[#allocation2 + $0xad8] sm:$0xff]
    %v476 = vld [vmem:[#allocation2 + $0xae0] sm:$0xff]
    %v477 = vld [vmem:[#allocation2 + $0xae8] sm:$0xff]
    %v478 = vld [vmem:[#allocation2 + $0xaf0] sm:$0xff]
    %v479 = vld [vmem:[#allocation2 + $0xaf8] sm:$0xff]
    %v480 = vld [vmem:[#allocation2 + $0xb00] sm:$0xff]
    %v481 = vld [vmem:[#allocation2 + $0xb08] sm:$0xff]
    %v482 = vld [vmem:[#allocation2 + $0xb10] sm:$0xff]
    %v483 = vld [vmem:[#allocation2 + $0xb18] sm:$0xff]
    %v484 = vld [vmem:[#allocation2 + $0xb20] sm:$0xff]
    %v485 = vld [vmem:[#allocation2 + $0xb28] sm:$0xff]
    %v486 = vld [vmem:[#allocation2 + $0xb30] sm:$0xff]
    %v487 = vld [vmem:[#allocation2 + $0xb38] sm:$0xff]
    %v488 = vld [vmem:[#allocation2 + $0xb40] sm:$0xff]
    %v489 = vld [vmem:[#allocation2 + $0xb48] sm:$0xff]
    %v490 = vld [vmem:[#allocation2 + $0xb50] sm:$0xff]
    %v491 = vld [vmem:[#allocation2 + $0xb58] sm:$0xff]
    %v492 = vld [vmem:[#allocation2 + $0xb60] sm:$0xff]
    %v493 = vld [vmem:[#allocation2 + $0xb68] sm:$0xff]
    %v494 = vld [vmem:[#allocation2 + $0xb70] sm:$0xff]
    %v495 = vld [vmem:[#allocation2 + $0xb78] sm:$0xff]
    %v496 = vld [vmem:[#allocation2 + $0xb80] sm:$0xff]
    %v497 = vld [vmem:[#allocation2 + $0xb88] sm:$0xff]
    %v498 = vld [vmem:[#allocation2 + $0xb90] sm:$0xff]
    %v499 = vld [vmem:[#allocation2 + $0xb98] sm:$0xff]
    %v500 = vld [vmem:[#allocation2 + $0xba0] sm:$0xff]
    %v501 = vld [vmem:[#allocation2 + $0xba8] sm:$0xff]
    %v502 = vld [vmem:[#allocation2 + $0xbb0] sm:$0xff]
    %v503 = vld [vmem:[#allocation2 + $0xbb8] sm:$0xff]
    %v504 = vld [vmem:[#allocation2 + $0xbc0] sm:$0xff]
    %v505 = vld [vmem:[#allocation2 + $0xbc8] sm:$0xff]
    %v506 = vld [vmem:[#allocation2 + $0xbd0] sm:$0xff]
    %v507 = vld [vmem:[#allocation2 + $0xbd8] sm:$0xff]
    %v508 = vld [vmem:[#allocation2 + $0xbe0] sm:$0xff]
    %v509 = vld [vmem:[#allocation2 + $0xbe8] sm:$0xff]
    %v510 = vld [vmem:[#allocation2 + $0xbf0] sm:$0xff]
    %v511 = vld [vmem:[#allocation2 + $0xbf8] sm:$0xff]
    %v512 = vld [vmem:[#allocation4] sm:$0xff]
    %v514 = vlaneseq
    %v515 = vshrl.u32 %v514, 7
    %v516 = vsub.s32 0, %v515
    %v517 = vrot.slane %v512, %v516
    %v518 = vlaneseq
    %v519 = vshrl.u32 %v518, 7
    %v520 = vsub.s32 1, %v519
    %v521 = vrot.slane %v512, %v520
    %v522 = vlaneseq
    %v523 = vshrl.u32 %v522, 7
    %v524 = vsub.s32 2, %v523
    %v525 = vrot.slane %v512, %v524
    %v526 = vlaneseq
    %v527 = vshrl.u32 %v526, 7
    %v528 = vsub.s32 3, %v527
    %v529 = vrot.slane %v512, %v528
    %v530 = vlaneseq
    %v531 = vshrl.u32 %v530, 7
    %v532 = vsub.s32 4, %v531
    %v533 = vrot.slane %v512, %v532
    %v534 = vlaneseq
    %v535 = vshrl.u32 %v534, 7
    %v536 = vsub.s32 5, %v535
    %v537 = vrot.slane %v512, %v536
    %v538 = vlaneseq
    %v539 = vshrl.u32 %v538, 7
    %v540 = vsub.s32 6, %v539
    %v541 = vrot.slane %v512, %v540
    %v542 = vlaneseq
    %v543 = vshrl.u32 %v542, 7
    %v544 = vsub.s32 7, %v543
    %v545 = vrot.slane %v512, %v544
    %v938 = vunpack.c.l.b16 %v128
    %v939 = vunpack.c.h.b16 %v128
    %v940 = vunpack.c.l.b16 %v129
    %v941 = vunpack.c.h.b16 %v129
    %v942 = vunpack.c.l.b16 %v130
    %v943 = vunpack.c.h.b16 %v130
    %v944 = vunpack.c.l.b16 %v131
    %v945 = vunpack.c.h.b16 %v131
    %v946 = vunpack.c.l.b16 %v132
    %v947 = vunpack.c.h.b16 %v132
    %v948 = vunpack.c.l.b16 %v133
    %v949 = vunpack.c.h.b16 %v133
    %v950 = vunpack.c.l.b16 %v134
    %v951 = vunpack.c.h.b16 %v134
    %v952 = vunpack.c.l.b16 %v135
    %v953 = vunpack.c.h.b16 %v135
    %v954 = vunpack.c.l.b16 %v136
    %v955 = vunpack.c.h.b16 %v136
    %v956 = vunpack.c.l.b16 %v137
    %v957 = vunpack.c.h.b16 %v137
    %v958 = vunpack.c.l.b16 %v138
    %v959 = vunpack.c.h.b16 %v138
    %v960 = vunpack.c.l.b16 %v139
    %v961 = vunpack.c.h.b16 %v139
    %v962 = vunpack.c.l.b16 %v140
    %v963 = vunpack.c.h.b16 %v140
    %v964 = vunpack.c.l.b16 %v141
    %v965 = vunpack.c.h.b16 %v141
    %v966 = vunpack.c.l.b16 %v142
    %v967 = vunpack.c.h.b16 %v142
    %v968 = vunpack.c.l.b16 %v143
    %v969 = vunpack.c.h.b16 %v143
    %v970 = vunpack.c.l.b16 %v144
    %v971 = vunpack.c.h.b16 %v144
    %v972 = vunpack.c.l.b16 %v145
    %v973 = vunpack.c.h.b16 %v145
    %v974 = vunpack.c.l.b16 %v146
    %v975 = vunpack.c.h.b16 %v146
    %v976 = vunpack.c.l.b16 %v147
    %v977 = vunpack.c.h.b16 %v147
    %v978 = vunpack.c.l.b16 %v148
    %v979 = vunpack.c.h.b16 %v148
    %v980 = vunpack.c.l.b16 %v149
    %v981 = vunpack.c.h.b16 %v149
    %v982 = vunpack.c.l.b16 %v150
    %v983 = vunpack.c.h.b16 %v150
    %v984 = vunpack.c.l.b16 %v151
    %v985 = vunpack.c.h.b16 %v151
    %v986 = vunpack.c.l.b16 %v152
    %v987 = vunpack.c.h.b16 %v152
    %v988 = vunpack.c.l.b16 %v153
    %v989 = vunpack.c.h.b16 %v153
    %v990 = vunpack.c.l.b16 %v154
    %v991 = vunpack.c.h.b16 %v154
    %v992 = vunpack.c.l.b16 %v155
    %v993 = vunpack.c.h.b16 %v155
    %v994 = vunpack.c.l.b16 %v156
    %v995 = vunpack.c.h.b16 %v156
    %v996 = vunpack.c.l.b16 %v157
    %v997 = vunpack.c.h.b16 %v157
    %v998 = vunpack.c.l.b16 %v158
    %v999 = vunpack.c.h.b16 %v158
    %v1000 = vunpack.c.l.b16 %v159
    %v1001 = vunpack.c.h.b16 %v159
    %v1002 = vunpack.c.l.b16 %v160
    %v1003 = vunpack.c.h.b16 %v160
    %v1004 = vunpack.c.l.b16 %v161
    %v1005 = vunpack.c.h.b16 %v161
    %v1006 = vunpack.c.l.b16 %v162
    %v1007 = vunpack.c.h.b16 %v162
    %v1008 = vunpack.c.l.b16 %v163
    %v1009 = vunpack.c.h.b16 %v163
    %v1010 = vunpack.c.l.b16 %v164
    %v1011 = vunpack.c.h.b16 %v164
    %v1012 = vunpack.c.l.b16 %v165
    %v1013 = vunpack.c.h.b16 %v165
    %v1014 = vunpack.c.l.b16 %v166
    %v1015 = vunpack.c.h.b16 %v166
    %v1016 = vunpack.c.l.b16 %v167
    %v1017 = vunpack.c.h.b16 %v167
    %v1018 = vunpack.c.l.b16 %v168
    %v1019 = vunpack.c.h.b16 %v168
    %v1020 = vunpack.c.l.b16 %v169
    %v1021 = vunpack.c.h.b16 %v169
    %v1022 = vunpack.c.l.b16 %v170
    %v1023 = vunpack.c.h.b16 %v170
    %v1024 = vunpack.c.l.b16 %v171
    %v1025 = vunpack.c.h.b16 %v171
    %v1026 = vunpack.c.l.b16 %v172
    %v1027 = vunpack.c.h.b16 %v172
    %v1028 = vunpack.c.l.b16 %v173
    %v1029 = vunpack.c.h.b16 %v173
    %v1030 = vunpack.c.l.b16 %v174
    %v1031 = vunpack.c.h.b16 %v174
    %v1032 = vunpack.c.l.b16 %v175
    %v1033 = vunpack.c.h.b16 %v175
    %v1034 = vunpack.c.l.b16 %v176
    %v1035 = vunpack.c.h.b16 %v176
    %v1036 = vunpack.c.l.b16 %v177
    %v1037 = vunpack.c.h.b16 %v177
    %v1038 = vunpack.c.l.b16 %v178
    %v1039 = vunpack.c.h.b16 %v178
    %v1040 = vunpack.c.l.b16 %v179
    %v1041 = vunpack.c.h.b16 %v179
    %v1042 = vunpack.c.l.b16 %v180
    %v1043 = vunpack.c.h.b16 %v180
    %v1044 = vunpack.c.l.b16 %v181
    %v1045 = vunpack.c.h.b16 %v181
    %v1046 = vunpack.c.l.b16 %v182
    %v1047 = vunpack.c.h.b16 %v182
    %v1048 = vunpack.c.l.b16 %v183
    %v1049 = vunpack.c.h.b16 %v183
    %v1050 = vunpack.c.l.b16 %v184
    %v1051 = vunpack.c.h.b16 %v184
    %v1052 = vunpack.c.l.b16 %v185
    %v1053 = vunpack.c.h.b16 %v185
    %v1054 = vunpack.c.l.b16 %v186
    %v1055 = vunpack.c.h.b16 %v186
    %v1056 = vunpack.c.l.b16 %v187
    %v1057 = vunpack.c.h.b16 %v187
    %v1058 = vunpack.c.l.b16 %v188
    %v1059 = vunpack.c.h.b16 %v188
    %v1060 = vunpack.c.l.b16 %v189
    %v1061 = vunpack.c.h.b16 %v189
    %v1062 = vunpack.c.l.b16 %v190
    %v1063 = vunpack.c.h.b16 %v190
    %v1064 = vunpack.c.l.b16 %v191
    %v1065 = vunpack.c.h.b16 %v191
    %v1066 = vunpack.c.l.b16 %v192
    %v1067 = vunpack.c.h.b16 %v192
    %v1068 = vunpack.c.l.b16 %v193
    %v1069 = vunpack.c.h.b16 %v193
    %v1070 = vunpack.c.l.b16 %v194
    %v1071 = vunpack.c.h.b16 %v194
    %v1072 = vunpack.c.l.b16 %v195
    %v1073 = vunpack.c.h.b16 %v195
    %v1074 = vunpack.c.l.b16 %v196
    %v1075 = vunpack.c.h.b16 %v196
    %v1076 = vunpack.c.l.b16 %v197
    %v1077 = vunpack.c.h.b16 %v197
    %v1078 = vunpack.c.l.b16 %v198
    %v1079 = vunpack.c.h.b16 %v198
    %v1080 = vunpack.c.l.b16 %v199
    %v1081 = vunpack.c.h.b16 %v199
    %v1082 = vunpack.c.l.b16 %v200
    %v1083 = vunpack.c.h.b16 %v200
    %v1084 = vunpack.c.l.b16 %v201
    %v1085 = vunpack.c.h.b16 %v201
    %v1086 = vunpack.c.l.b16 %v202
    %v1087 = vunpack.c.h.b16 %v202
    %v1088 = vunpack.c.l.b16 %v203
    %v1089 = vunpack.c.h.b16 %v203
    %v1090 = vunpack.c.l.b16 %v204
    %v1091 = vunpack.c.h.b16 %v204
    %v1092 = vunpack.c.l.b16 %v205
    %v1093 = vunpack.c.h.b16 %v205
    %v1094 = vunpack.c.l.b16 %v206
    %v1095 = vunpack.c.h.b16 %v206
    %v1096 = vunpack.c.l.b16 %v207
    %v1097 = vunpack.c.h.b16 %v207
    %v1098 = vunpack.c.l.b16 %v208
    %v1099 = vunpack.c.h.b16 %v208
    %v1100 = vunpack.c.l.b16 %v209
    %v1101 = vunpack.c.h.b16 %v209
    %v1102 = vunpack.c.l.b16 %v210
    %v1103 = vunpack.c.h.b16 %v210
    %v1104 = vunpack.c.l.b16 %v211
    %v1105 = vunpack.c.h.b16 %v211
    %v1106 = vunpack.c.l.b16 %v212
    %v1107 = vunpack.c.h.b16 %v212
    %v1108 = vunpack.c.l.b16 %v213
    %v1109 = vunpack.c.h.b16 %v213
    %v1110 = vunpack.c.l.b16 %v214
    %v1111 = vunpack.c.h.b16 %v214
    %v1112 = vunpack.c.l.b16 %v215
    %v1113 = vunpack.c.h.b16 %v215
    %v1114 = vunpack.c.l.b16 %v216
    %v1115 = vunpack.c.h.b16 %v216
    %v1116 = vunpack.c.l.b16 %v217
    %v1117 = vunpack.c.h.b16 %v217
    %v1118 = vunpack.c.l.b16 %v218
    %v1119 = vunpack.c.h.b16 %v218
    %v1120 = vunpack.c.l.b16 %v219
    %v1121 = vunpack.c.h.b16 %v219
    %v1122 = vunpack.c.l.b16 %v220
    %v1123 = vunpack.c.h.b16 %v220
    %v1124 = vunpack.c.l.b16 %v221
    %v1125 = vunpack.c.h.b16 %v221
    %v1126 = vunpack.c.l.b16 %v222
    %v1127 = vunpack.c.h.b16 %v222
    %v1128 = vunpack.c.l.b16 %v223
    %v1129 = vunpack.c.h.b16 %v223
    %v1130 = vunpack.c.l.b16 %v224
    %v1131 = vunpack.c.h.b16 %v224
    %v1132 = vunpack.c.l.b16 %v225
    %v1133 = vunpack.c.h.b16 %v225
    %v1134 = vunpack.c.l.b16 %v226
    %v1135 = vunpack.c.h.b16 %v226
    %v1136 = vunpack.c.l.b16 %v227
    %v1137 = vunpack.c.h.b16 %v227
    %v1138 = vunpack.c.l.b16 %v228
    %v1139 = vunpack.c.h.b16 %v228
    %v1140 = vunpack.c.l.b16 %v229
    %v1141 = vunpack.c.h.b16 %v229
    %v1142 = vunpack.c.l.b16 %v230
    %v1143 = vunpack.c.h.b16 %v230
    %v1144 = vunpack.c.l.b16 %v231
    %v1145 = vunpack.c.h.b16 %v231
    %v1146 = vunpack.c.l.b16 %v232
    %v1147 = vunpack.c.h.b16 %v232
    %v1148 = vunpack.c.l.b16 %v233
    %v1149 = vunpack.c.h.b16 %v233
    %v1150 = vunpack.c.l.b16 %v234
    %v1151 = vunpack.c.h.b16 %v234
    %v1152 = vunpack.c.l.b16 %v235
    %v1153 = vunpack.c.h.b16 %v235
    %v1154 = vunpack.c.l.b16 %v236
    %v1155 = vunpack.c.h.b16 %v236
    %v1156 = vunpack.c.l.b16 %v237
    %v1157 = vunpack.c.h.b16 %v237
    %v1158 = vunpack.c.l.b16 %v238
    %v1159 = vunpack.c.h.b16 %v238
    %v1160 = vunpack.c.l.b16 %v239
    %v1161 = vunpack.c.h.b16 %v239
    %v1162 = vunpack.c.l.b16 %v240
    %v1163 = vunpack.c.h.b16 %v240
    %v1164 = vunpack.c.l.b16 %v241
    %v1165 = vunpack.c.h.b16 %v241
    %v1166 = vunpack.c.l.b16 %v242
    %v1167 = vunpack.c.h.b16 %v242
    %v1168 = vunpack.c.l.b16 %v243
    %v1169 = vunpack.c.h.b16 %v243
    %v1170 = vunpack.c.l.b16 %v244
    %v1171 = vunpack.c.h.b16 %v244
    %v1172 = vunpack.c.l.b16 %v245
    %v1173 = vunpack.c.h.b16 %v245
    %v1174 = vunpack.c.l.b16 %v246
    %v1175 = vunpack.c.h.b16 %v246
    %v1176 = vunpack.c.l.b16 %v247
    %v1177 = vunpack.c.h.b16 %v247
    %v1178 = vunpack.c.l.b16 %v248
    %v1179 = vunpack.c.h.b16 %v248
    %v1180 = vunpack.c.l.b16 %v249
    %v1181 = vunpack.c.h.b16 %v249
    %v1182 = vunpack.c.l.b16 %v250
    %v1183 = vunpack.c.h.b16 %v250
    %v1184 = vunpack.c.l.b16 %v251
    %v1185 = vunpack.c.h.b16 %v251
    %v1186 = vunpack.c.l.b16 %v252
    %v1187 = vunpack.c.h.b16 %v252
    %v1188 = vunpack.c.l.b16 %v253
    %v1189 = vunpack.c.h.b16 %v253
    %v1190 = vunpack.c.l.b16 %v254
    %v1191 = vunpack.c.h.b16 %v254
    %v1192 = vunpack.c.l.b16 %v255
    %v1193 = vunpack.c.h.b16 %v255
    %v1194 = vunpack.c.l.b16 %v256
    %v1195 = vunpack.c.h.b16 %v256
    %v1196 = vunpack.c.l.b16 %v257
    %v1197 = vunpack.c.h.b16 %v257
    %v1198 = vunpack.c.l.b16 %v258
    %v1199 = vunpack.c.h.b16 %v258
    %v1200 = vunpack.c.l.b16 %v259
    %v1201 = vunpack.c.h.b16 %v259
    %v1202 = vunpack.c.l.b16 %v260
    %v1203 = vunpack.c.h.b16 %v260
    %v1204 = vunpack.c.l.b16 %v261
    %v1205 = vunpack.c.h.b16 %v261
    %v1206 = vunpack.c.l.b16 %v262
    %v1207 = vunpack.c.h.b16 %v262
    %v1208 = vunpack.c.l.b16 %v263
    %v1209 = vunpack.c.h.b16 %v263
    %v1210 = vunpack.c.l.b16 %v264
    %v1211 = vunpack.c.h.b16 %v264
    %v1212 = vunpack.c.l.b16 %v265
    %v1213 = vunpack.c.h.b16 %v265
    %v1214 = vunpack.c.l.b16 %v266
    %v1215 = vunpack.c.h.b16 %v266
    %v1216 = vunpack.c.l.b16 %v267
    %v1217 = vunpack.c.h.b16 %v267
    %v1218 = vunpack.c.l.b16 %v268
    %v1219 = vunpack.c.h.b16 %v268
    %v1220 = vunpack.c.l.b16 %v269
    %v1221 = vunpack.c.h.b16 %v269
    %v1222 = vunpack.c.l.b16 %v270
    %v1223 = vunpack.c.h.b16 %v270
    %v1224 = vunpack.c.l.b16 %v271
    %v1225 = vunpack.c.h.b16 %v271
    %v1226 = vunpack.c.l.b16 %v272
    %v1227 = vunpack.c.h.b16 %v272
    %v1228 = vunpack.c.l.b16 %v273
    %v1229 = vunpack.c.h.b16 %v273
    %v1230 = vunpack.c.l.b16 %v274
    %v1231 = vunpack.c.h.b16 %v274
    %v1232 = vunpack.c.l.b16 %v275
    %v1233 = vunpack.c.h.b16 %v275
    %v1234 = vunpack.c.l.b16 %v276
    %v1235 = vunpack.c.h.b16 %v276
    %v1236 = vunpack.c.l.b16 %v277
    %v1237 = vunpack.c.h.b16 %v277
    %v1238 = vunpack.c.l.b16 %v278
    %v1239 = vunpack.c.h.b16 %v278
    %v1240 = vunpack.c.l.b16 %v279
    %v1241 = vunpack.c.h.b16 %v279
    %v1242 = vunpack.c.l.b16 %v280
    %v1243 = vunpack.c.h.b16 %v280
    %v1244 = vunpack.c.l.b16 %v281
    %v1245 = vunpack.c.h.b16 %v281
    %v1246 = vunpack.c.l.b16 %v282
    %v1247 = vunpack.c.h.b16 %v282
    %v1248 = vunpack.c.l.b16 %v283
    %v1249 = vunpack.c.h.b16 %v283
    %v1250 = vunpack.c.l.b16 %v284
    %v1251 = vunpack.c.h.b16 %v284
    %v1252 = vunpack.c.l.b16 %v285
    %v1253 = vunpack.c.h.b16 %v285
    %v1254 = vunpack.c.l.b16 %v286
    %v1255 = vunpack.c.h.b16 %v286
    %v1256 = vunpack.c.l.b16 %v287
    %v1257 = vunpack.c.h.b16 %v287
    %v1258 = vunpack.c.l.b16 %v288
    %v1259 = vunpack.c.h.b16 %v288
    %v1260 = vunpack.c.l.b16 %v289
    %v1261 = vunpack.c.h.b16 %v289
    %v1262 = vunpack.c.l.b16 %v290
    %v1263 = vunpack.c.h.b16 %v290
    %v1264 = vunpack.c.l.b16 %v291
    %v1265 = vunpack.c.h.b16 %v291
    %v1266 = vunpack.c.l.b16 %v292
    %v1267 = vunpack.c.h.b16 %v292
    %v1268 = vunpack.c.l.b16 %v293
    %v1269 = vunpack.c.h.b16 %v293
    %v1270 = vunpack.c.l.b16 %v294
    %v1271 = vunpack.c.h.b16 %v294
    %v1272 = vunpack.c.l.b16 %v295
    %v1273 = vunpack.c.h.b16 %v295
    %v1274 = vunpack.c.l.b16 %v296
    %v1275 = vunpack.c.h.b16 %v296
    %v1276 = vunpack.c.l.b16 %v297
    %v1277 = vunpack.c.h.b16 %v297
    %v1278 = vunpack.c.l.b16 %v298
    %v1279 = vunpack.c.h.b16 %v298
    %v1280 = vunpack.c.l.b16 %v299
    %v1281 = vunpack.c.h.b16 %v299
    %v1282 = vunpack.c.l.b16 %v300
    %v1283 = vunpack.c.h.b16 %v300
    %v1284 = vunpack.c.l.b16 %v301
    %v1285 = vunpack.c.h.b16 %v301
    %v1286 = vunpack.c.l.b16 %v302
    %v1287 = vunpack.c.h.b16 %v302
    %v1288 = vunpack.c.l.b16 %v303
    %v1289 = vunpack.c.h.b16 %v303
    %v1290 = vunpack.c.l.b16 %v304
    %v1291 = vunpack.c.h.b16 %v304
    %v1292 = vunpack.c.l.b16 %v305
    %v1293 = vunpack.c.h.b16 %v305
    %v1294 = vunpack.c.l.b16 %v306
    %v1295 = vunpack.c.h.b16 %v306
    %v1296 = vunpack.c.l.b16 %v307
    %v1297 = vunpack.c.h.b16 %v307
    %v1298 = vunpack.c.l.b16 %v308
    %v1299 = vunpack.c.h.b16 %v308
    %v1300 = vunpack.c.l.b16 %v309
    %v1301 = vunpack.c.h.b16 %v309
    %v1302 = vunpack.c.l.b16 %v310
    %v1303 = vunpack.c.h.b16 %v310
    %v1304 = vunpack.c.l.b16 %v311
    %v1305 = vunpack.c.h.b16 %v311
    %v1306 = vunpack.c.l.b16 %v312
    %v1307 = vunpack.c.h.b16 %v312
    %v1308 = vunpack.c.l.b16 %v313
    %v1309 = vunpack.c.h.b16 %v313
    %v1310 = vunpack.c.l.b16 %v314
    %v1311 = vunpack.c.h.b16 %v314
    %v1312 = vunpack.c.l.b16 %v315
    %v1313 = vunpack.c.h.b16 %v315
    %v1314 = vunpack.c.l.b16 %v316
    %v1315 = vunpack.c.h.b16 %v316
    %v1316 = vunpack.c.l.b16 %v317
    %v1317 = vunpack.c.h.b16 %v317
    %v1318 = vunpack.c.l.b16 %v318
    %v1319 = vunpack.c.h.b16 %v318
    %v1320 = vunpack.c.l.b16 %v319
    %v1321 = vunpack.c.h.b16 %v319
    %v1322 = vunpack.c.l.b16 %v320
    %v1323 = vunpack.c.h.b16 %v320
    %v1324 = vunpack.c.l.b16 %v321
    %v1325 = vunpack.c.h.b16 %v321
    %v1326 = vunpack.c.l.b16 %v322
    %v1327 = vunpack.c.h.b16 %v322
    %v1328 = vunpack.c.l.b16 %v323
    %v1329 = vunpack.c.h.b16 %v323
    %v1330 = vunpack.c.l.b16 %v324
    %v1331 = vunpack.c.h.b16 %v324
    %v1332 = vunpack.c.l.b16 %v325
    %v1333 = vunpack.c.h.b16 %v325
    %v1334 = vunpack.c.l.b16 %v326
    %v1335 = vunpack.c.h.b16 %v326
    %v1336 = vunpack.c.l.b16 %v327
    %v1337 = vunpack.c.h.b16 %v327
    %v1338 = vunpack.c.l.b16 %v328
    %v1339 = vunpack.c.h.b16 %v328
    %v1340 = vunpack.c.l.b16 %v329
    %v1341 = vunpack.c.h.b16 %v329
    %v1342 = vunpack.c.l.b16 %v330
    %v1343 = vunpack.c.h.b16 %v330
    %v1344 = vunpack.c.l.b16 %v331
    %v1345 = vunpack.c.h.b16 %v331
    %v1346 = vunpack.c.l.b16 %v332
    %v1347 = vunpack.c.h.b16 %v332
    %v1348 = vunpack.c.l.b16 %v333
    %v1349 = vunpack.c.h.b16 %v333
    %v1350 = vunpack.c.l.b16 %v334
    %v1351 = vunpack.c.h.b16 %v334
    %v1352 = vunpack.c.l.b16 %v335
    %v1353 = vunpack.c.h.b16 %v335
    %v1354 = vunpack.c.l.b16 %v336
    %v1355 = vunpack.c.h.b16 %v336
    %v1356 = vunpack.c.l.b16 %v337
    %v1357 = vunpack.c.h.b16 %v337
    %v1358 = vunpack.c.l.b16 %v338
    %v1359 = vunpack.c.h.b16 %v338
    %v1360 = vunpack.c.l.b16 %v339
    %v1361 = vunpack.c.h.b16 %v339
    %v1362 = vunpack.c.l.b16 %v340
    %v1363 = vunpack.c.h.b16 %v340
    %v1364 = vunpack.c.l.b16 %v341
    %v1365 = vunpack.c.h.b16 %v341
    %v1366 = vunpack.c.l.b16 %v342
    %v1367 = vunpack.c.h.b16 %v342
    %v1368 = vunpack.c.l.b16 %v343
    %v1369 = vunpack.c.h.b16 %v343
    %v1370 = vunpack.c.l.b16 %v344
    %v1371 = vunpack.c.h.b16 %v344
    %v1372 = vunpack.c.l.b16 %v345
    %v1373 = vunpack.c.h.b16 %v345
    %v1374 = vunpack.c.l.b16 %v346
    %v1375 = vunpack.c.h.b16 %v346
    %v1376 = vunpack.c.l.b16 %v347
    %v1377 = vunpack.c.h.b16 %v347
    %v1378 = vunpack.c.l.b16 %v348
    %v1379 = vunpack.c.h.b16 %v348
    %v1380 = vunpack.c.l.b16 %v349
    %v1381 = vunpack.c.h.b16 %v349
    %v1382 = vunpack.c.l.b16 %v350
    %v1383 = vunpack.c.h.b16 %v350
    %v1384 = vunpack.c.l.b16 %v351
    %v1385 = vunpack.c.h.b16 %v351
    %v1386 = vunpack.c.l.b16 %v352
    %v1387 = vunpack.c.h.b16 %v352
    %v1388 = vunpack.c.l.b16 %v353
    %v1389 = vunpack.c.h.b16 %v353
    %v1390 = vunpack.c.l.b16 %v354
    %v1391 = vunpack.c.h.b16 %v354
    %v1392 = vunpack.c.l.b16 %v355
    %v1393 = vunpack.c.h.b16 %v355
    %v1394 = vunpack.c.l.b16 %v356
    %v1395 = vunpack.c.h.b16 %v356
    %v1396 = vunpack.c.l.b16 %v357
    %v1397 = vunpack.c.h.b16 %v357
    %v1398 = vunpack.c.l.b16 %v358
    %v1399 = vunpack.c.h.b16 %v358
    %v1400 = vunpack.c.l.b16 %v359
    %v1401 = vunpack.c.h.b16 %v359
    %v1402 = vunpack.c.l.b16 %v360
    %v1403 = vunpack.c.h.b16 %v360
    %v1404 = vunpack.c.l.b16 %v361
    %v1405 = vunpack.c.h.b16 %v361
    %v1406 = vunpack.c.l.b16 %v362
    %v1407 = vunpack.c.h.b16 %v362
    %v1408 = vunpack.c.l.b16 %v363
    %v1409 = vunpack.c.h.b16 %v363
    %v1410 = vunpack.c.l.b16 %v364
    %v1411 = vunpack.c.h.b16 %v364
    %v1412 = vunpack.c.l.b16 %v365
    %v1413 = vunpack.c.h.b16 %v365
    %v1414 = vunpack.c.l.b16 %v366
    %v1415 = vunpack.c.h.b16 %v366
    %v1416 = vunpack.c.l.b16 %v367
    %v1417 = vunpack.c.h.b16 %v367
    %v1418 = vunpack.c.l.b16 %v368
    %v1419 = vunpack.c.h.b16 %v368
    %v1420 = vunpack.c.l.b16 %v369
    %v1421 = vunpack.c.h.b16 %v369
    %v1422 = vunpack.c.l.b16 %v370
    %v1423 = vunpack.c.h.b16 %v370
    %v1424 = vunpack.c.l.b16 %v371
    %v1425 = vunpack.c.h.b16 %v371
    %v1426 = vunpack.c.l.b16 %v372
    %v1427 = vunpack.c.h.b16 %v372
    %v1428 = vunpack.c.l.b16 %v373
    %v1429 = vunpack.c.h.b16 %v373
    %v1430 = vunpack.c.l.b16 %v374
    %v1431 = vunpack.c.h.b16 %v374
    %v1432 = vunpack.c.l.b16 %v375
    %v1433 = vunpack.c.h.b16 %v375
    %v1434 = vunpack.c.l.b16 %v376
    %v1435 = vunpack.c.h.b16 %v376
    %v1436 = vunpack.c.l.b16 %v377
    %v1437 = vunpack.c.h.b16 %v377
    %v1438 = vunpack.c.l.b16 %v378
    %v1439 = vunpack.c.h.b16 %v378
    %v1440 = vunpack.c.l.b16 %v379
    %v1441 = vunpack.c.h.b16 %v379
    %v1442 = vunpack.c.l.b16 %v380
    %v1443 = vunpack.c.h.b16 %v380
    %v1444 = vunpack.c.l.b16 %v381
    %v1445 = vunpack.c.h.b16 %v381
    %v1446 = vunpack.c.l.b16 %v382
    %v1447 = vunpack.c.h.b16 %v382
    %v1448 = vunpack.c.l.b16 %v383
    %v1449 = vunpack.c.h.b16 %v383
    %v1450 = vunpack.c.l.b16 %v384
    %v1451 = vunpack.c.h.b16 %v384
    %v1452 = vunpack.c.l.b16 %v385
    %v1453 = vunpack.c.h.b16 %v385
    %v1454 = vunpack.c.l.b16 %v386
    %v1455 = vunpack.c.h.b16 %v386
    %v1456 = vunpack.c.l.b16 %v387
    %v1457 = vunpack.c.h.b16 %v387
    %v1458 = vunpack.c.l.b16 %v388
    %v1459 = vunpack.c.h.b16 %v388
    %v1460 = vunpack.c.l.b16 %v389
    %v1461 = vunpack.c.h.b16 %v389
    %v1462 = vunpack.c.l.b16 %v390
    %v1463 = vunpack.c.h.b16 %v390
    %v1464 = vunpack.c.l.b16 %v391
    %v1465 = vunpack.c.h.b16 %v391
    %v1466 = vunpack.c.l.b16 %v392
    %v1467 = vunpack.c.h.b16 %v392
    %v1468 = vunpack.c.l.b16 %v393
    %v1469 = vunpack.c.h.b16 %v393
    %v1470 = vunpack.c.l.b16 %v394
    %v1471 = vunpack.c.h.b16 %v394
    %v1472 = vunpack.c.l.b16 %v395
    %v1473 = vunpack.c.h.b16 %v395
    %v1474 = vunpack.c.l.b16 %v396
    %v1475 = vunpack.c.h.b16 %v396
    %v1476 = vunpack.c.l.b16 %v397
    %v1477 = vunpack.c.h.b16 %v397
    %v1478 = vunpack.c.l.b16 %v398
    %v1479 = vunpack.c.h.b16 %v398
    %v1480 = vunpack.c.l.b16 %v399
    %v1481 = vunpack.c.h.b16 %v399
    %v1482 = vunpack.c.l.b16 %v400
    %v1483 = vunpack.c.h.b16 %v400
    %v1484 = vunpack.c.l.b16 %v401
    %v1485 = vunpack.c.h.b16 %v401
    %v1486 = vunpack.c.l.b16 %v402
    %v1487 = vunpack.c.h.b16 %v402
    %v1488 = vunpack.c.l.b16 %v403
    %v1489 = vunpack.c.h.b16 %v403
    %v1490 = vunpack.c.l.b16 %v404
    %v1491 = vunpack.c.h.b16 %v404
    %v1492 = vunpack.c.l.b16 %v405
    %v1493 = vunpack.c.h.b16 %v405
    %v1494 = vunpack.c.l.b16 %v406
    %v1495 = vunpack.c.h.b16 %v406
    %v1496 = vunpack.c.l.b16 %v407
    %v1497 = vunpack.c.h.b16 %v407
    %v1498 = vunpack.c.l.b16 %v408
    %v1499 = vunpack.c.h.b16 %v408
    %v1500 = vunpack.c.l.b16 %v409
    %v1501 = vunpack.c.h.b16 %v409
    %v1502 = vunpack.c.l.b16 %v410
    %v1503 = vunpack.c.h.b16 %v410
    %v1504 = vunpack.c.l.b16 %v411
    %v1505 = vunpack.c.h.b16 %v411
    %v1506 = vunpack.c.l.b16 %v412
    %v1507 = vunpack.c.h.b16 %v412
    %v1508 = vunpack.c.l.b16 %v413
    %v1509 = vunpack.c.h.b16 %v413
    %v1510 = vunpack.c.l.b16 %v414
    %v1511 = vunpack.c.h.b16 %v414
    %v1512 = vunpack.c.l.b16 %v415
    %v1513 = vunpack.c.h.b16 %v415
    %v1514 = vunpack.c.l.b16 %v416
    %v1515 = vunpack.c.h.b16 %v416
    %v1516 = vunpack.c.l.b16 %v417
    %v1517 = vunpack.c.h.b16 %v417
    %v1518 = vunpack.c.l.b16 %v418
    %v1519 = vunpack.c.h.b16 %v418
    %v1520 = vunpack.c.l.b16 %v419
    %v1521 = vunpack.c.h.b16 %v419
    %v1522 = vunpack.c.l.b16 %v420
    %v1523 = vunpack.c.h.b16 %v420
    %v1524 = vunpack.c.l.b16 %v421
    %v1525 = vunpack.c.h.b16 %v421
    %v1526 = vunpack.c.l.b16 %v422
    %v1527 = vunpack.c.h.b16 %v422
    %v1528 = vunpack.c.l.b16 %v423
    %v1529 = vunpack.c.h.b16 %v423
    %v1530 = vunpack.c.l.b16 %v424
    %v1531 = vunpack.c.h.b16 %v424
    %v1532 = vunpack.c.l.b16 %v425
    %v1533 = vunpack.c.h.b16 %v425
    %v1534 = vunpack.c.l.b16 %v426
    %v1535 = vunpack.c.h.b16 %v426
    %v1536 = vunpack.c.l.b16 %v427
    %v1537 = vunpack.c.h.b16 %v427
    %v1538 = vunpack.c.l.b16 %v428
    %v1539 = vunpack.c.h.b16 %v428
    %v1540 = vunpack.c.l.b16 %v429
    %v1541 = vunpack.c.h.b16 %v429
    %v1542 = vunpack.c.l.b16 %v430
    %v1543 = vunpack.c.h.b16 %v430
    %v1544 = vunpack.c.l.b16 %v431
    %v1545 = vunpack.c.h.b16 %v431
    %v1546 = vunpack.c.l.b16 %v432
    %v1547 = vunpack.c.h.b16 %v432
    %v1548 = vunpack.c.l.b16 %v433
    %v1549 = vunpack.c.h.b16 %v433
    %v1550 = vunpack.c.l.b16 %v434
    %v1551 = vunpack.c.h.b16 %v434
    %v1552 = vunpack.c.l.b16 %v435
    %v1553 = vunpack.c.h.b16 %v435
    %v1554 = vunpack.c.l.b16 %v436
    %v1555 = vunpack.c.h.b16 %v436
    %v1556 = vunpack.c.l.b16 %v437
    %v1557 = vunpack.c.h.b16 %v437
    %v1558 = vunpack.c.l.b16 %v438
    %v1559 = vunpack.c.h.b16 %v438
    %v1560 = vunpack.c.l.b16 %v439
    %v1561 = vunpack.c.h.b16 %v439
    %v1562 = vunpack.c.l.b16 %v440
    %v1563 = vunpack.c.h.b16 %v440
    %v1564 = vunpack.c.l.b16 %v441
    %v1565 = vunpack.c.h.b16 %v441
    %v1566 = vunpack.c.l.b16 %v442
    %v1567 = vunpack.c.h.b16 %v442
    %v1568 = vunpack.c.l.b16 %v443
    %v1569 = vunpack.c.h.b16 %v443
    %v1570 = vunpack.c.l.b16 %v444
    %v1571 = vunpack.c.h.b16 %v444
    %v1572 = vunpack.c.l.b16 %v445
    %v1573 = vunpack.c.h.b16 %v445
    %v1574 = vunpack.c.l.b16 %v446
    %v1575 = vunpack.c.h.b16 %v446
    %v1576 = vunpack.c.l.b16 %v447
    %v1577 = vunpack.c.h.b16 %v447
    %v1578 = vunpack.c.l.b16 %v448
    %v1579 = vunpack.c.h.b16 %v448
    %v1580 = vunpack.c.l.b16 %v449
    %v1581 = vunpack.c.h.b16 %v449
    %v1582 = vunpack.c.l.b16 %v450
    %v1583 = vunpack.c.h.b16 %v450
    %v1584 = vunpack.c.l.b16 %v451
    %v1585 = vunpack.c.h.b16 %v451
    %v1586 = vunpack.c.l.b16 %v452
    %v1587 = vunpack.c.h.b16 %v452
    %v1588 = vunpack.c.l.b16 %v453
    %v1589 = vunpack.c.h.b16 %v453
    %v1590 = vunpack.c.l.b16 %v454
    %v1591 = vunpack.c.h.b16 %v454
    %v1592 = vunpack.c.l.b16 %v455
    %v1593 = vunpack.c.h.b16 %v455
    %v1594 = vunpack.c.l.b16 %v456
    %v1595 = vunpack.c.h.b16 %v456
    %v1596 = vunpack.c.l.b16 %v457
    %v1597 = vunpack.c.h.b16 %v457
    %v1598 = vunpack.c.l.b16 %v458
    %v1599 = vunpack.c.h.b16 %v458
    %v1600 = vunpack.c.l.b16 %v459
    %v1601 = vunpack.c.h.b16 %v459
    %v1602 = vunpack.c.l.b16 %v460
    %v1603 = vunpack.c.h.b16 %v460
    %v1604 = vunpack.c.l.b16 %v461
    %v1605 = vunpack.c.h.b16 %v461
    %v1606 = vunpack.c.l.b16 %v462
    %v1607 = vunpack.c.h.b16 %v462
    %v1608 = vunpack.c.l.b16 %v463
    %v1609 = vunpack.c.h.b16 %v463
    %v1610 = vunpack.c.l.b16 %v464
    %v1611 = vunpack.c.h.b16 %v464
    %v1612 = vunpack.c.l.b16 %v465
    %v1613 = vunpack.c.h.b16 %v465
    %v1614 = vunpack.c.l.b16 %v466
    %v1615 = vunpack.c.h.b16 %v466
    %v1616 = vunpack.c.l.b16 %v467
    %v1617 = vunpack.c.h.b16 %v467
    %v1618 = vunpack.c.l.b16 %v468
    %v1619 = vunpack.c.h.b16 %v468
    %v1620 = vunpack.c.l.b16 %v469
    %v1621 = vunpack.c.h.b16 %v469
    %v1622 = vunpack.c.l.b16 %v470
    %v1623 = vunpack.c.h.b16 %v470
    %v1624 = vunpack.c.l.b16 %v471
    %v1625 = vunpack.c.h.b16 %v471
    %v1626 = vunpack.c.l.b16 %v472
    %v1627 = vunpack.c.h.b16 %v472
    %v1628 = vunpack.c.l.b16 %v473
    %v1629 = vunpack.c.h.b16 %v473
    %v1630 = vunpack.c.l.b16 %v474
    %v1631 = vunpack.c.h.b16 %v474
    %v1632 = vunpack.c.l.b16 %v475
    %v1633 = vunpack.c.h.b16 %v475
    %v1634 = vunpack.c.l.b16 %v476
    %v1635 = vunpack.c.h.b16 %v476
    %v1636 = vunpack.c.l.b16 %v477
    %v1637 = vunpack.c.h.b16 %v477
    %v1638 = vunpack.c.l.b16 %v478
    %v1639 = vunpack.c.h.b16 %v478
    %v1640 = vunpack.c.l.b16 %v479
    %v1641 = vunpack.c.h.b16 %v479
    %v1642 = vunpack.c.l.b16 %v480
    %v1643 = vunpack.c.h.b16 %v480
    %v1644 = vunpack.c.l.b16 %v481
    %v1645 = vunpack.c.h.b16 %v481
    %v1646 = vunpack.c.l.b16 %v482
    %v1647 = vunpack.c.h.b16 %v482
    %v1648 = vunpack.c.l.b16 %v483
    %v1649 = vunpack.c.h.b16 %v483
    %v1650 = vunpack.c.l.b16 %v484
    %v1651 = vunpack.c.h.b16 %v484
    %v1652 = vunpack.c.l.b16 %v485
    %v1653 = vunpack.c.h.b16 %v485
    %v1654 = vunpack.c.l.b16 %v486
    %v1655 = vunpack.c.h.b16 %v486
    %v1656 = vunpack.c.l.b16 %v487
    %v1657 = vunpack.c.h.b16 %v487
    %v1658 = vunpack.c.l.b16 %v488
    %v1659 = vunpack.c.h.b16 %v488
    %v1660 = vunpack.c.l.b16 %v489
    %v1661 = vunpack.c.h.b16 %v489
    %v1662 = vunpack.c.l.b16 %v490
    %v1663 = vunpack.c.h.b16 %v490
    %v1664 = vunpack.c.l.b16 %v491
    %v1665 = vunpack.c.h.b16 %v491
    %v1666 = vunpack.c.l.b16 %v492
    %v1667 = vunpack.c.h.b16 %v492
    %v1668 = vunpack.c.l.b16 %v493
    %v1669 = vunpack.c.h.b16 %v493
    %v1670 = vunpack.c.l.b16 %v494
    %v1671 = vunpack.c.h.b16 %v494
    %v1672 = vunpack.c.l.b16 %v495
    %v1673 = vunpack.c.h.b16 %v495
    %v1674 = vunpack.c.l.b16 %v496
    %v1675 = vunpack.c.h.b16 %v496
    %v1676 = vunpack.c.l.b16 %v497
    %v1677 = vunpack.c.h.b16 %v497
    %v1678 = vunpack.c.l.b16 %v498
    %v1679 = vunpack.c.h.b16 %v498
    %v1680 = vunpack.c.l.b16 %v499
    %v1681 = vunpack.c.h.b16 %v499
    %v1682 = vunpack.c.l.b16 %v500
    %v1683 = vunpack.c.h.b16 %v500
    %v1684 = vunpack.c.l.b16 %v501
    %v1685 = vunpack.c.h.b16 %v501
    %v1686 = vunpack.c.l.b16 %v502
    %v1687 = vunpack.c.h.b16 %v502
    %v1688 = vunpack.c.l.b16 %v503
    %v1689 = vunpack.c.h.b16 %v503
    %v1690 = vunpack.c.l.b16 %v504
    %v1691 = vunpack.c.h.b16 %v504
    %v1692 = vunpack.c.l.b16 %v505
    %v1693 = vunpack.c.h.b16 %v505
    %v1694 = vunpack.c.l.b16 %v506
    %v1695 = vunpack.c.h.b16 %v506
    %v1696 = vunpack.c.l.b16 %v507
    %v1697 = vunpack.c.h.b16 %v507
    %v1698 = vunpack.c.l.b16 %v508
    %v1699 = vunpack.c.h.b16 %v508
    %v1700 = vunpack.c.l.b16 %v509
    %v1701 = vunpack.c.h.b16 %v509
    %v1702 = vunpack.c.l.b16 %v510
    %v1703 = vunpack.c.h.b16 %v510
    %v1704 = vunpack.c.l.b16 %v511
    %v1705 = vunpack.c.h.b16 %v511
    %v1706 = vpack.c.b16 %v946, %v938
    %v1707 = vpack.c.b16 %v947, %v939
    %v1708 = vpack.c.b16 %v948, %v940
    %v1709 = vpack.c.b16 %v949, %v941
    %v1710 = vpack.c.b16 %v950, %v942
    %v1711 = vpack.c.b16 %v951, %v943
    %v1712 = vpack.c.b16 %v952, %v944
    %v1713 = vpack.c.b16 %v953, %v945
    %v1714 = vpack.c.b16 %v962, %v954
    %v1715 = vpack.c.b16 %v963, %v955
    %v1716 = vpack.c.b16 %v964, %v956
    %v1717 = vpack.c.b16 %v965, %v957
    %v1718 = vpack.c.b16 %v966, %v958
    %v1719 = vpack.c.b16 %v967, %v959
    %v1720 = vpack.c.b16 %v968, %v960
    %v1721 = vpack.c.b16 %v969, %v961
    %v1722 = vpack.c.b16 %v978, %v970
    %v1723 = vpack.c.b16 %v979, %v971
    %v1724 = vpack.c.b16 %v980, %v972
    %v1725 = vpack.c.b16 %v981, %v973
    %v1726 = vpack.c.b16 %v982, %v974
    %v1727 = vpack.c.b16 %v983, %v975
    %v1728 = vpack.c.b16 %v984, %v976
    %v1729 = vpack.c.b16 %v985, %v977
    %v1730 = vpack.c.b16 %v994, %v986
    %v1731 = vpack.c.b16 %v995, %v987
    %v1732 = vpack.c.b16 %v996, %v988
    %v1733 = vpack.c.b16 %v997, %v989
    %v1734 = vpack.c.b16 %v998, %v990
    %v1735 = vpack.c.b16 %v999, %v991
    %v1736 = vpack.c.b16 %v1000, %v992
    %v1737 = vpack.c.b16 %v1001, %v993
    %v1738 = vpack.c.b16 %v1010, %v1002
    %v1739 = vpack.c.b16 %v1011, %v1003
    %v1740 = vpack.c.b16 %v1012, %v1004
    %v1741 = vpack.c.b16 %v1013, %v1005
    %v1742 = vpack.c.b16 %v1014, %v1006
    %v1743 = vpack.c.b16 %v1015, %v1007
    %v1744 = vpack.c.b16 %v1016, %v1008
    %v1745 = vpack.c.b16 %v1017, %v1009
    %v1746 = vpack.c.b16 %v1026, %v1018
    %v1747 = vpack.c.b16 %v1027, %v1019
    %v1748 = vpack.c.b16 %v1028, %v1020
    %v1749 = vpack.c.b16 %v1029, %v1021
    %v1750 = vpack.c.b16 %v1030, %v1022
    %v1751 = vpack.c.b16 %v1031, %v1023
    %v1752 = vpack.c.b16 %v1032, %v1024
    %v1753 = vpack.c.b16 %v1033, %v1025
    %v1754 = vpack.c.b16 %v1042, %v1034
    %v1755 = vpack.c.b16 %v1043, %v1035
    %v1756 = vpack.c.b16 %v1044, %v1036
    %v1757 = vpack.c.b16 %v1045, %v1037
    %v1758 = vpack.c.b16 %v1046, %v1038
    %v1759 = vpack.c.b16 %v1047, %v1039
    %v1760 = vpack.c.b16 %v1048, %v1040
    %v1761 = vpack.c.b16 %v1049, %v1041
    %v1762 = vpack.c.b16 %v1058, %v1050
    %v1763 = vpack.c.b16 %v1059, %v1051
    %v1764 = vpack.c.b16 %v1060, %v1052
    %v1765 = vpack.c.b16 %v1061, %v1053
    %v1766 = vpack.c.b16 %v1062, %v1054
    %v1767 = vpack.c.b16 %v1063, %v1055
    %v1768 = vpack.c.b16 %v1064, %v1056
    %v1769 = vpack.c.b16 %v1065, %v1057
    %v1770 = vpack.c.b16 %v1074, %v1066
    %v1771 = vpack.c.b16 %v1075, %v1067
    %v1772 = vpack.c.b16 %v1076, %v1068
    %v1773 = vpack.c.b16 %v1077, %v1069
    %v1774 = vpack.c.b16 %v1078, %v1070
    %v1775 = vpack.c.b16 %v1079, %v1071
    %v1776 = vpack.c.b16 %v1080, %v1072
    %v1777 = vpack.c.b16 %v1081, %v1073
    %v1778 = vpack.c.b16 %v1090, %v1082
    %v1779 = vpack.c.b16 %v1091, %v1083
    %v1780 = vpack.c.b16 %v1092, %v1084
    %v1781 = vpack.c.b16 %v1093, %v1085
    %v1782 = vpack.c.b16 %v1094, %v1086
    %v1783 = vpack.c.b16 %v1095, %v1087
    %v1784 = vpack.c.b16 %v1096, %v1088
    %v1785 = vpack.c.b16 %v1097, %v1089
    %v1786 = vpack.c.b16 %v1106, %v1098
    %v1787 = vpack.c.b16 %v1107, %v1099
    %v1788 = vpack.c.b16 %v1108, %v1100
    %v1789 = vpack.c.b16 %v1109, %v1101
    %v1790 = vpack.c.b16 %v1110, %v1102
    %v1791 = vpack.c.b16 %v1111, %v1103
    %v1792 = vpack.c.b16 %v1112, %v1104
    %v1793 = vpack.c.b16 %v1113, %v1105
    %v1794 = vpack.c.b16 %v1122, %v1114
    %v1795 = vpack.c.b16 %v1123, %v1115
    %v1796 = vpack.c.b16 %v1124, %v1116
    %v1797 = vpack.c.b16 %v1125, %v1117
    %v1798 = vpack.c.b16 %v1126, %v1118
    %v1799 = vpack.c.b16 %v1127, %v1119
    %v1800 = vpack.c.b16 %v1128, %v1120
    %v1801 = vpack.c.b16 %v1129, %v1121
    %v1802 = vpack.c.b16 %v1138, %v1130
    %v1803 = vpack.c.b16 %v1139, %v1131
    %v1804 = vpack.c.b16 %v1140, %v1132
    %v1805 = vpack.c.b16 %v1141, %v1133
    %v1806 = vpack.c.b16 %v1142, %v1134
    %v1807 = vpack.c.b16 %v1143, %v1135
    %v1808 = vpack.c.b16 %v1144, %v1136
    %v1809 = vpack.c.b16 %v1145, %v1137
    %v1810 = vpack.c.b16 %v1154, %v1146
    %v1811 = vpack.c.b16 %v1155, %v1147
    %v1812 = vpack.c.b16 %v1156, %v1148
    %v1813 = vpack.c.b16 %v1157, %v1149
    %v1814 = vpack.c.b16 %v1158, %v1150
    %v1815 = vpack.c.b16 %v1159, %v1151
    %v1816 = vpack.c.b16 %v1160, %v1152
    %v1817 = vpack.c.b16 %v1161, %v1153
    %v1818 = vpack.c.b16 %v1170, %v1162
    %v1819 = vpack.c.b16 %v1171, %v1163
    %v1820 = vpack.c.b16 %v1172, %v1164
    %v1821 = vpack.c.b16 %v1173, %v1165
    %v1822 = vpack.c.b16 %v1174, %v1166
    %v1823 = vpack.c.b16 %v1175, %v1167
    %v1824 = vpack.c.b16 %v1176, %v1168
    %v1825 = vpack.c.b16 %v1177, %v1169
    %v1826 = vpack.c.b16 %v1186, %v1178
    %v1827 = vpack.c.b16 %v1187, %v1179
    %v1828 = vpack.c.b16 %v1188, %v1180
    %v1829 = vpack.c.b16 %v1189, %v1181
    %v1830 = vpack.c.b16 %v1190, %v1182
    %v1831 = vpack.c.b16 %v1191, %v1183
    %v1832 = vpack.c.b16 %v1192, %v1184
    %v1833 = vpack.c.b16 %v1193, %v1185
    %v1834 = vpack.c.b16 %v1202, %v1194
    %v1835 = vpack.c.b16 %v1203, %v1195
    %v1836 = vpack.c.b16 %v1204, %v1196
    %v1837 = vpack.c.b16 %v1205, %v1197
    %v1838 = vpack.c.b16 %v1206, %v1198
    %v1839 = vpack.c.b16 %v1207, %v1199
    %v1840 = vpack.c.b16 %v1208, %v1200
    %v1841 = vpack.c.b16 %v1209, %v1201
    %v1842 = vpack.c.b16 %v1218, %v1210
    %v1843 = vpack.c.b16 %v1219, %v1211
    %v1844 = vpack.c.b16 %v1220, %v1212
    %v1845 = vpack.c.b16 %v1221, %v1213
    %v1846 = vpack.c.b16 %v1222, %v1214
    %v1847 = vpack.c.b16 %v1223, %v1215
    %v1848 = vpack.c.b16 %v1224, %v1216
    %v1849 = vpack.c.b16 %v1225, %v1217
    %v1850 = vpack.c.b16 %v1234, %v1226
    %v1851 = vpack.c.b16 %v1235, %v1227
    %v1852 = vpack.c.b16 %v1236, %v1228
    %v1853 = vpack.c.b16 %v1237, %v1229
    %v1854 = vpack.c.b16 %v1238, %v1230
    %v1855 = vpack.c.b16 %v1239, %v1231
    %v1856 = vpack.c.b16 %v1240, %v1232
    %v1857 = vpack.c.b16 %v1241, %v1233
    %v1858 = vpack.c.b16 %v1250, %v1242
    %v1859 = vpack.c.b16 %v1251, %v1243
    %v1860 = vpack.c.b16 %v1252, %v1244
    %v1861 = vpack.c.b16 %v1253, %v1245
    %v1862 = vpack.c.b16 %v1254, %v1246
    %v1863 = vpack.c.b16 %v1255, %v1247
    %v1864 = vpack.c.b16 %v1256, %v1248
    %v1865 = vpack.c.b16 %v1257, %v1249
    %v1866 = vpack.c.b16 %v1266, %v1258
    %v1867 = vpack.c.b16 %v1267, %v1259
    %v1868 = vpack.c.b16 %v1268, %v1260
    %v1869 = vpack.c.b16 %v1269, %v1261
    %v1870 = vpack.c.b16 %v1270, %v1262
    %v1871 = vpack.c.b16 %v1271, %v1263
    %v1872 = vpack.c.b16 %v1272, %v1264
    %v1873 = vpack.c.b16 %v1273, %v1265
    %v1874 = vpack.c.b16 %v1282, %v1274
    %v1875 = vpack.c.b16 %v1283, %v1275
    %v1876 = vpack.c.b16 %v1284, %v1276
    %v1877 = vpack.c.b16 %v1285, %v1277
    %v1878 = vpack.c.b16 %v1286, %v1278
    %v1879 = vpack.c.b16 %v1287, %v1279
    %v1880 = vpack.c.b16 %v1288, %v1280
    %v1881 = vpack.c.b16 %v1289, %v1281
    %v1882 = vpack.c.b16 %v1298, %v1290
    %v1883 = vpack.c.b16 %v1299, %v1291
    %v1884 = vpack.c.b16 %v1300, %v1292
    %v1885 = vpack.c.b16 %v1301, %v1293
    %v1886 = vpack.c.b16 %v1302, %v1294
    %v1887 = vpack.c.b16 %v1303, %v1295
    %v1888 = vpack.c.b16 %v1304, %v1296
    %v1889 = vpack.c.b16 %v1305, %v1297
    %v1890 = vpack.c.b16 %v1314, %v1306
    %v1891 = vpack.c.b16 %v1315, %v1307
    %v1892 = vpack.c.b16 %v1316, %v1308
    %v1893 = vpack.c.b16 %v1317, %v1309
    %v1894 = vpack.c.b16 %v1318, %v1310
    %v1895 = vpack.c.b16 %v1319, %v1311
    %v1896 = vpack.c.b16 %v1320, %v1312
    %v1897 = vpack.c.b16 %v1321, %v1313
    %v1898 = vpack.c.b16 %v1330, %v1322
    %v1899 = vpack.c.b16 %v1331, %v1323
    %v1900 = vpack.c.b16 %v1332, %v1324
    %v1901 = vpack.c.b16 %v1333, %v1325
    %v1902 = vpack.c.b16 %v1334, %v1326
    %v1903 = vpack.c.b16 %v1335, %v1327
    %v1904 = vpack.c.b16 %v1336, %v1328
    %v1905 = vpack.c.b16 %v1337, %v1329
    %v1906 = vpack.c.b16 %v1346, %v1338
    %v1907 = vpack.c.b16 %v1347, %v1339
    %v1908 = vpack.c.b16 %v1348, %v1340
    %v1909 = vpack.c.b16 %v1349, %v1341
    %v1910 = vpack.c.b16 %v1350, %v1342
    %v1911 = vpack.c.b16 %v1351, %v1343
    %v1912 = vpack.c.b16 %v1352, %v1344
    %v1913 = vpack.c.b16 %v1353, %v1345
    %v1914 = vpack.c.b16 %v1362, %v1354
    %v1915 = vpack.c.b16 %v1363, %v1355
    %v1916 = vpack.c.b16 %v1364, %v1356
    %v1917 = vpack.c.b16 %v1365, %v1357
    %v1918 = vpack.c.b16 %v1366, %v1358
    %v1919 = vpack.c.b16 %v1367, %v1359
    %v1920 = vpack.c.b16 %v1368, %v1360
    %v1921 = vpack.c.b16 %v1369, %v1361
    %v1922 = vpack.c.b16 %v1378, %v1370
    %v1923 = vpack.c.b16 %v1379, %v1371
    %v1924 = vpack.c.b16 %v1380, %v1372
    %v1925 = vpack.c.b16 %v1381, %v1373
    %v1926 = vpack.c.b16 %v1382, %v1374
    %v1927 = vpack.c.b16 %v1383, %v1375
    %v1928 = vpack.c.b16 %v1384, %v1376
    %v1929 = vpack.c.b16 %v1385, %v1377
    %v1930 = vpack.c.b16 %v1394, %v1386
    %v1931 = vpack.c.b16 %v1395, %v1387
    %v1932 = vpack.c.b16 %v1396, %v1388
    %v1933 = vpack.c.b16 %v1397, %v1389
    %v1934 = vpack.c.b16 %v1398, %v1390
    %v1935 = vpack.c.b16 %v1399, %v1391
    %v1936 = vpack.c.b16 %v1400, %v1392
    %v1937 = vpack.c.b16 %v1401, %v1393
    %v1938 = vpack.c.b16 %v1410, %v1402
    %v1939 = vpack.c.b16 %v1411, %v1403
    %v1940 = vpack.c.b16 %v1412, %v1404
    %v1941 = vpack.c.b16 %v1413, %v1405
    %v1942 = vpack.c.b16 %v1414, %v1406
    %v1943 = vpack.c.b16 %v1415, %v1407
    %v1944 = vpack.c.b16 %v1416, %v1408
    %v1945 = vpack.c.b16 %v1417, %v1409
    %v1946 = vpack.c.b16 %v1426, %v1418
    %v1947 = vpack.c.b16 %v1427, %v1419
    %v1948 = vpack.c.b16 %v1428, %v1420
    %v1949 = vpack.c.b16 %v1429, %v1421
    %v1950 = vpack.c.b16 %v1430, %v1422
    %v1951 = vpack.c.b16 %v1431, %v1423
    %v1952 = vpack.c.b16 %v1432, %v1424
    %v1953 = vpack.c.b16 %v1433, %v1425
    %v1954 = vpack.c.b16 %v1442, %v1434
    %v1955 = vpack.c.b16 %v1443, %v1435
    %v1956 = vpack.c.b16 %v1444, %v1436
    %v1957 = vpack.c.b16 %v1445, %v1437
    %v1958 = vpack.c.b16 %v1446, %v1438
    %v1959 = vpack.c.b16 %v1447, %v1439
    %v1960 = vpack.c.b16 %v1448, %v1440
    %v1961 = vpack.c.b16 %v1449, %v1441
    %v1962 = vpack.c.b16 %v1458, %v1450
    %v1963 = vpack.c.b16 %v1459, %v1451
    %v1964 = vpack.c.b16 %v1460, %v1452
    %v1965 = vpack.c.b16 %v1461, %v1453
    %v1966 = vpack.c.b16 %v1462, %v1454
    %v1967 = vpack.c.b16 %v1463, %v1455
    %v1968 = vpack.c.b16 %v1464, %v1456
    %v1969 = vpack.c.b16 %v1465, %v1457
    %v1970 = vpack.c.b16 %v1474, %v1466
    %v1971 = vpack.c.b16 %v1475, %v1467
    %v1972 = vpack.c.b16 %v1476, %v1468
    %v1973 = vpack.c.b16 %v1477, %v1469
    %v1974 = vpack.c.b16 %v1478, %v1470
    %v1975 = vpack.c.b16 %v1479, %v1471
    %v1976 = vpack.c.b16 %v1480, %v1472
    %v1977 = vpack.c.b16 %v1481, %v1473
    %v1978 = vpack.c.b16 %v1490, %v1482
    %v1979 = vpack.c.b16 %v1491, %v1483
    %v1980 = vpack.c.b16 %v1492, %v1484
    %v1981 = vpack.c.b16 %v1493, %v1485
    %v1982 = vpack.c.b16 %v1494, %v1486
    %v1983 = vpack.c.b16 %v1495, %v1487
    %v1984 = vpack.c.b16 %v1496, %v1488
    %v1985 = vpack.c.b16 %v1497, %v1489
    %v1986 = vpack.c.b16 %v1506, %v1498
    %v1987 = vpack.c.b16 %v1507, %v1499
    %v1988 = vpack.c.b16 %v1508, %v1500
    %v1989 = vpack.c.b16 %v1509, %v1501
    %v1990 = vpack.c.b16 %v1510, %v1502
    %v1991 = vpack.c.b16 %v1511, %v1503
    %v1992 = vpack.c.b16 %v1512, %v1504
    %v1993 = vpack.c.b16 %v1513, %v1505
    %v1994 = vpack.c.b16 %v1522, %v1514
    %v1995 = vpack.c.b16 %v1523, %v1515
    %v1996 = vpack.c.b16 %v1524, %v1516
    %v1997 = vpack.c.b16 %v1525, %v1517
    %v1998 = vpack.c.b16 %v1526, %v1518
    %v1999 = vpack.c.b16 %v1527, %v1519
    %v2000 = vpack.c.b16 %v1528, %v1520
    %v2001 = vpack.c.b16 %v1529, %v1521
    %v2002 = vpack.c.b16 %v1538, %v1530
    %v2003 = vpack.c.b16 %v1539, %v1531
    %v2004 = vpack.c.b16 %v1540, %v1532
    %v2005 = vpack.c.b16 %v1541, %v1533
    %v2006 = vpack.c.b16 %v1542, %v1534
    %v2007 = vpack.c.b16 %v1543, %v1535
    %v2008 = vpack.c.b16 %v1544, %v1536
    %v2009 = vpack.c.b16 %v1545, %v1537
    %v2010 = vpack.c.b16 %v1554, %v1546
    %v2011 = vpack.c.b16 %v1555, %v1547
    %v2012 = vpack.c.b16 %v1556, %v1548
    %v2013 = vpack.c.b16 %v1557, %v1549
    %v2014 = vpack.c.b16 %v1558, %v1550
    %v2015 = vpack.c.b16 %v1559, %v1551
    %v2016 = vpack.c.b16 %v1560, %v1552
    %v2017 = vpack.c.b16 %v1561, %v1553
    %v2018 = vpack.c.b16 %v1570, %v1562
    %v2019 = vpack.c.b16 %v1571, %v1563
    %v2020 = vpack.c.b16 %v1572, %v1564
    %v2021 = vpack.c.b16 %v1573, %v1565
    %v2022 = vpack.c.b16 %v1574, %v1566
    %v2023 = vpack.c.b16 %v1575, %v1567
    %v2024 = vpack.c.b16 %v1576, %v1568
    %v2025 = vpack.c.b16 %v1577, %v1569
    %v2026 = vpack.c.b16 %v1586, %v1578
    %v2027 = vpack.c.b16 %v1587, %v1579
    %v2028 = vpack.c.b16 %v1588, %v1580
    %v2029 = vpack.c.b16 %v1589, %v1581
    %v2030 = vpack.c.b16 %v1590, %v1582
    %v2031 = vpack.c.b16 %v1591, %v1583
    %v2032 = vpack.c.b16 %v1592, %v1584
    %v2033 = vpack.c.b16 %v1593, %v1585
    %v2034 = vpack.c.b16 %v1602, %v1594
    %v2035 = vpack.c.b16 %v1603, %v1595
    %v2036 = vpack.c.b16 %v1604, %v1596
    %v2037 = vpack.c.b16 %v1605, %v1597
    %v2038 = vpack.c.b16 %v1606, %v1598
    %v2039 = vpack.c.b16 %v1607, %v1599
    %v2040 = vpack.c.b16 %v1608, %v1600
    %v2041 = vpack.c.b16 %v1609, %v1601
    %v2042 = vpack.c.b16 %v1618, %v1610
    %v2043 = vpack.c.b16 %v1619, %v1611
    %v2044 = vpack.c.b16 %v1620, %v1612
    %v2045 = vpack.c.b16 %v1621, %v1613
    %v2046 = vpack.c.b16 %v1622, %v1614
    %v2047 = vpack.c.b16 %v1623, %v1615
    %v2048 = vpack.c.b16 %v1624, %v1616
    %v2049 = vpack.c.b16 %v1625, %v1617
    %v2050 = vpack.c.b16 %v1634, %v1626
    %v2051 = vpack.c.b16 %v1635, %v1627
    %v2052 = vpack.c.b16 %v1636, %v1628
    %v2053 = vpack.c.b16 %v1637, %v1629
    %v2054 = vpack.c.b16 %v1638, %v1630
    %v2055 = vpack.c.b16 %v1639, %v1631
    %v2056 = vpack.c.b16 %v1640, %v1632
    %v2057 = vpack.c.b16 %v1641, %v1633
    %v2058 = vpack.c.b16 %v1650, %v1642
    %v2059 = vpack.c.b16 %v1651, %v1643
    %v2060 = vpack.c.b16 %v1652, %v1644
    %v2061 = vpack.c.b16 %v1653, %v1645
    %v2062 = vpack.c.b16 %v1654, %v1646
    %v2063 = vpack.c.b16 %v1655, %v1647
    %v2064 = vpack.c.b16 %v1656, %v1648
    %v2065 = vpack.c.b16 %v1657, %v1649
    %v2066 = vpack.c.b16 %v1666, %v1658
    %v2067 = vpack.c.b16 %v1667, %v1659
    %v2068 = vpack.c.b16 %v1668, %v1660
    %v2069 = vpack.c.b16 %v1669, %v1661
    %v2070 = vpack.c.b16 %v1670, %v1662
    %v2071 = vpack.c.b16 %v1671, %v1663
    %v2072 = vpack.c.b16 %v1672, %v1664
    %v2073 = vpack.c.b16 %v1673, %v1665
    %v2074 = vpack.c.b16 %v1682, %v1674
    %v2075 = vpack.c.b16 %v1683, %v1675
    %v2076 = vpack.c.b16 %v1684, %v1676
    %v2077 = vpack.c.b16 %v1685, %v1677
    %v2078 = vpack.c.b16 %v1686, %v1678
    %v2079 = vpack.c.b16 %v1687, %v1679
    %v2080 = vpack.c.b16 %v1688, %v1680
    %v2081 = vpack.c.b16 %v1689, %v1681
    %v2082 = vpack.c.b16 %v1698, %v1690
    %v2083 = vpack.c.b16 %v1699, %v1691
    %v2084 = vpack.c.b16 %v1700, %v1692
    %v2085 = vpack.c.b16 %v1701, %v1693
    %v2086 = vpack.c.b16 %v1702, %v1694
    %v2087 = vpack.c.b16 %v1703, %v1695
    %v2088 = vpack.c.b16 %v1704, %v1696
    %v2089 = vpack.c.b16 %v1705, %v1697
    %2474 = vmatprep.subr.bf16.mxu0 %v1707
    %2475 = vmatpush1.bf16.msra.mxu0 %v1706
    %2476 = vmatprep.subr.bf16.mxu0 %v1715
    %2477 = vmatpush1.bf16.msra.mxu0 %v1714
    %2478 = vmatprep.subr.bf16.mxu0 %v1723
    %2479 = vmatpush1.bf16.msra.mxu0 %v1722
    %2480 = vmatprep.subr.bf16.mxu0 %v1731
    %2481 = vmatpush1.bf16.msra.mxu0 %v1730
    %2482 = vmatprep.subr.bf16.mxu0 %v1739
    %2483 = vmatpush1.bf16.msra.mxu0 %v1738
    %2484 = vmatprep.subr.bf16.mxu0 %v1747
    %2485 = vmatpush1.bf16.msra.mxu0 %v1746
    %2486 = vmatprep.subr.bf16.mxu0 %v1755
    %2487 = vmatpush1.bf16.msra.mxu0 %v1754
    %2488 = vmatprep.subr.bf16.mxu0 %v1763
    %2489 = vmatpush1.bf16.msra.mxu0 %v1762
    %2490 = vmatprep.subr.bf16.mxu0 %v1771
    %2491 = vmatpush1.bf16.msra.mxu0 %v1770
    %2492 = vmatprep.subr.bf16.mxu0 %v1779
    %2493 = vmatpush1.bf16.msra.mxu0 %v1778
    %2494 = vmatprep.subr.bf16.mxu0 %v1787
    %2495 = vmatpush1.bf16.msra.mxu0 %v1786
    %2496 = vmatprep.subr.bf16.mxu0 %v1795
    %2497 = vmatpush1.bf16.msra.mxu0 %v1794
    %2498 = vmatprep.subr.bf16.mxu0 %v1803
    %2499 = vmatpush1.bf16.msra.mxu0 %v1802
    %2500 = vmatprep.subr.bf16.mxu0 %v1811
    %2501 = vmatpush1.bf16.msra.mxu0 %v1810
    %2502 = vmatprep.subr.bf16.mxu0 %v1819
    %2503 = vmatpush1.bf16.msra.mxu0 %v1818
    %2504 = vmatprep.subr.bf16.mxu0 %v1827
    %2505 = vmatpush1.bf16.msra.mxu0 %v1826
    %2506 = vmatprep.mubr.bf16.mxu0 %v123
    %2507 = vmatmul.mubr.bf16.gmra.mrb[0].mxu0 %v122
    %v2508 = vpop.f32.mrb[0].mxu0
    %v2509 = vadd.f32 %v517, %v2508
    %v2510 = vpop.f32.mrb[0].mxu0
    %v2511 = vadd.f32 %v521, %v2510
    %v2512 = vpop.f32.mrb[0].mxu0
    %v2513 = vpop.f32.mrb[0].mxu0
    %2514 = vdwg.mxu0
    %2515 = vmatprep.subr.bf16.mxu0 %v1835
    %2516 = vmatpush1.bf16.msra.mxu0 %v1834
    %2517 = vmatprep.subr.bf16.mxu0 %v1843
    %2518 = vmatpush1.bf16.msra.mxu0 %v1842
    %2519 = vmatprep.subr.bf16.mxu0 %v1851
    %2520 = vmatpush1.bf16.msra.mxu0 %v1850
    %2521 = vmatprep.subr.bf16.mxu0 %v1859
    %2522 = vmatpush1.bf16.msra.mxu0 %v1858
    %2523 = vmatprep.subr.bf16.mxu0 %v1867
    %2524 = vmatpush1.bf16.msra.mxu0 %v1866
    %2525 = vmatprep.subr.bf16.mxu0 %v1875
    %2526 = vmatpush1.bf16.msra.mxu0 %v1874
    %2527 = vmatprep.subr.bf16.mxu0 %v1883
    %2528 = vmatpush1.bf16.msra.mxu0 %v1882
    %2529 = vmatprep.subr.bf16.mxu0 %v1891
    %2530 = vmatpush1.bf16.msra.mxu0 %v1890
    %2531 = vmatprep.subr.bf16.mxu0 %v1899
    %2532 = vmatpush1.bf16.msra.mxu0 %v1898
    %2533 = vmatprep.subr.bf16.mxu0 %v1907
    %2534 = vmatpush1.bf16.msra.mxu0 %v1906
    %2535 = vmatprep.subr.bf16.mxu0 %v1915
    %2536 = vmatpush1.bf16.msra.mxu0 %v1914
    %2537 = vmatprep.subr.bf16.mxu0 %v1923
    %2538 = vmatpush1.bf16.msra.mxu0 %v1922
    %2539 = vmatprep.subr.bf16.mxu0 %v1931
    %2540 = vmatpush1.bf16.msra.mxu0 %v1930
    %2541 = vmatprep.subr.bf16.mxu0 %v1939
    %2542 = vmatpush1.bf16.msra.mxu0 %v1938
    %2543 = vmatprep.subr.bf16.mxu0 %v1947
    %2544 = vmatpush1.bf16.msra.mxu0 %v1946
    %2545 = vmatprep.subr.bf16.mxu0 %v1955
    %2546 = vmatpush1.bf16.msra.mxu0 %v1954
    %2547 = vmatprep.mubr.bf16.mxu0 %v125
    %2548 = vmatmul.mubr.bf16.gmra.mrb[0].mxu0 %v124
    %v2549 = vpop.f32.mrb[0].mxu0
    %v2550 = vadd.f32 %v2509, %v2549
    %v2551 = vpop.f32.mrb[0].mxu0
    %v2552 = vadd.f32 %v2511, %v2551
    %v2553 = vpop.f32.mrb[0].mxu0
    %v2554 = vpop.f32.mrb[0].mxu0
    %2555 = vdwg.mxu0
    %2556 = vmatprep.subr.bf16.mxu0 %v1963
    %2557 = vmatpush1.bf16.msra.mxu0 %v1962
    %2558 = vmatprep.subr.bf16.mxu0 %v1971
    %2559 = vmatpush1.bf16.msra.mxu0 %v1970
    %2560 = vmatprep.subr.bf16.mxu0 %v1979
    %2561 = vmatpush1.bf16.msra.mxu0 %v1978
    %2562 = vmatprep.subr.bf16.mxu0 %v1987
    %2563 = vmatpush1.bf16.msra.mxu0 %v1986
    %2564 = vmatprep.subr.bf16.mxu0 %v1995
    %2565 = vmatpush1.bf16.msra.mxu0 %v1994
    %2566 = vmatprep.subr.bf16.mxu0 %v2003
    %2567 = vmatpush1.bf16.msra.mxu0 %v2002
    %2568 = vmatprep.subr.bf16.mxu0 %v2011
    %2569 = vmatpush1.bf16.msra.mxu0 %v2010
    %2570 = vmatprep.subr.bf16.mxu0 %v2019
    %2571 = vmatpush1.bf16.msra.mxu0 %v2018
    %2572 = vmatprep.subr.bf16.mxu0 %v2027
    %2573 = vmatpush1.bf16.msra.mxu0 %v2026
    %2574 = vmatprep.subr.bf16.mxu0 %v2035
    %2575 = vmatpush1.bf16.msra.mxu0 %v2034
    %2576 = vmatprep.subr.bf16.mxu0 %v2043
    %2577 = vmatpush1.bf16.msra.mxu0 %v2042
    %2578 = vmatprep.subr.bf16.mxu0 %v2051
    %2579 = vmatpush1.bf16.msra.mxu0 %v2050
    %2580 = vmatprep.subr.bf16.mxu0 %v2059
    %2581 = vmatpush1.bf16.msra.mxu0 %v2058
    %2582 = vmatprep.subr.bf16.mxu0 %v2067
    %2583 = vmatpush1.bf16.msra.mxu0 %v2066
    %2584 = vmatprep.subr.bf16.mxu0 %v2075
    %2585 = vmatpush1.bf16.msra.mxu0 %v2074
    %2586 = vmatprep.subr.bf16.mxu0 %v2083
    %2587 = vmatpush1.bf16.msra.mxu0 %v2082
    %2588 = vmatprep.mubr.bf16.mxu0 %v127
    %2589 = vmatmul.mubr.bf16.gmra.mrb[0].mxu0 %v126
    %v2590 = vpop.f32.mrb[0].mxu0
    %v2591 = vadd.f32 %v2550, %v2590
    %v2592 = vpop.f32.mrb[0].mxu0
    %v2593 = vadd.f32 %v2552, %v2592
    %v2594 = vpop.f32.mrb[0].mxu0
    %v2595 = vpop.f32.mrb[0].mxu0
    %2596 = vdwg.mxu0
    %2597 = vmatprep.subr.bf16.mxu0 %v1709
    %2598 = vmatpush1.bf16.msra.mxu0 %v1708
    %2599 = vmatprep.subr.bf16.mxu0 %v1717
    %2600 = vmatpush1.bf16.msra.mxu0 %v1716
    %2601 = vmatprep.subr.bf16.mxu0 %v1725
    %2602 = vmatpush1.bf16.msra.mxu0 %v1724
    %2603 = vmatprep.subr.bf16.mxu0 %v1733
    %2604 = vmatpush1.bf16.msra.mxu0 %v1732
    %2605 = vmatprep.subr.bf16.mxu0 %v1741
    %2606 = vmatpush1.bf16.msra.mxu0 %v1740
    %2607 = vmatprep.subr.bf16.mxu0 %v1749
    %2608 = vmatpush1.bf16.msra.mxu0 %v1748
    %2609 = vmatprep.subr.bf16.mxu0 %v1757
    %2610 = vmatpush1.bf16.msra.mxu0 %v1756
    %2611 = vmatprep.subr.bf16.mxu0 %v1765
    %2612 = vmatpush1.bf16.msra.mxu0 %v1764
    %2613 = vmatprep.subr.bf16.mxu0 %v1773
    %2614 = vmatpush1.bf16.msra.mxu0 %v1772
    %2615 = vmatprep.subr.bf16.mxu0 %v1781
    %2616 = vmatpush1.bf16.msra.mxu0 %v1780
    %2617 = vmatprep.subr.bf16.mxu0 %v1789
    %2618 = vmatpush1.bf16.msra.mxu0 %v1788
    %2619 = vmatprep.subr.bf16.mxu0 %v1797
    %2620 = vmatpush1.bf16.msra.mxu0 %v1796
    %2621 = vmatprep.subr.bf16.mxu0 %v1805
    %2622 = vmatpush1.bf16.msra.mxu0 %v1804
    %2623 = vmatprep.subr.bf16.mxu0 %v1813
    %2624 = vmatpush1.bf16.msra.mxu0 %v1812
    %2625 = vmatprep.subr.bf16.mxu0 %v1821
    %2626 = vmatpush1.bf16.msra.mxu0 %v1820
    %2627 = vmatprep.subr.bf16.mxu0 %v1829
    %2628 = vmatpush1.bf16.msra.mxu0 %v1828
    %2629 = vmatprep.mubr.bf16.mxu0 %v123
    %2630 = vmatmul.mubr.bf16.gmra.mrb[0].mxu0 %v122
    %v2631 = vpop.f32.mrb[0].mxu0
    %v2632 = vadd.f32 %v525, %v2631
    %v2633 = vpop.f32.mrb[0].mxu0
    %v2634 = vadd.f32 %v529, %v2633
    %v2635 = vpop.f32.mrb[0].mxu0
    %v2636 = vpop.f32.mrb[0].mxu0
    %2637 = vdwg.mxu0
    %2638 = vmatprep.subr.bf16.mxu0 %v1837
    %2639 = vmatpush1.bf16.msra.mxu0 %v1836
    %2640 = vmatprep.subr.bf16.mxu0 %v1845
    %2641 = vmatpush1.bf16.msra.mxu0 %v1844
    %2642 = vmatprep.subr.bf16.mxu0 %v1853
    %2643 = vmatpush1.bf16.msra.mxu0 %v1852
    %2644 = vmatprep.subr.bf16.mxu0 %v1861
    %2645 = vmatpush1.bf16.msra.mxu0 %v1860
    %2646 = vmatprep.subr.bf16.mxu0 %v1869
    %2647 = vmatpush1.bf16.msra.mxu0 %v1868
    %2648 = vmatprep.subr.bf16.mxu0 %v1877
    %2649 = vmatpush1.bf16.msra.mxu0 %v1876
    %2650 = vmatprep.subr.bf16.mxu0 %v1885
    %2651 = vmatpush1.bf16.msra.mxu0 %v1884
    %2652 = vmatprep.subr.bf16.mxu0 %v1893
    %2653 = vmatpush1.bf16.msra.mxu0 %v1892
    %2654 = vmatprep.subr.bf16.mxu0 %v1901
    %2655 = vmatpush1.bf16.msra.mxu0 %v1900
    %2656 = vmatprep.subr.bf16.mxu0 %v1909
    %2657 = vmatpush1.bf16.msra.mxu0 %v1908
    %2658 = vmatprep.subr.bf16.mxu0 %v1917
    %2659 = vmatpush1.bf16.msra.mxu0 %v1916
    %2660 = vmatprep.subr.bf16.mxu0 %v1925
    %2661 = vmatpush1.bf16.msra.mxu0 %v1924
    %2662 = vmatprep.subr.bf16.mxu0 %v1933
    %2663 = vmatpush1.bf16.msra.mxu0 %v1932
    %2664 = vmatprep.subr.bf16.mxu0 %v1941
    %2665 = vmatpush1.bf16.msra.mxu0 %v1940
    %2666 = vmatprep.subr.bf16.mxu0 %v1949
    %2667 = vmatpush1.bf16.msra.mxu0 %v1948
    %2668 = vmatprep.subr.bf16.mxu0 %v1957
    %2669 = vmatpush1.bf16.msra.mxu0 %v1956
    %2670 = vmatprep.mubr.bf16.mxu0 %v125
    %2671 = vmatmul.mubr.bf16.gmra.mrb[0].mxu0 %v124
    %v2672 = vpop.f32.mrb[0].mxu0
    %v2673 = vadd.f32 %v2632, %v2672
    %v2674 = vpop.f32.mrb[0].mxu0
    %v2675 = vadd.f32 %v2634, %v2674
    %v2676 = vpop.f32.mrb[0].mxu0
    %v2677 = vpop.f32.mrb[0].mxu0
    %2678 = vdwg.mxu0
    %2679 = vmatprep.subr.bf16.mxu0 %v1965
    %2680 = vmatpush1.bf16.msra.mxu0 %v1964
    %2681 = vmatprep.subr.bf16.mxu0 %v1973
    %2682 = vmatpush1.bf16.msra.mxu0 %v1972
    %2683 = vmatprep.subr.bf16.mxu0 %v1981
    %2684 = vmatpush1.bf16.msra.mxu0 %v1980
    %2685 = vmatprep.subr.bf16.mxu0 %v1989
    %2686 = vmatpush1.bf16.msra.mxu0 %v1988
    %2687 = vmatprep.subr.bf16.mxu0 %v1997
    %2688 = vmatpush1.bf16.msra.mxu0 %v1996
    %2689 = vmatprep.subr.bf16.mxu0 %v2005
    %2690 = vmatpush1.bf16.msra.mxu0 %v2004
    %2691 = vmatprep.subr.bf16.mxu0 %v2013
    %2692 = vmatpush1.bf16.msra.mxu0 %v2012
    %2693 = vmatprep.subr.bf16.mxu0 %v2021
    %2694 = vmatpush1.bf16.msra.mxu0 %v2020
    %2695 = vmatprep.subr.bf16.mxu0 %v2029
    %2696 = vmatpush1.bf16.msra.mxu0 %v2028
    %2697 = vmatprep.subr.bf16.mxu0 %v2037
    %2698 = vmatpush1.bf16.msra.mxu0 %v2036
    %2699 = vmatprep.subr.bf16.mxu0 %v2045
    %2700 = vmatpush1.bf16.msra.mxu0 %v2044
    %2701 = vmatprep.subr.bf16.mxu0 %v2053
    %2702 = vmatpush1.bf16.msra.mxu0 %v2052
    %2703 = vmatprep.subr.bf16.mxu0 %v2061
    %2704 = vmatpush1.bf16.msra.mxu0 %v2060
    %2705 = vmatprep.subr.bf16.mxu0 %v2069
    %2706 = vmatpush1.bf16.msra.mxu0 %v2068
    %2707 = vmatprep.subr.bf16.mxu0 %v2077
    %2708 = vmatpush1.bf16.msra.mxu0 %v2076
    %2709 = vmatprep.subr.bf16.mxu0 %v2085
    %2710 = vmatpush1.bf16.msra.mxu0 %v2084
    %2711 = vmatprep.mubr.bf16.mxu0 %v127
    %2712 = vmatmul.mubr.bf16.gmra.mrb[0].mxu0 %v126
    %v2713 = vpop.f32.mrb[0].mxu0
    %v2714 = vadd.f32 %v2673, %v2713
    %v2715 = vpop.f32.mrb[0].mxu0
    %v2716 = vadd.f32 %v2675, %v2715
    %v2717 = vpop.f32.mrb[0].mxu0
    %v2718 = vpop.f32.mrb[0].mxu0
    %2719 = vdwg.mxu0
    %2720 = vmatprep.subr.bf16.mxu0 %v1711
    %2721 = vmatpush1.bf16.msra.mxu0 %v1710
    %2722 = vmatprep.subr.bf16.mxu0 %v1719
    %2723 = vmatpush1.bf16.msra.mxu0 %v1718
    %2724 = vmatprep.subr.bf16.mxu0 %v1727
    %2725 = vmatpush1.bf16.msra.mxu0 %v1726
    %2726 = vmatprep.subr.bf16.mxu0 %v1735
    %2727 = vmatpush1.bf16.msra.mxu0 %v1734
    %2728 = vmatprep.subr.bf16.mxu0 %v1743
    %2729 = vmatpush1.bf16.msra.mxu0 %v1742
    %2730 = vmatprep.subr.bf16.mxu0 %v1751
    %2731 = vmatpush1.bf16.msra.mxu0 %v1750
    %2732 = vmatprep.subr.bf16.mxu0 %v1759
    %2733 = vmatpush1.bf16.msra.mxu0 %v1758
    %2734 = vmatprep.subr.bf16.mxu0 %v1767
    %2735 = vmatpush1.bf16.msra.mxu0 %v1766
    %2736 = vmatprep.subr.bf16.mxu0 %v1775
    %2737 = vmatpush1.bf16.msra.mxu0 %v1774
    %2738 = vmatprep.subr.bf16.mxu0 %v1783
    %2739 = vmatpush1.bf16.msra.mxu0 %v1782
    %2740 = vmatprep.subr.bf16.mxu0 %v1791
    %2741 = vmatpush1.bf16.msra.mxu0 %v1790
    %2742 = vmatprep.subr.bf16.mxu0 %v1799
    %2743 = vmatpush1.bf16.msra.mxu0 %v1798
    %2744 = vmatprep.subr.bf16.mxu0 %v1807
    %2745 = vmatpush1.bf16.msra.mxu0 %v1806
    %2746 = vmatprep.subr.bf16.mxu0 %v1815
    %2747 = vmatpush1.bf16.msra.mxu0 %v1814
    %2748 = vmatprep.subr.bf16.mxu0 %v1823
    %2749 = vmatpush1.bf16.msra.mxu0 %v1822
    %2750 = vmatprep.subr.bf16.mxu0 %v1831
    %2751 = vmatpush1.bf16.msra.mxu0 %v1830
    %2752 = vmatprep.mubr.bf16.mxu0 %v123
    %2753 = vmatmul.mubr.bf16.gmra.mrb[0].mxu0 %v122
    %v2754 = vpop.f32.mrb[0].mxu0
    %v2755 = vadd.f32 %v533, %v2754
    %v2756 = vpop.f32.mrb[0].mxu0
    %v2757 = vadd.f32 %v537, %v2756
    %v2758 = vpop.f32.mrb[0].mxu0
    %v2759 = vpop.f32.mrb[0].mxu0
    %2760 = vdwg.mxu0
    %2761 = vmatprep.subr.bf16.mxu0 %v1839
    %2762 = vmatpush1.bf16.msra.mxu0 %v1838
    %2763 = vmatprep.subr.bf16.mxu0 %v1847
    %2764 = vmatpush1.bf16.msra.mxu0 %v1846
    %2765 = vmatprep.subr.bf16.mxu0 %v1855
    %2766 = vmatpush1.bf16.msra.mxu0 %v1854
    %2767 = vmatprep.subr.bf16.mxu0 %v1863
    %2768 = vmatpush1.bf16.msra.mxu0 %v1862
    %2769 = vmatprep.subr.bf16.mxu0 %v1871
    %2770 = vmatpush1.bf16.msra.mxu0 %v1870
    %2771 = vmatprep.subr.bf16.mxu0 %v1879
    %2772 = vmatpush1.bf16.msra.mxu0 %v1878
    %2773 = vmatprep.subr.bf16.mxu0 %v1887
    %2774 = vmatpush1.bf16.msra.mxu0 %v1886
    %2775 = vmatprep.subr.bf16.mxu0 %v1895
    %2776 = vmatpush1.bf16.msra.mxu0 %v1894
    %2777 = vmatprep.subr.bf16.mxu0 %v1903
    %2778 = vmatpush1.bf16.msra.mxu0 %v1902
    %2779 = vmatprep.subr.bf16.mxu0 %v1911
    %2780 = vmatpush1.bf16.msra.mxu0 %v1910
    %2781 = vmatprep.subr.bf16.mxu0 %v1919
    %2782 = vmatpush1.bf16.msra.mxu0 %v1918
    %2783 = vmatprep.subr.bf16.mxu0 %v1927
    %2784 = vmatpush1.bf16.msra.mxu0 %v1926
    %2785 = vmatprep.subr.bf16.mxu0 %v1935
    %2786 = vmatpush1.bf16.msra.mxu0 %v1934
    %2787 = vmatprep.subr.bf16.mxu0 %v1943
    %2788 = vmatpush1.bf16.msra.mxu0 %v1942
    %2789 = vmatprep.subr.bf16.mxu0 %v1951
    %2790 = vmatpush1.bf16.msra.mxu0 %v1950
    %2791 = vmatprep.subr.bf16.mxu0 %v1959
    %2792 = vmatpush1.bf16.msra.mxu0 %v1958
    %2793 = vmatprep.mubr.bf16.mxu0 %v125
    %2794 = vmatmul.mubr.bf16.gmra.mrb[0].mxu0 %v124
    %v2795 = vpop.f32.mrb[0].mxu0
    %v2796 = vadd.f32 %v2755, %v2795
    %v2797 = vpop.f32.mrb[0].mxu0
    %v2798 = vadd.f32 %v2757, %v2797
    %v2799 = vpop.f32.mrb[0].mxu0
    %v2800 = vpop.f32.mrb[0].mxu0
    %2801 = vdwg.mxu0
    %2802 = vmatprep.subr.bf16.mxu0 %v1967
    %2803 = vmatpush1.bf16.msra.mxu0 %v1966
    %2804 = vmatprep.subr.bf16.mxu0 %v1975
    %2805 = vmatpush1.bf16.msra.mxu0 %v1974
    %2806 = vmatprep.subr.bf16.mxu0 %v1983
    %2807 = vmatpush1.bf16.msra.mxu0 %v1982
    %2808 = vmatprep.subr.bf16.mxu0 %v1991
    %2809 = vmatpush1.bf16.msra.mxu0 %v1990
    %2810 = vmatprep.subr.bf16.mxu0 %v1999
    %2811 = vmatpush1.bf16.msra.mxu0 %v1998
    %2812 = vmatprep.subr.bf16.mxu0 %v2007
    %2813 = vmatpush1.bf16.msra.mxu0 %v2006
    %2814 = vmatprep.subr.bf16.mxu0 %v2015
    %2815 = vmatpush1.bf16.msra.mxu0 %v2014
    %2816 = vmatprep.subr.bf16.mxu0 %v2023
    %2817 = vmatpush1.bf16.msra.mxu0 %v2022
    %2818 = vmatprep.subr.bf16.mxu0 %v2031
    %2819 = vmatpush1.bf16.msra.mxu0 %v2030
    %2820 = vmatprep.subr.bf16.mxu0 %v2039
    %2821 = vmatpush1.bf16.msra.mxu0 %v2038
    %2822 = vmatprep.subr.bf16.mxu0 %v2047
    %2823 = vmatpush1.bf16.msra.mxu0 %v2046
    %2824 = vmatprep.subr.bf16.mxu0 %v2055
    %2825 = vmatpush1.bf16.msra.mxu0 %v2054
    %2826 = vmatprep.subr.bf16.mxu0 %v2063
    %2827 = vmatpush1.bf16.msra.mxu0 %v2062
    %2828 = vmatprep.subr.bf16.mxu0 %v2071
    %2829 = vmatpush1.bf16.msra.mxu0 %v2070
    %2830 = vmatprep.subr.bf16.mxu0 %v2079
    %2831 = vmatpush1.bf16.msra.mxu0 %v2078
    %2832 = vmatprep.subr.bf16.mxu0 %v2087
    %2833 = vmatpush1.bf16.msra.mxu0 %v2086
    %2834 = vmatprep.mubr.bf16.mxu0 %v127
    %2835 = vmatmul.mubr.bf16.gmra.mrb[0].mxu0 %v126
    %v2836 = vpop.f32.mrb[0].mxu0
    %v2837 = vadd.f32 %v2796, %v2836
    %v2838 = vpop.f32.mrb[0].mxu0
    %v2839 = vadd.f32 %v2798, %v2838
    %v2840 = vpop.f32.mrb[0].mxu0
    %v2841 = vpop.f32.mrb[0].mxu0
    %2842 = vdwg.mxu0
    %2843 = vmatprep.subr.bf16.mxu0 %v1713
    %2844 = vmatpush1.bf16.msra.mxu0 %v1712
    %2845 = vmatprep.subr.bf16.mxu0 %v1721
    %2846 = vmatpush1.bf16.msra.mxu0 %v1720
    %2847 = vmatprep.subr.bf16.mxu0 %v1729
    %2848 = vmatpush1.bf16.msra.mxu0 %v1728
    %2849 = vmatprep.subr.bf16.mxu0 %v1737
    %2850 = vmatpush1.bf16.msra.mxu0 %v1736
    %2851 = vmatprep.subr.bf16.mxu0 %v1745
    %2852 = vmatpush1.bf16.msra.mxu0 %v1744
    %2853 = vmatprep.subr.bf16.mxu0 %v1753
    %2854 = vmatpush1.bf16.msra.mxu0 %v1752
    %2855 = vmatprep.subr.bf16.mxu0 %v1761
    %2856 = vmatpush1.bf16.msra.mxu0 %v1760
    %2857 = vmatprep.subr.bf16.mxu0 %v1769
    %2858 = vmatpush1.bf16.msra.mxu0 %v1768
    %2859 = vmatprep.subr.bf16.mxu0 %v1777
    %2860 = vmatpush1.bf16.msra.mxu0 %v1776
    %2861 = vmatprep.subr.bf16.mxu0 %v1785
    %2862 = vmatpush1.bf16.msra.mxu0 %v1784
    %2863 = vmatprep.subr.bf16.mxu0 %v1793
    %2864 = vmatpush1.bf16.msra.mxu0 %v1792
    %2865 = vmatprep.subr.bf16.mxu0 %v1801
    %2866 = vmatpush1.bf16.msra.mxu0 %v1800
    %2867 = vmatprep.subr.bf16.mxu0 %v1809
    %2868 = vmatpush1.bf16.msra.mxu0 %v1808
    %2869 = vmatprep.subr.bf16.mxu0 %v1817
    %2870 = vmatpush1.bf16.msra.mxu0 %v1816
    %2871 = vmatprep.subr.bf16.mxu0 %v1825
    %2872 = vmatpush1.bf16.msra.mxu0 %v1824
    %2873 = vmatprep.subr.bf16.mxu0 %v1833
    %2874 = vmatpush1.bf16.msra.mxu0 %v1832
    %2875 = vmatprep.mubr.bf16.mxu0 %v123
    %2876 = vmatmul.mubr.bf16.gmra.mrb[0].mxu0 %v122
    %v2877 = vpop.f32.mrb[0].mxu0
    %v2878 = vadd.f32 %v541, %v2877
    %v2879 = vpop.f32.mrb[0].mxu0
    %v2880 = vadd.f32 %v545, %v2879
    %v2881 = vpop.f32.mrb[0].mxu0
    %v2882 = vpop.f32.mrb[0].mxu0
    %2883 = vdwg.mxu0
    %2884 = vmatprep.subr.bf16.mxu0 %v1841
    %2885 = vmatpush1.bf16.msra.mxu0 %v1840
    %2886 = vmatprep.subr.bf16.mxu0 %v1849
    %2887 = vmatpush1.bf16.msra.mxu0 %v1848
    %2888 = vmatprep.subr.bf16.mxu0 %v1857
    %2889 = vmatpush1.bf16.msra.mxu0 %v1856
    %2890 = vmatprep.subr.bf16.mxu0 %v1865
    %2891 = vmatpush1.bf16.msra.mxu0 %v1864
    %2892 = vmatprep.subr.bf16.mxu0 %v1873
    %2893 = vmatpush1.bf16.msra.mxu0 %v1872
    %2894 = vmatprep.subr.bf16.mxu0 %v1881
    %2895 = vmatpush1.bf16.msra.mxu0 %v1880
    %2896 = vmatprep.subr.bf16.mxu0 %v1889
    %2897 = vmatpush1.bf16.msra.mxu0 %v1888
    %2898 = vmatprep.subr.bf16.mxu0 %v1897
    %2899 = vmatpush1.bf16.msra.mxu0 %v1896
    %2900 = vmatprep.subr.bf16.mxu0 %v1905
    %2901 = vmatpush1.bf16.msra.mxu0 %v1904
    %2902 = vmatprep.subr.bf16.mxu0 %v1913
    %2903 = vmatpush1.bf16.msra.mxu0 %v1912
    %2904 = vmatprep.subr.bf16.mxu0 %v1921
    %2905 = vmatpush1.bf16.msra.mxu0 %v1920
    %2906 = vmatprep.subr.bf16.mxu0 %v1929
    %2907 = vmatpush1.bf16.msra.mxu0 %v1928
    %2908 = vmatprep.subr.bf16.mxu0 %v1937
    %2909 = vmatpush1.bf16.msra.mxu0 %v1936
    %2910 = vmatprep.subr.bf16.mxu0 %v1945
    %2911 = vmatpush1.bf16.msra.mxu0 %v1944
    %2912 = vmatprep.subr.bf16.mxu0 %v1953
    %2913 = vmatpush1.bf16.msra.mxu0 %v1952
    %2914 = vmatprep.subr.bf16.mxu0 %v1961
    %2915 = vmatpush1.bf16.msra.mxu0 %v1960
    %2916 = vmatprep.mubr.bf16.mxu0 %v125
    %2917 = vmatmul.mubr.bf16.gmra.mrb[0].mxu0 %v124
    %v2918 = vpop.f32.mrb[0].mxu0
    %v2919 = vadd.f32 %v2878, %v2918
    %v2920 = vpop.f32.mrb[0].mxu0
    %v2921 = vadd.f32 %v2880, %v2920
    %v2922 = vpop.f32.mrb[0].mxu0
    %v2923 = vpop.f32.mrb[0].mxu0
    %2924 = vdwg.mxu0
    %2925 = vmatprep.subr.bf16.mxu0 %v1969
    %2926 = vmatpush1.bf16.msra.mxu0 %v1968
    %2927 = vmatprep.subr.bf16.mxu0 %v1977
    %2928 = vmatpush1.bf16.msra.mxu0 %v1976
    %2929 = vmatprep.subr.bf16.mxu0 %v1985
    %2930 = vmatpush1.bf16.msra.mxu0 %v1984
    %2931 = vmatprep.subr.bf16.mxu0 %v1993
    %2932 = vmatpush1.bf16.msra.mxu0 %v1992
    %2933 = vmatprep.subr.bf16.mxu0 %v2001
    %2934 = vmatpush1.bf16.msra.mxu0 %v2000
    %2935 = vmatprep.subr.bf16.mxu0 %v2009
    %2936 = vmatpush1.bf16.msra.mxu0 %v2008
    %2937 = vmatprep.subr.bf16.mxu0 %v2017
    %2938 = vmatpush1.bf16.msra.mxu0 %v2016
    %2939 = vmatprep.subr.bf16.mxu0 %v2025
    %2940 = vmatpush1.bf16.msra.mxu0 %v2024
    %2941 = vmatprep.subr.bf16.mxu0 %v2033
    %2942 = vmatpush1.bf16.msra.mxu0 %v2032
    %2943 = vmatprep.subr.bf16.mxu0 %v2041
    %2944 = vmatpush1.bf16.msra.mxu0 %v2040
    %2945 = vmatprep.subr.bf16.mxu0 %v2049
    %2946 = vmatpush1.bf16.msra.mxu0 %v2048
    %2947 = vmatprep.subr.bf16.mxu0 %v2057
    %2948 = vmatpush1.bf16.msra.mxu0 %v2056
    %2949 = vmatprep.subr.bf16.mxu0 %v2065
    %2950 = vmatpush1.bf16.msra.mxu0 %v2064
    %2951 = vmatprep.subr.bf16.mxu0 %v2073
    %2952 = vmatpush1.bf16.msra.mxu0 %v2072
    %2953 = vmatprep.subr.bf16.mxu0 %v2081
    %2954 = vmatpush1.bf16.msra.mxu0 %v2080
    %2955 = vmatprep.subr.bf16.mxu0 %v2089
    %2956 = vmatpush1.bf16.msra.mxu0 %v2088
    %2957 = vmatprep.mubr.bf16.mxu0 %v127
    %2958 = vmatmul.mubr.bf16.gmra.mrb[0].mxu0 %v126
    %v2959 = vpop.f32.mrb[0].mxu0
    %v2960 = vadd.f32 %v2919, %v2959
    %v2961 = vpop.f32.mrb[0].mxu0
    %v2962 = vadd.f32 %v2921, %v2961
    %v2963 = vpop.f32.mrb[0].mxu0
    %v2964 = vpop.f32.mrb[0].mxu0
    %2965 = vdwg.mxu0
    %v2974 = vcombine.low %v2591, %v2593
    %v2975 = vcombine.low %v2714, %v2716
    %v2977 = vunpack.c.l.s4 1983009808
    %v2978 = vunpack.c.0.s8 %v2977
    %v2979 = vlaneseq
    %v2980 = vshrl.u32 %v2979, 7
    %v2981 = vsub.s32 %v2978, %v2980
    %v2982 = vrot.slane %v2974, %v2981
    %v2984 = vunpack.c.l.s4 1983009808
    %v2985 = vunpack.c.0.s8 %v2984
    %v2986 = vlaneseq
    %v2987 = vshrl.u32 %v2986, 7
    %v2988 = vsub.s32 %v2985, %v2987
    %v2989 = vrot.slane %v2975, %v2988
    %v2990 = vcombine.low %v2982, %v2989
    %v2991 = vcombine.low %v2837, %v2839
    %v2992 = vcombine.low %v2960, %v2962
    %v2994 = vunpack.c.l.s4 1983009808
    %v2995 = vunpack.c.0.s8 %v2994
    %v2996 = vlaneseq
    %v2997 = vshrl.u32 %v2996, 7
    %v2998 = vsub.s32 %v2995, %v2997
    %v2999 = vrot.slane %v2991, %v2998
    %v3001 = vunpack.c.l.s4 1983009808
    %v3002 = vunpack.c.0.s8 %v3001
    %v3003 = vlaneseq
    %v3004 = vshrl.u32 %v3003, 7
    %v3005 = vsub.s32 %v3002, %v3004
    %v3006 = vrot.slane %v2992, %v3005
    %v3007 = vcombine.low %v2999, %v3006
    %3010 = vst [vmem:[%s6] sm:$0xff] %v2990
    %3011 = vst [vmem:[%s6 + $0x8] sm:$0xff] %v3007
    %v3012 = vld [vmem:[#allocation6] sm:$0x3]
    %v3013 = vld [vmem:[#allocation7] sm:$0xff]
    %v3014 = vld [vmem:[#allocation7 + $0x8] sm:$0xff]
    %v3015 = vld [vmem:[#allocation9] sm:$0x1]
    %v3017 = vlaneseq
    %v3018 = vshrl.u32 %v3017, 7
    %v3019 = vsub.s32 0, %v3018
    %v3020 = vrot.slane %v3015, %v3019
    %vm3022 = vcmask 130048
    %v3024 = vsel %vm3022, %v3012, 0
    %3026 = vmatprep.subr.mxu0 0.0
    %3027 = vmatpush1.msra.mxu0 %v3013
    %3028 = vmatprep.subr.mxu0 0.0
    %3029 = vmatpush1.msra.mxu0 %v3014
    %3030 = vmatprep.subr.mxu0 0.0
    %3031 = vmatpush1.msra.mxu0 0.0
    %3032 = vmatprep.subr.mxu0 0.0
    %3033 = vmatpush1.msra.mxu0 0.0
    %3034 = vmatprep.subr.mxu0 0.0
    %3035 = vmatpush1.msra.mxu0 0.0
    %3036 = vmatprep.subr.mxu0 0.0
    %3037 = vmatpush1.msra.mxu0 0.0
    %3038 = vmatprep.subr.mxu0 0.0
    %3039 = vmatpush1.msra.mxu0 0.0
    %3040 = vmatprep.subr.mxu0 0.0
    %3041 = vmatpush1.msra.mxu0 0.0
    %3042 = vmatprep.subr.mxu0 0.0
    %3043 = vmatpush1.msra.mxu0 0.0
    %3044 = vmatprep.subr.mxu0 0.0
    %3045 = vmatpush1.msra.mxu0 0.0
    %3046 = vmatprep.subr.mxu0 0.0
    %3047 = vmatpush1.msra.mxu0 0.0
    %3048 = vmatprep.subr.mxu0 0.0
    %3049 = vmatpush1.msra.mxu0 0.0
    %3050 = vmatprep.subr.mxu0 0.0
    %3051 = vmatpush1.msra.mxu0 0.0
    %3052 = vmatprep.subr.mxu0 0.0
    %3053 = vmatpush1.msra.mxu0 0.0
    %3054 = vmatprep.subr.mxu0 0.0
    %3055 = vmatpush1.msra.mxu0 0.0
    %3056 = vmatprep.subr.mxu0 0.0
    %3057 = vmatpush1.msra.mxu0 0.0
    %3058 = vmatprep.subr.mxu0 0.0
    %3059 = vmatpush1.msra.mxu0 0.0
    %3060 = vmatprep.subr.mxu0 0.0
    %3061 = vmatpush1.msra.mxu0 0.0
    %3062 = vmatprep.subr.mxu0 0.0
    %3063 = vmatpush1.msra.mxu0 0.0
    %3064 = vmatprep.subr.mxu0 0.0
    %3065 = vmatpush1.msra.mxu0 0.0
    %3066 = vmatprep.subr.mxu0 0.0
    %3067 = vmatpush1.msra.mxu0 0.0
    %3068 = vmatprep.subr.mxu0 0.0
    %3069 = vmatpush1.msra.mxu0 0.0
    %3070 = vmatprep.subr.mxu0 0.0
    %3071 = vmatpush1.msra.mxu0 0.0
    %3072 = vmatprep.subr.mxu0 0.0
    %3073 = vmatpush1.msra.mxu0 0.0
    %3074 = vmatprep.subr.mxu0 0.0
    %3075 = vmatpush1.msra.mxu0 0.0
    %3076 = vmatprep.subr.mxu0 0.0
    %3077 = vmatpush1.msra.mxu0 0.0
    %3078 = vmatprep.subr.mxu0 0.0
    %3079 = vmatpush1.msra.mxu0 0.0
    %3080 = vmatprep.subr.mxu0 0.0
    %3081 = vmatpush1.msra.mxu0 0.0
    %3082 = vmatprep.subr.mxu0 0.0
    %3083 = vmatpush1.msra.mxu0 0.0
    %3084 = vmatprep.subr.mxu0 0.0
    %3085 = vmatpush1.msra.mxu0 0.0
    %3086 = vmatprep.subr.mxu0 0.0
    %3087 = vmatpush1.msra.mxu0 0.0
    %3088 = vmatprep.subr.mxu0 0.0
    %3089 = vmatpush1.msra.mxu0 0.0
    %3090 = vmatprep.mubr.f32.mxu0 0.0
    %3091 = vmatmul.mubr.f32.gmra.mrb[0].mxu0 %v3024
    %v3092 = vpop.f32.mrb[0].mxu0
    %v3093 = vadd.f32 %v3020, %v3092
    %v3094 = vpop.f32.mrb[0].mxu0
    %3095 = vdwg.mxu0
    %vm3096 = vcmask 517120
    %3097 = vst.msk [vmem:[%s7] sm:$0x3] %vm3096, %v3093
    // Predicated region
    $region46: #{model_forward.3} parent=1 // pred_check
      _
    $region47: #{model_forward.3} parent=1 // pred_check_branch
      %3099 = sbr.rel (0) target = $region49
    $region48: #{model_forward.3} parent=1 // pred_region
      _
    $region49: #{model_forward.3} parent=1 // pred_fallthru
      _
    // Predicated region
    $region50: #{model_forward.3} parent=1 // pred_check
      _
    $region51: #{model_forward.3} parent=1 // pred_check_branch
      %3101 = sbr.rel (0) target = $region53
    $region52: #{model_forward.3} parent=1 // pred_region
      _
    $region53: #{model_forward.3} parent=1 // pred_fallthru
      _
    // Predicated region
    $region54: #{model_forward.3} parent=1 // pred_check
      _
    $region55: #{model_forward.3} parent=1 // pred_check_branch
      %3103 = sbr.rel (0) target = $region57
    $region56: #{model_forward.3} parent=1 // pred_region
      _
    $region57: #{model_forward.3} parent=1 // pred_fallthru
      _
    // Predicated region
    $region58: #{model_forward.3} parent=1 // pred_check
      _
    $region59: #{model_forward.3} parent=1 // pred_check_branch
      %3105 = sbr.rel (0) target = $region61
    $region60: #{model_forward.3} parent=1 // pred_region
      _
    $region61: #{model_forward.3} parent=1 // pred_fallthru
      _
    %3106 = vsyncpa [#allocation3], 1
    %3107 = vsyncpa [#allocation5], 1
    %3108 = vsyncpa [#allocation8], 1

// kernel: model_forward.4
$region0: #{model_forward.4}
  #allocation0 [shape = 'u32[]', space=smem, size = 0x4, offset = 0x4, fixed_abs, tag = 'smem constant byte address 0x4 - core index']
  #allocation1 [shape = 'u32[144,128]{1,0:T(1,128)}', space=vmem, size = 0x12000, scoped, tag = 'internal scratch']
  %s0 = inlined_call_operand.vmem [shape: f32[512,4], index: 0, kind: input, shape index: {}]
  %s1 = inlined_call_operand.vmem [shape: f32[32,4], index: 1, kind: input, shape index: {}]
  %s2 = inlined_call_operand.vmem [shape: f32[512,32], index: 2, kind: input, shape index: {}]
  %s3 = inlined_call_operand.vmem [shape: f32[32,512], index: 3, kind: input, shape index: {}]
  %s4 = inlined_call_operand.vmem [shape: f32[4,32], index: 4, kind: input, shape index: {}]
  %s5 = inlined_call_operand.vmem [shape: f32[1,32], index: 5, kind: input, shape index: {}]
  %s6 = inlined_call_operand.vmem [shape: f32[4,32], index: 6, kind: input, shape index: {}]
  %s7 = inlined_call_operand.vmem [shape: f32[32,32], index: 7, kind: input, shape index: {}]
  %s8 = inlined_call_operand.vmem [shape: f32[1,32], index: 8, kind: input, shape index: {}]
  %s9 = inlined_call_operand.vmem [shape: f32[4,32], index: 9, kind: input, shape index: {}]
  %s10 = inlined_call_operand.vmem [shape: f32[32,32], index: 10, kind: input, shape index: {}]
  %s11 = inlined_call_operand.vmem [shape: f32[1,32], index: 11, kind: input, shape index: {}]
  %s12 = inlined_call_operand.vmem [shape: f32[32,32], index: 12, kind: input, shape index: {}]
  %s13 = inlined_call_operand.vmem [shape: f32[32,32], index: 13, kind: input, shape index: {}]
  %s14 = inlined_call_operand.vmem [shape: f32[1,32], index: 14, kind: input, shape index: {}]
  %s15 = inlined_call_operand.vmem [shape: f32[32,32], index: 15, kind: input, shape index: {}]
  %s16 = inlined_call_operand.vmem [shape: f32[1,32], index: 16, kind: input, shape index: {}]
  %s17 = inlined_call_operand.vmem [shape: f32[1,32], index: 17, kind: input, shape index: {}]
  %s18 = inlined_call_operand.vmem [shape: f32[512,32], index: 18, kind: output, shape index: {}]
  %s19 = sld [smem:[#allocation0]]
  $region82: #{model_forward.4} parent=0
    _
  %s21 = ssub.s32 1, %s19
  %s22 = scalar_select 0, %s21, %s19
  // Predicated region
  $region2: #{model_forward.4} parent=0 // pred_check
    _
  $region3: #{model_forward.4} parent=0 // pred_check_branch
    %24 = sbr.rel (0) target = $region5
  $region4: #{model_forward.4} parent=0 // pred_region
    _
  $region5: #{model_forward.4} parent=0 // pred_fallthru
    _
  // Predicated region
  $region6: #{model_forward.4} parent=0 // pred_check
    _
  $region7: #{model_forward.4} parent=0 // pred_check_branch
    %26 = sbr.rel (0) target = $region9
  $region8: #{model_forward.4} parent=0 // pred_region
    _
  $region9: #{model_forward.4} parent=0 // pred_fallthru
    _
  // Predicated region
  $region10: #{model_forward.4} parent=0 // pred_check
    _
  $region11: #{model_forward.4} parent=0 // pred_check_branch
    %28 = sbr.rel (0) target = $region13
  $region12: #{model_forward.4} parent=0 // pred_region
    _
  $region13: #{model_forward.4} parent=0 // pred_fallthru
    _
  // Predicated region
  $region14: #{model_forward.4} parent=0 // pred_check
    _
  $region15: #{model_forward.4} parent=0 // pred_check_branch
    %30 = sbr.rel (0) target = $region17
  $region16: #{model_forward.4} parent=0 // pred_region
    _
  $region17: #{model_forward.4} parent=0 // pred_fallthru
    _
  // Predicated region
  $region18: #{model_forward.4} parent=0 // pred_check
    _
  $region19: #{model_forward.4} parent=0 // pred_check_branch
    %32 = sbr.rel (0) target = $region21
  $region20: #{model_forward.4} parent=0 // pred_region
    _
  $region21: #{model_forward.4} parent=0 // pred_fallthru
    _
  // Predicated region
  $region22: #{model_forward.4} parent=0 // pred_check
    _
  $region23: #{model_forward.4} parent=0 // pred_check_branch
    %34 = sbr.rel (0) target = $region25
  $region24: #{model_forward.4} parent=0 // pred_region
    _
  $region25: #{model_forward.4} parent=0 // pred_fallthru
    _
  // Predicated region
  $region26: #{model_forward.4} parent=0 // pred_check
    _
  $region27: #{model_forward.4} parent=0 // pred_check_branch
    %36 = sbr.rel (0) target = $region29
  $region28: #{model_forward.4} parent=0 // pred_region
    _
  $region29: #{model_forward.4} parent=0 // pred_fallthru
    _
  // Predicated region
  $region30: #{model_forward.4} parent=0 // pred_check
    _
  $region31: #{model_forward.4} parent=0 // pred_check_branch
    %38 = sbr.rel (0) target = $region33
  $region32: #{model_forward.4} parent=0 // pred_region
    _
  $region33: #{model_forward.4} parent=0 // pred_fallthru
    _
  // Predicated region
  $region34: #{model_forward.4} parent=0 // pred_check
    _
  $region35: #{model_forward.4} parent=0 // pred_check_branch
    %40 = sbr.rel (0) target = $region37
  $region36: #{model_forward.4} parent=0 // pred_region
    _
  $region37: #{model_forward.4} parent=0 // pred_fallthru
    _
  // Predicated region
  $region38: #{model_forward.4} parent=0 // pred_check
    _
  $region39: #{model_forward.4} parent=0 // pred_check_branch
    %42 = sbr.rel (0) target = $region41
  $region40: #{model_forward.4} parent=0 // pred_region
    _
  $region41: #{model_forward.4} parent=0 // pred_fallthru
    _
  // Predicated region
  $region42: #{model_forward.4} parent=0 // pred_check
    _
  $region43: #{model_forward.4} parent=0 // pred_check_branch
    %44 = sbr.rel (0) target = $region45
  $region44: #{model_forward.4} parent=0 // pred_region
    _
  $region45: #{model_forward.4} parent=0 // pred_fallthru
    _
  // Predicated region
  $region46: #{model_forward.4} parent=0 // pred_check
    _
  $region47: #{model_forward.4} parent=0 // pred_check_branch
    %46 = sbr.rel (0) target = $region49
  $region48: #{model_forward.4} parent=0 // pred_region
    _
  $region49: #{model_forward.4} parent=0 // pred_fallthru
    _
  // Predicated region
  $region50: #{model_forward.4} parent=0 // pred_check
    _
  $region51: #{model_forward.4} parent=0 // pred_check_branch
    %48 = sbr.rel (0) target = $region53
  $region52: #{model_forward.4} parent=0 // pred_region
    _
  $region53: #{model_forward.4} parent=0 // pred_fallthru
    _
  // Predicated region
  $region54: #{model_forward.4} parent=0 // pred_check
    _
  $region55: #{model_forward.4} parent=0 // pred_check_branch
    %50 = sbr.rel (0) target = $region57
  $region56: #{model_forward.4} parent=0 // pred_region
    _
  $region57: #{model_forward.4} parent=0 // pred_fallthru
    _
  // Predicated region
  $region58: #{model_forward.4} parent=0 // pred_check
    _
  $region59: #{model_forward.4} parent=0 // pred_check_branch
    %52 = sbr.rel (0) target = $region61
  $region60: #{model_forward.4} parent=0 // pred_region
    _
  $region61: #{model_forward.4} parent=0 // pred_fallthru
    _
  // Predicated region
  $region62: #{model_forward.4} parent=0 // pred_check
    _
  $region63: #{model_forward.4} parent=0 // pred_check_branch
    %54 = sbr.rel (0) target = $region65
  $region64: #{model_forward.4} parent=0 // pred_region
    _
  $region65: #{model_forward.4} parent=0 // pred_fallthru
    _
  // Predicated region
  $region66: #{model_forward.4} parent=0 // pred_check
    _
  $region67: #{model_forward.4} parent=0 // pred_check_branch
    %56 = sbr.rel (0) target = $region69
  $region68: #{model_forward.4} parent=0 // pred_region
    _
  $region69: #{model_forward.4} parent=0 // pred_fallthru
    _
  // Predicated region
  $region70: #{model_forward.4} parent=0 // pred_check
    _
  $region71: #{model_forward.4} parent=0 // pred_check_branch
    %58 = sbr.rel (0) target = $region73
  $region72: #{model_forward.4} parent=0 // pred_region
    _
  $region73: #{model_forward.4} parent=0 // pred_fallthru
    _
  %v59 = vld [vmem:[%s0] sm:$0xff]
  %v60 = vld [vmem:[%s0 + $0x8] sm:$0xff]
  %v61 = vld [vmem:[%s0 + $0x10] sm:$0xff]
  %v62 = vld [vmem:[%s0 + $0x18] sm:$0xff]
  %v63 = vld [vmem:[%s0 + $0x20] sm:$0xff]
  %v64 = vld [vmem:[%s0 + $0x28] sm:$0xff]
  %v65 = vld [vmem:[%s0 + $0x30] sm:$0xff]
  %v66 = vld [vmem:[%s0 + $0x38] sm:$0xff]
  %v67 = vld [vmem:[%s0 + $0x40] sm:$0xff]
  %v68 = vld [vmem:[%s0 + $0x48] sm:$0xff]
  %v69 = vld [vmem:[%s0 + $0x50] sm:$0xff]
  %v70 = vld [vmem:[%s0 + $0x58] sm:$0xff]
  %v71 = vld [vmem:[%s0 + $0x60] sm:$0xff]
  %v72 = vld [vmem:[%s0 + $0x68] sm:$0xff]
  %v73 = vld [vmem:[%s0 + $0x70] sm:$0xff]
  %v74 = vld [vmem:[%s0 + $0x78] sm:$0xff]
  %v75 = vld [vmem:[%s0 + $0x80] sm:$0xff]
  %v76 = vld [vmem:[%s0 + $0x88] sm:$0xff]
  %v77 = vld [vmem:[%s0 + $0x90] sm:$0xff]
  %v78 = vld [vmem:[%s0 + $0x98] sm:$0xff]
  %v79 = vld [vmem:[%s0 + $0xa0] sm:$0xff]
  %v80 = vld [vmem:[%s0 + $0xa8] sm:$0xff]
  %v81 = vld [vmem:[%s0 + $0xb0] sm:$0xff]
  %v82 = vld [vmem:[%s0 + $0xb8] sm:$0xff]
  %v83 = vld [vmem:[%s0 + $0xc0] sm:$0xff]
  %v84 = vld [vmem:[%s0 + $0xc8] sm:$0xff]
  %v85 = vld [vmem:[%s0 + $0xd0] sm:$0xff]
  %v86 = vld [vmem:[%s0 + $0xd8] sm:$0xff]
  %v87 = vld [vmem:[%s0 + $0xe0] sm:$0xff]
  %v88 = vld [vmem:[%s0 + $0xe8] sm:$0xff]
  %v89 = vld [vmem:[%s0 + $0xf0] sm:$0xff]
  %v90 = vld [vmem:[%s0 + $0xf8] sm:$0xff]
  %v91 = vld [vmem:[%s0 + $0x100] sm:$0xff]
  %v92 = vld [vmem:[%s0 + $0x108] sm:$0xff]
  %v93 = vld [vmem:[%s0 + $0x110] sm:$0xff]
  %v94 = vld [vmem:[%s0 + $0x118] sm:$0xff]
  %v95 = vld [vmem:[%s0 + $0x120] sm:$0xff]
  %v96 = vld [vmem:[%s0 + $0x128] sm:$0xff]
  %v97 = vld [vmem:[%s0 + $0x130] sm:$0xff]
  %v98 = vld [vmem:[%s0 + $0x138] sm:$0xff]
  %v99 = vld [vmem:[%s0 + $0x140] sm:$0xff]
  %v100 = vld [vmem:[%s0 + $0x148] sm:$0xff]
  %v101 = vld [vmem:[%s0 + $0x150] sm:$0xff]
  %v102 = vld [vmem:[%s0 + $0x158] sm:$0xff]
  %v103 = vld [vmem:[%s0 + $0x160] sm:$0xff]
  %v104 = vld [vmem:[%s0 + $0x168] sm:$0xff]
  %v105 = vld [vmem:[%s0 + $0x170] sm:$0xff]
  %v106 = vld [vmem:[%s0 + $0x178] sm:$0xff]
  %v107 = vld [vmem:[%s0 + $0x180] sm:$0xff]
  %v108 = vld [vmem:[%s0 + $0x188] sm:$0xff]
  %v109 = vld [vmem:[%s0 + $0x190] sm:$0xff]
  %v110 = vld [vmem:[%s0 + $0x198] sm:$0xff]
  %v111 = vld [vmem:[%s0 + $0x1a0] sm:$0xff]
  %v112 = vld [vmem:[%s0 + $0x1a8] sm:$0xff]
  %v113 = vld [vmem:[%s0 + $0x1b0] sm:$0xff]
  %v114 = vld [vmem:[%s0 + $0x1b8] sm:$0xff]
  %v115 = vld [vmem:[%s0 + $0x1c0] sm:$0xff]
  %v116 = vld [vmem:[%s0 + $0x1c8] sm:$0xff]
  %v117 = vld [vmem:[%s0 + $0x1d0] sm:$0xff]
  %v118 = vld [vmem:[%s0 + $0x1d8] sm:$0xff]
  %v119 = vld [vmem:[%s0 + $0x1e0] sm:$0xff]
  %v120 = vld [vmem:[%s0 + $0x1e8] sm:$0xff]
  %v121 = vld [vmem:[%s0 + $0x1f0] sm:$0xff]
  %v122 = vld [vmem:[%s0 + $0x1f8] sm:$0xff]
  %v123 = vld [vmem:[%s1] sm:$0xff]
  %v124 = vld [vmem:[%s1 + $0x8] sm:$0xff]
  %v125 = vld [vmem:[%s1 + $0x10] sm:$0xff]
  %v126 = vld [vmem:[%s1 + $0x18] sm:$0xff]
  %v127 = vld [vmem:[%s2] sm:$0xff]
  %v128 = vld [vmem:[%s2 + $0x8] sm:$0xff]
  %v129 = vld [vmem:[%s2 + $0x10] sm:$0xff]
  %v130 = vld [vmem:[%s2 + $0x18] sm:$0xff]
  %v131 = vld [vmem:[%s2 + $0x20] sm:$0xff]
  %v132 = vld [vmem:[%s2 + $0x28] sm:$0xff]
  %v133 = vld [vmem:[%s2 + $0x30] sm:$0xff]
  %v134 = vld [vmem:[%s2 + $0x38] sm:$0xff]
  %v135 = vld [vmem:[%s2 + $0x40] sm:$0xff]
  %v136 = vld [vmem:[%s2 + $0x48] sm:$0xff]
  %v137 = vld [vmem:[%s2 + $0x50] sm:$0xff]
  %v138 = vld [vmem:[%s2 + $0x58] sm:$0xff]
  %v139 = vld [vmem:[%s2 + $0x60] sm:$0xff]
  %v140 = vld [vmem:[%s2 + $0x68] sm:$0xff]
  %v141 = vld [vmem:[%s2 + $0x70] sm:$0xff]
  %v142 = vld [vmem:[%s2 + $0x78] sm:$0xff]
  %v143 = vld [vmem:[%s2 + $0x80] sm:$0xff]
  %v144 = vld [vmem:[%s2 + $0x88] sm:$0xff]
  %v145 = vld [vmem:[%s2 + $0x90] sm:$0xff]
  %v146 = vld [vmem:[%s2 + $0x98] sm:$0xff]
  %v147 = vld [vmem:[%s2 + $0xa0] sm:$0xff]
  %v148 = vld [vmem:[%s2 + $0xa8] sm:$0xff]
  %v149 = vld [vmem:[%s2 + $0xb0] sm:$0xff]
  %v150 = vld [vmem:[%s2 + $0xb8] sm:$0xff]
  %v151 = vld [vmem:[%s2 + $0xc0] sm:$0xff]
  %v152 = vld [vmem:[%s2 + $0xc8] sm:$0xff]
  %v153 = vld [vmem:[%s2 + $0xd0] sm:$0xff]
  %v154 = vld [vmem:[%s2 + $0xd8] sm:$0xff]
  %v155 = vld [vmem:[%s2 + $0xe0] sm:$0xff]
  %v156 = vld [vmem:[%s2 + $0xe8] sm:$0xff]
  %v157 = vld [vmem:[%s2 + $0xf0] sm:$0xff]
  %v158 = vld [vmem:[%s2 + $0xf8] sm:$0xff]
  %v159 = vld [vmem:[%s2 + $0x100] sm:$0xff]
  %v160 = vld [vmem:[%s2 + $0x108] sm:$0xff]
  %v161 = vld [vmem:[%s2 + $0x110] sm:$0xff]
  %v162 = vld [vmem:[%s2 + $0x118] sm:$0xff]
  %v163 = vld [vmem:[%s2 + $0x120] sm:$0xff]
  %v164 = vld [vmem:[%s2 + $0x128] sm:$0xff]
  %v165 = vld [vmem:[%s2 + $0x130] sm:$0xff]
  %v166 = vld [vmem:[%s2 + $0x138] sm:$0xff]
  %v167 = vld [vmem:[%s2 + $0x140] sm:$0xff]
  %v168 = vld [vmem:[%s2 + $0x148] sm:$0xff]
  %v169 = vld [vmem:[%s2 + $0x150] sm:$0xff]
  %v170 = vld [vmem:[%s2 + $0x158] sm:$0xff]
  %v171 = vld [vmem:[%s2 + $0x160] sm:$0xff]
  %v172 = vld [vmem:[%s2 + $0x168] sm:$0xff]
  %v173 = vld [vmem:[%s2 + $0x170] sm:$0xff]
  %v174 = vld [vmem:[%s2 + $0x178] sm:$0xff]
  %v175 = vld [vmem:[%s2 + $0x180] sm:$0xff]
  %v176 = vld [vmem:[%s2 + $0x188] sm:$0xff]
  %v177 = vld [vmem:[%s2 + $0x190] sm:$0xff]
  %v178 = vld [vmem:[%s2 + $0x198] sm:$0xff]
  %v179 = vld [vmem:[%s2 + $0x1a0] sm:$0xff]
  %v180 = vld [vmem:[%s2 + $0x1a8] sm:$0xff]
  %v181 = vld [vmem:[%s2 + $0x1b0] sm:$0xff]
  %v182 = vld [vmem:[%s2 + $0x1b8] sm:$0xff]
  %v183 = vld [vmem:[%s2 + $0x1c0] sm:$0xff]
  %v184 = vld [vmem:[%s2 + $0x1c8] sm:$0xff]
  %v185 = vld [vmem:[%s2 + $0x1d0] sm:$0xff]
  %v186 = vld [vmem:[%s2 + $0x1d8] sm:$0xff]
  %v187 = vld [vmem:[%s2 + $0x1e0] sm:$0xff]
  %v188 = vld [vmem:[%s2 + $0x1e8] sm:$0xff]
  %v189 = vld [vmem:[%s2 + $0x1f0] sm:$0xff]
  %v190 = vld [vmem:[%s2 + $0x1f8] sm:$0xff]
  %v191 = vld [vmem:[%s3] sm:$0xff]
  %v192 = vld [vmem:[%s3 + $0x8] sm:$0xff]
  %v193 = vld [vmem:[%s3 + $0x10] sm:$0xff]
  %v194 = vld [vmem:[%s3 + $0x18] sm:$0xff]
  %v195 = vld [vmem:[%s3 + $0x20] sm:$0xff]
  %v196 = vld [vmem:[%s3 + $0x28] sm:$0xff]
  %v197 = vld [vmem:[%s3 + $0x30] sm:$0xff]
  %v198 = vld [vmem:[%s3 + $0x38] sm:$0xff]
  %v199 = vld [vmem:[%s3 + $0x40] sm:$0xff]
  %v200 = vld [vmem:[%s3 + $0x48] sm:$0xff]
  %v201 = vld [vmem:[%s3 + $0x50] sm:$0xff]
  %v202 = vld [vmem:[%s3 + $0x58] sm:$0xff]
  %v203 = vld [vmem:[%s3 + $0x60] sm:$0xff]
  %v204 = vld [vmem:[%s3 + $0x68] sm:$0xff]
  %v205 = vld [vmem:[%s3 + $0x70] sm:$0xff]
  %v206 = vld [vmem:[%s3 + $0x78] sm:$0xff]
  %v207 = vld [vmem:[%s4] sm:$0xf]
  %v208 = vld [vmem:[%s5] sm:$0x1]
  %v209 = vld [vmem:[%s6] sm:$0xf]
  %v210 = vld [vmem:[%s7] sm:$0xff]
  %v211 = vld [vmem:[%s7 + $0x8] sm:$0xff]
  %v212 = vld [vmem:[%s7 + $0x10] sm:$0xff]
  %v213 = vld [vmem:[%s7 + $0x18] sm:$0xff]
  %v214 = vld [vmem:[%s8] sm:$0x1]
  %v215 = vld [vmem:[%s9] sm:$0xf]
  %vm216 = vcmask 31744
  %v218 = vsel %vm216, %v123, 0
  %v221 = vsel %vm216, %v124, 0
  %v224 = vsel %vm216, %v125, 0
  %v227 = vsel %vm216, %v126, 0
  %vm229 = vcmask 1043456
  %v231 = vsel %vm229, %v207, 0
  %233 = vmatprep.subr.mxu0 0.0
  %234 = vmatpush1.msra.mxu0 %v231
  %235 = vmatprep.subr.mxu0 0.0
  %236 = vmatpush1.msra.mxu0 0.0
  %237 = vmatprep.subr.mxu0 0.0
  %238 = vmatpush1.msra.mxu0 0.0
  %239 = vmatprep.subr.mxu0 0.0
  %240 = vmatpush1.msra.mxu0 0.0
  %241 = vmatprep.subr.mxu0 0.0
  %242 = vmatpush1.msra.mxu0 0.0
  %243 = vmatprep.subr.mxu0 0.0
  %244 = vmatpush1.msra.mxu0 0.0
  %245 = vmatprep.subr.mxu0 0.0
  %246 = vmatpush1.msra.mxu0 0.0
  %247 = vmatprep.subr.mxu0 0.0
  %248 = vmatpush1.msra.mxu0 0.0
  %249 = vmatprep.subr.mxu0 0.0
  %250 = vmatpush1.msra.mxu0 0.0
  %251 = vmatprep.subr.mxu0 0.0
  %252 = vmatpush1.msra.mxu0 0.0
  %253 = vmatprep.subr.mxu0 0.0
  %254 = vmatpush1.msra.mxu0 0.0
  %255 = vmatprep.subr.mxu0 0.0
  %256 = vmatpush1.msra.mxu0 0.0
  %257 = vmatprep.subr.mxu0 0.0
  %258 = vmatpush1.msra.mxu0 0.0
  %259 = vmatprep.subr.mxu0 0.0
  %260 = vmatpush1.msra.mxu0 0.0
  %261 = vmatprep.subr.mxu0 0.0
  %262 = vmatpush1.msra.mxu0 0.0
  %263 = vmatprep.subr.mxu0 0.0
  %264 = vmatpush1.msra.mxu0 0.0
  %265 = vmatprep.subr.mxu0 0.0
  %266 = vmatpush1.msra.mxu0 0.0
  %267 = vmatprep.subr.mxu0 0.0
  %268 = vmatpush1.msra.mxu0 0.0
  %269 = vmatprep.subr.mxu0 0.0
  %270 = vmatpush1.msra.mxu0 0.0
  %271 = vmatprep.subr.mxu0 0.0
  %272 = vmatpush1.msra.mxu0 0.0
  %273 = vmatprep.subr.mxu0 0.0
  %274 = vmatpush1.msra.mxu0 0.0
  %275 = vmatprep.subr.mxu0 0.0
  %276 = vmatpush1.msra.mxu0 0.0
  %277 = vmatprep.subr.mxu0 0.0
  %278 = vmatpush1.msra.mxu0 0.0
  %279 = vmatprep.subr.mxu0 0.0
  %280 = vmatpush1.msra.mxu0 0.0
  %281 = vmatprep.subr.mxu0 0.0
  %282 = vmatpush1.msra.mxu0 0.0
  %283 = vmatprep.subr.mxu0 0.0
  %284 = vmatpush1.msra.mxu0 0.0
  %285 = vmatprep.subr.mxu0 0.0
  %286 = vmatpush1.msra.mxu0 0.0
  %287 = vmatprep.subr.mxu0 0.0
  %288 = vmatpush1.msra.mxu0 0.0
  %289 = vmatprep.subr.mxu0 0.0
  %290 = vmatpush1.msra.mxu0 0.0
  %291 = vmatprep.subr.mxu0 0.0
  %292 = vmatpush1.msra.mxu0 0.0
  %293 = vmatprep.subr.mxu0 0.0
  %294 = vmatpush1.msra.mxu0 0.0
  %295 = vmatprep.subr.mxu0 0.0
  %296 = vmatpush1.msra.mxu0 0.0
  %297 = vmatprep.mubr.f32.mxu0 0.0
  %298 = vmatmul.mubr.f32.gmra.mrb[0].mxu0 %v218
  %v299 = vpop.f32.mrb[0].mxu0
  %v300 = vadd.f32 0.0, %v299
  %v301 = vpop.f32.mrb[0].mxu0
  %302 = vmatprep.mubr.f32.mxu0 0.0
  %303 = vmatmul.mubr.f32.gmra.mrb[0].mxu0 %v221
  %v304 = vpop.f32.mrb[0].mxu0
  %v305 = vadd.f32 0.0, %v304
  %v306 = vpop.f32.mrb[0].mxu0
  %307 = vmatprep.mubr.f32.mxu0 0.0
  %308 = vmatmul.mubr.f32.gmra.mrb[0].mxu0 %v224
  %v309 = vpop.f32.mrb[0].mxu0
  %v310 = vadd.f32 0.0, %v309
  %v311 = vpop.f32.mrb[0].mxu0
  %312 = vmatprep.mubr.f32.mxu0 0.0
  %313 = vmatmul.mubr.f32.gmra.mrb[0].mxu0 %v227
  %v314 = vpop.f32.mrb[0].mxu0
  %v315 = vadd.f32 0.0, %v314
  %v316 = vpop.f32.mrb[0].mxu0
  %317 = vdwg.mxu0
  %v319 = vlaneseq
  %v320 = vshrl.u32 %v319, 7
  %v321 = vsub.s32 0, %v320
  %v322 = vrot.slane %v208, %v321
  %vm324 = vcmask 261120
  %v326 = vsel %vm324, %v127, 0
  %v329 = vsel %vm324, %v128, 0
  %v332 = vsel %vm324, %v129, 0
  %v335 = vsel %vm324, %v130, 0
  %v338 = vsel %vm324, %v131, 0
  %v341 = vsel %vm324, %v132, 0
  %v344 = vsel %vm324, %v133, 0
  %v347 = vsel %vm324, %v134, 0
  %v350 = vsel %vm324, %v135, 0
  %v353 = vsel %vm324, %v136, 0
  %v356 = vsel %vm324, %v137, 0
  %v359 = vsel %vm324, %v138, 0
  %v362 = vsel %vm324, %v139, 0
  %v365 = vsel %vm324, %v140, 0
  %v368 = vsel %vm324, %v141, 0
  %v371 = vsel %vm324, %v142, 0
  %v374 = vsel %vm324, %v143, 0
  %v377 = vsel %vm324, %v144, 0
  %v380 = vsel %vm324, %v145, 0
  %v383 = vsel %vm324, %v146, 0
  %v386 = vsel %vm324, %v147, 0
  %v389 = vsel %vm324, %v148, 0
  %v392 = vsel %vm324, %v149, 0
  %v395 = vsel %vm324, %v150, 0
  %v398 = vsel %vm324, %v151, 0
  %v401 = vsel %vm324, %v152, 0
  %v404 = vsel %vm324, %v153, 0
  %v407 = vsel %vm324, %v154, 0
  %v410 = vsel %vm324, %v155, 0
  %v413 = vsel %vm324, %v156, 0
  %v416 = vsel %vm324, %v157, 0
  %v419 = vsel %vm324, %v158, 0
  %v422 = vsel %vm324, %v159, 0
  %v425 = vsel %vm324, %v160, 0
  %v428 = vsel %vm324, %v161, 0
  %v431 = vsel %vm324, %v162, 0
  %v434 = vsel %vm324, %v163, 0
  %v437 = vsel %vm324, %v164, 0
  %v440 = vsel %vm324, %v165, 0
  %v443 = vsel %vm324, %v166, 0
  %v446 = vsel %vm324, %v167, 0
  %v449 = vsel %vm324, %v168, 0
  %v452 = vsel %vm324, %v169, 0
  %v455 = vsel %vm324, %v170, 0
  %v458 = vsel %vm324, %v171, 0
  %v461 = vsel %vm324, %v172, 0
  %v464 = vsel %vm324, %v173, 0
  %v467 = vsel %vm324, %v174, 0
  %v470 = vsel %vm324, %v175, 0
  %v473 = vsel %vm324, %v176, 0
  %v476 = vsel %vm324, %v177, 0
  %v479 = vsel %vm324, %v178, 0
  %v482 = vsel %vm324, %v179, 0
  %v485 = vsel %vm324, %v180, 0
  %v488 = vsel %vm324, %v181, 0
  %v491 = vsel %vm324, %v182, 0
  %v494 = vsel %vm324, %v183, 0
  %v497 = vsel %vm324, %v184, 0
  %v500 = vsel %vm324, %v185, 0
  %v503 = vsel %vm324, %v186, 0
  %v506 = vsel %vm324, %v187, 0
  %v509 = vsel %vm324, %v188, 0
  %v512 = vsel %vm324, %v189, 0
  %v515 = vsel %vm324, %v190, 0
  %517 = vmatprep.subr.mxu0 0.0
  %518 = vmatpush1.msra.mxu0 %v300
  %519 = vmatprep.subr.mxu0 0.0
  %520 = vmatpush1.msra.mxu0 %v305
  %521 = vmatprep.subr.mxu0 0.0
  %522 = vmatpush1.msra.mxu0 %v310
  %523 = vmatprep.subr.mxu0 0.0
  %524 = vmatpush1.msra.mxu0 %v315
  %525 = vmatprep.subr.mxu0 0.0
  %526 = vmatpush1.msra.mxu0 0.0
  %527 = vmatprep.subr.mxu0 0.0
  %528 = vmatpush1.msra.mxu0 0.0
  %529 = vmatprep.subr.mxu0 0.0
  %530 = vmatpush1.msra.mxu0 0.0
  %531 = vmatprep.subr.mxu0 0.0
  %532 = vmatpush1.msra.mxu0 0.0
  %533 = vmatprep.subr.mxu0 0.0
  %534 = vmatpush1.msra.mxu0 0.0
  %535 = vmatprep.subr.mxu0 0.0
  %536 = vmatpush1.msra.mxu0 0.0
  %537 = vmatprep.subr.mxu0 0.0
  %538 = vmatpush1.msra.mxu0 0.0
  %539 = vmatprep.subr.mxu0 0.0
  %540 = vmatpush1.msra.mxu0 0.0
  %541 = vmatprep.subr.mxu0 0.0
  %542 = vmatpush1.msra.mxu0 0.0
  %543 = vmatprep.subr.mxu0 0.0
  %544 = vmatpush1.msra.mxu0 0.0
  %545 = vmatprep.subr.mxu0 0.0
  %546 = vmatpush1.msra.mxu0 0.0
  %547 = vmatprep.subr.mxu0 0.0
  %548 = vmatpush1.msra.mxu0 0.0
  %549 = vmatprep.subr.mxu0 0.0
  %550 = vmatpush1.msra.mxu0 0.0
  %551 = vmatprep.subr.mxu0 0.0
  %552 = vmatpush1.msra.mxu0 0.0
  %553 = vmatprep.subr.mxu0 0.0
  %554 = vmatpush1.msra.mxu0 0.0
  %555 = vmatprep.subr.mxu0 0.0
  %556 = vmatpush1.msra.mxu0 0.0
  %557 = vmatprep.subr.mxu0 0.0
  %558 = vmatpush1.msra.mxu0 0.0
  %559 = vmatprep.subr.mxu0 0.0
  %560 = vmatpush1.msra.mxu0 0.0
  %561 = vmatprep.subr.mxu0 0.0
  %562 = vmatpush1.msra.mxu0 0.0
  %563 = vmatprep.subr.mxu0 0.0
  %564 = vmatpush1.msra.mxu0 0.0
  %565 = vmatprep.subr.mxu0 0.0
  %566 = vmatpush1.msra.mxu0 0.0
  %567 = vmatprep.subr.mxu0 0.0
  %568 = vmatpush1.msra.mxu0 0.0
  %569 = vmatprep.subr.mxu0 0.0
  %570 = vmatpush1.msra.mxu0 0.0
  %571 = vmatprep.subr.mxu0 0.0
  %572 = vmatpush1.msra.mxu0 0.0
  %573 = vmatprep.subr.mxu0 0.0
  %574 = vmatpush1.msra.mxu0 0.0
  %575 = vmatprep.subr.mxu0 0.0
  %576 = vmatpush1.msra.mxu0 0.0
  %577 = vmatprep.subr.mxu0 0.0
  %578 = vmatpush1.msra.mxu0 0.0
  %579 = vmatprep.subr.mxu0 0.0
  %580 = vmatpush1.msra.mxu0 0.0
  %581 = vmatprep.mubr.f32.mxu0 0.0
  %582 = vmatmul.mubr.f32.gmra.mrb[0].mxu0 %v326
  %v583 = vpop.f32.mrb[0].mxu0
  %v584 = vadd.f32 %v322, %v583
  %v585 = vpop.f32.mrb[0].mxu0
  %586 = vmatprep.mubr.f32.mxu0 0.0
  %587 = vmatmul.mubr.f32.gmra.mrb[0].mxu0 %v329
  %v588 = vpop.f32.mrb[0].mxu0
  %v589 = vadd.f32 %v322, %v588
  %v590 = vpop.f32.mrb[0].mxu0
  %591 = vmatprep.mubr.f32.mxu0 0.0
  %592 = vmatmul.mubr.f32.gmra.mrb[0].mxu0 %v332
  %v593 = vpop.f32.mrb[0].mxu0
  %v594 = vadd.f32 %v322, %v593
  %v595 = vpop.f32.mrb[0].mxu0
  %596 = vmatprep.mubr.f32.mxu0 0.0
  %597 = vmatmul.mubr.f32.gmra.mrb[0].mxu0 %v335
  %v598 = vpop.f32.mrb[0].mxu0
  %v599 = vadd.f32 %v322, %v598
  %v600 = vpop.f32.mrb[0].mxu0
  %601 = vmatprep.mubr.f32.mxu0 0.0
  %602 = vmatmul.mubr.f32.gmra.mrb[0].mxu0 %v338
  %v603 = vpop.f32.mrb[0].mxu0
  %v604 = vadd.f32 %v322, %v603
  %v605 = vpop.f32.mrb[0].mxu0
  %606 = vmatprep.mubr.f32.mxu0 0.0
  %607 = vmatmul.mubr.f32.gmra.mrb[0].mxu0 %v341
  %v608 = vpop.f32.mrb[0].mxu0
  %v609 = vadd.f32 %v322, %v608
  %v610 = vpop.f32.mrb[0].mxu0
  %611 = vmatprep.mubr.f32.mxu0 0.0
  %612 = vmatmul.mubr.f32.gmra.mrb[0].mxu0 %v344
  %v613 = vpop.f32.mrb[0].mxu0
  %v614 = vadd.f32 %v322, %v613
  %v615 = vpop.f32.mrb[0].mxu0
  %616 = vmatprep.mubr.f32.mxu0 0.0
  %617 = vmatmul.mubr.f32.gmra.mrb[0].mxu0 %v347
  %v618 = vpop.f32.mrb[0].mxu0
  %v619 = vadd.f32 %v322, %v618
  %v620 = vpop.f32.mrb[0].mxu0
  %621 = vmatprep.mubr.f32.mxu0 0.0
  %622 = vmatmul.mubr.f32.gmra.mrb[0].mxu0 %v350
  %v623 = vpop.f32.mrb[0].mxu0
  %v624 = vadd.f32 %v322, %v623
  %v625 = vpop.f32.mrb[0].mxu0
  %626 = vmatprep.mubr.f32.mxu0 0.0
  %627 = vmatmul.mubr.f32.gmra.mrb[0].mxu0 %v353
  %v628 = vpop.f32.mrb[0].mxu0
  %v629 = vadd.f32 %v322, %v628
  %v630 = vpop.f32.mrb[0].mxu0
  %631 = vmatprep.mubr.f32.mxu0 0.0
  %632 = vmatmul.mubr.f32.gmra.mrb[0].mxu0 %v356
  %v633 = vpop.f32.mrb[0].mxu0
  %v634 = vadd.f32 %v322, %v633
  %v635 = vpop.f32.mrb[0].mxu0
  %636 = vmatprep.mubr.f32.mxu0 0.0
  %637 = vmatmul.mubr.f32.gmra.mrb[0].mxu0 %v359
  %v638 = vpop.f32.mrb[0].mxu0
  %v639 = vadd.f32 %v322, %v638
  %v640 = vpop.f32.mrb[0].mxu0
  %641 = vmatprep.mubr.f32.mxu0 0.0
  %642 = vmatmul.mubr.f32.gmra.mrb[0].mxu0 %v362
  %v643 = vpop.f32.mrb[0].mxu0
  %v644 = vadd.f32 %v322, %v643
  %v645 = vpop.f32.mrb[0].mxu0
  %646 = vmatprep.mubr.f32.mxu0 0.0
  %647 = vmatmul.mubr.f32.gmra.mrb[0].mxu0 %v365
  %v648 = vpop.f32.mrb[0].mxu0
  %v649 = vadd.f32 %v322, %v648
  %v650 = vpop.f32.mrb[0].mxu0
  %651 = vmatprep.mubr.f32.mxu0 0.0
  %652 = vmatmul.mubr.f32.gmra.mrb[0].mxu0 %v368
  %v653 = vpop.f32.mrb[0].mxu0
  %v654 = vadd.f32 %v322, %v653
  %v655 = vpop.f32.mrb[0].mxu0
  %656 = vmatprep.mubr.f32.mxu0 0.0
  %657 = vmatmul.mubr.f32.gmra.mrb[0].mxu0 %v371
  %v658 = vpop.f32.mrb[0].mxu0
  %v659 = vadd.f32 %v322, %v658
  %v660 = vpop.f32.mrb[0].mxu0
  %661 = vmatprep.mubr.f32.mxu0 0.0
  %662 = vmatmul.mubr.f32.gmra.mrb[0].mxu0 %v374
  %v663 = vpop.f32.mrb[0].mxu0
  %v664 = vadd.f32 %v322, %v663
  %v665 = vpop.f32.mrb[0].mxu0
  %666 = vmatprep.mubr.f32.mxu0 0.0
  %667 = vmatmul.mubr.f32.gmra.mrb[0].mxu0 %v377
  %v668 = vpop.f32.mrb[0].mxu0
  %v669 = vadd.f32 %v322, %v668
  %v670 = vpop.f32.mrb[0].mxu0
  %671 = vmatprep.mubr.f32.mxu0 0.0
  %672 = vmatmul.mubr.f32.gmra.mrb[0].mxu0 %v380
  %v673 = vpop.f32.mrb[0].mxu0
  %v674 = vadd.f32 %v322, %v673
  %v675 = vpop.f32.mrb[0].mxu0
  %676 = vmatprep.mubr.f32.mxu0 0.0
  %677 = vmatmul.mubr.f32.gmra.mrb[0].mxu0 %v383
  %v678 = vpop.f32.mrb[0].mxu0
  %v679 = vadd.f32 %v322, %v678
  %v680 = vpop.f32.mrb[0].mxu0
  %681 = vmatprep.mubr.f32.mxu0 0.0
  %682 = vmatmul.mubr.f32.gmra.mrb[0].mxu0 %v386
  %v683 = vpop.f32.mrb[0].mxu0
  %v684 = vadd.f32 %v322, %v683
  %v685 = vpop.f32.mrb[0].mxu0
  %686 = vmatprep.mubr.f32.mxu0 0.0
  %687 = vmatmul.mubr.f32.gmra.mrb[0].mxu0 %v389
  %v688 = vpop.f32.mrb[0].mxu0
  %v689 = vadd.f32 %v322, %v688
  %v690 = vpop.f32.mrb[0].mxu0
  %691 = vmatprep.mubr.f32.mxu0 0.0
  %692 = vmatmul.mubr.f32.gmra.mrb[0].mxu0 %v392
  %v693 = vpop.f32.mrb[0].mxu0
  %v694 = vadd.f32 %v322, %v693
  %v695 = vpop.f32.mrb[0].mxu0
  %696 = vmatprep.mubr.f32.mxu0 0.0
  %697 = vmatmul.mubr.f32.gmra.mrb[0].mxu0 %v395
  %v698 = vpop.f32.mrb[0].mxu0
  %v699 = vadd.f32 %v322, %v698
  %v700 = vpop.f32.mrb[0].mxu0
  %701 = vmatprep.mubr.f32.mxu0 0.0
  %702 = vmatmul.mubr.f32.gmra.mrb[0].mxu0 %v398
  %v703 = vpop.f32.mrb[0].mxu0
  %v704 = vadd.f32 %v322, %v703
  %v705 = vpop.f32.mrb[0].mxu0
  %706 = vmatprep.mubr.f32.mxu0 0.0
  %707 = vmatmul.mubr.f32.gmra.mrb[0].mxu0 %v401
  %v708 = vpop.f32.mrb[0].mxu0
  %v709 = vadd.f32 %v322, %v708
  %v710 = vpop.f32.mrb[0].mxu0
  %711 = vmatprep.mubr.f32.mxu0 0.0
  %712 = vmatmul.mubr.f32.gmra.mrb[0].mxu0 %v404
  %v713 = vpop.f32.mrb[0].mxu0
  %v714 = vadd.f32 %v322, %v713
  %v715 = vpop.f32.mrb[0].mxu0
  %716 = vmatprep.mubr.f32.mxu0 0.0
  %717 = vmatmul.mubr.f32.gmra.mrb[0].mxu0 %v407
  %v718 = vpop.f32.mrb[0].mxu0
  %v719 = vadd.f32 %v322, %v718
  %v720 = vpop.f32.mrb[0].mxu0
  %721 = vmatprep.mubr.f32.mxu0 0.0
  %722 = vmatmul.mubr.f32.gmra.mrb[0].mxu0 %v410
  %v723 = vpop.f32.mrb[0].mxu0
  %v724 = vadd.f32 %v322, %v723
  %v725 = vpop.f32.mrb[0].mxu0
  %726 = vmatprep.mubr.f32.mxu0 0.0
  %727 = vmatmul.mubr.f32.gmra.mrb[0].mxu0 %v413
  %v728 = vpop.f32.mrb[0].mxu0
  %v729 = vadd.f32 %v322, %v728
  %v730 = vpop.f32.mrb[0].mxu0
  %731 = vmatprep.mubr.f32.mxu0 0.0
  %732 = vmatmul.mubr.f32.gmra.mrb[0].mxu0 %v416
  %v733 = vpop.f32.mrb[0].mxu0
  %v734 = vadd.f32 %v322, %v733
  %v735 = vpop.f32.mrb[0].mxu0
  %736 = vmatprep.mubr.f32.mxu0 0.0
  %737 = vmatmul.mubr.f32.gmra.mrb[0].mxu0 %v419
  %v738 = vpop.f32.mrb[0].mxu0
  %v739 = vadd.f32 %v322, %v738
  %v740 = vpop.f32.mrb[0].mxu0
  %741 = vmatprep.mubr.f32.mxu0 0.0
  %742 = vmatmul.mubr.f32.gmra.mrb[0].mxu0 %v422
  %v743 = vpop.f32.mrb[0].mxu0
  %v744 = vadd.f32 %v322, %v743
  %v745 = vpop.f32.mrb[0].mxu0
  %746 = vmatprep.mubr.f32.mxu0 0.0
  %747 = vmatmul.mubr.f32.gmra.mrb[0].mxu0 %v425
  %v748 = vpop.f32.mrb[0].mxu0
  %v749 = vadd.f32 %v322, %v748
  %v750 = vpop.f32.mrb[0].mxu0
  %751 = vmatprep.mubr.f32.mxu0 0.0
  %752 = vmatmul.mubr.f32.gmra.mrb[0].mxu0 %v428
  %v753 = vpop.f32.mrb[0].mxu0
  %v754 = vadd.f32 %v322, %v753
  %v755 = vpop.f32.mrb[0].mxu0
  %756 = vmatprep.mubr.f32.mxu0 0.0
  %757 = vmatmul.mubr.f32.gmra.mrb[0].mxu0 %v431
  %v758 = vpop.f32.mrb[0].mxu0
  %v759 = vadd.f32 %v322, %v758
  %v760 = vpop.f32.mrb[0].mxu0
  %761 = vmatprep.mubr.f32.mxu0 0.0
  %762 = vmatmul.mubr.f32.gmra.mrb[0].mxu0 %v434
  %v763 = vpop.f32.mrb[0].mxu0
  %v764 = vadd.f32 %v322, %v763
  %v765 = vpop.f32.mrb[0].mxu0
  %766 = vmatprep.mubr.f32.mxu0 0.0
  %767 = vmatmul.mubr.f32.gmra.mrb[0].mxu0 %v437
  %v768 = vpop.f32.mrb[0].mxu0
  %v769 = vadd.f32 %v322, %v768
  %v770 = vpop.f32.mrb[0].mxu0
  %771 = vmatprep.mubr.f32.mxu0 0.0
  %772 = vmatmul.mubr.f32.gmra.mrb[0].mxu0 %v440
  %v773 = vpop.f32.mrb[0].mxu0
  %v774 = vadd.f32 %v322, %v773
  %v775 = vpop.f32.mrb[0].mxu0
  %776 = vmatprep.mubr.f32.mxu0 0.0
  %777 = vmatmul.mubr.f32.gmra.mrb[0].mxu0 %v443
  %v778 = vpop.f32.mrb[0].mxu0
  %v779 = vadd.f32 %v322, %v778
  %v780 = vpop.f32.mrb[0].mxu0
  %781 = vmatprep.mubr.f32.mxu0 0.0
  %782 = vmatmul.mubr.f32.gmra.mrb[0].mxu0 %v446
  %v783 = vpop.f32.mrb[0].mxu0
  %v784 = vadd.f32 %v322, %v783
  %v785 = vpop.f32.mrb[0].mxu0
  %786 = vmatprep.mubr.f32.mxu0 0.0
  %787 = vmatmul.mubr.f32.gmra.mrb[0].mxu0 %v449
  %v788 = vpop.f32.mrb[0].mxu0
  %v789 = vadd.f32 %v322, %v788
  %v790 = vpop.f32.mrb[0].mxu0
  %791 = vmatprep.mubr.f32.mxu0 0.0
  %792 = vmatmul.mubr.f32.gmra.mrb[0].mxu0 %v452
  %v793 = vpop.f32.mrb[0].mxu0
  %v794 = vadd.f32 %v322, %v793
  %v795 = vpop.f32.mrb[0].mxu0
  %796 = vmatprep.mubr.f32.mxu0 0.0
  %797 = vmatmul.mubr.f32.gmra.mrb[0].mxu0 %v455
  %v798 = vpop.f32.mrb[0].mxu0
  %v799 = vadd.f32 %v322, %v798
  %v800 = vpop.f32.mrb[0].mxu0
  %801 = vmatprep.mubr.f32.mxu0 0.0
  %802 = vmatmul.mubr.f32.gmra.mrb[0].mxu0 %v458
  %v803 = vpop.f32.mrb[0].mxu0
  %v804 = vadd.f32 %v322, %v803
  %v805 = vpop.f32.mrb[0].mxu0
  %806 = vmatprep.mubr.f32.mxu0 0.0
  %807 = vmatmul.mubr.f32.gmra.mrb[0].mxu0 %v461
  %v808 = vpop.f32.mrb[0].mxu0
  %v809 = vadd.f32 %v322, %v808
  %v810 = vpop.f32.mrb[0].mxu0
  %811 = vmatprep.mubr.f32.mxu0 0.0
  %812 = vmatmul.mubr.f32.gmra.mrb[0].mxu0 %v464
  %v813 = vpop.f32.mrb[0].mxu0
  %v814 = vadd.f32 %v322, %v813
  %v815 = vpop.f32.mrb[0].mxu0
  %816 = vmatprep.mubr.f32.mxu0 0.0
  %817 = vmatmul.mubr.f32.gmra.mrb[0].mxu0 %v467
  %v818 = vpop.f32.mrb[0].mxu0
  %v819 = vadd.f32 %v322, %v818
  %v820 = vpop.f32.mrb[0].mxu0
  %821 = vmatprep.mubr.f32.mxu0 0.0
  %822 = vmatmul.mubr.f32.gmra.mrb[0].mxu0 %v470
  %v823 = vpop.f32.mrb[0].mxu0
  %v824 = vadd.f32 %v322, %v823
  %v825 = vpop.f32.mrb[0].mxu0
  %826 = vmatprep.mubr.f32.mxu0 0.0
  %827 = vmatmul.mubr.f32.gmra.mrb[0].mxu0 %v473
  %v828 = vpop.f32.mrb[0].mxu0
  %v829 = vadd.f32 %v322, %v828
  %v830 = vpop.f32.mrb[0].mxu0
  %831 = vmatprep.mubr.f32.mxu0 0.0
  %832 = vmatmul.mubr.f32.gmra.mrb[0].mxu0 %v476
  %v833 = vpop.f32.mrb[0].mxu0
  %v834 = vadd.f32 %v322, %v833
  %v835 = vpop.f32.mrb[0].mxu0
  %836 = vmatprep.mubr.f32.mxu0 0.0
  %837 = vmatmul.mubr.f32.gmra.mrb[0].mxu0 %v479
  %v838 = vpop.f32.mrb[0].mxu0
  %v839 = vadd.f32 %v322, %v838
  %v840 = vpop.f32.mrb[0].mxu0
  %841 = vmatprep.mubr.f32.mxu0 0.0
  %842 = vmatmul.mubr.f32.gmra.mrb[0].mxu0 %v482
  %v843 = vpop.f32.mrb[0].mxu0
  %v844 = vadd.f32 %v322, %v843
  %v845 = vpop.f32.mrb[0].mxu0
  %846 = vmatprep.mubr.f32.mxu0 0.0
  %847 = vmatmul.mubr.f32.gmra.mrb[0].mxu0 %v485
  %v848 = vpop.f32.mrb[0].mxu0
  %v849 = vadd.f32 %v322, %v848
  %v850 = vpop.f32.mrb[0].mxu0
  %851 = vmatprep.mubr.f32.mxu0 0.0
  %852 = vmatmul.mubr.f32.gmra.mrb[0].mxu0 %v488
  %v853 = vpop.f32.mrb[0].mxu0
  %v854 = vadd.f32 %v322, %v853
  %v855 = vpop.f32.mrb[0].mxu0
  %856 = vmatprep.mubr.f32.mxu0 0.0
  %857 = vmatmul.mubr.f32.gmra.mrb[0].mxu0 %v491
  %v858 = vpop.f32.mrb[0].mxu0
  %v859 = vadd.f32 %v322, %v858
  %v860 = vpop.f32.mrb[0].mxu0
  %861 = vmatprep.mubr.f32.mxu0 0.0
  %862 = vmatmul.mubr.f32.gmra.mrb[0].mxu0 %v494
  %v863 = vpop.f32.mrb[0].mxu0
  %v864 = vadd.f32 %v322, %v863
  %v865 = vpop.f32.mrb[0].mxu0
  %866 = vmatprep.mubr.f32.mxu0 0.0
  %867 = vmatmul.mubr.f32.gmra.mrb[0].mxu0 %v497
  %v868 = vpop.f32.mrb[0].mxu0
  %v869 = vadd.f32 %v322, %v868
  %v870 = vpop.f32.mrb[0].mxu0
  %871 = vmatprep.mubr.f32.mxu0 0.0
  %872 = vmatmul.mubr.f32.gmra.mrb[0].mxu0 %v500
  %v873 = vpop.f32.mrb[0].mxu0
  %v874 = vadd.f32 %v322, %v873
  %v875 = vpop.f32.mrb[0].mxu0
  %876 = vmatprep.mubr.f32.mxu0 0.0
  %877 = vmatmul.mubr.f32.gmra.mrb[0].mxu0 %v503
  %v878 = vpop.f32.mrb[0].mxu0
  %v879 = vadd.f32 %v322, %v878
  %v880 = vpop.f32.mrb[0].mxu0
  %881 = vmatprep.mubr.f32.mxu0 0.0
  %882 = vmatmul.mubr.f32.gmra.mrb[0].mxu0 %v506
  %v883 = vpop.f32.mrb[0].mxu0
  %v884 = vadd.f32 %v322, %v883
  %v885 = vpop.f32.mrb[0].mxu0
  %886 = vmatprep.mubr.f32.mxu0 0.0
  %887 = vmatmul.mubr.f32.gmra.mrb[0].mxu0 %v509
  %v888 = vpop.f32.mrb[0].mxu0
  %v889 = vadd.f32 %v322, %v888
  %v890 = vpop.f32.mrb[0].mxu0
  %891 = vmatprep.mubr.f32.mxu0 0.0
  %892 = vmatmul.mubr.f32.gmra.mrb[0].mxu0 %v512
  %v893 = vpop.f32.mrb[0].mxu0
  %v894 = vadd.f32 %v322, %v893
  %v895 = vpop.f32.mrb[0].mxu0
  %896 = vmatprep.mubr.f32.mxu0 0.0
  %897 = vmatmul.mubr.f32.gmra.mrb[0].mxu0 %v515
  %v898 = vpop.f32.mrb[0].mxu0
  %v899 = vadd.f32 %v322, %v898
  %v900 = vpop.f32.mrb[0].mxu0
  %901 = vdwg.mxu0
  %v903 = vsel %vm216, %v59, 0
  %v906 = vsel %vm216, %v60, 0
  %v909 = vsel %vm216, %v61, 0
  %v912 = vsel %vm216, %v62, 0
  %v915 = vsel %vm216, %v63, 0
  %v918 = vsel %vm216, %v64, 0
  %v921 = vsel %vm216, %v65, 0
  %v924 = vsel %vm216, %v66, 0
  %v927 = vsel %vm216, %v67, 0
  %v930 = vsel %vm216, %v68, 0
  %v933 = vsel %vm216, %v69, 0
  %v936 = vsel %vm216, %v70, 0
  %v939 = vsel %vm216, %v71, 0
  %v942 = vsel %vm216, %v72, 0
  %v945 = vsel %vm216, %v73, 0
  %v948 = vsel %vm216, %v74, 0
  %v951 = vsel %vm216, %v75, 0
  %v954 = vsel %vm216, %v76, 0
  %v957 = vsel %vm216, %v77, 0
  %v960 = vsel %vm216, %v78, 0
  %v963 = vsel %vm216, %v79, 0
  %v966 = vsel %vm216, %v80, 0
  %v969 = vsel %vm216, %v81, 0
  %v972 = vsel %vm216, %v82, 0
  %v975 = vsel %vm216, %v83, 0
  %v978 = vsel %vm216, %v84, 0
  %v981 = vsel %vm216, %v85, 0
  %v984 = vsel %vm216, %v86, 0
  %v987 = vsel %vm216, %v87, 0
  %v990 = vsel %vm216, %v88, 0
  %v993 = vsel %vm216, %v89, 0
  %v996 = vsel %vm216, %v90, 0
  %v999 = vsel %vm216, %v91, 0
  %v1002 = vsel %vm216, %v92, 0
  %v1005 = vsel %vm216, %v93, 0
  %v1008 = vsel %vm216, %v94, 0
  %v1011 = vsel %vm216, %v95, 0
  %v1014 = vsel %vm216, %v96, 0
  %v1017 = vsel %vm216, %v97, 0
  %v1020 = vsel %vm216, %v98, 0
  %v1023 = vsel %vm216, %v99, 0
  %v1026 = vsel %vm216, %v100, 0
  %v1029 = vsel %vm216, %v101, 0
  %v1032 = vsel %vm216, %v102, 0
  %v1035 = vsel %vm216, %v103, 0
  %v1038 = vsel %vm216, %v104, 0
  %v1041 = vsel %vm216, %v105, 0
  %v1044 = vsel %vm216, %v106, 0
  %v1047 = vsel %vm216, %v107, 0
  %v1050 = vsel %vm216, %v108, 0
  %v1053 = vsel %vm216, %v109, 0
  %v1056 = vsel %vm216, %v110, 0
  %v1059 = vsel %vm216, %v111, 0
  %v1062 = vsel %vm216, %v112, 0
  %v1065 = vsel %vm216, %v113, 0
  %v1068 = vsel %vm216, %v114, 0
  %v1071 = vsel %vm216, %v115, 0
  %v1074 = vsel %vm216, %v116, 0
  %v1077 = vsel %vm216, %v117, 0
  %v1080 = vsel %vm216, %v118, 0
  %v1083 = vsel %vm216, %v119, 0
  %v1086 = vsel %vm216, %v120, 0
  %v1089 = vsel %vm216, %v121, 0
  %v1092 = vsel %vm216, %v122, 0
  %v1095 = vsel %vm229, %v209, 0
  %1097 = vmatprep.subr.mxu0 0.0
  %1098 = vmatpush1.msra.mxu0 %v1095
  %1099 = vmatprep.subr.mxu0 0.0
  %1100 = vmatpush1.msra.mxu0 0.0
  %1101 = vmatprep.subr.mxu0 0.0
  %1102 = vmatpush1.msra.mxu0 0.0
  %1103 = vmatprep.subr.mxu0 0.0
  %1104 = vmatpush1.msra.mxu0 0.0
  %1105 = vmatprep.subr.mxu0 0.0
  %1106 = vmatpush1.msra.mxu0 0.0
  %1107 = vmatprep.subr.mxu0 0.0
  %1108 = vmatpush1.msra.mxu0 0.0
  %1109 = vmatprep.subr.mxu0 0.0
  %1110 = vmatpush1.msra.mxu0 0.0
  %1111 = vmatprep.subr.mxu0 0.0
  %1112 = vmatpush1.msra.mxu0 0.0
  %1113 = vmatprep.subr.mxu0 0.0
  %1114 = vmatpush1.msra.mxu0 0.0
  %1115 = vmatprep.subr.mxu0 0.0
  %1116 = vmatpush1.msra.mxu0 0.0
  %1117 = vmatprep.subr.mxu0 0.0
  %1118 = vmatpush1.msra.mxu0 0.0
  %1119 = vmatprep.subr.mxu0 0.0
  %1120 = vmatpush1.msra.mxu0 0.0
  %1121 = vmatprep.subr.mxu0 0.0
  %1122 = vmatpush1.msra.mxu0 0.0
  %1123 = vmatprep.subr.mxu0 0.0
  %1124 = vmatpush1.msra.mxu0 0.0
  %1125 = vmatprep.subr.mxu0 0.0
  %1126 = vmatpush1.msra.mxu0 0.0
  %1127 = vmatprep.subr.mxu0 0.0
  %1128 = vmatpush1.msra.mxu0 0.0
  %1129 = vmatprep.subr.mxu0 0.0
  %1130 = vmatpush1.msra.mxu0 0.0
  %1131 = vmatprep.subr.mxu0 0.0
  %1132 = vmatpush1.msra.mxu0 0.0
  %1133 = vmatprep.subr.mxu0 0.0
  %1134 = vmatpush1.msra.mxu0 0.0
  %1135 = vmatprep.subr.mxu0 0.0
  %1136 = vmatpush1.msra.mxu0 0.0
  %1137 = vmatprep.subr.mxu0 0.0
  %1138 = vmatpush1.msra.mxu0 0.0
  %1139 = vmatprep.subr.mxu0 0.0
  %1140 = vmatpush1.msra.mxu0 0.0
  %1141 = vmatprep.subr.mxu0 0.0
  %1142 = vmatpush1.msra.mxu0 0.0
  %1143 = vmatprep.subr.mxu0 0.0
  %1144 = vmatpush1.msra.mxu0 0.0
  %1145 = vmatprep.subr.mxu0 0.0
  %1146 = vmatpush1.msra.mxu0 0.0
  %1147 = vmatprep.subr.mxu0 0.0
  %1148 = vmatpush1.msra.mxu0 0.0
  %1149 = vmatprep.subr.mxu0 0.0
  %1150 = vmatpush1.msra.mxu0 0.0
  %1151 = vmatprep.subr.mxu0 0.0
  %1152 = vmatpush1.msra.mxu0 0.0
  %1153 = vmatprep.subr.mxu0 0.0
  %1154 = vmatpush1.msra.mxu0 0.0
  %1155 = vmatprep.subr.mxu0 0.0
  %1156 = vmatpush1.msra.mxu0 0.0
  %1157 = vmatprep.subr.mxu0 0.0
  %1158 = vmatpush1.msra.mxu0 0.0
  %1159 = vmatprep.subr.mxu0 0.0
  %1160 = vmatpush1.msra.mxu0 0.0
  %1161 = vmatprep.mubr.f32.mxu0 0.0
  %1162 = vmatmul.mubr.f32.gmra.mrb[0].mxu0 %v903
  %v1163 = vpop.f32.mrb[0].mxu0
  %v1164 = vadd.f32 0.0, %v1163
  %v1165 = vpop.f32.mrb[0].mxu0
  %1166 = vmatprep.mubr.f32.mxu0 0.0
  %1167 = vmatmul.mubr.f32.gmra.mrb[0].mxu0 %v906
  %v1168 = vpop.f32.mrb[0].mxu0
  %v1169 = vadd.f32 0.0, %v1168
  %v1170 = vpop.f32.mrb[0].mxu0
  %1171 = vmatprep.mubr.f32.mxu0 0.0
  %1172 = vmatmul.mubr.f32.gmra.mrb[0].mxu0 %v909
  %v1173 = vpop.f32.mrb[0].mxu0
  %v1174 = vadd.f32 0.0, %v1173
  %v1175 = vpop.f32.mrb[0].mxu0
  %1176 = vmatprep.mubr.f32.mxu0 0.0
  %1177 = vmatmul.mubr.f32.gmra.mrb[0].mxu0 %v912
  %v1178 = vpop.f32.mrb[0].mxu0
  %v1179 = vadd.f32 0.0, %v1178
  %v1180 = vpop.f32.mrb[0].mxu0
  %1181 = vmatprep.mubr.f32.mxu0 0.0
  %1182 = vmatmul.mubr.f32.gmra.mrb[0].mxu0 %v915
  %v1183 = vpop.f32.mrb[0].mxu0
  %v1184 = vadd.f32 0.0, %v1183
  %v1185 = vpop.f32.mrb[0].mxu0
  %1186 = vmatprep.mubr.f32.mxu0 0.0
  %1187 = vmatmul.mubr.f32.gmra.mrb[0].mxu0 %v918
  %v1188 = vpop.f32.mrb[0].mxu0
  %v1189 = vadd.f32 0.0, %v1188
  %v1190 = vpop.f32.mrb[0].mxu0
  %1191 = vmatprep.mubr.f32.mxu0 0.0
  %1192 = vmatmul.mubr.f32.gmra.mrb[0].mxu0 %v921
  %v1193 = vpop.f32.mrb[0].mxu0
  %v1194 = vadd.f32 0.0, %v1193
  %v1195 = vpop.f32.mrb[0].mxu0
  %1196 = vmatprep.mubr.f32.mxu0 0.0
  %1197 = vmatmul.mubr.f32.gmra.mrb[0].mxu0 %v924
  %v1198 = vpop.f32.mrb[0].mxu0
  %v1199 = vadd.f32 0.0, %v1198
  %v1200 = vpop.f32.mrb[0].mxu0
  %1201 = vmatprep.mubr.f32.mxu0 0.0
  %1202 = vmatmul.mubr.f32.gmra.mrb[0].mxu0 %v927
  %v1203 = vpop.f32.mrb[0].mxu0
  %v1204 = vadd.f32 0.0, %v1203
  %v1205 = vpop.f32.mrb[0].mxu0
  %1206 = vmatprep.mubr.f32.mxu0 0.0
  %1207 = vmatmul.mubr.f32.gmra.mrb[0].mxu0 %v930
  %v1208 = vpop.f32.mrb[0].mxu0
  %v1209 = vadd.f32 0.0, %v1208
  %v1210 = vpop.f32.mrb[0].mxu0
  %1211 = vmatprep.mubr.f32.mxu0 0.0
  %1212 = vmatmul.mubr.f32.gmra.mrb[0].mxu0 %v933
  %v1213 = vpop.f32.mrb[0].mxu0
  %v1214 = vadd.f32 0.0, %v1213
  %v1215 = vpop.f32.mrb[0].mxu0
  %1216 = vmatprep.mubr.f32.mxu0 0.0
  %1217 = vmatmul.mubr.f32.gmra.mrb[0].mxu0 %v936
  %v1218 = vpop.f32.mrb[0].mxu0
  %v1219 = vadd.f32 0.0, %v1218
  %v1220 = vpop.f32.mrb[0].mxu0
  %1221 = vmatprep.mubr.f32.mxu0 0.0
  %1222 = vmatmul.mubr.f32.gmra.mrb[0].mxu0 %v939
  %v1223 = vpop.f32.mrb[0].mxu0
  %v1224 = vadd.f32 0.0, %v1223
  %v1225 = vpop.f32.mrb[0].mxu0
  %1226 = vmatprep.mubr.f32.mxu0 0.0
  %1227 = vmatmul.mubr.f32.gmra.mrb[0].mxu0 %v942
  %v1228 = vpop.f32.mrb[0].mxu0
  %v1229 = vadd.f32 0.0, %v1228
  %v1230 = vpop.f32.mrb[0].mxu0
  %1231 = vmatprep.mubr.f32.mxu0 0.0
  %1232 = vmatmul.mubr.f32.gmra.mrb[0].mxu0 %v945
  %v1233 = vpop.f32.mrb[0].mxu0
  %v1234 = vadd.f32 0.0, %v1233
  %v1235 = vpop.f32.mrb[0].mxu0
  %1236 = vmatprep.mubr.f32.mxu0 0.0
  %1237 = vmatmul.mubr.f32.gmra.mrb[0].mxu0 %v948
  %v1238 = vpop.f32.mrb[0].mxu0
  %v1239 = vadd.f32 0.0, %v1238
  %v1240 = vpop.f32.mrb[0].mxu0
  %1241 = vmatprep.mubr.f32.mxu0 0.0
  %1242 = vmatmul.mubr.f32.gmra.mrb[0].mxu0 %v951
  %v1243 = vpop.f32.mrb[0].mxu0
  %v1244 = vadd.f32 0.0, %v1243
  %v1245 = vpop.f32.mrb[0].mxu0
  %1246 = vmatprep.mubr.f32.mxu0 0.0
  %1247 = vmatmul.mubr.f32.gmra.mrb[0].mxu0 %v954
  %v1248 = vpop.f32.mrb[0].mxu0
  %v1249 = vadd.f32 0.0, %v1248
  %v1250 = vpop.f32.mrb[0].mxu0
  %1251 = vmatprep.mubr.f32.mxu0 0.0
  %1252 = vmatmul.mubr.f32.gmra.mrb[0].mxu0 %v957
  %v1253 = vpop.f32.mrb[0].mxu0
  %v1254 = vadd.f32 0.0, %v1253
  %v1255 = vpop.f32.mrb[0].mxu0
  %1256 = vmatprep.mubr.f32.mxu0 0.0
  %1257 = vmatmul.mubr.f32.gmra.mrb[0].mxu0 %v960
  %v1258 = vpop.f32.mrb[0].mxu0
  %v1259 = vadd.f32 0.0, %v1258
  %v1260 = vpop.f32.mrb[0].mxu0
  %1261 = vmatprep.mubr.f32.mxu0 0.0
  %1262 = vmatmul.mubr.f32.gmra.mrb[0].mxu0 %v963
  %v1263 = vpop.f32.mrb[0].mxu0
  %v1264 = vadd.f32 0.0, %v1263
  %v1265 = vpop.f32.mrb[0].mxu0
  %1266 = vmatprep.mubr.f32.mxu0 0.0
  %1267 = vmatmul.mubr.f32.gmra.mrb[0].mxu0 %v966
  %v1268 = vpop.f32.mrb[0].mxu0
  %v1269 = vadd.f32 0.0, %v1268
  %v1270 = vpop.f32.mrb[0].mxu0
  %1271 = vmatprep.mubr.f32.mxu0 0.0
  %1272 = vmatmul.mubr.f32.gmra.mrb[0].mxu0 %v969
  %v1273 = vpop.f32.mrb[0].mxu0
  %v1274 = vadd.f32 0.0, %v1273
  %v1275 = vpop.f32.mrb[0].mxu0
  %1276 = vmatprep.mubr.f32.mxu0 0.0
  %1277 = vmatmul.mubr.f32.gmra.mrb[0].mxu0 %v972
  %v1278 = vpop.f32.mrb[0].mxu0
  %v1279 = vadd.f32 0.0, %v1278
  %v1280 = vpop.f32.mrb[0].mxu0
  %1281 = vmatprep.mubr.f32.mxu0 0.0
  %1282 = vmatmul.mubr.f32.gmra.mrb[0].mxu0 %v975
  %v1283 = vpop.f32.mrb[0].mxu0
  %v1284 = vadd.f32 0.0, %v1283
  %v1285 = vpop.f32.mrb[0].mxu0
  %1286 = vmatprep.mubr.f32.mxu0 0.0
  %1287 = vmatmul.mubr.f32.gmra.mrb[0].mxu0 %v978
  %v1288 = vpop.f32.mrb[0].mxu0
  %v1289 = vadd.f32 0.0, %v1288
  %v1290 = vpop.f32.mrb[0].mxu0
  %1291 = vmatprep.mubr.f32.mxu0 0.0
  %1292 = vmatmul.mubr.f32.gmra.mrb[0].mxu0 %v981
  %v1293 = vpop.f32.mrb[0].mxu0
  %v1294 = vadd.f32 0.0, %v1293
  %v1295 = vpop.f32.mrb[0].mxu0
  %1296 = vmatprep.mubr.f32.mxu0 0.0
  %1297 = vmatmul.mubr.f32.gmra.mrb[0].mxu0 %v984
  %v1298 = vpop.f32.mrb[0].mxu0
  %v1299 = vadd.f32 0.0, %v1298
  %v1300 = vpop.f32.mrb[0].mxu0
  %1301 = vmatprep.mubr.f32.mxu0 0.0
  %1302 = vmatmul.mubr.f32.gmra.mrb[0].mxu0 %v987
  %v1303 = vpop.f32.mrb[0].mxu0
  %v1304 = vadd.f32 0.0, %v1303
  %v1305 = vpop.f32.mrb[0].mxu0
  %1306 = vmatprep.mubr.f32.mxu0 0.0
  %1307 = vmatmul.mubr.f32.gmra.mrb[0].mxu0 %v990
  %v1308 = vpop.f32.mrb[0].mxu0
  %v1309 = vadd.f32 0.0, %v1308
  %v1310 = vpop.f32.mrb[0].mxu0
  %1311 = vmatprep.mubr.f32.mxu0 0.0
  %1312 = vmatmul.mubr.f32.gmra.mrb[0].mxu0 %v993
  %v1313 = vpop.f32.mrb[0].mxu0
  %v1314 = vadd.f32 0.0, %v1313
  %v1315 = vpop.f32.mrb[0].mxu0
  %1316 = vmatprep.mubr.f32.mxu0 0.0
  %1317 = vmatmul.mubr.f32.gmra.mrb[0].mxu0 %v996
  %v1318 = vpop.f32.mrb[0].mxu0
  %v1319 = vadd.f32 0.0, %v1318
  %v1320 = vpop.f32.mrb[0].mxu0
  %1321 = vmatprep.mubr.f32.mxu0 0.0
  %1322 = vmatmul.mubr.f32.gmra.mrb[0].mxu0 %v999
  %v1323 = vpop.f32.mrb[0].mxu0
  %v1324 = vadd.f32 0.0, %v1323
  %v1325 = vpop.f32.mrb[0].mxu0
  %1326 = vmatprep.mubr.f32.mxu0 0.0
  %1327 = vmatmul.mubr.f32.gmra.mrb[0].mxu0 %v1002
  %v1328 = vpop.f32.mrb[0].mxu0
  %v1329 = vadd.f32 0.0, %v1328
  %v1330 = vpop.f32.mrb[0].mxu0
  %1331 = vmatprep.mubr.f32.mxu0 0.0
  %1332 = vmatmul.mubr.f32.gmra.mrb[0].mxu0 %v1005
  %v1333 = vpop.f32.mrb[0].mxu0
  %v1334 = vadd.f32 0.0, %v1333
  %v1335 = vpop.f32.mrb[0].mxu0
  %1336 = vmatprep.mubr.f32.mxu0 0.0
  %1337 = vmatmul.mubr.f32.gmra.mrb[0].mxu0 %v1008
  %v1338 = vpop.f32.mrb[0].mxu0
  %v1339 = vadd.f32 0.0, %v1338
  %v1340 = vpop.f32.mrb[0].mxu0
  %1341 = vmatprep.mubr.f32.mxu0 0.0
  %1342 = vmatmul.mubr.f32.gmra.mrb[0].mxu0 %v1011
  %v1343 = vpop.f32.mrb[0].mxu0
  %v1344 = vadd.f32 0.0, %v1343
  %v1345 = vpop.f32.mrb[0].mxu0
  %1346 = vmatprep.mubr.f32.mxu0 0.0
  %1347 = vmatmul.mubr.f32.gmra.mrb[0].mxu0 %v1014
  %v1348 = vpop.f32.mrb[0].mxu0
  %v1349 = vadd.f32 0.0, %v1348
  %v1350 = vpop.f32.mrb[0].mxu0
  %1351 = vmatprep.mubr.f32.mxu0 0.0
  %1352 = vmatmul.mubr.f32.gmra.mrb[0].mxu0 %v1017
  %v1353 = vpop.f32.mrb[0].mxu0
  %v1354 = vadd.f32 0.0, %v1353
  %v1355 = vpop.f32.mrb[0].mxu0
  %1356 = vmatprep.mubr.f32.mxu0 0.0
  %1357 = vmatmul.mubr.f32.gmra.mrb[0].mxu0 %v1020
  %v1358 = vpop.f32.mrb[0].mxu0
  %v1359 = vadd.f32 0.0, %v1358
  %v1360 = vpop.f32.mrb[0].mxu0
  %1361 = vmatprep.mubr.f32.mxu0 0.0
  %1362 = vmatmul.mubr.f32.gmra.mrb[0].mxu0 %v1023
  %v1363 = vpop.f32.mrb[0].mxu0
  %v1364 = vadd.f32 0.0, %v1363
  %v1365 = vpop.f32.mrb[0].mxu0
  %1366 = vmatprep.mubr.f32.mxu0 0.0
  %1367 = vmatmul.mubr.f32.gmra.mrb[0].mxu0 %v1026
  %v1368 = vpop.f32.mrb[0].mxu0
  %v1369 = vadd.f32 0.0, %v1368
  %v1370 = vpop.f32.mrb[0].mxu0
  %1371 = vmatprep.mubr.f32.mxu0 0.0
  %1372 = vmatmul.mubr.f32.gmra.mrb[0].mxu0 %v1029
  %v1373 = vpop.f32.mrb[0].mxu0
  %v1374 = vadd.f32 0.0, %v1373
  %v1375 = vpop.f32.mrb[0].mxu0
  %1376 = vmatprep.mubr.f32.mxu0 0.0
  %1377 = vmatmul.mubr.f32.gmra.mrb[0].mxu0 %v1032
  %v1378 = vpop.f32.mrb[0].mxu0
  %v1379 = vadd.f32 0.0, %v1378
  %v1380 = vpop.f32.mrb[0].mxu0
  %1381 = vmatprep.mubr.f32.mxu0 0.0
  %1382 = vmatmul.mubr.f32.gmra.mrb[0].mxu0 %v1035
  %v1383 = vpop.f32.mrb[0].mxu0
  %v1384 = vadd.f32 0.0, %v1383
  %v1385 = vpop.f32.mrb[0].mxu0
  %1386 = vmatprep.mubr.f32.mxu0 0.0
  %1387 = vmatmul.mubr.f32.gmra.mrb[0].mxu0 %v1038
  %v1388 = vpop.f32.mrb[0].mxu0
  %v1389 = vadd.f32 0.0, %v1388
  %v1390 = vpop.f32.mrb[0].mxu0
  %1391 = vmatprep.mubr.f32.mxu0 0.0
  %1392 = vmatmul.mubr.f32.gmra.mrb[0].mxu0 %v1041
  %v1393 = vpop.f32.mrb[0].mxu0
  %v1394 = vadd.f32 0.0, %v1393
  %v1395 = vpop.f32.mrb[0].mxu0
  %1396 = vmatprep.mubr.f32.mxu0 0.0
  %1397 = vmatmul.mubr.f32.gmra.mrb[0].mxu0 %v1044
  %v1398 = vpop.f32.mrb[0].mxu0
  %v1399 = vadd.f32 0.0, %v1398
  %v1400 = vpop.f32.mrb[0].mxu0
  %1401 = vmatprep.mubr.f32.mxu0 0.0
  %1402 = vmatmul.mubr.f32.gmra.mrb[0].mxu0 %v1047
  %v1403 = vpop.f32.mrb[0].mxu0
  %v1404 = vadd.f32 0.0, %v1403
  %v1405 = vpop.f32.mrb[0].mxu0
  %1406 = vmatprep.mubr.f32.mxu0 0.0
  %1407 = vmatmul.mubr.f32.gmra.mrb[0].mxu0 %v1050
  %v1408 = vpop.f32.mrb[0].mxu0
  %v1409 = vadd.f32 0.0, %v1408
  %v1410 = vpop.f32.mrb[0].mxu0
  %1411 = vmatprep.mubr.f32.mxu0 0.0
  %1412 = vmatmul.mubr.f32.gmra.mrb[0].mxu0 %v1053
  %v1413 = vpop.f32.mrb[0].mxu0
  %v1414 = vadd.f32 0.0, %v1413
  %v1415 = vpop.f32.mrb[0].mxu0
  %1416 = vmatprep.mubr.f32.mxu0 0.0
  %1417 = vmatmul.mubr.f32.gmra.mrb[0].mxu0 %v1056
  %v1418 = vpop.f32.mrb[0].mxu0
  %v1419 = vadd.f32 0.0, %v1418
  %v1420 = vpop.f32.mrb[0].mxu0
  %1421 = vmatprep.mubr.f32.mxu0 0.0
  %1422 = vmatmul.mubr.f32.gmra.mrb[0].mxu0 %v1059
  %v1423 = vpop.f32.mrb[0].mxu0
  %v1424 = vadd.f32 0.0, %v1423
  %v1425 = vpop.f32.mrb[0].mxu0
  %1426 = vmatprep.mubr.f32.mxu0 0.0
  %1427 = vmatmul.mubr.f32.gmra.mrb[0].mxu0 %v1062
  %v1428 = vpop.f32.mrb[0].mxu0
  %v1429 = vadd.f32 0.0, %v1428
  %v1430 = vpop.f32.mrb[0].mxu0
  %1431 = vmatprep.mubr.f32.mxu0 0.0
  %1432 = vmatmul.mubr.f32.gmra.mrb[0].mxu0 %v1065
  %v1433 = vpop.f32.mrb[0].mxu0
  %v1434 = vadd.f32 0.0, %v1433
  %v1435 = vpop.f32.mrb[0].mxu0
  %1436 = vmatprep.mubr.f32.mxu0 0.0
  %1437 = vmatmul.mubr.f32.gmra.mrb[0].mxu0 %v1068
  %v1438 = vpop.f32.mrb[0].mxu0
  %v1439 = vadd.f32 0.0, %v1438
  %v1440 = vpop.f32.mrb[0].mxu0
  %1441 = vmatprep.mubr.f32.mxu0 0.0
  %1442 = vmatmul.mubr.f32.gmra.mrb[0].mxu0 %v1071
  %v1443 = vpop.f32.mrb[0].mxu0
  %v1444 = vadd.f32 0.0, %v1443
  %v1445 = vpop.f32.mrb[0].mxu0
  %1446 = vmatprep.mubr.f32.mxu0 0.0
  %1447 = vmatmul.mubr.f32.gmra.mrb[0].mxu0 %v1074
  %v1448 = vpop.f32.mrb[0].mxu0
  %v1449 = vadd.f32 0.0, %v1448
  %v1450 = vpop.f32.mrb[0].mxu0
  %1451 = vmatprep.mubr.f32.mxu0 0.0
  %1452 = vmatmul.mubr.f32.gmra.mrb[0].mxu0 %v1077
  %v1453 = vpop.f32.mrb[0].mxu0
  %v1454 = vadd.f32 0.0, %v1453
  %v1455 = vpop.f32.mrb[0].mxu0
  %1456 = vmatprep.mubr.f32.mxu0 0.0
  %1457 = vmatmul.mubr.f32.gmra.mrb[0].mxu0 %v1080
  %v1458 = vpop.f32.mrb[0].mxu0
  %v1459 = vadd.f32 0.0, %v1458
  %v1460 = vpop.f32.mrb[0].mxu0
  %1461 = vmatprep.mubr.f32.mxu0 0.0
  %1462 = vmatmul.mubr.f32.gmra.mrb[0].mxu0 %v1083
  %v1463 = vpop.f32.mrb[0].mxu0
  %v1464 = vadd.f32 0.0, %v1463
  %v1465 = vpop.f32.mrb[0].mxu0
  %1466 = vmatprep.mubr.f32.mxu0 0.0
  %1467 = vmatmul.mubr.f32.gmra.mrb[0].mxu0 %v1086
  %v1468 = vpop.f32.mrb[0].mxu0
  %v1469 = vadd.f32 0.0, %v1468
  %v1470 = vpop.f32.mrb[0].mxu0
  %1471 = vmatprep.mubr.f32.mxu0 0.0
  %1472 = vmatmul.mubr.f32.gmra.mrb[0].mxu0 %v1089
  %v1473 = vpop.f32.mrb[0].mxu0
  %v1474 = vadd.f32 0.0, %v1473
  %v1475 = vpop.f32.mrb[0].mxu0
  %1476 = vmatprep.mubr.f32.mxu0 0.0
  %1477 = vmatmul.mubr.f32.gmra.mrb[0].mxu0 %v1092
  %v1478 = vpop.f32.mrb[0].mxu0
  %v1479 = vadd.f32 0.0, %v1478
  %v1480 = vpop.f32.mrb[0].mxu0
  %1481 = vdwg.mxu0
  %v1482 = vadd.f32 %v584, %v1164
  %v1483 = vadd.f32 %v589, %v1169
  %v1484 = vadd.f32 %v594, %v1174
  %v1485 = vadd.f32 %v599, %v1179
  %v1486 = vadd.f32 %v604, %v1184
  %v1487 = vadd.f32 %v609, %v1189
  %v1488 = vadd.f32 %v614, %v1194
  %v1489 = vadd.f32 %v619, %v1199
  %v1490 = vadd.f32 %v624, %v1204
  %v1491 = vadd.f32 %v629, %v1209
  %v1492 = vadd.f32 %v634, %v1214
  %v1493 = vadd.f32 %v639, %v1219
  %v1494 = vadd.f32 %v644, %v1224
  %v1495 = vadd.f32 %v649, %v1229
  %v1496 = vadd.f32 %v654, %v1234
  %v1497 = vadd.f32 %v659, %v1239
  %v1498 = vadd.f32 %v664, %v1244
  %v1499 = vadd.f32 %v669, %v1249
  %v1500 = vadd.f32 %v674, %v1254
  %v1501 = vadd.f32 %v679, %v1259
  %v1502 = vadd.f32 %v684, %v1264
  %v1503 = vadd.f32 %v689, %v1269
  %v1504 = vadd.f32 %v694, %v1274
  %v1505 = vadd.f32 %v699, %v1279
  %v1506 = vadd.f32 %v704, %v1284
  %v1507 = vadd.f32 %v709, %v1289
  %v1508 = vadd.f32 %v714, %v1294
  %v1509 = vadd.f32 %v719, %v1299
  %v1510 = vadd.f32 %v724, %v1304
  %v1511 = vadd.f32 %v729, %v1309
  %v1512 = vadd.f32 %v734, %v1314
  %v1513 = vadd.f32 %v739, %v1319
  %v1514 = vadd.f32 %v744, %v1324
  %v1515 = vadd.f32 %v749, %v1329
  %v1516 = vadd.f32 %v754, %v1334
  %v1517 = vadd.f32 %v759, %v1339
  %v1518 = vadd.f32 %v764, %v1344
  %v1519 = vadd.f32 %v769, %v1349
  %v1520 = vadd.f32 %v774, %v1354
  %v1521 = vadd.f32 %v779, %v1359
  %v1522 = vadd.f32 %v784, %v1364
  %v1523 = vadd.f32 %v789, %v1369
  %v1524 = vadd.f32 %v794, %v1374
  %v1525 = vadd.f32 %v799, %v1379
  %v1526 = vadd.f32 %v804, %v1384
  %v1527 = vadd.f32 %v809, %v1389
  %v1528 = vadd.f32 %v814, %v1394
  %v1529 = vadd.f32 %v819, %v1399
  %v1530 = vadd.f32 %v824, %v1404
  %v1531 = vadd.f32 %v829, %v1409
  %v1532 = vadd.f32 %v834, %v1414
  %v1533 = vadd.f32 %v839, %v1419
  %v1534 = vadd.f32 %v844, %v1424
  %v1535 = vadd.f32 %v849, %v1429
  %v1536 = vadd.f32 %v854, %v1434
  %v1537 = vadd.f32 %v859, %v1439
  %v1538 = vadd.f32 %v864, %v1444
  %v1539 = vadd.f32 %v869, %v1449
  %v1540 = vadd.f32 %v874, %v1454
  %v1541 = vadd.f32 %v879, %v1459
  %v1542 = vadd.f32 %v884, %v1464
  %v1543 = vadd.f32 %v889, %v1469
  %v1544 = vadd.f32 %v894, %v1474
  %v1545 = vadd.f32 %v899, %v1479
  %v1546 = vmax.f32 %v1482, 0.0
  %v1547 = vmax.f32 %v1483, 0.0
  %v1548 = vmax.f32 %v1484, 0.0
  %v1549 = vmax.f32 %v1485, 0.0
  %v1550 = vmax.f32 %v1486, 0.0
  %v1551 = vmax.f32 %v1487, 0.0
  %v1552 = vmax.f32 %v1488, 0.0
  %v1553 = vmax.f32 %v1489, 0.0
  %v1554 = vmax.f32 %v1490, 0.0
  %v1555 = vmax.f32 %v1491, 0.0
  %v1556 = vmax.f32 %v1492, 0.0
  %v1557 = vmax.f32 %v1493, 0.0
  %v1558 = vmax.f32 %v1494, 0.0
  %v1559 = vmax.f32 %v1495, 0.0
  %v1560 = vmax.f32 %v1496, 0.0
  %v1561 = vmax.f32 %v1497, 0.0
  %v1562 = vmax.f32 %v1498, 0.0
  %v1563 = vmax.f32 %v1499, 0.0
  %v1564 = vmax.f32 %v1500, 0.0
  %v1565 = vmax.f32 %v1501, 0.0
  %v1566 = vmax.f32 %v1502, 0.0
  %v1567 = vmax.f32 %v1503, 0.0
  %v1568 = vmax.f32 %v1504, 0.0
  %v1569 = vmax.f32 %v1505, 0.0
  %v1570 = vmax.f32 %v1506, 0.0
  %v1571 = vmax.f32 %v1507, 0.0
  %v1572 = vmax.f32 %v1508, 0.0
  %v1573 = vmax.f32 %v1509, 0.0
  %v1574 = vmax.f32 %v1510, 0.0
  %v1575 = vmax.f32 %v1511, 0.0
  %v1576 = vmax.f32 %v1512, 0.0
  %v1577 = vmax.f32 %v1513, 0.0
  %v1578 = vmax.f32 %v1514, 0.0
  %v1579 = vmax.f32 %v1515, 0.0
  %v1580 = vmax.f32 %v1516, 0.0
  %v1581 = vmax.f32 %v1517, 0.0
  %v1582 = vmax.f32 %v1518, 0.0
  %v1583 = vmax.f32 %v1519, 0.0
  %v1584 = vmax.f32 %v1520, 0.0
  %v1585 = vmax.f32 %v1521, 0.0
  %v1586 = vmax.f32 %v1522, 0.0
  %v1587 = vmax.f32 %v1523, 0.0
  %v1588 = vmax.f32 %v1524, 0.0
  %v1589 = vmax.f32 %v1525, 0.0
  %v1590 = vmax.f32 %v1526, 0.0
  %v1591 = vmax.f32 %v1527, 0.0
  %v1592 = vmax.f32 %v1528, 0.0
  %v1593 = vmax.f32 %v1529, 0.0
  %v1594 = vmax.f32 %v1530, 0.0
  %v1595 = vmax.f32 %v1531, 0.0
  %v1596 = vmax.f32 %v1532, 0.0
  %v1597 = vmax.f32 %v1533, 0.0
  %v1598 = vmax.f32 %v1534, 0.0
  %v1599 = vmax.f32 %v1535, 0.0
  %v1600 = vmax.f32 %v1536, 0.0
  %v1601 = vmax.f32 %v1537, 0.0
  %v1602 = vmax.f32 %v1538, 0.0
  %v1603 = vmax.f32 %v1539, 0.0
  %v1604 = vmax.f32 %v1540, 0.0
  %v1605 = vmax.f32 %v1541, 0.0
  %v1606 = vmax.f32 %v1542, 0.0
  %v1607 = vmax.f32 %v1543, 0.0
  %v1608 = vmax.f32 %v1544, 0.0
  %v1609 = vmax.f32 %v1545, 0.0
  %1610 = vmatprep.subr.mxu0 0.0
  %1611 = vmatpush1.msra.mxu0 %v1546
  %1612 = vmatprep.subr.mxu0 0.0
  %1613 = vmatpush1.msra.mxu0 %v1547
  %1614 = vmatprep.subr.mxu0 0.0
  %1615 = vmatpush1.msra.mxu0 %v1548
  %1616 = vmatprep.subr.mxu0 0.0
  %1617 = vmatpush1.msra.mxu0 %v1549
  %1618 = vmatprep.subr.mxu0 0.0
  %1619 = vmatpush1.msra.mxu0 %v1550
  %1620 = vmatprep.subr.mxu0 0.0
  %1621 = vmatpush1.msra.mxu0 %v1551
  %1622 = vmatprep.subr.mxu0 0.0
  %1623 = vmatpush1.msra.mxu0 %v1552
  %1624 = vmatprep.subr.mxu0 0.0
  %1625 = vmatpush1.msra.mxu0 %v1553
  %1626 = vmatprep.subr.mxu0 0.0
  %1627 = vmatpush1.msra.mxu0 %v1554
  %1628 = vmatprep.subr.mxu0 0.0
  %1629 = vmatpush1.msra.mxu0 %v1555
  %1630 = vmatprep.subr.mxu0 0.0
  %1631 = vmatpush1.msra.mxu0 %v1556
  %1632 = vmatprep.subr.mxu0 0.0
  %1633 = vmatpush1.msra.mxu0 %v1557
  %1634 = vmatprep.subr.mxu0 0.0
  %1635 = vmatpush1.msra.mxu0 %v1558
  %1636 = vmatprep.subr.mxu0 0.0
  %1637 = vmatpush1.msra.mxu0 %v1559
  %1638 = vmatprep.subr.mxu0 0.0
  %1639 = vmatpush1.msra.mxu0 %v1560
  %1640 = vmatprep.subr.mxu0 0.0
  %1641 = vmatpush1.msra.mxu0 %v1561
  %1642 = vmatprep.subr.mxu0 0.0
  %1643 = vmatpush1.msra.mxu0 %v1562
  %1644 = vmatprep.subr.mxu0 0.0
  %1645 = vmatpush1.msra.mxu0 %v1563
  %1646 = vmatprep.subr.mxu0 0.0
  %1647 = vmatpush1.msra.mxu0 %v1564
  %1648 = vmatprep.subr.mxu0 0.0
  %1649 = vmatpush1.msra.mxu0 %v1565
  %1650 = vmatprep.subr.mxu0 0.0
  %1651 = vmatpush1.msra.mxu0 %v1566
  %1652 = vmatprep.subr.mxu0 0.0
  %1653 = vmatpush1.msra.mxu0 %v1567
  %1654 = vmatprep.subr.mxu0 0.0
  %1655 = vmatpush1.msra.mxu0 %v1568
  %1656 = vmatprep.subr.mxu0 0.0
  %1657 = vmatpush1.msra.mxu0 %v1569
  %1658 = vmatprep.subr.mxu0 0.0
  %1659 = vmatpush1.msra.mxu0 %v1570
  %1660 = vmatprep.subr.mxu0 0.0
  %1661 = vmatpush1.msra.mxu0 %v1571
  %1662 = vmatprep.subr.mxu0 0.0
  %1663 = vmatpush1.msra.mxu0 %v1572
  %1664 = vmatprep.subr.mxu0 0.0
  %1665 = vmatpush1.msra.mxu0 %v1573
  %1666 = vmatprep.subr.mxu0 0.0
  %1667 = vmatpush1.msra.mxu0 %v1574
  %1668 = vmatprep.subr.mxu0 0.0
  %1669 = vmatpush1.msra.mxu0 %v1575
  %1670 = vmatprep.subr.mxu0 0.0
  %1671 = vmatpush1.msra.mxu0 %v1576
  %1672 = vmatprep.subr.mxu0 0.0
  %1673 = vmatpush1.msra.mxu0 %v1577
  %1674 = vmatprep.mubr.f32.mxu0 %v192
  %1675 = vmatmul.mubr.f32.gmra.mrb[0].mxu0 %v191
  %v1676 = vpop.f32.mrb[0].mxu0
  %v1677 = vadd.f32 0.0, %v1676
  %v1678 = vpop.f32.mrb[0].mxu0
  %1679 = vmatprep.mubr.f32.mxu0 %v196
  %1680 = vmatmul.mubr.f32.gmra.mrb[0].mxu0 %v195
  %v1681 = vpop.f32.mrb[0].mxu0
  %v1682 = vadd.f32 0.0, %v1681
  %v1683 = vpop.f32.mrb[0].mxu0
  %1684 = vmatprep.mubr.f32.mxu0 %v200
  %1685 = vmatmul.mubr.f32.gmra.mrb[0].mxu0 %v199
  %v1686 = vpop.f32.mrb[0].mxu0
  %v1687 = vadd.f32 0.0, %v1686
  %v1688 = vpop.f32.mrb[0].mxu0
  %1689 = vmatprep.mubr.f32.mxu0 %v204
  %1690 = vmatmul.mubr.f32.gmra.mrb[0].mxu0 %v203
  %v1691 = vpop.f32.mrb[0].mxu0
  %v1692 = vadd.f32 0.0, %v1691
  %v1693 = vpop.f32.mrb[0].mxu0
  %1694 = vdwg.mxu0
  %1695 = vmatprep.subr.mxu0 0.0
  %1696 = vmatpush1.msra.mxu0 %v1578
  %1697 = vmatprep.subr.mxu0 0.0
  %1698 = vmatpush1.msra.mxu0 %v1579
  %1699 = vmatprep.subr.mxu0 0.0
  %1700 = vmatpush1.msra.mxu0 %v1580
  %1701 = vmatprep.subr.mxu0 0.0
  %1702 = vmatpush1.msra.mxu0 %v1581
  %1703 = vmatprep.subr.mxu0 0.0
  %1704 = vmatpush1.msra.mxu0 %v1582
  %1705 = vmatprep.subr.mxu0 0.0
  %1706 = vmatpush1.msra.mxu0 %v1583
  %1707 = vmatprep.subr.mxu0 0.0
  %1708 = vmatpush1.msra.mxu0 %v1584
  %1709 = vmatprep.subr.mxu0 0.0
  %1710 = vmatpush1.msra.mxu0 %v1585
  %1711 = vmatprep.subr.mxu0 0.0
  %1712 = vmatpush1.msra.mxu0 %v1586
  %1713 = vmatprep.subr.mxu0 0.0
  %1714 = vmatpush1.msra.mxu0 %v1587
  %1715 = vmatprep.subr.mxu0 0.0
  %1716 = vmatpush1.msra.mxu0 %v1588
  %1717 = vmatprep.subr.mxu0 0.0
  %1718 = vmatpush1.msra.mxu0 %v1589
  %1719 = vmatprep.subr.mxu0 0.0
  %1720 = vmatpush1.msra.mxu0 %v1590
  %1721 = vmatprep.subr.mxu0 0.0
  %1722 = vmatpush1.msra.mxu0 %v1591
  %1723 = vmatprep.subr.mxu0 0.0
  %1724 = vmatpush1.msra.mxu0 %v1592
  %1725 = vmatprep.subr.mxu0 0.0
  %1726 = vmatpush1.msra.mxu0 %v1593
  %1727 = vmatprep.subr.mxu0 0.0
  %1728 = vmatpush1.msra.mxu0 %v1594
  %1729 = vmatprep.subr.mxu0 0.0
  %1730 = vmatpush1.msra.mxu0 %v1595
  %1731 = vmatprep.subr.mxu0 0.0
  %1732 = vmatpush1.msra.mxu0 %v1596
  %1733 = vmatprep.subr.mxu0 0.0
  %1734 = vmatpush1.msra.mxu0 %v1597
  %1735 = vmatprep.subr.mxu0 0.0
  %1736 = vmatpush1.msra.mxu0 %v1598
  %1737 = vmatprep.subr.mxu0 0.0
  %1738 = vmatpush1.msra.mxu0 %v1599
  %1739 = vmatprep.subr.mxu0 0.0
  %1740 = vmatpush1.msra.mxu0 %v1600
  %1741 = vmatprep.subr.mxu0 0.0
  %1742 = vmatpush1.msra.mxu0 %v1601
  %1743 = vmatprep.subr.mxu0 0.0
  %1744 = vmatpush1.msra.mxu0 %v1602
  %1745 = vmatprep.subr.mxu0 0.0
  %1746 = vmatpush1.msra.mxu0 %v1603
  %1747 = vmatprep.subr.mxu0 0.0
  %1748 = vmatpush1.msra.mxu0 %v1604
  %1749 = vmatprep.subr.mxu0 0.0
  %1750 = vmatpush1.msra.mxu0 %v1605
  %1751 = vmatprep.subr.mxu0 0.0
  %1752 = vmatpush1.msra.mxu0 %v1606
  %1753 = vmatprep.subr.mxu0 0.0
  %1754 = vmatpush1.msra.mxu0 %v1607
  %1755 = vmatprep.subr.mxu0 0.0
  %1756 = vmatpush1.msra.mxu0 %v1608
  %1757 = vmatprep.subr.mxu0 0.0
  %1758 = vmatpush1.msra.mxu0 %v1609
  %1759 = vmatprep.mubr.f32.mxu0 %v194
  %1760 = vmatmul.mubr.f32.gmra.mrb[0].mxu0 %v193
  %v1761 = vpop.f32.mrb[0].mxu0
  %v1762 = vadd.f32 %v1677, %v1761
  %v1763 = vpop.f32.mrb[0].mxu0
  %1764 = vmatprep.mubr.f32.mxu0 %v198
  %1765 = vmatmul.mubr.f32.gmra.mrb[0].mxu0 %v197
  %v1766 = vpop.f32.mrb[0].mxu0
  %v1767 = vadd.f32 %v1682, %v1766
  %v1768 = vpop.f32.mrb[0].mxu0
  %1769 = vmatprep.mubr.f32.mxu0 %v202
  %1770 = vmatmul.mubr.f32.gmra.mrb[0].mxu0 %v201
  %v1771 = vpop.f32.mrb[0].mxu0
  %v1772 = vadd.f32 %v1687, %v1771
  %v1773 = vpop.f32.mrb[0].mxu0
  %1774 = vmatprep.mubr.f32.mxu0 %v206
  %1775 = vmatmul.mubr.f32.gmra.mrb[0].mxu0 %v205
  %v1776 = vpop.f32.mrb[0].mxu0
  %v1777 = vadd.f32 %v1692, %v1776
  %v1778 = vpop.f32.mrb[0].mxu0
  %1779 = vdwg.mxu0
  %v1781 = vlaneseq
  %v1782 = vshrl.u32 %v1781, 7
  %v1783 = vsub.s32 0, %v1782
  %v1784 = vrot.slane %v214, %v1783
  %v1787 = vsel %vm324, %v1762, 0
  %v1790 = vsel %vm324, %v1767, 0
  %v1793 = vsel %vm324, %v1772, 0
  %v1796 = vsel %vm324, %v1777, 0
  %1798 = vmatprep.subr.mxu0 0.0
  %1799 = vmatpush1.msra.mxu0 %v210
  %1800 = vmatprep.subr.mxu0 0.0
  %1801 = vmatpush1.msra.mxu0 %v211
  %1802 = vmatprep.subr.mxu0 0.0
  %1803 = vmatpush1.msra.mxu0 %v212
  %1804 = vmatprep.subr.mxu0 0.0
  %1805 = vmatpush1.msra.mxu0 %v213
  %1806 = vmatprep.subr.mxu0 0.0
  %1807 = vmatpush1.msra.mxu0 0.0
  %1808 = vmatprep.subr.mxu0 0.0
  %1809 = vmatpush1.msra.mxu0 0.0
  %1810 = vmatprep.subr.mxu0 0.0
  %1811 = vmatpush1.msra.mxu0 0.0
  %1812 = vmatprep.subr.mxu0 0.0
  %1813 = vmatpush1.msra.mxu0 0.0
  %1814 = vmatprep.subr.mxu0 0.0
  %1815 = vmatpush1.msra.mxu0 0.0
  %1816 = vmatprep.subr.mxu0 0.0
  %1817 = vmatpush1.msra.mxu0 0.0
  %1818 = vmatprep.subr.mxu0 0.0
  %1819 = vmatpush1.msra.mxu0 0.0
  %1820 = vmatprep.subr.mxu0 0.0
  %1821 = vmatpush1.msra.mxu0 0.0
  %1822 = vmatprep.subr.mxu0 0.0
  %1823 = vmatpush1.msra.mxu0 0.0
  %1824 = vmatprep.subr.mxu0 0.0
  %1825 = vmatpush1.msra.mxu0 0.0
  %1826 = vmatprep.subr.mxu0 0.0
  %1827 = vmatpush1.msra.mxu0 0.0
  %1828 = vmatprep.subr.mxu0 0.0
  %1829 = vmatpush1.msra.mxu0 0.0
  %1830 = vmatprep.subr.mxu0 0.0
  %1831 = vmatpush1.msra.mxu0 0.0
  %1832 = vmatprep.subr.mxu0 0.0
  %1833 = vmatpush1.msra.mxu0 0.0
  %1834 = vmatprep.subr.mxu0 0.0
  %1835 = vmatpush1.msra.mxu0 0.0
  %1836 = vmatprep.subr.mxu0 0.0
  %1837 = vmatpush1.msra.mxu0 0.0
  %1838 = vmatprep.subr.mxu0 0.0
  %1839 = vmatpush1.msra.mxu0 0.0
  %1840 = vmatprep.subr.mxu0 0.0
  %1841 = vmatpush1.msra.mxu0 0.0
  %1842 = vmatprep.subr.mxu0 0.0
  %1843 = vmatpush1.msra.mxu0 0.0
  %1844 = vmatprep.subr.mxu0 0.0
  %1845 = vmatpush1.msra.mxu0 0.0
  %1846 = vmatprep.subr.mxu0 0.0
  %1847 = vmatpush1.msra.mxu0 0.0
  %1848 = vmatprep.subr.mxu0 0.0
  %1849 = vmatpush1.msra.mxu0 0.0
  %1850 = vmatprep.subr.mxu0 0.0
  %1851 = vmatpush1.msra.mxu0 0.0
  %1852 = vmatprep.subr.mxu0 0.0
  %1853 = vmatpush1.msra.mxu0 0.0
  %1854 = vmatprep.subr.mxu0 0.0
  %1855 = vmatpush1.msra.mxu0 0.0
  %1856 = vmatprep.subr.mxu0 0.0
  %1857 = vmatpush1.msra.mxu0 0.0
  %1858 = vmatprep.subr.mxu0 0.0
  %1859 = vmatpush1.msra.mxu0 0.0
  %1860 = vmatprep.subr.mxu0 0.0
  %1861 = vmatpush1.msra.mxu0 0.0
  %1862 = vmatprep.mubr.f32.mxu0 0.0
  %1863 = vmatmul.mubr.f32.gmra.mrb[0].mxu0 %v1787
  %v1864 = vpop.f32.mrb[0].mxu0
  %v1865 = vadd.f32 %v1784, %v1864
  %v1866 = vpop.f32.mrb[0].mxu0
  %1867 = vmatprep.mubr.f32.mxu0 0.0
  %1868 = vmatmul.mubr.f32.gmra.mrb[0].mxu0 %v1790
  %v1869 = vpop.f32.mrb[0].mxu0
  %v1870 = vadd.f32 %v1784, %v1869
  %v1871 = vpop.f32.mrb[0].mxu0
  %1872 = vmatprep.mubr.f32.mxu0 0.0
  %1873 = vmatmul.mubr.f32.gmra.mrb[0].mxu0 %v1793
  %v1874 = vpop.f32.mrb[0].mxu0
  %v1875 = vadd.f32 %v1784, %v1874
  %v1876 = vpop.f32.mrb[0].mxu0
  %1877 = vmatprep.mubr.f32.mxu0 0.0
  %1878 = vmatmul.mubr.f32.gmra.mrb[0].mxu0 %v1796
  %v1879 = vpop.f32.mrb[0].mxu0
  %v1880 = vadd.f32 %v1784, %v1879
  %v1881 = vpop.f32.mrb[0].mxu0
  %1882 = vdwg.mxu0
  %v1884 = vsel %vm229, %v215, 0
  %1886 = vmatprep.subr.mxu0 0.0
  %1887 = vmatpush1.msra.mxu0 %v1884
  %1888 = vmatprep.subr.mxu0 0.0
  %1889 = vmatpush1.msra.mxu0 0.0
  %1890 = vmatprep.subr.mxu0 0.0
  %1891 = vmatpush1.msra.mxu0 0.0
  %1892 = vmatprep.subr.mxu0 0.0
  %1893 = vmatpush1.msra.mxu0 0.0
  %1894 = vmatprep.subr.mxu0 0.0
  %1895 = vmatpush1.msra.mxu0 0.0
  %1896 = vmatprep.subr.mxu0 0.0
  %1897 = vmatpush1.msra.mxu0 0.0
  %1898 = vmatprep.subr.mxu0 0.0
  %1899 = vmatpush1.msra.mxu0 0.0
  %1900 = vmatprep.subr.mxu0 0.0
  %1901 = vmatpush1.msra.mxu0 0.0
  %1902 = vmatprep.subr.mxu0 0.0
  %1903 = vmatpush1.msra.mxu0 0.0
  %1904 = vmatprep.subr.mxu0 0.0
  %1905 = vmatpush1.msra.mxu0 0.0
  %1906 = vmatprep.subr.mxu0 0.0
  %1907 = vmatpush1.msra.mxu0 0.0
  %1908 = vmatprep.subr.mxu0 0.0
  %1909 = vmatpush1.msra.mxu0 0.0
  %1910 = vmatprep.subr.mxu0 0.0
  %1911 = vmatpush1.msra.mxu0 0.0
  %1912 = vmatprep.subr.mxu0 0.0
  %1913 = vmatpush1.msra.mxu0 0.0
  %1914 = vmatprep.subr.mxu0 0.0
  %1915 = vmatpush1.msra.mxu0 0.0
  %1916 = vmatprep.subr.mxu0 0.0
  %1917 = vmatpush1.msra.mxu0 0.0
  %1918 = vmatprep.subr.mxu0 0.0
  %1919 = vmatpush1.msra.mxu0 0.0
  %1920 = vmatprep.subr.mxu0 0.0
  %1921 = vmatpush1.msra.mxu0 0.0
  %1922 = vmatprep.subr.mxu0 0.0
  %1923 = vmatpush1.msra.mxu0 0.0
  %1924 = vmatprep.subr.mxu0 0.0
  %1925 = vmatpush1.msra.mxu0 0.0
  %1926 = vmatprep.subr.mxu0 0.0
  %1927 = vmatpush1.msra.mxu0 0.0
  %1928 = vmatprep.subr.mxu0 0.0
  %1929 = vmatpush1.msra.mxu0 0.0
  %1930 = vmatprep.subr.mxu0 0.0
  %1931 = vmatpush1.msra.mxu0 0.0
  %1932 = vmatprep.subr.mxu0 0.0
  %1933 = vmatpush1.msra.mxu0 0.0
  %1934 = vmatprep.subr.mxu0 0.0
  %1935 = vmatpush1.msra.mxu0 0.0
  %1936 = vmatprep.subr.mxu0 0.0
  %1937 = vmatpush1.msra.mxu0 0.0
  %1938 = vmatprep.subr.mxu0 0.0
  %1939 = vmatpush1.msra.mxu0 0.0
  %1940 = vmatprep.subr.mxu0 0.0
  %1941 = vmatpush1.msra.mxu0 0.0
  %1942 = vmatprep.subr.mxu0 0.0
  %1943 = vmatpush1.msra.mxu0 0.0
  %1944 = vmatprep.subr.mxu0 0.0
  %1945 = vmatpush1.msra.mxu0 0.0
  %1946 = vmatprep.subr.mxu0 0.0
  %1947 = vmatpush1.msra.mxu0 0.0
  %1948 = vmatprep.subr.mxu0 0.0
  %1949 = vmatpush1.msra.mxu0 0.0
  %1950 = vmatprep.mubr.f32.mxu0 0.0
  %1951 = vmatmul.mubr.f32.gmra.mrb[0].mxu0 %v218
  %v1952 = vpop.f32.mrb[0].mxu0
  %v1953 = vadd.f32 0.0, %v1952
  %v1954 = vpop.f32.mrb[0].mxu0
  %1955 = vmatprep.mubr.f32.mxu0 0.0
  %1956 = vmatmul.mubr.f32.gmra.mrb[0].mxu0 %v221
  %v1957 = vpop.f32.mrb[0].mxu0
  %v1958 = vadd.f32 0.0, %v1957
  %v1959 = vpop.f32.mrb[0].mxu0
  %1960 = vmatprep.mubr.f32.mxu0 0.0
  %1961 = vmatmul.mubr.f32.gmra.mrb[0].mxu0 %v224
  %v1962 = vpop.f32.mrb[0].mxu0
  %v1963 = vadd.f32 0.0, %v1962
  %v1964 = vpop.f32.mrb[0].mxu0
  %1965 = vmatprep.mubr.f32.mxu0 0.0
  %1966 = vmatmul.mubr.f32.gmra.mrb[0].mxu0 %v227
  %v1967 = vpop.f32.mrb[0].mxu0
  %v1968 = vadd.f32 0.0, %v1967
  %v1969 = vpop.f32.mrb[0].mxu0
  %1970 = vdwg.mxu0
  %v1971 = vadd.f32 %v1865, %v1953
  %v1972 = vadd.f32 %v1870, %v1958
  %v1973 = vadd.f32 %v1875, %v1963
  %v1974 = vadd.f32 %v1880, %v1968
  %v1975 = vmax.f32 %v1971, 0.0
  %v1976 = vmax.f32 %v1972, 0.0
  %v1977 = vmax.f32 %v1973, 0.0
  %v1978 = vmax.f32 %v1974, 0.0
  %v1979 = vld [vmem:[%s16] sm:$0x1]
  %v1980 = vld [vmem:[%s17] sm:$0x1]
  %v1981 = vsel %vm324, %v1546, 0.0
  %1982 = vadd.xlane.f32.xlu0 %v1981
  %v1983 = vpop.xlane.xlu0 %1982
  %v1984 = vsel %vm324, %v1547, 0.0
  %1985 = vadd.xlane.f32.xlu0 %v1984
  %v1986 = vpop.xlane.xlu0 %1985
  %v1987 = vsel %vm324, %v1548, 0.0
  %1988 = vadd.xlane.f32.xlu0 %v1987
  %v1989 = vpop.xlane.xlu0 %1988
  %v1990 = vsel %vm324, %v1549, 0.0
  %1991 = vadd.xlane.f32.xlu0 %v1990
  %v1992 = vpop.xlane.xlu0 %1991
  %v1993 = vsel %vm324, %v1550, 0.0
  %1994 = vadd.xlane.f32.xlu0 %v1993
  %v1995 = vpop.xlane.xlu0 %1994
  %v1996 = vsel %vm324, %v1551, 0.0
  %1997 = vadd.xlane.f32.xlu0 %v1996
  %v1998 = vpop.xlane.xlu0 %1997
  %v1999 = vsel %vm324, %v1552, 0.0
  %2000 = vadd.xlane.f32.xlu0 %v1999
  %v2001 = vpop.xlane.xlu0 %2000
  %v2002 = vsel %vm324, %v1553, 0.0
  %2003 = vadd.xlane.f32.xlu0 %v2002
  %v2004 = vpop.xlane.xlu0 %2003
  %v2005 = vsel %vm324, %v1554, 0.0
  %2006 = vadd.xlane.f32.xlu0 %v2005
  %v2007 = vpop.xlane.xlu0 %2006
  %v2008 = vsel %vm324, %v1555, 0.0
  %2009 = vadd.xlane.f32.xlu0 %v2008
  %v2010 = vpop.xlane.xlu0 %2009
  %v2011 = vsel %vm324, %v1556, 0.0
  %2012 = vadd.xlane.f32.xlu0 %v2011
  %v2013 = vpop.xlane.xlu0 %2012
  %v2014 = vsel %vm324, %v1557, 0.0
  %2015 = vadd.xlane.f32.xlu0 %v2014
  %v2016 = vpop.xlane.xlu0 %2015
  %v2017 = vsel %vm324, %v1558, 0.0
  %2018 = vadd.xlane.f32.xlu0 %v2017
  %v2019 = vpop.xlane.xlu0 %2018
  %v2020 = vsel %vm324, %v1559, 0.0
  %2021 = vadd.xlane.f32.xlu0 %v2020
  %v2022 = vpop.xlane.xlu0 %2021
  %v2023 = vsel %vm324, %v1560, 0.0
  %2024 = vadd.xlane.f32.xlu0 %v2023
  %v2025 = vpop.xlane.xlu0 %2024
  %v2026 = vsel %vm324, %v1561, 0.0
  %2027 = vadd.xlane.f32.xlu0 %v2026
  %v2028 = vpop.xlane.xlu0 %2027
  %v2029 = vsel %vm324, %v1562, 0.0
  %2030 = vadd.xlane.f32.xlu0 %v2029
  %v2031 = vpop.xlane.xlu0 %2030
  %v2032 = vsel %vm324, %v1563, 0.0
  %2033 = vadd.xlane.f32.xlu0 %v2032
  %v2034 = vpop.xlane.xlu0 %2033
  %v2035 = vsel %vm324, %v1564, 0.0
  %2036 = vadd.xlane.f32.xlu0 %v2035
  %v2037 = vpop.xlane.xlu0 %2036
  %v2038 = vsel %vm324, %v1565, 0.0
  %2039 = vadd.xlane.f32.xlu0 %v2038
  %v2040 = vpop.xlane.xlu0 %2039
  %v2041 = vsel %vm324, %v1566, 0.0
  %2042 = vadd.xlane.f32.xlu0 %v2041
  %v2043 = vpop.xlane.xlu0 %2042
  %v2044 = vsel %vm324, %v1567, 0.0
  %2045 = vadd.xlane.f32.xlu0 %v2044
  %v2046 = vpop.xlane.xlu0 %2045
  %v2047 = vsel %vm324, %v1568, 0.0
  %2048 = vadd.xlane.f32.xlu0 %v2047
  %v2049 = vpop.xlane.xlu0 %2048
  %v2050 = vsel %vm324, %v1569, 0.0
  %2051 = vadd.xlane.f32.xlu0 %v2050
  %v2052 = vpop.xlane.xlu0 %2051
  %v2053 = vsel %vm324, %v1570, 0.0
  %2054 = vadd.xlane.f32.xlu0 %v2053
  %v2055 = vpop.xlane.xlu0 %2054
  %v2056 = vsel %vm324, %v1571, 0.0
  %2057 = vadd.xlane.f32.xlu0 %v2056
  %v2058 = vpop.xlane.xlu0 %2057
  %v2059 = vsel %vm324, %v1572, 0.0
  %2060 = vadd.xlane.f32.xlu0 %v2059
  %v2061 = vpop.xlane.xlu0 %2060
  %v2062 = vsel %vm324, %v1573, 0.0
  %2063 = vadd.xlane.f32.xlu0 %v2062
  %v2064 = vpop.xlane.xlu0 %2063
  %v2065 = vsel %vm324, %v1574, 0.0
  %2066 = vadd.xlane.f32.xlu0 %v2065
  %v2067 = vpop.xlane.xlu0 %2066
  %v2068 = vsel %vm324, %v1575, 0.0
  %2069 = vadd.xlane.f32.xlu0 %v2068
  %v2070 = vpop.xlane.xlu0 %2069
  %v2071 = vsel %vm324, %v1576, 0.0
  %2072 = vadd.xlane.f32.xlu0 %v2071
  %v2073 = vpop.xlane.xlu0 %2072
  %v2074 = vsel %vm324, %v1577, 0.0
  %2075 = vadd.xlane.f32.xlu0 %v2074
  %v2076 = vpop.xlane.xlu0 %2075
  %v2077 = vsel %vm324, %v1578, 0.0
  %2078 = vadd.xlane.f32.xlu0 %v2077
  %v2079 = vpop.xlane.xlu0 %2078
  %v2080 = vsel %vm324, %v1579, 0.0
  %2081 = vadd.xlane.f32.xlu0 %v2080
  %v2082 = vpop.xlane.xlu0 %2081
  %v2083 = vsel %vm324, %v1580, 0.0
  %2084 = vadd.xlane.f32.xlu0 %v2083
  %v2085 = vpop.xlane.xlu0 %2084
  %v2086 = vsel %vm324, %v1581, 0.0
  %2087 = vadd.xlane.f32.xlu0 %v2086
  %v2088 = vpop.xlane.xlu0 %2087
  %v2089 = vsel %vm324, %v1582, 0.0
  %2090 = vadd.xlane.f32.xlu0 %v2089
  %v2091 = vpop.xlane.xlu0 %2090
  %v2092 = vsel %vm324, %v1583, 0.0
  %2093 = vadd.xlane.f32.xlu0 %v2092
  %v2094 = vpop.xlane.xlu0 %2093
  %v2095 = vsel %vm324, %v1584, 0.0
  %2096 = vadd.xlane.f32.xlu0 %v2095
  %v2097 = vpop.xlane.xlu0 %2096
  %v2098 = vsel %vm324, %v1585, 0.0
  %2099 = vadd.xlane.f32.xlu0 %v2098
  %v2100 = vpop.xlane.xlu0 %2099
  %v2101 = vsel %vm324, %v1586, 0.0
  %2102 = vadd.xlane.f32.xlu0 %v2101
  %v2103 = vpop.xlane.xlu0 %2102
  %v2104 = vsel %vm324, %v1587, 0.0
  %2105 = vadd.xlane.f32.xlu0 %v2104
  %v2106 = vpop.xlane.xlu0 %2105
  %v2107 = vsel %vm324, %v1588, 0.0
  %2108 = vadd.xlane.f32.xlu0 %v2107
  %v2109 = vpop.xlane.xlu0 %2108
  %v2110 = vsel %vm324, %v1589, 0.0
  %2111 = vadd.xlane.f32.xlu0 %v2110
  %v2112 = vpop.xlane.xlu0 %2111
  %v2113 = vsel %vm324, %v1590, 0.0
  %2114 = vadd.xlane.f32.xlu0 %v2113
  %v2115 = vpop.xlane.xlu0 %2114
  %v2116 = vsel %vm324, %v1591, 0.0
  %2117 = vadd.xlane.f32.xlu0 %v2116
  %v2118 = vpop.xlane.xlu0 %2117
  %v2119 = vsel %vm324, %v1592, 0.0
  %2120 = vadd.xlane.f32.xlu0 %v2119
  %v2121 = vpop.xlane.xlu0 %2120
  %v2122 = vsel %vm324, %v1593, 0.0
  %2123 = vadd.xlane.f32.xlu0 %v2122
  %v2124 = vpop.xlane.xlu0 %2123
  %v2125 = vsel %vm324, %v1594, 0.0
  %2126 = vadd.xlane.f32.xlu0 %v2125
  %v2127 = vpop.xlane.xlu0 %2126
  %v2128 = vsel %vm324, %v1595, 0.0
  %2129 = vadd.xlane.f32.xlu0 %v2128
  %v2130 = vpop.xlane.xlu0 %2129
  %v2131 = vsel %vm324, %v1596, 0.0
  %2132 = vadd.xlane.f32.xlu0 %v2131
  %v2133 = vpop.xlane.xlu0 %2132
  %v2134 = vsel %vm324, %v1597, 0.0
  %2135 = vadd.xlane.f32.xlu0 %v2134
  %v2136 = vpop.xlane.xlu0 %2135
  %v2137 = vsel %vm324, %v1598, 0.0
  %2138 = vadd.xlane.f32.xlu0 %v2137
  %v2139 = vpop.xlane.xlu0 %2138
  %v2140 = vsel %vm324, %v1599, 0.0
  %2141 = vadd.xlane.f32.xlu0 %v2140
  %v2142 = vpop.xlane.xlu0 %2141
  %v2143 = vsel %vm324, %v1600, 0.0
  %2144 = vadd.xlane.f32.xlu0 %v2143
  %v2145 = vpop.xlane.xlu0 %2144
  %v2146 = vsel %vm324, %v1601, 0.0
  %2147 = vadd.xlane.f32.xlu0 %v2146
  %v2148 = vpop.xlane.xlu0 %2147
  %v2149 = vsel %vm324, %v1602, 0.0
  %2150 = vadd.xlane.f32.xlu0 %v2149
  %v2151 = vpop.xlane.xlu0 %2150
  %v2152 = vsel %vm324, %v1603, 0.0
  %2153 = vadd.xlane.f32.xlu0 %v2152
  %v2154 = vpop.xlane.xlu0 %2153
  %v2155 = vsel %vm324, %v1604, 0.0
  %2156 = vadd.xlane.f32.xlu0 %v2155
  %v2157 = vpop.xlane.xlu0 %2156
  %v2158 = vsel %vm324, %v1605, 0.0
  %2159 = vadd.xlane.f32.xlu0 %v2158
  %v2160 = vpop.xlane.xlu0 %2159
  %v2161 = vsel %vm324, %v1606, 0.0
  %2162 = vadd.xlane.f32.xlu0 %v2161
  %v2163 = vpop.xlane.xlu0 %2162
  %v2164 = vsel %vm324, %v1607, 0.0
  %2165 = vadd.xlane.f32.xlu0 %v2164
  %v2166 = vpop.xlane.xlu0 %2165
  %v2167 = vsel %vm324, %v1608, 0.0
  %2168 = vadd.xlane.f32.xlu0 %v2167
  %v2169 = vpop.xlane.xlu0 %2168
  %v2170 = vsel %vm324, %v1609, 0.0
  %2171 = vadd.xlane.f32.xlu0 %v2170
  %v2172 = vpop.xlane.xlu0 %2171
  %v2173 = vrcp.pop 32.0
  %v2174 = vmul.f32 %v1983, %v2173
  %v2175 = vmul.f32 %v1986, %v2173
  %v2176 = vmul.f32 %v1989, %v2173
  %v2177 = vmul.f32 %v1992, %v2173
  %v2178 = vmul.f32 %v1995, %v2173
  %v2179 = vmul.f32 %v1998, %v2173
  %v2180 = vmul.f32 %v2001, %v2173
  %v2181 = vmul.f32 %v2004, %v2173
  %v2182 = vmul.f32 %v2007, %v2173
  %v2183 = vmul.f32 %v2010, %v2173
  %v2184 = vmul.f32 %v2013, %v2173
  %v2185 = vmul.f32 %v2016, %v2173
  %v2186 = vmul.f32 %v2019, %v2173
  %v2187 = vmul.f32 %v2022, %v2173
  %v2188 = vmul.f32 %v2025, %v2173
  %v2189 = vmul.f32 %v2028, %v2173
  %v2190 = vmul.f32 %v2031, %v2173
  %v2191 = vmul.f32 %v2034, %v2173
  %v2192 = vmul.f32 %v2037, %v2173
  %v2193 = vmul.f32 %v2040, %v2173
  %v2194 = vmul.f32 %v2043, %v2173
  %v2195 = vmul.f32 %v2046, %v2173
  %v2196 = vmul.f32 %v2049, %v2173
  %v2197 = vmul.f32 %v2052, %v2173
  %v2198 = vmul.f32 %v2055, %v2173
  %v2199 = vmul.f32 %v2058, %v2173
  %v2200 = vmul.f32 %v2061, %v2173
  %v2201 = vmul.f32 %v2064, %v2173
  %v2202 = vmul.f32 %v2067, %v2173
  %v2203 = vmul.f32 %v2070, %v2173
  %v2204 = vmul.f32 %v2073, %v2173
  %v2205 = vmul.f32 %v2076, %v2173
  %v2206 = vmul.f32 %v2079, %v2173
  %v2207 = vmul.f32 %v2082, %v2173
  %v2208 = vmul.f32 %v2085, %v2173
  %v2209 = vmul.f32 %v2088, %v2173
  %v2210 = vmul.f32 %v2091, %v2173
  %v2211 = vmul.f32 %v2094, %v2173
  %v2212 = vmul.f32 %v2097, %v2173
  %v2213 = vmul.f32 %v2100, %v2173
  %v2214 = vmul.f32 %v2103, %v2173
  %v2215 = vmul.f32 %v2106, %v2173
  %v2216 = vmul.f32 %v2109, %v2173
  %v2217 = vmul.f32 %v2112, %v2173
  %v2218 = vmul.f32 %v2115, %v2173
  %v2219 = vmul.f32 %v2118, %v2173
  %v2220 = vmul.f32 %v2121, %v2173
  %v2221 = vmul.f32 %v2124, %v2173
  %v2222 = vmul.f32 %v2127, %v2173
  %v2223 = vmul.f32 %v2130, %v2173
  %v2224 = vmul.f32 %v2133, %v2173
  %v2225 = vmul.f32 %v2136, %v2173
  %v2226 = vmul.f32 %v2139, %v2173
  %v2227 = vmul.f32 %v2142, %v2173
  %v2228 = vmul.f32 %v2145, %v2173
  %v2229 = vmul.f32 %v2148, %v2173
  %v2230 = vmul.f32 %v2151, %v2173
  %v2231 = vmul.f32 %v2154, %v2173
  %v2232 = vmul.f32 %v2157, %v2173
  %v2233 = vmul.f32 %v2160, %v2173
  %v2234 = vmul.f32 %v2163, %v2173
  %v2235 = vmul.f32 %v2166, %v2173
  %v2236 = vmul.f32 %v2169, %v2173
  %v2237 = vmul.f32 %v2172, %v2173
  %v2238 = vsub.f32 %v1546, %v2174
  %v2239 = vsub.f32 %v1547, %v2175
  %v2240 = vsub.f32 %v1548, %v2176
  %v2241 = vsub.f32 %v1549, %v2177
  %v2242 = vsub.f32 %v1550, %v2178
  %v2243 = vsub.f32 %v1551, %v2179
  %v2244 = vsub.f32 %v1552, %v2180
  %v2245 = vsub.f32 %v1553, %v2181
  %v2246 = vsub.f32 %v1554, %v2182
  %v2247 = vsub.f32 %v1555, %v2183
  %v2248 = vsub.f32 %v1556, %v2184
  %v2249 = vsub.f32 %v1557, %v2185
  %v2250 = vsub.f32 %v1558, %v2186
  %v2251 = vsub.f32 %v1559, %v2187
  %v2252 = vsub.f32 %v1560, %v2188
  %v2253 = vsub.f32 %v1561, %v2189
  %v2254 = vsub.f32 %v1562, %v2190
  %v2255 = vsub.f32 %v1563, %v2191
  %v2256 = vsub.f32 %v1564, %v2192
  %v2257 = vsub.f32 %v1565, %v2193
  %v2258 = vsub.f32 %v1566, %v2194
  %v2259 = vsub.f32 %v1567, %v2195
  %v2260 = vsub.f32 %v1568, %v2196
  %v2261 = vsub.f32 %v1569, %v2197
  %v2262 = vsub.f32 %v1570, %v2198
  %v2263 = vsub.f32 %v1571, %v2199
  %v2264 = vsub.f32 %v1572, %v2200
  %v2265 = vsub.f32 %v1573, %v2201
  %v2266 = vsub.f32 %v1574, %v2202
  %v2267 = vsub.f32 %v1575, %v2203
  %v2268 = vsub.f32 %v1576, %v2204
  %v2269 = vsub.f32 %v1577, %v2205
  %v2270 = vsub.f32 %v1578, %v2206
  %v2271 = vsub.f32 %v1579, %v2207
  %v2272 = vsub.f32 %v1580, %v2208
  %v2273 = vsub.f32 %v1581, %v2209
  %v2274 = vsub.f32 %v1582, %v2210
  %v2275 = vsub.f32 %v1583, %v2211
  %v2276 = vsub.f32 %v1584, %v2212
  %v2277 = vsub.f32 %v1585, %v2213
  %v2278 = vsub.f32 %v1586, %v2214
  %v2279 = vsub.f32 %v1587, %v2215
  %v2280 = vsub.f32 %v1588, %v2216
  %v2281 = vsub.f32 %v1589, %v2217
  %v2282 = vsub.f32 %v1590, %v2218
  %v2283 = vsub.f32 %v1591, %v2219
  %v2284 = vsub.f32 %v1592, %v2220
  %v2285 = vsub.f32 %v1593, %v2221
  %v2286 = vsub.f32 %v1594, %v2222
  %v2287 = vsub.f32 %v1595, %v2223
  %v2288 = vsub.f32 %v1596, %v2224
  %v2289 = vsub.f32 %v1597, %v2225
  %v2290 = vsub.f32 %v1598, %v2226
  %v2291 = vsub.f32 %v1599, %v2227
  %v2292 = vsub.f32 %v1600, %v2228
  %v2293 = vsub.f32 %v1601, %v2229
  %v2294 = vsub.f32 %v1602, %v2230
  %v2295 = vsub.f32 %v1603, %v2231
  %v2296 = vsub.f32 %v1604, %v2232
  %v2297 = vsub.f32 %v1605, %v2233
  %v2298 = vsub.f32 %v1606, %v2234
  %v2299 = vsub.f32 %v1607, %v2235
  %v2300 = vsub.f32 %v1608, %v2236
  %v2301 = vsub.f32 %v1609, %v2237
  %v2302 = vmul.f32 %v2238, %v2238
  %v2303 = vmul.f32 %v2239, %v2239
  %v2304 = vmul.f32 %v2240, %v2240
  %v2305 = vmul.f32 %v2241, %v2241
  %v2306 = vmul.f32 %v2242, %v2242
  %v2307 = vmul.f32 %v2243, %v2243
  %v2308 = vmul.f32 %v2244, %v2244
  %v2309 = vmul.f32 %v2245, %v2245
  %v2310 = vmul.f32 %v2246, %v2246
  %v2311 = vmul.f32 %v2247, %v2247
  %v2312 = vmul.f32 %v2248, %v2248
  %v2313 = vmul.f32 %v2249, %v2249
  %v2314 = vmul.f32 %v2250, %v2250
  %v2315 = vmul.f32 %v2251, %v2251
  %v2316 = vmul.f32 %v2252, %v2252
  %v2317 = vmul.f32 %v2253, %v2253
  %v2318 = vmul.f32 %v2254, %v2254
  %v2319 = vmul.f32 %v2255, %v2255
  %v2320 = vmul.f32 %v2256, %v2256
  %v2321 = vmul.f32 %v2257, %v2257
  %v2322 = vmul.f32 %v2258, %v2258
  %v2323 = vmul.f32 %v2259, %v2259
  %v2324 = vmul.f32 %v2260, %v2260
  %v2325 = vmul.f32 %v2261, %v2261
  %v2326 = vmul.f32 %v2262, %v2262
  %v2327 = vmul.f32 %v2263, %v2263
  %v2328 = vmul.f32 %v2264, %v2264
  %v2329 = vmul.f32 %v2265, %v2265
  %v2330 = vmul.f32 %v2266, %v2266
  %v2331 = vmul.f32 %v2267, %v2267
  %v2332 = vmul.f32 %v2268, %v2268
  %v2333 = vmul.f32 %v2269, %v2269
  %v2334 = vmul.f32 %v2270, %v2270
  %v2335 = vmul.f32 %v2271, %v2271
  %v2336 = vmul.f32 %v2272, %v2272
  %v2337 = vmul.f32 %v2273, %v2273
  %v2338 = vmul.f32 %v2274, %v2274
  %v2339 = vmul.f32 %v2275, %v2275
  %v2340 = vmul.f32 %v2276, %v2276
  %v2341 = vmul.f32 %v2277, %v2277
  %v2342 = vmul.f32 %v2278, %v2278
  %v2343 = vmul.f32 %v2279, %v2279
  %v2344 = vmul.f32 %v2280, %v2280
  %v2345 = vmul.f32 %v2281, %v2281
  %v2346 = vmul.f32 %v2282, %v2282
  %v2347 = vmul.f32 %v2283, %v2283
  %v2348 = vmul.f32 %v2284, %v2284
  %v2349 = vmul.f32 %v2285, %v2285
  %v2350 = vmul.f32 %v2286, %v2286
  %v2351 = vmul.f32 %v2287, %v2287
  %v2352 = vmul.f32 %v2288, %v2288
  %v2353 = vmul.f32 %v2289, %v2289
  %v2354 = vmul.f32 %v2290, %v2290
  %v2355 = vmul.f32 %v2291, %v2291
  %v2356 = vmul.f32 %v2292, %v2292
  %v2357 = vmul.f32 %v2293, %v2293
  %v2358 = vmul.f32 %v2294, %v2294
  %v2359 = vmul.f32 %v2295, %v2295
  %v2360 = vmul.f32 %v2296, %v2296
  %v2361 = vmul.f32 %v2297, %v2297
  %v2362 = vmul.f32 %v2298, %v2298
  %v2363 = vmul.f32 %v2299, %v2299
  %v2364 = vmul.f32 %v2300, %v2300
  %v2365 = vmul.f32 %v2301, %v2301
  %v2366 = vsel %vm324, %v2302, 0.0
  %2367 = vadd.xlane.f32.xlu0 %v2366
  %v2368 = vpop.xlane.xlu0 %2367
  %v2369 = vsel %vm324, %v2303, 0.0
  %2370 = vadd.xlane.f32.xlu0 %v2369
  %v2371 = vpop.xlane.xlu0 %2370
  %v2372 = vsel %vm324, %v2304, 0.0
  %2373 = vadd.xlane.f32.xlu0 %v2372
  %v2374 = vpop.xlane.xlu0 %2373
  %v2375 = vsel %vm324, %v2305, 0.0
  %2376 = vadd.xlane.f32.xlu0 %v2375
  %v2377 = vpop.xlane.xlu0 %2376
  %v2378 = vsel %vm324, %v2306, 0.0
  %2379 = vadd.xlane.f32.xlu0 %v2378
  %v2380 = vpop.xlane.xlu0 %2379
  %v2381 = vsel %vm324, %v2307, 0.0
  %2382 = vadd.xlane.f32.xlu0 %v2381
  %v2383 = vpop.xlane.xlu0 %2382
  %v2384 = vsel %vm324, %v2308, 0.0
  %2385 = vadd.xlane.f32.xlu0 %v2384
  %v2386 = vpop.xlane.xlu0 %2385
  %v2387 = vsel %vm324, %v2309, 0.0
  %2388 = vadd.xlane.f32.xlu0 %v2387
  %v2389 = vpop.xlane.xlu0 %2388
  %v2390 = vsel %vm324, %v2310, 0.0
  %2391 = vadd.xlane.f32.xlu0 %v2390
  %v2392 = vpop.xlane.xlu0 %2391
  %v2393 = vsel %vm324, %v2311, 0.0
  %2394 = vadd.xlane.f32.xlu0 %v2393
  %v2395 = vpop.xlane.xlu0 %2394
  %v2396 = vsel %vm324, %v2312, 0.0
  %2397 = vadd.xlane.f32.xlu0 %v2396
  %v2398 = vpop.xlane.xlu0 %2397
  %v2399 = vsel %vm324, %v2313, 0.0
  %2400 = vadd.xlane.f32.xlu0 %v2399
  %v2401 = vpop.xlane.xlu0 %2400
  %v2402 = vsel %vm324, %v2314, 0.0
  %2403 = vadd.xlane.f32.xlu0 %v2402
  %v2404 = vpop.xlane.xlu0 %2403
  %v2405 = vsel %vm324, %v2315, 0.0
  %2406 = vadd.xlane.f32.xlu0 %v2405
  %v2407 = vpop.xlane.xlu0 %2406
  %v2408 = vsel %vm324, %v2316, 0.0
  %2409 = vadd.xlane.f32.xlu0 %v2408
  %v2410 = vpop.xlane.xlu0 %2409
  %v2411 = vsel %vm324, %v2317, 0.0
  %2412 = vadd.xlane.f32.xlu0 %v2411
  %v2413 = vpop.xlane.xlu0 %2412
  %v2414 = vsel %vm324, %v2318, 0.0
  %2415 = vadd.xlane.f32.xlu0 %v2414
  %v2416 = vpop.xlane.xlu0 %2415
  %v2417 = vsel %vm324, %v2319, 0.0
  %2418 = vadd.xlane.f32.xlu0 %v2417
  %v2419 = vpop.xlane.xlu0 %2418
  %v2420 = vsel %vm324, %v2320, 0.0
  %2421 = vadd.xlane.f32.xlu0 %v2420
  %v2422 = vpop.xlane.xlu0 %2421
  %v2423 = vsel %vm324, %v2321, 0.0
  %2424 = vadd.xlane.f32.xlu0 %v2423
  %v2425 = vpop.xlane.xlu0 %2424
  %v2426 = vsel %vm324, %v2322, 0.0
  %2427 = vadd.xlane.f32.xlu0 %v2426
  %v2428 = vpop.xlane.xlu0 %2427
  %v2429 = vsel %vm324, %v2323, 0.0
  %2430 = vadd.xlane.f32.xlu0 %v2429
  %v2431 = vpop.xlane.xlu0 %2430
  %v2432 = vsel %vm324, %v2324, 0.0
  %2433 = vadd.xlane.f32.xlu0 %v2432
  %v2434 = vpop.xlane.xlu0 %2433
  %v2435 = vsel %vm324, %v2325, 0.0
  %2436 = vadd.xlane.f32.xlu0 %v2435
  %v2437 = vpop.xlane.xlu0 %2436
  %v2438 = vsel %vm324, %v2326, 0.0
  %2439 = vadd.xlane.f32.xlu0 %v2438
  %v2440 = vpop.xlane.xlu0 %2439
  %v2441 = vsel %vm324, %v2327, 0.0
  %2442 = vadd.xlane.f32.xlu0 %v2441
  %v2443 = vpop.xlane.xlu0 %2442
  %v2444 = vsel %vm324, %v2328, 0.0
  %2445 = vadd.xlane.f32.xlu0 %v2444
  %v2446 = vpop.xlane.xlu0 %2445
  %v2447 = vsel %vm324, %v2329, 0.0
  %2448 = vadd.xlane.f32.xlu0 %v2447
  %v2449 = vpop.xlane.xlu0 %2448
  %v2450 = vsel %vm324, %v2330, 0.0
  %2451 = vadd.xlane.f32.xlu0 %v2450
  %v2452 = vpop.xlane.xlu0 %2451
  %v2453 = vsel %vm324, %v2331, 0.0
  %2454 = vadd.xlane.f32.xlu0 %v2453
  %v2455 = vpop.xlane.xlu0 %2454
  %v2456 = vsel %vm324, %v2332, 0.0
  %2457 = vadd.xlane.f32.xlu0 %v2456
  %v2458 = vpop.xlane.xlu0 %2457
  %v2459 = vsel %vm324, %v2333, 0.0
  %2460 = vadd.xlane.f32.xlu0 %v2459
  %v2461 = vpop.xlane.xlu0 %2460
  %v2462 = vsel %vm324, %v2334, 0.0
  %2463 = vadd.xlane.f32.xlu0 %v2462
  %v2464 = vpop.xlane.xlu0 %2463
  %v2465 = vsel %vm324, %v2335, 0.0
  %2466 = vadd.xlane.f32.xlu0 %v2465
  %v2467 = vpop.xlane.xlu0 %2466
  %v2468 = vsel %vm324, %v2336, 0.0
  %2469 = vadd.xlane.f32.xlu0 %v2468
  %v2470 = vpop.xlane.xlu0 %2469
  %v2471 = vsel %vm324, %v2337, 0.0
  %2472 = vadd.xlane.f32.xlu0 %v2471
  %v2473 = vpop.xlane.xlu0 %2472
  %v2474 = vsel %vm324, %v2338, 0.0
  %2475 = vadd.xlane.f32.xlu0 %v2474
  %v2476 = vpop.xlane.xlu0 %2475
  %v2477 = vsel %vm324, %v2339, 0.0
  %2478 = vadd.xlane.f32.xlu0 %v2477
  %v2479 = vpop.xlane.xlu0 %2478
  %v2480 = vsel %vm324, %v2340, 0.0
  %2481 = vadd.xlane.f32.xlu0 %v2480
  %v2482 = vpop.xlane.xlu0 %2481
  %v2483 = vsel %vm324, %v2341, 0.0
  %2484 = vadd.xlane.f32.xlu0 %v2483
  %v2485 = vpop.xlane.xlu0 %2484
  %v2486 = vsel %vm324, %v2342, 0.0
  %2487 = vadd.xlane.f32.xlu0 %v2486
  %v2488 = vpop.xlane.xlu0 %2487
  %v2489 = vsel %vm324, %v2343, 0.0
  %2490 = vadd.xlane.f32.xlu0 %v2489
  %v2491 = vpop.xlane.xlu0 %2490
  %v2492 = vsel %vm324, %v2344, 0.0
  %2493 = vadd.xlane.f32.xlu0 %v2492
  %v2494 = vpop.xlane.xlu0 %2493
  %v2495 = vsel %vm324, %v2345, 0.0
  %2496 = vadd.xlane.f32.xlu0 %v2495
  %v2497 = vpop.xlane.xlu0 %2496
  %v2498 = vsel %vm324, %v2346, 0.0
  %2499 = vadd.xlane.f32.xlu0 %v2498
  %v2500 = vpop.xlane.xlu0 %2499
  %v2501 = vsel %vm324, %v2347, 0.0
  %2502 = vadd.xlane.f32.xlu0 %v2501
  %v2503 = vpop.xlane.xlu0 %2502
  %v2504 = vsel %vm324, %v2348, 0.0
  %2505 = vadd.xlane.f32.xlu0 %v2504
  %v2506 = vpop.xlane.xlu0 %2505
  %v2507 = vsel %vm324, %v2349, 0.0
  %2508 = vadd.xlane.f32.xlu0 %v2507
  %v2509 = vpop.xlane.xlu0 %2508
  %v2510 = vsel %vm324, %v2350, 0.0
  %2511 = vadd.xlane.f32.xlu0 %v2510
  %v2512 = vpop.xlane.xlu0 %2511
  %v2513 = vsel %vm324, %v2351, 0.0
  %2514 = vadd.xlane.f32.xlu0 %v2513
  %v2515 = vpop.xlane.xlu0 %2514
  %v2516 = vsel %vm324, %v2352, 0.0
  %2517 = vadd.xlane.f32.xlu0 %v2516
  %v2518 = vpop.xlane.xlu0 %2517
  %v2519 = vsel %vm324, %v2353, 0.0
  %2520 = vadd.xlane.f32.xlu0 %v2519
  %v2521 = vpop.xlane.xlu0 %2520
  %v2522 = vsel %vm324, %v2354, 0.0
  %2523 = vadd.xlane.f32.xlu0 %v2522
  %v2524 = vpop.xlane.xlu0 %2523
  %v2525 = vsel %vm324, %v2355, 0.0
  %2526 = vadd.xlane.f32.xlu0 %v2525
  %v2527 = vpop.xlane.xlu0 %2526
  %v2528 = vsel %vm324, %v2356, 0.0
  %2529 = vadd.xlane.f32.xlu0 %v2528
  %v2530 = vpop.xlane.xlu0 %2529
  %v2531 = vsel %vm324, %v2357, 0.0
  %2532 = vadd.xlane.f32.xlu0 %v2531
  %v2533 = vpop.xlane.xlu0 %2532
  %v2534 = vsel %vm324, %v2358, 0.0
  %2535 = vadd.xlane.f32.xlu0 %v2534
  %v2536 = vpop.xlane.xlu0 %2535
  %v2537 = vsel %vm324, %v2359, 0.0
  %2538 = vadd.xlane.f32.xlu0 %v2537
  %v2539 = vpop.xlane.xlu0 %2538
  %v2540 = vsel %vm324, %v2360, 0.0
  %2541 = vadd.xlane.f32.xlu0 %v2540
  %v2542 = vpop.xlane.xlu0 %2541
  %v2543 = vsel %vm324, %v2361, 0.0
  %2544 = vadd.xlane.f32.xlu0 %v2543
  %v2545 = vpop.xlane.xlu0 %2544
  %v2546 = vsel %vm324, %v2362, 0.0
  %2547 = vadd.xlane.f32.xlu0 %v2546
  %v2548 = vpop.xlane.xlu0 %2547
  %v2549 = vsel %vm324, %v2363, 0.0
  %2550 = vadd.xlane.f32.xlu0 %v2549
  %v2551 = vpop.xlane.xlu0 %2550
  %v2552 = vsel %vm324, %v2364, 0.0
  %2553 = vadd.xlane.f32.xlu0 %v2552
  %v2554 = vpop.xlane.xlu0 %2553
  %v2555 = vsel %vm324, %v2365, 0.0
  %2556 = vadd.xlane.f32.xlu0 %v2555
  %v2557 = vpop.xlane.xlu0 %2556
  %v2558 = vmul.f32 %v2368, %v2173
  %v2559 = vmul.f32 %v2371, %v2173
  %v2560 = vmul.f32 %v2374, %v2173
  %v2561 = vmul.f32 %v2377, %v2173
  %v2562 = vmul.f32 %v2380, %v2173
  %v2563 = vmul.f32 %v2383, %v2173
  %v2564 = vmul.f32 %v2386, %v2173
  %v2565 = vmul.f32 %v2389, %v2173
  %v2566 = vmul.f32 %v2392, %v2173
  %v2567 = vmul.f32 %v2395, %v2173
  %v2568 = vmul.f32 %v2398, %v2173
  %v2569 = vmul.f32 %v2401, %v2173
  %v2570 = vmul.f32 %v2404, %v2173
  %v2571 = vmul.f32 %v2407, %v2173
  %v2572 = vmul.f32 %v2410, %v2173
  %v2573 = vmul.f32 %v2413, %v2173
  %v2574 = vmul.f32 %v2416, %v2173
  %v2575 = vmul.f32 %v2419, %v2173
  %v2576 = vmul.f32 %v2422, %v2173
  %v2577 = vmul.f32 %v2425, %v2173
  %v2578 = vmul.f32 %v2428, %v2173
  %v2579 = vmul.f32 %v2431, %v2173
  %v2580 = vmul.f32 %v2434, %v2173
  %v2581 = vmul.f32 %v2437, %v2173
  %v2582 = vmul.f32 %v2440, %v2173
  %v2583 = vmul.f32 %v2443, %v2173
  %v2584 = vmul.f32 %v2446, %v2173
  %v2585 = vmul.f32 %v2449, %v2173
  %v2586 = vmul.f32 %v2452, %v2173
  %v2587 = vmul.f32 %v2455, %v2173
  %v2588 = vmul.f32 %v2458, %v2173
  %v2589 = vmul.f32 %v2461, %v2173
  %v2590 = vmul.f32 %v2464, %v2173
  %v2591 = vmul.f32 %v2467, %v2173
  %v2592 = vmul.f32 %v2470, %v2173
  %v2593 = vmul.f32 %v2473, %v2173
  %v2594 = vmul.f32 %v2476, %v2173
  %v2595 = vmul.f32 %v2479, %v2173
  %v2596 = vmul.f32 %v2482, %v2173
  %v2597 = vmul.f32 %v2485, %v2173
  %v2598 = vmul.f32 %v2488, %v2173
  %v2599 = vmul.f32 %v2491, %v2173
  %v2600 = vmul.f32 %v2494, %v2173
  %v2601 = vmul.f32 %v2497, %v2173
  %v2602 = vmul.f32 %v2500, %v2173
  %v2603 = vmul.f32 %v2503, %v2173
  %v2604 = vmul.f32 %v2506, %v2173
  %v2605 = vmul.f32 %v2509, %v2173
  %v2606 = vmul.f32 %v2512, %v2173
  %v2607 = vmul.f32 %v2515, %v2173
  %v2608 = vmul.f32 %v2518, %v2173
  %v2609 = vmul.f32 %v2521, %v2173
  %v2610 = vmul.f32 %v2524, %v2173
  %v2611 = vmul.f32 %v2527, %v2173
  %v2612 = vmul.f32 %v2530, %v2173
  %v2613 = vmul.f32 %v2533, %v2173
  %v2614 = vmul.f32 %v2536, %v2173
  %v2615 = vmul.f32 %v2539, %v2173
  %v2616 = vmul.f32 %v2542, %v2173
  %v2617 = vmul.f32 %v2545, %v2173
  %v2618 = vmul.f32 %v2548, %v2173
  %v2619 = vmul.f32 %v2551, %v2173
  %v2620 = vmul.f32 %v2554, %v2173
  %v2621 = vmul.f32 %v2557, %v2173
  %v2622 = vadd.f32 %v2558, 1e-05
  %v2623 = vadd.f32 %v2559, 1e-05
  %v2624 = vadd.f32 %v2560, 1e-05
  %v2625 = vadd.f32 %v2561, 1e-05
  %v2626 = vadd.f32 %v2562, 1e-05
  %v2627 = vadd.f32 %v2563, 1e-05
  %v2628 = vadd.f32 %v2564, 1e-05
  %v2629 = vadd.f32 %v2565, 1e-05
  %v2630 = vadd.f32 %v2566, 1e-05
  %v2631 = vadd.f32 %v2567, 1e-05
  %v2632 = vadd.f32 %v2568, 1e-05
  %v2633 = vadd.f32 %v2569, 1e-05
  %v2634 = vadd.f32 %v2570, 1e-05
  %v2635 = vadd.f32 %v2571, 1e-05
  %v2636 = vadd.f32 %v2572, 1e-05
  %v2637 = vadd.f32 %v2573, 1e-05
  %v2638 = vadd.f32 %v2574, 1e-05
  %v2639 = vadd.f32 %v2575, 1e-05
  %v2640 = vadd.f32 %v2576, 1e-05
  %v2641 = vadd.f32 %v2577, 1e-05
  %v2642 = vadd.f32 %v2578, 1e-05
  %v2643 = vadd.f32 %v2579, 1e-05
  %v2644 = vadd.f32 %v2580, 1e-05
  %v2645 = vadd.f32 %v2581, 1e-05
  %v2646 = vadd.f32 %v2582, 1e-05
  %v2647 = vadd.f32 %v2583, 1e-05
  %v2648 = vadd.f32 %v2584, 1e-05
  %v2649 = vadd.f32 %v2585, 1e-05
  %v2650 = vadd.f32 %v2586, 1e-05
  %v2651 = vadd.f32 %v2587, 1e-05
  %v2652 = vadd.f32 %v2588, 1e-05
  %v2653 = vadd.f32 %v2589, 1e-05
  %v2654 = vadd.f32 %v2590, 1e-05
  %v2655 = vadd.f32 %v2591, 1e-05
  %v2656 = vadd.f32 %v2592, 1e-05
  %v2657 = vadd.f32 %v2593, 1e-05
  %v2658 = vadd.f32 %v2594, 1e-05
  %v2659 = vadd.f32 %v2595, 1e-05
  %v2660 = vadd.f32 %v2596, 1e-05
  %v2661 = vadd.f32 %v2597, 1e-05
  %v2662 = vadd.f32 %v2598, 1e-05
  %v2663 = vadd.f32 %v2599, 1e-05
  %v2664 = vadd.f32 %v2600, 1e-05
  %v2665 = vadd.f32 %v2601, 1e-05
  %v2666 = vadd.f32 %v2602, 1e-05
  %v2667 = vadd.f32 %v2603, 1e-05
  %v2668 = vadd.f32 %v2604, 1e-05
  %v2669 = vadd.f32 %v2605, 1e-05
  %v2670 = vadd.f32 %v2606, 1e-05
  %v2671 = vadd.f32 %v2607, 1e-05
  %v2672 = vadd.f32 %v2608, 1e-05
  %v2673 = vadd.f32 %v2609, 1e-05
  %v2674 = vadd.f32 %v2610, 1e-05
  %v2675 = vadd.f32 %v2611, 1e-05
  %v2676 = vadd.f32 %v2612, 1e-05
  %v2677 = vadd.f32 %v2613, 1e-05
  %v2678 = vadd.f32 %v2614, 1e-05
  %v2679 = vadd.f32 %v2615, 1e-05
  %v2680 = vadd.f32 %v2616, 1e-05
  %v2681 = vadd.f32 %v2617, 1e-05
  %v2682 = vadd.f32 %v2618, 1e-05
  %v2683 = vadd.f32 %v2619, 1e-05
  %v2684 = vadd.f32 %v2620, 1e-05
  %v2685 = vadd.f32 %v2621, 1e-05
  %v2686 = vrsqrt.pop %v2622
  %v2687 = vrsqrt.pop %v2623
  %v2688 = vrsqrt.pop %v2624
  %v2689 = vrsqrt.pop %v2625
  %v2690 = vrsqrt.pop %v2626
  %v2691 = vrsqrt.pop %v2627
  %v2692 = vrsqrt.pop %v2628
  %v2693 = vrsqrt.pop %v2629
  %v2694 = vrsqrt.pop %v2630
  %v2695 = vrsqrt.pop %v2631
  %v2696 = vrsqrt.pop %v2632
  %v2697 = vrsqrt.pop %v2633
  %v2698 = vrsqrt.pop %v2634
  %v2699 = vrsqrt.pop %v2635
  %v2700 = vrsqrt.pop %v2636
  %v2701 = vrsqrt.pop %v2637
  %v2702 = vrsqrt.pop %v2638
  %v2703 = vrsqrt.pop %v2639
  %v2704 = vrsqrt.pop %v2640
  %v2705 = vrsqrt.pop %v2641
  %v2706 = vrsqrt.pop %v2642
  %v2707 = vrsqrt.pop %v2643
  %v2708 = vrsqrt.pop %v2644
  %v2709 = vrsqrt.pop %v2645
  %v2710 = vrsqrt.pop %v2646
  %v2711 = vrsqrt.pop %v2647
  %v2712 = vrsqrt.pop %v2648
  %v2713 = vrsqrt.pop %v2649
  %v2714 = vrsqrt.pop %v2650
  %v2715 = vrsqrt.pop %v2651
  %v2716 = vrsqrt.pop %v2652
  %v2717 = vrsqrt.pop %v2653
  %v2718 = vrsqrt.pop %v2654
  %v2719 = vrsqrt.pop %v2655
  %v2720 = vrsqrt.pop %v2656
  %v2721 = vrsqrt.pop %v2657
  %v2722 = vrsqrt.pop %v2658
  %v2723 = vrsqrt.pop %v2659
  %v2724 = vrsqrt.pop %v2660
  %v2725 = vrsqrt.pop %v2661
  %v2726 = vrsqrt.pop %v2662
  %v2727 = vrsqrt.pop %v2663
  %v2728 = vrsqrt.pop %v2664
  %v2729 = vrsqrt.pop %v2665
  %v2730 = vrsqrt.pop %v2666
  %v2731 = vrsqrt.pop %v2667
  %v2732 = vrsqrt.pop %v2668
  %v2733 = vrsqrt.pop %v2669
  %v2734 = vrsqrt.pop %v2670
  %v2735 = vrsqrt.pop %v2671
  %v2736 = vrsqrt.pop %v2672
  %v2737 = vrsqrt.pop %v2673
  %v2738 = vrsqrt.pop %v2674
  %v2739 = vrsqrt.pop %v2675
  %v2740 = vrsqrt.pop %v2676
  %v2741 = vrsqrt.pop %v2677
  %v2742 = vrsqrt.pop %v2678
  %v2743 = vrsqrt.pop %v2679
  %v2744 = vrsqrt.pop %v2680
  %v2745 = vrsqrt.pop %v2681
  %v2746 = vrsqrt.pop %v2682
  %v2747 = vrsqrt.pop %v2683
  %v2748 = vrsqrt.pop %v2684
  %v2749 = vrsqrt.pop %v2685
  %v2750 = vmul.f32 %v2238, %v2686
  %v2751 = vmul.f32 %v2239, %v2687
  %v2752 = vmul.f32 %v2240, %v2688
  %v2753 = vmul.f32 %v2241, %v2689
  %v2754 = vmul.f32 %v2242, %v2690
  %v2755 = vmul.f32 %v2243, %v2691
  %v2756 = vmul.f32 %v2244, %v2692
  %v2757 = vmul.f32 %v2245, %v2693
  %v2758 = vmul.f32 %v2246, %v2694
  %v2759 = vmul.f32 %v2247, %v2695
  %v2760 = vmul.f32 %v2248, %v2696
  %v2761 = vmul.f32 %v2249, %v2697
  %v2762 = vmul.f32 %v2250, %v2698
  %v2763 = vmul.f32 %v2251, %v2699
  %v2764 = vmul.f32 %v2252, %v2700
  %v2765 = vmul.f32 %v2253, %v2701
  %v2766 = vmul.f32 %v2254, %v2702
  %v2767 = vmul.f32 %v2255, %v2703
  %v2768 = vmul.f32 %v2256, %v2704
  %v2769 = vmul.f32 %v2257, %v2705
  %v2770 = vmul.f32 %v2258, %v2706
  %v2771 = vmul.f32 %v2259, %v2707
  %v2772 = vmul.f32 %v2260, %v2708
  %v2773 = vmul.f32 %v2261, %v2709
  %v2774 = vmul.f32 %v2262, %v2710
  %v2775 = vmul.f32 %v2263, %v2711
  %v2776 = vmul.f32 %v2264, %v2712
  %v2777 = vmul.f32 %v2265, %v2713
  %v2778 = vmul.f32 %v2266, %v2714
  %v2779 = vmul.f32 %v2267, %v2715
  %v2780 = vmul.f32 %v2268, %v2716
  %v2781 = vmul.f32 %v2269, %v2717
  %v2782 = vmul.f32 %v2270, %v2718
  %v2783 = vmul.f32 %v2271, %v2719
  %v2784 = vmul.f32 %v2272, %v2720
  %v2785 = vmul.f32 %v2273, %v2721
  %v2786 = vmul.f32 %v2274, %v2722
  %v2787 = vmul.f32 %v2275, %v2723
  %v2788 = vmul.f32 %v2276, %v2724
  %v2789 = vmul.f32 %v2277, %v2725
  %v2790 = vmul.f32 %v2278, %v2726
  %v2791 = vmul.f32 %v2279, %v2727
  %v2792 = vmul.f32 %v2280, %v2728
  %v2793 = vmul.f32 %v2281, %v2729
  %v2794 = vmul.f32 %v2282, %v2730
  %v2795 = vmul.f32 %v2283, %v2731
  %v2796 = vmul.f32 %v2284, %v2732
  %v2797 = vmul.f32 %v2285, %v2733
  %v2798 = vmul.f32 %v2286, %v2734
  %v2799 = vmul.f32 %v2287, %v2735
  %v2800 = vmul.f32 %v2288, %v2736
  %v2801 = vmul.f32 %v2289, %v2737
  %v2802 = vmul.f32 %v2290, %v2738
  %v2803 = vmul.f32 %v2291, %v2739
  %v2804 = vmul.f32 %v2292, %v2740
  %v2805 = vmul.f32 %v2293, %v2741
  %v2806 = vmul.f32 %v2294, %v2742
  %v2807 = vmul.f32 %v2295, %v2743
  %v2808 = vmul.f32 %v2296, %v2744
  %v2809 = vmul.f32 %v2297, %v2745
  %v2810 = vmul.f32 %v2298, %v2746
  %v2811 = vmul.f32 %v2299, %v2747
  %v2812 = vmul.f32 %v2300, %v2748
  %v2813 = vmul.f32 %v2301, %v2749
  %v2815 = vlaneseq
  %v2816 = vshrl.u32 %v2815, 7
  %v2817 = vsub.s32 0, %v2816
  %v2818 = vrot.slane %v1979, %v2817
  %v2820 = vmul.f32 %v2750, %v2818
  %v2821 = vmul.f32 %v2751, %v2818
  %v2822 = vmul.f32 %v2752, %v2818
  %v2823 = vmul.f32 %v2753, %v2818
  %v2824 = vmul.f32 %v2754, %v2818
  %v2825 = vmul.f32 %v2755, %v2818
  %v2826 = vmul.f32 %v2756, %v2818
  %v2827 = vmul.f32 %v2757, %v2818
  %v2828 = vmul.f32 %v2758, %v2818
  %v2829 = vmul.f32 %v2759, %v2818
  %v2830 = vmul.f32 %v2760, %v2818
  %v2831 = vmul.f32 %v2761, %v2818
  %v2832 = vmul.f32 %v2762, %v2818
  %v2833 = vmul.f32 %v2763, %v2818
  %v2834 = vmul.f32 %v2764, %v2818
  %v2835 = vmul.f32 %v2765, %v2818
  %v2836 = vmul.f32 %v2766, %v2818
  %v2837 = vmul.f32 %v2767, %v2818
  %v2838 = vmul.f32 %v2768, %v2818
  %v2839 = vmul.f32 %v2769, %v2818
  %v2840 = vmul.f32 %v2770, %v2818
  %v2841 = vmul.f32 %v2771, %v2818
  %v2842 = vmul.f32 %v2772, %v2818
  %v2843 = vmul.f32 %v2773, %v2818
  %v2844 = vmul.f32 %v2774, %v2818
  %v2845 = vmul.f32 %v2775, %v2818
  %v2846 = vmul.f32 %v2776, %v2818
  %v2847 = vmul.f32 %v2777, %v2818
  %v2848 = vmul.f32 %v2778, %v2818
  %v2849 = vmul.f32 %v2779, %v2818
  %v2850 = vmul.f32 %v2780, %v2818
  %v2851 = vmul.f32 %v2781, %v2818
  %v2852 = vmul.f32 %v2782, %v2818
  %v2853 = vmul.f32 %v2783, %v2818
  %v2854 = vmul.f32 %v2784, %v2818
  %v2855 = vmul.f32 %v2785, %v2818
  %v2856 = vmul.f32 %v2786, %v2818
  %v2857 = vmul.f32 %v2787, %v2818
  %v2858 = vmul.f32 %v2788, %v2818
  %v2859 = vmul.f32 %v2789, %v2818
  %v2860 = vmul.f32 %v2790, %v2818
  %v2861 = vmul.f32 %v2791, %v2818
  %v2862 = vmul.f32 %v2792, %v2818
  %v2863 = vmul.f32 %v2793, %v2818
  %v2864 = vmul.f32 %v2794, %v2818
  %v2865 = vmul.f32 %v2795, %v2818
  %v2866 = vmul.f32 %v2796, %v2818
  %v2867 = vmul.f32 %v2797, %v2818
  %v2868 = vmul.f32 %v2798, %v2818
  %v2869 = vmul.f32 %v2799, %v2818
  %v2870 = vmul.f32 %v2800, %v2818
  %v2871 = vmul.f32 %v2801, %v2818
  %v2872 = vmul.f32 %v2802, %v2818
  %v2873 = vmul.f32 %v2803, %v2818
  %v2874 = vmul.f32 %v2804, %v2818
  %v2875 = vmul.f32 %v2805, %v2818
  %v2876 = vmul.f32 %v2806, %v2818
  %v2877 = vmul.f32 %v2807, %v2818
  %v2878 = vmul.f32 %v2808, %v2818
  %v2879 = vmul.f32 %v2809, %v2818
  %v2880 = vmul.f32 %v2810, %v2818
  %v2881 = vmul.f32 %v2811, %v2818
  %v2882 = vmul.f32 %v2812, %v2818
  %v2883 = vmul.f32 %v2813, %v2818
  %v2885 = vlaneseq
  %v2886 = vshrl.u32 %v2885, 7
  %v2887 = vsub.s32 0, %v2886
  %v2888 = vrot.slane %v1980, %v2887
  %v2890 = vadd.f32 %v2820, %v2888
  %v2891 = vadd.f32 %v2821, %v2888
  %v2892 = vadd.f32 %v2822, %v2888
  %v2893 = vadd.f32 %v2823, %v2888
  %v2894 = vadd.f32 %v2824, %v2888
  %v2895 = vadd.f32 %v2825, %v2888
  %v2896 = vadd.f32 %v2826, %v2888
  %v2897 = vadd.f32 %v2827, %v2888
  %v2898 = vadd.f32 %v2828, %v2888
  %v2899 = vadd.f32 %v2829, %v2888
  %v2900 = vadd.f32 %v2830, %v2888
  %v2901 = vadd.f32 %v2831, %v2888
  %v2902 = vadd.f32 %v2832, %v2888
  %v2903 = vadd.f32 %v2833, %v2888
  %v2904 = vadd.f32 %v2834, %v2888
  %v2905 = vadd.f32 %v2835, %v2888
  %v2906 = vadd.f32 %v2836, %v2888
  %v2907 = vadd.f32 %v2837, %v2888
  %v2908 = vadd.f32 %v2838, %v2888
  %v2909 = vadd.f32 %v2839, %v2888
  %v2910 = vadd.f32 %v2840, %v2888
  %v2911 = vadd.f32 %v2841, %v2888
  %v2912 = vadd.f32 %v2842, %v2888
  %v2913 = vadd.f32 %v2843, %v2888
  %v2914 = vadd.f32 %v2844, %v2888
  %v2915 = vadd.f32 %v2845, %v2888
  %v2916 = vadd.f32 %v2846, %v2888
  %v2917 = vadd.f32 %v2847, %v2888
  %v2918 = vadd.f32 %v2848, %v2888
  %v2919 = vadd.f32 %v2849, %v2888
  %v2920 = vadd.f32 %v2850, %v2888
  %v2921 = vadd.f32 %v2851, %v2888
  %v2922 = vadd.f32 %v2852, %v2888
  %v2923 = vadd.f32 %v2853, %v2888
  %v2924 = vadd.f32 %v2854, %v2888
  %v2925 = vadd.f32 %v2855, %v2888
  %v2926 = vadd.f32 %v2856, %v2888
  %v2927 = vadd.f32 %v2857, %v2888
  %v2928 = vadd.f32 %v2858, %v2888
  %v2929 = vadd.f32 %v2859, %v2888
  %v2930 = vadd.f32 %v2860, %v2888
  %v2931 = vadd.f32 %v2861, %v2888
  %v2932 = vadd.f32 %v2862, %v2888
  %v2933 = vadd.f32 %v2863, %v2888
  %v2934 = vadd.f32 %v2864, %v2888
  %v2935 = vadd.f32 %v2865, %v2888
  %v2936 = vadd.f32 %v2866, %v2888
  %v2937 = vadd.f32 %v2867, %v2888
  %v2938 = vadd.f32 %v2868, %v2888
  %v2939 = vadd.f32 %v2869, %v2888
  %v2940 = vadd.f32 %v2870, %v2888
  %v2941 = vadd.f32 %v2871, %v2888
  %v2942 = vadd.f32 %v2872, %v2888
  %v2943 = vadd.f32 %v2873, %v2888
  %v2944 = vadd.f32 %v2874, %v2888
  %v2945 = vadd.f32 %v2875, %v2888
  %v2946 = vadd.f32 %v2876, %v2888
  %v2947 = vadd.f32 %v2877, %v2888
  %v2948 = vadd.f32 %v2878, %v2888
  %v2949 = vadd.f32 %v2879, %v2888
  %v2950 = vadd.f32 %v2880, %v2888
  %v2951 = vadd.f32 %v2881, %v2888
  %v2952 = vadd.f32 %v2882, %v2888
  %v2953 = vadd.f32 %v2883, %v2888
  %v2954 = vsel %vm324, %v1975, 0.0
  %2955 = vadd.xlane.f32.xlu0 %v2954
  %v2956 = vpop.xlane.xlu0 %2955
  %v2957 = vsel %vm324, %v1976, 0.0
  %2958 = vadd.xlane.f32.xlu0 %v2957
  %v2959 = vpop.xlane.xlu0 %2958
  %v2960 = vsel %vm324, %v1977, 0.0
  %2961 = vadd.xlane.f32.xlu0 %v2960
  %v2962 = vpop.xlane.xlu0 %2961
  %v2963 = vsel %vm324, %v1978, 0.0
  %2964 = vadd.xlane.f32.xlu0 %v2963
  %v2965 = vpop.xlane.xlu0 %2964
  %v2966 = vmul.f32 %v2956, %v2173
  %v2967 = vmul.f32 %v2959, %v2173
  %v2968 = vmul.f32 %v2962, %v2173
  %v2969 = vmul.f32 %v2965, %v2173
  %v2970 = vsub.f32 %v1975, %v2966
  %v2971 = vsub.f32 %v1976, %v2967
  %v2972 = vsub.f32 %v1977, %v2968
  %v2973 = vsub.f32 %v1978, %v2969
  %v2974 = vmul.f32 %v2970, %v2970
  %v2975 = vmul.f32 %v2971, %v2971
  %v2976 = vmul.f32 %v2972, %v2972
  %v2977 = vmul.f32 %v2973, %v2973
  %v2978 = vsel %vm324, %v2974, 0.0
  %2979 = vadd.xlane.f32.xlu0 %v2978
  %v2980 = vpop.xlane.xlu0 %2979
  %v2981 = vsel %vm324, %v2975, 0.0
  %2982 = vadd.xlane.f32.xlu0 %v2981
  %v2983 = vpop.xlane.xlu0 %2982
  %v2984 = vsel %vm324, %v2976, 0.0
  %2985 = vadd.xlane.f32.xlu0 %v2984
  %v2986 = vpop.xlane.xlu0 %2985
  %v2987 = vsel %vm324, %v2977, 0.0
  %2988 = vadd.xlane.f32.xlu0 %v2987
  %v2989 = vpop.xlane.xlu0 %2988
  %v2990 = vmul.f32 %v2980, %v2173
  %v2991 = vmul.f32 %v2983, %v2173
  %v2992 = vmul.f32 %v2986, %v2173
  %v2993 = vmul.f32 %v2989, %v2173
  %v2994 = vadd.f32 %v2990, 1e-05
  %v2995 = vadd.f32 %v2991, 1e-05
  %v2996 = vadd.f32 %v2992, 1e-05
  %v2997 = vadd.f32 %v2993, 1e-05
  %v2998 = vrsqrt.pop %v2994
  %v2999 = vrsqrt.pop %v2995
  %v3000 = vrsqrt.pop %v2996
  %v3001 = vrsqrt.pop %v2997
  %v3002 = vmul.f32 %v2970, %v2998
  %v3003 = vmul.f32 %v2971, %v2999
  %v3004 = vmul.f32 %v2972, %v3000
  %v3005 = vmul.f32 %v2973, %v3001
  %v3006 = vmul.f32 %v3002, %v2818
  %v3007 = vmul.f32 %v3003, %v2818
  %v3008 = vmul.f32 %v3004, %v2818
  %v3009 = vmul.f32 %v3005, %v2818
  %v3010 = vadd.f32 %v3006, %v2888
  %v3011 = vadd.f32 %v3007, %v2888
  %v3012 = vadd.f32 %v3008, %v2888
  %v3013 = vadd.f32 %v3009, %v2888
  %v3014 = vld [vmem:[%s10] sm:$0xff]
  %v3015 = vld [vmem:[%s10 + $0x8] sm:$0xff]
  %v3016 = vld [vmem:[%s10 + $0x10] sm:$0xff]
  %v3017 = vld [vmem:[%s10 + $0x18] sm:$0xff]
  %v3018 = vld [vmem:[%s11] sm:$0x1]
  %v3019 = vld [vmem:[%s12] sm:$0xff]
  %v3020 = vld [vmem:[%s12 + $0x8] sm:$0xff]
  %v3021 = vld [vmem:[%s12 + $0x10] sm:$0xff]
  %v3022 = vld [vmem:[%s12 + $0x18] sm:$0xff]
  %v3024 = vsel %vm324, %v3010, 0
  %v3027 = vsel %vm324, %v3011, 0
  %v3030 = vsel %vm324, %v3012, 0
  %v3033 = vsel %vm324, %v3013, 0
  %3035 = vmatprep.subr.mxu0 0.0
  %3036 = vmatpush1.msra.mxu0 %v3014
  %3037 = vmatprep.subr.mxu0 0.0
  %3038 = vmatpush1.msra.mxu0 %v3015
  %3039 = vmatprep.subr.mxu0 0.0
  %3040 = vmatpush1.msra.mxu0 %v3016
  %3041 = vmatprep.subr.mxu0 0.0
  %3042 = vmatpush1.msra.mxu0 %v3017
  %3043 = vmatprep.subr.mxu0 0.0
  %3044 = vmatpush1.msra.mxu0 0.0
  %3045 = vmatprep.subr.mxu0 0.0
  %3046 = vmatpush1.msra.mxu0 0.0
  %3047 = vmatprep.subr.mxu0 0.0
  %3048 = vmatpush1.msra.mxu0 0.0
  %3049 = vmatprep.subr.mxu0 0.0
  %3050 = vmatpush1.msra.mxu0 0.0
  %3051 = vmatprep.subr.mxu0 0.0
  %3052 = vmatpush1.msra.mxu0 0.0
  %3053 = vmatprep.subr.mxu0 0.0
  %3054 = vmatpush1.msra.mxu0 0.0
  %3055 = vmatprep.subr.mxu0 0.0
  %3056 = vmatpush1.msra.mxu0 0.0
  %3057 = vmatprep.subr.mxu0 0.0
  %3058 = vmatpush1.msra.mxu0 0.0
  %3059 = vmatprep.subr.mxu0 0.0
  %3060 = vmatpush1.msra.mxu0 0.0
  %3061 = vmatprep.subr.mxu0 0.0
  %3062 = vmatpush1.msra.mxu0 0.0
  %3063 = vmatprep.subr.mxu0 0.0
  %3064 = vmatpush1.msra.mxu0 0.0
  %3065 = vmatprep.subr.mxu0 0.0
  %3066 = vmatpush1.msra.mxu0 0.0
  %3067 = vmatprep.subr.mxu0 0.0
  %3068 = vmatpush1.msra.mxu0 0.0
  %3069 = vmatprep.subr.mxu0 0.0
  %3070 = vmatpush1.msra.mxu0 0.0
  %3071 = vmatprep.subr.mxu0 0.0
  %3072 = vmatpush1.msra.mxu0 0.0
  %3073 = vmatprep.subr.mxu0 0.0
  %3074 = vmatpush1.msra.mxu0 0.0
  %3075 = vmatprep.subr.mxu0 0.0
  %3076 = vmatpush1.msra.mxu0 0.0
  %3077 = vmatprep.subr.mxu0 0.0
  %3078 = vmatpush1.msra.mxu0 0.0
  %3079 = vmatprep.subr.mxu0 0.0
  %3080 = vmatpush1.msra.mxu0 0.0
  %3081 = vmatprep.subr.mxu0 0.0
  %3082 = vmatpush1.msra.mxu0 0.0
  %3083 = vmatprep.subr.mxu0 0.0
  %3084 = vmatpush1.msra.mxu0 0.0
  %3085 = vmatprep.subr.mxu0 0.0
  %3086 = vmatpush1.msra.mxu0 0.0
  %3087 = vmatprep.subr.mxu0 0.0
  %3088 = vmatpush1.msra.mxu0 0.0
  %3089 = vmatprep.subr.mxu0 0.0
  %3090 = vmatpush1.msra.mxu0 0.0
  %3091 = vmatprep.subr.mxu0 0.0
  %3092 = vmatpush1.msra.mxu0 0.0
  %3093 = vmatprep.subr.mxu0 0.0
  %3094 = vmatpush1.msra.mxu0 0.0
  %3095 = vmatprep.subr.mxu0 0.0
  %3096 = vmatpush1.msra.mxu0 0.0
  %3097 = vmatprep.subr.mxu0 0.0
  %3098 = vmatpush1.msra.mxu0 0.0
  %3099 = vmatprep.mubr.f32.mxu0 0.0
  %3100 = vmatmul.mubr.f32.gmra.mrb[0].mxu0 %v3024
  %v3101 = vpop.f32.mrb[0].mxu0
  %v3102 = vadd.f32 0.0, %v3101
  %v3103 = vpop.f32.mrb[0].mxu0
  %3104 = vmatprep.mubr.f32.mxu0 0.0
  %3105 = vmatmul.mubr.f32.gmra.mrb[0].mxu0 %v3027
  %v3106 = vpop.f32.mrb[0].mxu0
  %v3107 = vadd.f32 0.0, %v3106
  %v3108 = vpop.f32.mrb[0].mxu0
  %3109 = vmatprep.mubr.f32.mxu0 0.0
  %3110 = vmatmul.mubr.f32.gmra.mrb[0].mxu0 %v3030
  %v3111 = vpop.f32.mrb[0].mxu0
  %v3112 = vadd.f32 0.0, %v3111
  %v3113 = vpop.f32.mrb[0].mxu0
  %3114 = vmatprep.mubr.f32.mxu0 0.0
  %3115 = vmatmul.mubr.f32.gmra.mrb[0].mxu0 %v3033
  %v3116 = vpop.f32.mrb[0].mxu0
  %v3117 = vadd.f32 0.0, %v3116
  %v3118 = vpop.f32.mrb[0].mxu0
  %3119 = vdwg.mxu0
  %v3121 = vlaneseq
  %v3122 = vshrl.u32 %v3121, 7
  %v3123 = vsub.s32 0, %v3122
  %v3124 = vrot.slane %v3018, %v3123
  %3126 = vmatprep.subr.mxu0 0.0
  %3127 = vmatpush1.msra.mxu0 %v3102
  %3128 = vmatprep.subr.mxu0 0.0
  %3129 = vmatpush1.msra.mxu0 %v3107
  %3130 = vmatprep.subr.mxu0 0.0
  %3131 = vmatpush1.msra.mxu0 %v3112
  %3132 = vmatprep.subr.mxu0 0.0
  %3133 = vmatpush1.msra.mxu0 %v3117
  %3134 = vmatprep.subr.mxu0 0.0
  %3135 = vmatpush1.msra.mxu0 0.0
  %3136 = vmatprep.subr.mxu0 0.0
  %3137 = vmatpush1.msra.mxu0 0.0
  %3138 = vmatprep.subr.mxu0 0.0
  %3139 = vmatpush1.msra.mxu0 0.0
  %3140 = vmatprep.subr.mxu0 0.0
  %3141 = vmatpush1.msra.mxu0 0.0
  %3142 = vmatprep.subr.mxu0 0.0
  %3143 = vmatpush1.msra.mxu0 0.0
  %3144 = vmatprep.subr.mxu0 0.0
  %3145 = vmatpush1.msra.mxu0 0.0
  %3146 = vmatprep.subr.mxu0 0.0
  %3147 = vmatpush1.msra.mxu0 0.0
  %3148 = vmatprep.subr.mxu0 0.0
  %3149 = vmatpush1.msra.mxu0 0.0
  %3150 = vmatprep.subr.mxu0 0.0
  %3151 = vmatpush1.msra.mxu0 0.0
  %3152 = vmatprep.subr.mxu0 0.0
  %3153 = vmatpush1.msra.mxu0 0.0
  %3154 = vmatprep.subr.mxu0 0.0
  %3155 = vmatpush1.msra.mxu0 0.0
  %3156 = vmatprep.subr.mxu0 0.0
  %3157 = vmatpush1.msra.mxu0 0.0
  %3158 = vmatprep.subr.mxu0 0.0
  %3159 = vmatpush1.msra.mxu0 0.0
  %3160 = vmatprep.subr.mxu0 0.0
  %3161 = vmatpush1.msra.mxu0 0.0
  %3162 = vmatprep.subr.mxu0 0.0
  %3163 = vmatpush1.msra.mxu0 0.0
  %3164 = vmatprep.subr.mxu0 0.0
  %3165 = vmatpush1.msra.mxu0 0.0
  %3166 = vmatprep.subr.mxu0 0.0
  %3167 = vmatpush1.msra.mxu0 0.0
  %3168 = vmatprep.subr.mxu0 0.0
  %3169 = vmatpush1.msra.mxu0 0.0
  %3170 = vmatprep.subr.mxu0 0.0
  %3171 = vmatpush1.msra.mxu0 0.0
  %3172 = vmatprep.subr.mxu0 0.0
  %3173 = vmatpush1.msra.mxu0 0.0
  %3174 = vmatprep.subr.mxu0 0.0
  %3175 = vmatpush1.msra.mxu0 0.0
  %3176 = vmatprep.subr.mxu0 0.0
  %3177 = vmatpush1.msra.mxu0 0.0
  %3178 = vmatprep.subr.mxu0 0.0
  %3179 = vmatpush1.msra.mxu0 0.0
  %3180 = vmatprep.subr.mxu0 0.0
  %3181 = vmatpush1.msra.mxu0 0.0
  %3182 = vmatprep.subr.mxu0 0.0
  %3183 = vmatpush1.msra.mxu0 0.0
  %3184 = vmatprep.subr.mxu0 0.0
  %3185 = vmatpush1.msra.mxu0 0.0
  %3186 = vmatprep.subr.mxu0 0.0
  %3187 = vmatpush1.msra.mxu0 0.0
  %3188 = vmatprep.subr.mxu0 0.0
  %3189 = vmatpush1.msra.mxu0 0.0
  %3190 = vmatprep.mubr.f32.mxu0 0.0
  %3191 = vmatmul.mubr.f32.gmra.mrb[0].mxu0 %v326
  %v3192 = vpop.f32.mrb[0].mxu0
  %v3193 = vadd.f32 %v3124, %v3192
  %v3194 = vpop.f32.mrb[0].mxu0
  %3195 = vmatprep.mubr.f32.mxu0 0.0
  %3196 = vmatmul.mubr.f32.gmra.mrb[0].mxu0 %v329
  %v3197 = vpop.f32.mrb[0].mxu0
  %v3198 = vadd.f32 %v3124, %v3197
  %v3199 = vpop.f32.mrb[0].mxu0
  %3200 = vmatprep.mubr.f32.mxu0 0.0
  %3201 = vmatmul.mubr.f32.gmra.mrb[0].mxu0 %v332
  %v3202 = vpop.f32.mrb[0].mxu0
  %v3203 = vadd.f32 %v3124, %v3202
  %v3204 = vpop.f32.mrb[0].mxu0
  %3205 = vmatprep.mubr.f32.mxu0 0.0
  %3206 = vmatmul.mubr.f32.gmra.mrb[0].mxu0 %v335
  %v3207 = vpop.f32.mrb[0].mxu0
  %v3208 = vadd.f32 %v3124, %v3207
  %v3209 = vpop.f32.mrb[0].mxu0
  %3210 = vmatprep.mubr.f32.mxu0 0.0
  %3211 = vmatmul.mubr.f32.gmra.mrb[0].mxu0 %v338
  %v3212 = vpop.f32.mrb[0].mxu0
  %v3213 = vadd.f32 %v3124, %v3212
  %v3214 = vpop.f32.mrb[0].mxu0
  %3215 = vmatprep.mubr.f32.mxu0 0.0
  %3216 = vmatmul.mubr.f32.gmra.mrb[0].mxu0 %v341
  %v3217 = vpop.f32.mrb[0].mxu0
  %v3218 = vadd.f32 %v3124, %v3217
  %v3219 = vpop.f32.mrb[0].mxu0
  %3220 = vmatprep.mubr.f32.mxu0 0.0
  %3221 = vmatmul.mubr.f32.gmra.mrb[0].mxu0 %v344
  %v3222 = vpop.f32.mrb[0].mxu0
  %v3223 = vadd.f32 %v3124, %v3222
  %v3224 = vpop.f32.mrb[0].mxu0
  %3225 = vmatprep.mubr.f32.mxu0 0.0
  %3226 = vmatmul.mubr.f32.gmra.mrb[0].mxu0 %v347
  %v3227 = vpop.f32.mrb[0].mxu0
  %v3228 = vadd.f32 %v3124, %v3227
  %v3229 = vpop.f32.mrb[0].mxu0
  %3230 = vmatprep.mubr.f32.mxu0 0.0
  %3231 = vmatmul.mubr.f32.gmra.mrb[0].mxu0 %v350
  %v3232 = vpop.f32.mrb[0].mxu0
  %v3233 = vadd.f32 %v3124, %v3232
  %v3234 = vpop.f32.mrb[0].mxu0
  %3235 = vmatprep.mubr.f32.mxu0 0.0
  %3236 = vmatmul.mubr.f32.gmra.mrb[0].mxu0 %v353
  %v3237 = vpop.f32.mrb[0].mxu0
  %v3238 = vadd.f32 %v3124, %v3237
  %v3239 = vpop.f32.mrb[0].mxu0
  %3240 = vmatprep.mubr.f32.mxu0 0.0
  %3241 = vmatmul.mubr.f32.gmra.mrb[0].mxu0 %v356
  %v3242 = vpop.f32.mrb[0].mxu0
  %v3243 = vadd.f32 %v3124, %v3242
  %v3244 = vpop.f32.mrb[0].mxu0
  %3245 = vmatprep.mubr.f32.mxu0 0.0
  %3246 = vmatmul.mubr.f32.gmra.mrb[0].mxu0 %v359
  %v3247 = vpop.f32.mrb[0].mxu0
  %v3248 = vadd.f32 %v3124, %v3247
  %v3249 = vpop.f32.mrb[0].mxu0
  %3250 = vmatprep.mubr.f32.mxu0 0.0
  %3251 = vmatmul.mubr.f32.gmra.mrb[0].mxu0 %v362
  %v3252 = vpop.f32.mrb[0].mxu0
  %v3253 = vadd.f32 %v3124, %v3252
  %v3254 = vpop.f32.mrb[0].mxu0
  %3255 = vmatprep.mubr.f32.mxu0 0.0
  %3256 = vmatmul.mubr.f32.gmra.mrb[0].mxu0 %v365
  %v3257 = vpop.f32.mrb[0].mxu0
  %v3258 = vadd.f32 %v3124, %v3257
  %v3259 = vpop.f32.mrb[0].mxu0
  %3260 = vmatprep.mubr.f32.mxu0 0.0
  %3261 = vmatmul.mubr.f32.gmra.mrb[0].mxu0 %v368
  %v3262 = vpop.f32.mrb[0].mxu0
  %v3263 = vadd.f32 %v3124, %v3262
  %v3264 = vpop.f32.mrb[0].mxu0
  %3265 = vmatprep.mubr.f32.mxu0 0.0
  %3266 = vmatmul.mubr.f32.gmra.mrb[0].mxu0 %v371
  %v3267 = vpop.f32.mrb[0].mxu0
  %v3268 = vadd.f32 %v3124, %v3267
  %v3269 = vpop.f32.mrb[0].mxu0
  %3270 = vmatprep.mubr.f32.mxu0 0.0
  %3271 = vmatmul.mubr.f32.gmra.mrb[0].mxu0 %v374
  %v3272 = vpop.f32.mrb[0].mxu0
  %v3273 = vadd.f32 %v3124, %v3272
  %v3274 = vpop.f32.mrb[0].mxu0
  %3275 = vmatprep.mubr.f32.mxu0 0.0
  %3276 = vmatmul.mubr.f32.gmra.mrb[0].mxu0 %v377
  %v3277 = vpop.f32.mrb[0].mxu0
  %v3278 = vadd.f32 %v3124, %v3277
  %v3279 = vpop.f32.mrb[0].mxu0
  %3280 = vmatprep.mubr.f32.mxu0 0.0
  %3281 = vmatmul.mubr.f32.gmra.mrb[0].mxu0 %v380
  %v3282 = vpop.f32.mrb[0].mxu0
  %v3283 = vadd.f32 %v3124, %v3282
  %v3284 = vpop.f32.mrb[0].mxu0
  %3285 = vmatprep.mubr.f32.mxu0 0.0
  %3286 = vmatmul.mubr.f32.gmra.mrb[0].mxu0 %v383
  %v3287 = vpop.f32.mrb[0].mxu0
  %v3288 = vadd.f32 %v3124, %v3287
  %v3289 = vpop.f32.mrb[0].mxu0
  %3290 = vmatprep.mubr.f32.mxu0 0.0
  %3291 = vmatmul.mubr.f32.gmra.mrb[0].mxu0 %v386
  %v3292 = vpop.f32.mrb[0].mxu0
  %v3293 = vadd.f32 %v3124, %v3292
  %v3294 = vpop.f32.mrb[0].mxu0
  %3295 = vmatprep.mubr.f32.mxu0 0.0
  %3296 = vmatmul.mubr.f32.gmra.mrb[0].mxu0 %v389
  %v3297 = vpop.f32.mrb[0].mxu0
  %v3298 = vadd.f32 %v3124, %v3297
  %v3299 = vpop.f32.mrb[0].mxu0
  %3300 = vmatprep.mubr.f32.mxu0 0.0
  %3301 = vmatmul.mubr.f32.gmra.mrb[0].mxu0 %v392
  %v3302 = vpop.f32.mrb[0].mxu0
  %v3303 = vadd.f32 %v3124, %v3302
  %v3304 = vpop.f32.mrb[0].mxu0
  %3305 = vmatprep.mubr.f32.mxu0 0.0
  %3306 = vmatmul.mubr.f32.gmra.mrb[0].mxu0 %v395
  %v3307 = vpop.f32.mrb[0].mxu0
  %v3308 = vadd.f32 %v3124, %v3307
  %v3309 = vpop.f32.mrb[0].mxu0
  %3310 = vmatprep.mubr.f32.mxu0 0.0
  %3311 = vmatmul.mubr.f32.gmra.mrb[0].mxu0 %v398
  %v3312 = vpop.f32.mrb[0].mxu0
  %v3313 = vadd.f32 %v3124, %v3312
  %v3314 = vpop.f32.mrb[0].mxu0
  %3315 = vmatprep.mubr.f32.mxu0 0.0
  %3316 = vmatmul.mubr.f32.gmra.mrb[0].mxu0 %v401
  %v3317 = vpop.f32.mrb[0].mxu0
  %v3318 = vadd.f32 %v3124, %v3317
  %v3319 = vpop.f32.mrb[0].mxu0
  %3320 = vmatprep.mubr.f32.mxu0 0.0
  %3321 = vmatmul.mubr.f32.gmra.mrb[0].mxu0 %v404
  %v3322 = vpop.f32.mrb[0].mxu0
  %v3323 = vadd.f32 %v3124, %v3322
  %v3324 = vpop.f32.mrb[0].mxu0
  %3325 = vmatprep.mubr.f32.mxu0 0.0
  %3326 = vmatmul.mubr.f32.gmra.mrb[0].mxu0 %v407
  %v3327 = vpop.f32.mrb[0].mxu0
  %v3328 = vadd.f32 %v3124, %v3327
  %v3329 = vpop.f32.mrb[0].mxu0
  %3330 = vmatprep.mubr.f32.mxu0 0.0
  %3331 = vmatmul.mubr.f32.gmra.mrb[0].mxu0 %v410
  %v3332 = vpop.f32.mrb[0].mxu0
  %v3333 = vadd.f32 %v3124, %v3332
  %v3334 = vpop.f32.mrb[0].mxu0
  %3335 = vmatprep.mubr.f32.mxu0 0.0
  %3336 = vmatmul.mubr.f32.gmra.mrb[0].mxu0 %v413
  %v3337 = vpop.f32.mrb[0].mxu0
  %v3338 = vadd.f32 %v3124, %v3337
  %v3339 = vpop.f32.mrb[0].mxu0
  %3340 = vmatprep.mubr.f32.mxu0 0.0
  %3341 = vmatmul.mubr.f32.gmra.mrb[0].mxu0 %v416
  %v3342 = vpop.f32.mrb[0].mxu0
  %v3343 = vadd.f32 %v3124, %v3342
  %v3344 = vpop.f32.mrb[0].mxu0
  %3345 = vmatprep.mubr.f32.mxu0 0.0
  %3346 = vmatmul.mubr.f32.gmra.mrb[0].mxu0 %v419
  %v3347 = vpop.f32.mrb[0].mxu0
  %v3348 = vadd.f32 %v3124, %v3347
  %v3349 = vpop.f32.mrb[0].mxu0
  %3350 = vmatprep.mubr.f32.mxu0 0.0
  %3351 = vmatmul.mubr.f32.gmra.mrb[0].mxu0 %v422
  %v3352 = vpop.f32.mrb[0].mxu0
  %v3353 = vadd.f32 %v3124, %v3352
  %v3354 = vpop.f32.mrb[0].mxu0
  %3355 = vmatprep.mubr.f32.mxu0 0.0
  %3356 = vmatmul.mubr.f32.gmra.mrb[0].mxu0 %v425
  %v3357 = vpop.f32.mrb[0].mxu0
  %v3358 = vadd.f32 %v3124, %v3357
  %v3359 = vpop.f32.mrb[0].mxu0
  %3360 = vmatprep.mubr.f32.mxu0 0.0
  %3361 = vmatmul.mubr.f32.gmra.mrb[0].mxu0 %v428
  %v3362 = vpop.f32.mrb[0].mxu0
  %v3363 = vadd.f32 %v3124, %v3362
  %v3364 = vpop.f32.mrb[0].mxu0
  %3365 = vmatprep.mubr.f32.mxu0 0.0
  %3366 = vmatmul.mubr.f32.gmra.mrb[0].mxu0 %v431
  %v3367 = vpop.f32.mrb[0].mxu0
  %v3368 = vadd.f32 %v3124, %v3367
  %v3369 = vpop.f32.mrb[0].mxu0
  %3370 = vmatprep.mubr.f32.mxu0 0.0
  %3371 = vmatmul.mubr.f32.gmra.mrb[0].mxu0 %v434
  %v3372 = vpop.f32.mrb[0].mxu0
  %v3373 = vadd.f32 %v3124, %v3372
  %v3374 = vpop.f32.mrb[0].mxu0
  %3375 = vmatprep.mubr.f32.mxu0 0.0
  %3376 = vmatmul.mubr.f32.gmra.mrb[0].mxu0 %v437
  %v3377 = vpop.f32.mrb[0].mxu0
  %v3378 = vadd.f32 %v3124, %v3377
  %v3379 = vpop.f32.mrb[0].mxu0
  %3380 = vmatprep.mubr.f32.mxu0 0.0
  %3381 = vmatmul.mubr.f32.gmra.mrb[0].mxu0 %v440
  %v3382 = vpop.f32.mrb[0].mxu0
  %v3383 = vadd.f32 %v3124, %v3382
  %v3384 = vpop.f32.mrb[0].mxu0
  %3385 = vmatprep.mubr.f32.mxu0 0.0
  %3386 = vmatmul.mubr.f32.gmra.mrb[0].mxu0 %v443
  %v3387 = vpop.f32.mrb[0].mxu0
  %v3388 = vadd.f32 %v3124, %v3387
  %v3389 = vpop.f32.mrb[0].mxu0
  %3390 = vmatprep.mubr.f32.mxu0 0.0
  %3391 = vmatmul.mubr.f32.gmra.mrb[0].mxu0 %v446
  %v3392 = vpop.f32.mrb[0].mxu0
  %v3393 = vadd.f32 %v3124, %v3392
  %v3394 = vpop.f32.mrb[0].mxu0
  %3395 = vmatprep.mubr.f32.mxu0 0.0
  %3396 = vmatmul.mubr.f32.gmra.mrb[0].mxu0 %v449
  %v3397 = vpop.f32.mrb[0].mxu0
  %v3398 = vadd.f32 %v3124, %v3397
  %v3399 = vpop.f32.mrb[0].mxu0
  %3400 = vmatprep.mubr.f32.mxu0 0.0
  %3401 = vmatmul.mubr.f32.gmra.mrb[0].mxu0 %v452
  %v3402 = vpop.f32.mrb[0].mxu0
  %v3403 = vadd.f32 %v3124, %v3402
  %v3404 = vpop.f32.mrb[0].mxu0
  %3405 = vmatprep.mubr.f32.mxu0 0.0
  %3406 = vmatmul.mubr.f32.gmra.mrb[0].mxu0 %v455
  %v3407 = vpop.f32.mrb[0].mxu0
  %v3408 = vadd.f32 %v3124, %v3407
  %v3409 = vpop.f32.mrb[0].mxu0
  %3410 = vmatprep.mubr.f32.mxu0 0.0
  %3411 = vmatmul.mubr.f32.gmra.mrb[0].mxu0 %v458
  %v3412 = vpop.f32.mrb[0].mxu0
  %v3413 = vadd.f32 %v3124, %v3412
  %v3414 = vpop.f32.mrb[0].mxu0
  %3415 = vmatprep.mubr.f32.mxu0 0.0
  %3416 = vmatmul.mubr.f32.gmra.mrb[0].mxu0 %v461
  %v3417 = vpop.f32.mrb[0].mxu0
  %v3418 = vadd.f32 %v3124, %v3417
  %v3419 = vpop.f32.mrb[0].mxu0
  %3420 = vmatprep.mubr.f32.mxu0 0.0
  %3421 = vmatmul.mubr.f32.gmra.mrb[0].mxu0 %v464
  %v3422 = vpop.f32.mrb[0].mxu0
  %v3423 = vadd.f32 %v3124, %v3422
  %v3424 = vpop.f32.mrb[0].mxu0
  %3425 = vmatprep.mubr.f32.mxu0 0.0
  %3426 = vmatmul.mubr.f32.gmra.mrb[0].mxu0 %v467
  %v3427 = vpop.f32.mrb[0].mxu0
  %v3428 = vadd.f32 %v3124, %v3427
  %v3429 = vpop.f32.mrb[0].mxu0
  %3430 = vmatprep.mubr.f32.mxu0 0.0
  %3431 = vmatmul.mubr.f32.gmra.mrb[0].mxu0 %v470
  %v3432 = vpop.f32.mrb[0].mxu0
  %v3433 = vadd.f32 %v3124, %v3432
  %v3434 = vpop.f32.mrb[0].mxu0
  %3435 = vmatprep.mubr.f32.mxu0 0.0
  %3436 = vmatmul.mubr.f32.gmra.mrb[0].mxu0 %v473
  %v3437 = vpop.f32.mrb[0].mxu0
  %v3438 = vadd.f32 %v3124, %v3437
  %v3439 = vpop.f32.mrb[0].mxu0
  %3440 = vmatprep.mubr.f32.mxu0 0.0
  %3441 = vmatmul.mubr.f32.gmra.mrb[0].mxu0 %v476
  %v3442 = vpop.f32.mrb[0].mxu0
  %v3443 = vadd.f32 %v3124, %v3442
  %v3444 = vpop.f32.mrb[0].mxu0
  %3445 = vmatprep.mubr.f32.mxu0 0.0
  %3446 = vmatmul.mubr.f32.gmra.mrb[0].mxu0 %v479
  %v3447 = vpop.f32.mrb[0].mxu0
  %v3448 = vadd.f32 %v3124, %v3447
  %v3449 = vpop.f32.mrb[0].mxu0
  %3450 = vmatprep.mubr.f32.mxu0 0.0
  %3451 = vmatmul.mubr.f32.gmra.mrb[0].mxu0 %v482
  %v3452 = vpop.f32.mrb[0].mxu0
  %v3453 = vadd.f32 %v3124, %v3452
  %v3454 = vpop.f32.mrb[0].mxu0
  %3455 = vmatprep.mubr.f32.mxu0 0.0
  %3456 = vmatmul.mubr.f32.gmra.mrb[0].mxu0 %v485
  %v3457 = vpop.f32.mrb[0].mxu0
  %v3458 = vadd.f32 %v3124, %v3457
  %v3459 = vpop.f32.mrb[0].mxu0
  %3460 = vmatprep.mubr.f32.mxu0 0.0
  %3461 = vmatmul.mubr.f32.gmra.mrb[0].mxu0 %v488
  %v3462 = vpop.f32.mrb[0].mxu0
  %v3463 = vadd.f32 %v3124, %v3462
  %v3464 = vpop.f32.mrb[0].mxu0
  %3465 = vmatprep.mubr.f32.mxu0 0.0
  %3466 = vmatmul.mubr.f32.gmra.mrb[0].mxu0 %v491
  %v3467 = vpop.f32.mrb[0].mxu0
  %v3468 = vadd.f32 %v3124, %v3467
  %v3469 = vpop.f32.mrb[0].mxu0
  %3470 = vmatprep.mubr.f32.mxu0 0.0
  %3471 = vmatmul.mubr.f32.gmra.mrb[0].mxu0 %v494
  %v3472 = vpop.f32.mrb[0].mxu0
  %v3473 = vadd.f32 %v3124, %v3472
  %v3474 = vpop.f32.mrb[0].mxu0
  %3475 = vmatprep.mubr.f32.mxu0 0.0
  %3476 = vmatmul.mubr.f32.gmra.mrb[0].mxu0 %v497
  %v3477 = vpop.f32.mrb[0].mxu0
  %v3478 = vadd.f32 %v3124, %v3477
  %v3479 = vpop.f32.mrb[0].mxu0
  %3480 = vmatprep.mubr.f32.mxu0 0.0
  %3481 = vmatmul.mubr.f32.gmra.mrb[0].mxu0 %v500
  %v3482 = vpop.f32.mrb[0].mxu0
  %v3483 = vadd.f32 %v3124, %v3482
  %v3484 = vpop.f32.mrb[0].mxu0
  %3485 = vmatprep.mubr.f32.mxu0 0.0
  %3486 = vmatmul.mubr.f32.gmra.mrb[0].mxu0 %v503
  %v3487 = vpop.f32.mrb[0].mxu0
  %v3488 = vadd.f32 %v3124, %v3487
  %v3489 = vpop.f32.mrb[0].mxu0
  %3490 = vmatprep.mubr.f32.mxu0 0.0
  %3491 = vmatmul.mubr.f32.gmra.mrb[0].mxu0 %v506
  %v3492 = vpop.f32.mrb[0].mxu0
  %v3493 = vadd.f32 %v3124, %v3492
  %v3494 = vpop.f32.mrb[0].mxu0
  %3495 = vmatprep.mubr.f32.mxu0 0.0
  %3496 = vmatmul.mubr.f32.gmra.mrb[0].mxu0 %v509
  %v3497 = vpop.f32.mrb[0].mxu0
  %v3498 = vadd.f32 %v3124, %v3497
  %v3499 = vpop.f32.mrb[0].mxu0
  %3500 = vmatprep.mubr.f32.mxu0 0.0
  %3501 = vmatmul.mubr.f32.gmra.mrb[0].mxu0 %v512
  %v3502 = vpop.f32.mrb[0].mxu0
  %v3503 = vadd.f32 %v3124, %v3502
  %v3504 = vpop.f32.mrb[0].mxu0
  %3505 = vmatprep.mubr.f32.mxu0 0.0
  %3506 = vmatmul.mubr.f32.gmra.mrb[0].mxu0 %v515
  %v3507 = vpop.f32.mrb[0].mxu0
  %v3508 = vadd.f32 %v3124, %v3507
  %v3509 = vpop.f32.mrb[0].mxu0
  %3510 = vdwg.mxu0
  %v3512 = vsel %vm324, %v2890, 0
  %v3515 = vsel %vm324, %v2891, 0
  %v3518 = vsel %vm324, %v2892, 0
  %v3521 = vsel %vm324, %v2893, 0
  %v3524 = vsel %vm324, %v2894, 0
  %v3527 = vsel %vm324, %v2895, 0
  %v3530 = vsel %vm324, %v2896, 0
  %v3533 = vsel %vm324, %v2897, 0
  %v3536 = vsel %vm324, %v2898, 0
  %v3539 = vsel %vm324, %v2899, 0
  %v3542 = vsel %vm324, %v2900, 0
  %v3545 = vsel %vm324, %v2901, 0
  %v3548 = vsel %vm324, %v2902, 0
  %v3551 = vsel %vm324, %v2903, 0
  %v3554 = vsel %vm324, %v2904, 0
  %v3557 = vsel %vm324, %v2905, 0
  %v3560 = vsel %vm324, %v2906, 0
  %v3563 = vsel %vm324, %v2907, 0
  %v3566 = vsel %vm324, %v2908, 0
  %v3569 = vsel %vm324, %v2909, 0
  %v3572 = vsel %vm324, %v2910, 0
  %v3575 = vsel %vm324, %v2911, 0
  %v3578 = vsel %vm324, %v2912, 0
  %v3581 = vsel %vm324, %v2913, 0
  %v3584 = vsel %vm324, %v2914, 0
  %v3587 = vsel %vm324, %v2915, 0
  %v3590 = vsel %vm324, %v2916, 0
  %v3593 = vsel %vm324, %v2917, 0
  %v3596 = vsel %vm324, %v2918, 0
  %v3599 = vsel %vm324, %v2919, 0
  %v3602 = vsel %vm324, %v2920, 0
  %v3605 = vsel %vm324, %v2921, 0
  %v3608 = vsel %vm324, %v2922, 0
  %v3611 = vsel %vm324, %v2923, 0
  %v3614 = vsel %vm324, %v2924, 0
  %v3617 = vsel %vm324, %v2925, 0
  %v3620 = vsel %vm324, %v2926, 0
  %v3623 = vsel %vm324, %v2927, 0
  %v3626 = vsel %vm324, %v2928, 0
  %v3629 = vsel %vm324, %v2929, 0
  %v3632 = vsel %vm324, %v2930, 0
  %v3635 = vsel %vm324, %v2931, 0
  %v3638 = vsel %vm324, %v2932, 0
  %v3641 = vsel %vm324, %v2933, 0
  %v3644 = vsel %vm324, %v2934, 0
  %v3647 = vsel %vm324, %v2935, 0
  %v3650 = vsel %vm324, %v2936, 0
  %v3653 = vsel %vm324, %v2937, 0
  %v3656 = vsel %vm324, %v2938, 0
  %v3659 = vsel %vm324, %v2939, 0
  %v3662 = vsel %vm324, %v2940, 0
  %v3665 = vsel %vm324, %v2941, 0
  %v3668 = vsel %vm324, %v2942, 0
  %v3671 = vsel %vm324, %v2943, 0
  %v3674 = vsel %vm324, %v2944, 0
  %v3677 = vsel %vm324, %v2945, 0
  %v3680 = vsel %vm324, %v2946, 0
  %v3683 = vsel %vm324, %v2947, 0
  %v3686 = vsel %vm324, %v2948, 0
  %v3689 = vsel %vm324, %v2949, 0
  %v3692 = vsel %vm324, %v2950, 0
  %v3695 = vsel %vm324, %v2951, 0
  %v3698 = vsel %vm324, %v2952, 0
  %v3701 = vsel %vm324, %v2953, 0
  %3703 = vmatprep.subr.mxu0 0.0
  %3704 = vmatpush1.msra.mxu0 %v3019
  %3705 = vmatprep.subr.mxu0 0.0
  %3706 = vmatpush1.msra.mxu0 %v3020
  %3707 = vmatprep.subr.mxu0 0.0
  %3708 = vmatpush1.msra.mxu0 %v3021
  %3709 = vmatprep.subr.mxu0 0.0
  %3710 = vmatpush1.msra.mxu0 %v3022
  %3711 = vmatprep.subr.mxu0 0.0
  %3712 = vmatpush1.msra.mxu0 0.0
  %3713 = vmatprep.subr.mxu0 0.0
  %3714 = vmatpush1.msra.mxu0 0.0
  %3715 = vmatprep.subr.mxu0 0.0
  %3716 = vmatpush1.msra.mxu0 0.0
  %3717 = vmatprep.subr.mxu0 0.0
  %3718 = vmatpush1.msra.mxu0 0.0
  %3719 = vmatprep.subr.mxu0 0.0
  %3720 = vmatpush1.msra.mxu0 0.0
  %3721 = vmatprep.subr.mxu0 0.0
  %3722 = vmatpush1.msra.mxu0 0.0
  %3723 = vmatprep.subr.mxu0 0.0
  %3724 = vmatpush1.msra.mxu0 0.0
  %3725 = vmatprep.subr.mxu0 0.0
  %3726 = vmatpush1.msra.mxu0 0.0
  %3727 = vmatprep.subr.mxu0 0.0
  %3728 = vmatpush1.msra.mxu0 0.0
  %3729 = vmatprep.subr.mxu0 0.0
  %3730 = vmatpush1.msra.mxu0 0.0
  %3731 = vmatprep.subr.mxu0 0.0
  %3732 = vmatpush1.msra.mxu0 0.0
  %3733 = vmatprep.subr.mxu0 0.0
  %3734 = vmatpush1.msra.mxu0 0.0
  %3735 = vmatprep.subr.mxu0 0.0
  %3736 = vmatpush1.msra.mxu0 0.0
  %3737 = vmatprep.subr.mxu0 0.0
  %3738 = vmatpush1.msra.mxu0 0.0
  %3739 = vmatprep.subr.mxu0 0.0
  %3740 = vmatpush1.msra.mxu0 0.0
  %3741 = vmatprep.subr.mxu0 0.0
  %3742 = vmatpush1.msra.mxu0 0.0
  %3743 = vmatprep.subr.mxu0 0.0
  %3744 = vmatpush1.msra.mxu0 0.0
  %3745 = vmatprep.subr.mxu0 0.0
  %3746 = vmatpush1.msra.mxu0 0.0
  %3747 = vmatprep.subr.mxu0 0.0
  %3748 = vmatpush1.msra.mxu0 0.0
  %3749 = vmatprep.subr.mxu0 0.0
  %3750 = vmatpush1.msra.mxu0 0.0
  %3751 = vmatprep.subr.mxu0 0.0
  %3752 = vmatpush1.msra.mxu0 0.0
  %3753 = vmatprep.subr.mxu0 0.0
  %3754 = vmatpush1.msra.mxu0 0.0
  %3755 = vmatprep.subr.mxu0 0.0
  %3756 = vmatpush1.msra.mxu0 0.0
  %3757 = vmatprep.subr.mxu0 0.0
  %3758 = vmatpush1.msra.mxu0 0.0
  %3759 = vmatprep.subr.mxu0 0.0
  %3760 = vmatpush1.msra.mxu0 0.0
  %3761 = vmatprep.subr.mxu0 0.0
  %3762 = vmatpush1.msra.mxu0 0.0
  %3763 = vmatprep.subr.mxu0 0.0
  %3764 = vmatpush1.msra.mxu0 0.0
  %3765 = vmatprep.subr.mxu0 0.0
  %3766 = vmatpush1.msra.mxu0 0.0
  %3767 = vmatprep.mubr.f32.mxu0 0.0
  %3768 = vmatmul.mubr.f32.gmra.mrb[0].mxu0 %v3512
  %v3769 = vpop.f32.mrb[0].mxu0
  %v3770 = vadd.f32 0.0, %v3769
  %v3771 = vpop.f32.mrb[0].mxu0
  %3772 = vmatprep.mubr.f32.mxu0 0.0
  %3773 = vmatmul.mubr.f32.gmra.mrb[0].mxu0 %v3515
  %v3774 = vpop.f32.mrb[0].mxu0
  %v3775 = vadd.f32 0.0, %v3774
  %v3776 = vpop.f32.mrb[0].mxu0
  %3777 = vmatprep.mubr.f32.mxu0 0.0
  %3778 = vmatmul.mubr.f32.gmra.mrb[0].mxu0 %v3518
  %v3779 = vpop.f32.mrb[0].mxu0
  %v3780 = vadd.f32 0.0, %v3779
  %v3781 = vpop.f32.mrb[0].mxu0
  %3782 = vmatprep.mubr.f32.mxu0 0.0
  %3783 = vmatmul.mubr.f32.gmra.mrb[0].mxu0 %v3521
  %v3784 = vpop.f32.mrb[0].mxu0
  %v3785 = vadd.f32 0.0, %v3784
  %v3786 = vpop.f32.mrb[0].mxu0
  %3787 = vmatprep.mubr.f32.mxu0 0.0
  %3788 = vmatmul.mubr.f32.gmra.mrb[0].mxu0 %v3524
  %v3789 = vpop.f32.mrb[0].mxu0
  %v3790 = vadd.f32 0.0, %v3789
  %v3791 = vpop.f32.mrb[0].mxu0
  %3792 = vmatprep.mubr.f32.mxu0 0.0
  %3793 = vmatmul.mubr.f32.gmra.mrb[0].mxu0 %v3527
  %v3794 = vpop.f32.mrb[0].mxu0
  %v3795 = vadd.f32 0.0, %v3794
  %v3796 = vpop.f32.mrb[0].mxu0
  %3797 = vmatprep.mubr.f32.mxu0 0.0
  %3798 = vmatmul.mubr.f32.gmra.mrb[0].mxu0 %v3530
  %v3799 = vpop.f32.mrb[0].mxu0
  %v3800 = vadd.f32 0.0, %v3799
  %v3801 = vpop.f32.mrb[0].mxu0
  %3802 = vmatprep.mubr.f32.mxu0 0.0
  %3803 = vmatmul.mubr.f32.gmra.mrb[0].mxu0 %v3533
  %v3804 = vpop.f32.mrb[0].mxu0
  %v3805 = vadd.f32 0.0, %v3804
  %v3806 = vpop.f32.mrb[0].mxu0
  %3807 = vmatprep.mubr.f32.mxu0 0.0
  %3808 = vmatmul.mubr.f32.gmra.mrb[0].mxu0 %v3536
  %v3809 = vpop.f32.mrb[0].mxu0
  %v3810 = vadd.f32 0.0, %v3809
  %v3811 = vpop.f32.mrb[0].mxu0
  %3812 = vmatprep.mubr.f32.mxu0 0.0
  %3813 = vmatmul.mubr.f32.gmra.mrb[0].mxu0 %v3539
  %v3814 = vpop.f32.mrb[0].mxu0
  %v3815 = vadd.f32 0.0, %v3814
  %v3816 = vpop.f32.mrb[0].mxu0
  %3817 = vmatprep.mubr.f32.mxu0 0.0
  %3818 = vmatmul.mubr.f32.gmra.mrb[0].mxu0 %v3542
  %v3819 = vpop.f32.mrb[0].mxu0
  %v3820 = vadd.f32 0.0, %v3819
  %v3821 = vpop.f32.mrb[0].mxu0
  %3822 = vmatprep.mubr.f32.mxu0 0.0
  %3823 = vmatmul.mubr.f32.gmra.mrb[0].mxu0 %v3545
  %v3824 = vpop.f32.mrb[0].mxu0
  %v3825 = vadd.f32 0.0, %v3824
  %v3826 = vpop.f32.mrb[0].mxu0
  %3827 = vmatprep.mubr.f32.mxu0 0.0
  %3828 = vmatmul.mubr.f32.gmra.mrb[0].mxu0 %v3548
  %v3829 = vpop.f32.mrb[0].mxu0
  %v3830 = vadd.f32 0.0, %v3829
  %v3831 = vpop.f32.mrb[0].mxu0
  %3832 = vmatprep.mubr.f32.mxu0 0.0
  %3833 = vmatmul.mubr.f32.gmra.mrb[0].mxu0 %v3551
  %v3834 = vpop.f32.mrb[0].mxu0
  %v3835 = vadd.f32 0.0, %v3834
  %v3836 = vpop.f32.mrb[0].mxu0
  %3837 = vmatprep.mubr.f32.mxu0 0.0
  %3838 = vmatmul.mubr.f32.gmra.mrb[0].mxu0 %v3554
  %v3839 = vpop.f32.mrb[0].mxu0
  %v3840 = vadd.f32 0.0, %v3839
  %v3841 = vpop.f32.mrb[0].mxu0
  %3842 = vmatprep.mubr.f32.mxu0 0.0
  %3843 = vmatmul.mubr.f32.gmra.mrb[0].mxu0 %v3557
  %v3844 = vpop.f32.mrb[0].mxu0
  %v3845 = vadd.f32 0.0, %v3844
  %v3846 = vpop.f32.mrb[0].mxu0
  %3847 = vmatprep.mubr.f32.mxu0 0.0
  %3848 = vmatmul.mubr.f32.gmra.mrb[0].mxu0 %v3560
  %v3849 = vpop.f32.mrb[0].mxu0
  %v3850 = vadd.f32 0.0, %v3849
  %v3851 = vpop.f32.mrb[0].mxu0
  %3852 = vmatprep.mubr.f32.mxu0 0.0
  %3853 = vmatmul.mubr.f32.gmra.mrb[0].mxu0 %v3563
  %v3854 = vpop.f32.mrb[0].mxu0
  %v3855 = vadd.f32 0.0, %v3854
  %v3856 = vpop.f32.mrb[0].mxu0
  %3857 = vmatprep.mubr.f32.mxu0 0.0
  %3858 = vmatmul.mubr.f32.gmra.mrb[0].mxu0 %v3566
  %v3859 = vpop.f32.mrb[0].mxu0
  %v3860 = vadd.f32 0.0, %v3859
  %v3861 = vpop.f32.mrb[0].mxu0
  %3862 = vmatprep.mubr.f32.mxu0 0.0
  %3863 = vmatmul.mubr.f32.gmra.mrb[0].mxu0 %v3569
  %v3864 = vpop.f32.mrb[0].mxu0
  %v3865 = vadd.f32 0.0, %v3864
  %v3866 = vpop.f32.mrb[0].mxu0
  %3867 = vmatprep.mubr.f32.mxu0 0.0
  %3868 = vmatmul.mubr.f32.gmra.mrb[0].mxu0 %v3572
  %v3869 = vpop.f32.mrb[0].mxu0
  %v3870 = vadd.f32 0.0, %v3869
  %v3871 = vpop.f32.mrb[0].mxu0
  %3872 = vmatprep.mubr.f32.mxu0 0.0
  %3873 = vmatmul.mubr.f32.gmra.mrb[0].mxu0 %v3575
  %v3874 = vpop.f32.mrb[0].mxu0
  %v3875 = vadd.f32 0.0, %v3874
  %v3876 = vpop.f32.mrb[0].mxu0
  %3877 = vmatprep.mubr.f32.mxu0 0.0
  %3878 = vmatmul.mubr.f32.gmra.mrb[0].mxu0 %v3578
  %v3879 = vpop.f32.mrb[0].mxu0
  %v3880 = vadd.f32 0.0, %v3879
  %v3881 = vpop.f32.mrb[0].mxu0
  %3882 = vmatprep.mubr.f32.mxu0 0.0
  %3883 = vmatmul.mubr.f32.gmra.mrb[0].mxu0 %v3581
  %v3884 = vpop.f32.mrb[0].mxu0
  %v3885 = vadd.f32 0.0, %v3884
  %v3886 = vpop.f32.mrb[0].mxu0
  %3887 = vmatprep.mubr.f32.mxu0 0.0
  %3888 = vmatmul.mubr.f32.gmra.mrb[0].mxu0 %v3584
  %v3889 = vpop.f32.mrb[0].mxu0
  %v3890 = vadd.f32 0.0, %v3889
  %v3891 = vpop.f32.mrb[0].mxu0
  %3892 = vmatprep.mubr.f32.mxu0 0.0
  %3893 = vmatmul.mubr.f32.gmra.mrb[0].mxu0 %v3587
  %v3894 = vpop.f32.mrb[0].mxu0
  %v3895 = vadd.f32 0.0, %v3894
  %v3896 = vpop.f32.mrb[0].mxu0
  %3897 = vmatprep.mubr.f32.mxu0 0.0
  %3898 = vmatmul.mubr.f32.gmra.mrb[0].mxu0 %v3590
  %v3899 = vpop.f32.mrb[0].mxu0
  %v3900 = vadd.f32 0.0, %v3899
  %v3901 = vpop.f32.mrb[0].mxu0
  %3902 = vmatprep.mubr.f32.mxu0 0.0
  %3903 = vmatmul.mubr.f32.gmra.mrb[0].mxu0 %v3593
  %v3904 = vpop.f32.mrb[0].mxu0
  %v3905 = vadd.f32 0.0, %v3904
  %v3906 = vpop.f32.mrb[0].mxu0
  %3907 = vmatprep.mubr.f32.mxu0 0.0
  %3908 = vmatmul.mubr.f32.gmra.mrb[0].mxu0 %v3596
  %v3909 = vpop.f32.mrb[0].mxu0
  %v3910 = vadd.f32 0.0, %v3909
  %v3911 = vpop.f32.mrb[0].mxu0
  %3912 = vmatprep.mubr.f32.mxu0 0.0
  %3913 = vmatmul.mubr.f32.gmra.mrb[0].mxu0 %v3599
  %v3914 = vpop.f32.mrb[0].mxu0
  %v3915 = vadd.f32 0.0, %v3914
  %v3916 = vpop.f32.mrb[0].mxu0
  %3917 = vmatprep.mubr.f32.mxu0 0.0
  %3918 = vmatmul.mubr.f32.gmra.mrb[0].mxu0 %v3602
  %v3919 = vpop.f32.mrb[0].mxu0
  %v3920 = vadd.f32 0.0, %v3919
  %v3921 = vpop.f32.mrb[0].mxu0
  %3922 = vmatprep.mubr.f32.mxu0 0.0
  %3923 = vmatmul.mubr.f32.gmra.mrb[0].mxu0 %v3605
  %v3924 = vpop.f32.mrb[0].mxu0
  %v3925 = vadd.f32 0.0, %v3924
  %v3926 = vpop.f32.mrb[0].mxu0
  %3927 = vmatprep.mubr.f32.mxu0 0.0
  %3928 = vmatmul.mubr.f32.gmra.mrb[0].mxu0 %v3608
  %v3929 = vpop.f32.mrb[0].mxu0
  %v3930 = vadd.f32 0.0, %v3929
  %v3931 = vpop.f32.mrb[0].mxu0
  %3932 = vmatprep.mubr.f32.mxu0 0.0
  %3933 = vmatmul.mubr.f32.gmra.mrb[0].mxu0 %v3611
  %v3934 = vpop.f32.mrb[0].mxu0
  %v3935 = vadd.f32 0.0, %v3934
  %v3936 = vpop.f32.mrb[0].mxu0
  %3937 = vmatprep.mubr.f32.mxu0 0.0
  %3938 = vmatmul.mubr.f32.gmra.mrb[0].mxu0 %v3614
  %v3939 = vpop.f32.mrb[0].mxu0
  %v3940 = vadd.f32 0.0, %v3939
  %v3941 = vpop.f32.mrb[0].mxu0
  %3942 = vmatprep.mubr.f32.mxu0 0.0
  %3943 = vmatmul.mubr.f32.gmra.mrb[0].mxu0 %v3617
  %v3944 = vpop.f32.mrb[0].mxu0
  %v3945 = vadd.f32 0.0, %v3944
  %v3946 = vpop.f32.mrb[0].mxu0
  %3947 = vmatprep.mubr.f32.mxu0 0.0
  %3948 = vmatmul.mubr.f32.gmra.mrb[0].mxu0 %v3620
  %v3949 = vpop.f32.mrb[0].mxu0
  %v3950 = vadd.f32 0.0, %v3949
  %v3951 = vpop.f32.mrb[0].mxu0
  %3952 = vmatprep.mubr.f32.mxu0 0.0
  %3953 = vmatmul.mubr.f32.gmra.mrb[0].mxu0 %v3623
  %v3954 = vpop.f32.mrb[0].mxu0
  %v3955 = vadd.f32 0.0, %v3954
  %v3956 = vpop.f32.mrb[0].mxu0
  %3957 = vmatprep.mubr.f32.mxu0 0.0
  %3958 = vmatmul.mubr.f32.gmra.mrb[0].mxu0 %v3626
  %v3959 = vpop.f32.mrb[0].mxu0
  %v3960 = vadd.f32 0.0, %v3959
  %v3961 = vpop.f32.mrb[0].mxu0
  %3962 = vmatprep.mubr.f32.mxu0 0.0
  %3963 = vmatmul.mubr.f32.gmra.mrb[0].mxu0 %v3629
  %v3964 = vpop.f32.mrb[0].mxu0
  %v3965 = vadd.f32 0.0, %v3964
  %v3966 = vpop.f32.mrb[0].mxu0
  %3967 = vmatprep.mubr.f32.mxu0 0.0
  %3968 = vmatmul.mubr.f32.gmra.mrb[0].mxu0 %v3632
  %v3969 = vpop.f32.mrb[0].mxu0
  %v3970 = vadd.f32 0.0, %v3969
  %v3971 = vpop.f32.mrb[0].mxu0
  %3972 = vmatprep.mubr.f32.mxu0 0.0
  %3973 = vmatmul.mubr.f32.gmra.mrb[0].mxu0 %v3635
  %v3974 = vpop.f32.mrb[0].mxu0
  %v3975 = vadd.f32 0.0, %v3974
  %v3976 = vpop.f32.mrb[0].mxu0
  %3977 = vmatprep.mubr.f32.mxu0 0.0
  %3978 = vmatmul.mubr.f32.gmra.mrb[0].mxu0 %v3638
  %v3979 = vpop.f32.mrb[0].mxu0
  %v3980 = vadd.f32 0.0, %v3979
  %v3981 = vpop.f32.mrb[0].mxu0
  %3982 = vmatprep.mubr.f32.mxu0 0.0
  %3983 = vmatmul.mubr.f32.gmra.mrb[0].mxu0 %v3641
  %v3984 = vpop.f32.mrb[0].mxu0
  %v3985 = vadd.f32 0.0, %v3984
  %v3986 = vpop.f32.mrb[0].mxu0
  %3987 = vmatprep.mubr.f32.mxu0 0.0
  %3988 = vmatmul.mubr.f32.gmra.mrb[0].mxu0 %v3644
  %v3989 = vpop.f32.mrb[0].mxu0
  %v3990 = vadd.f32 0.0, %v3989
  %v3991 = vpop.f32.mrb[0].mxu0
  %3992 = vmatprep.mubr.f32.mxu0 0.0
  %3993 = vmatmul.mubr.f32.gmra.mrb[0].mxu0 %v3647
  %v3994 = vpop.f32.mrb[0].mxu0
  %v3995 = vadd.f32 0.0, %v3994
  %v3996 = vpop.f32.mrb[0].mxu0
  %3997 = vmatprep.mubr.f32.mxu0 0.0
  %3998 = vmatmul.mubr.f32.gmra.mrb[0].mxu0 %v3650
  %v3999 = vpop.f32.mrb[0].mxu0
  %v4000 = vadd.f32 0.0, %v3999
  %v4001 = vpop.f32.mrb[0].mxu0
  %4002 = vmatprep.mubr.f32.mxu0 0.0
  %4003 = vmatmul.mubr.f32.gmra.mrb[0].mxu0 %v3653
  %v4004 = vpop.f32.mrb[0].mxu0
  %v4005 = vadd.f32 0.0, %v4004
  %v4006 = vpop.f32.mrb[0].mxu0
  %4007 = vmatprep.mubr.f32.mxu0 0.0
  %4008 = vmatmul.mubr.f32.gmra.mrb[0].mxu0 %v3656
  %v4009 = vpop.f32.mrb[0].mxu0
  %v4010 = vadd.f32 0.0, %v4009
  %v4011 = vpop.f32.mrb[0].mxu0
  %4012 = vmatprep.mubr.f32.mxu0 0.0
  %4013 = vmatmul.mubr.f32.gmra.mrb[0].mxu0 %v3659
  %v4014 = vpop.f32.mrb[0].mxu0
  %v4015 = vadd.f32 0.0, %v4014
  %v4016 = vpop.f32.mrb[0].mxu0
  %4017 = vmatprep.mubr.f32.mxu0 0.0
  %4018 = vmatmul.mubr.f32.gmra.mrb[0].mxu0 %v3662
  %v4019 = vpop.f32.mrb[0].mxu0
  %v4020 = vadd.f32 0.0, %v4019
  %v4021 = vpop.f32.mrb[0].mxu0
  %4022 = vmatprep.mubr.f32.mxu0 0.0
  %4023 = vmatmul.mubr.f32.gmra.mrb[0].mxu0 %v3665
  %v4024 = vpop.f32.mrb[0].mxu0
  %v4025 = vadd.f32 0.0, %v4024
  %v4026 = vpop.f32.mrb[0].mxu0
  %4027 = vmatprep.mubr.f32.mxu0 0.0
  %4028 = vmatmul.mubr.f32.gmra.mrb[0].mxu0 %v3668
  %v4029 = vpop.f32.mrb[0].mxu0
  %v4030 = vadd.f32 0.0, %v4029
  %v4031 = vpop.f32.mrb[0].mxu0
  %4032 = vmatprep.mubr.f32.mxu0 0.0
  %4033 = vmatmul.mubr.f32.gmra.mrb[0].mxu0 %v3671
  %v4034 = vpop.f32.mrb[0].mxu0
  %v4035 = vadd.f32 0.0, %v4034
  %v4036 = vpop.f32.mrb[0].mxu0
  %4037 = vmatprep.mubr.f32.mxu0 0.0
  %4038 = vmatmul.mubr.f32.gmra.mrb[0].mxu0 %v3674
  %v4039 = vpop.f32.mrb[0].mxu0
  %v4040 = vadd.f32 0.0, %v4039
  %v4041 = vpop.f32.mrb[0].mxu0
  %4042 = vmatprep.mubr.f32.mxu0 0.0
  %4043 = vmatmul.mubr.f32.gmra.mrb[0].mxu0 %v3677
  %v4044 = vpop.f32.mrb[0].mxu0
  %v4045 = vadd.f32 0.0, %v4044
  %v4046 = vpop.f32.mrb[0].mxu0
  %4047 = vmatprep.mubr.f32.mxu0 0.0
  %4048 = vmatmul.mubr.f32.gmra.mrb[0].mxu0 %v3680
  %v4049 = vpop.f32.mrb[0].mxu0
  %v4050 = vadd.f32 0.0, %v4049
  %v4051 = vpop.f32.mrb[0].mxu0
  %4052 = vmatprep.mubr.f32.mxu0 0.0
  %4053 = vmatmul.mubr.f32.gmra.mrb[0].mxu0 %v3683
  %v4054 = vpop.f32.mrb[0].mxu0
  %v4055 = vadd.f32 0.0, %v4054
  %v4056 = vpop.f32.mrb[0].mxu0
  %4057 = vmatprep.mubr.f32.mxu0 0.0
  %4058 = vmatmul.mubr.f32.gmra.mrb[0].mxu0 %v3686
  %v4059 = vpop.f32.mrb[0].mxu0
  %v4060 = vadd.f32 0.0, %v4059
  %v4061 = vpop.f32.mrb[0].mxu0
  %4062 = vmatprep.mubr.f32.mxu0 0.0
  %4063 = vmatmul.mubr.f32.gmra.mrb[0].mxu0 %v3689
  %v4064 = vpop.f32.mrb[0].mxu0
  %v4065 = vadd.f32 0.0, %v4064
  %v4066 = vpop.f32.mrb[0].mxu0
  %4067 = vmatprep.mubr.f32.mxu0 0.0
  %4068 = vmatmul.mubr.f32.gmra.mrb[0].mxu0 %v3692
  %v4069 = vpop.f32.mrb[0].mxu0
  %v4070 = vadd.f32 0.0, %v4069
  %v4071 = vpop.f32.mrb[0].mxu0
  %4072 = vmatprep.mubr.f32.mxu0 0.0
  %4073 = vmatmul.mubr.f32.gmra.mrb[0].mxu0 %v3695
  %v4074 = vpop.f32.mrb[0].mxu0
  %v4075 = vadd.f32 0.0, %v4074
  %v4076 = vpop.f32.mrb[0].mxu0
  %4077 = vmatprep.mubr.f32.mxu0 0.0
  %4078 = vmatmul.mubr.f32.gmra.mrb[0].mxu0 %v3698
  %v4079 = vpop.f32.mrb[0].mxu0
  %v4080 = vadd.f32 0.0, %v4079
  %v4081 = vpop.f32.mrb[0].mxu0
  %4082 = vmatprep.mubr.f32.mxu0 0.0
  %4083 = vmatmul.mubr.f32.gmra.mrb[0].mxu0 %v3701
  %v4084 = vpop.f32.mrb[0].mxu0
  %v4085 = vadd.f32 0.0, %v4084
  %v4086 = vpop.f32.mrb[0].mxu0
  %4087 = vdwg.mxu0
  %v4088 = vadd.f32 %v3193, %v3770
  %v4089 = vadd.f32 %v3198, %v3775
  %v4090 = vadd.f32 %v3203, %v3780
  %v4091 = vadd.f32 %v3208, %v3785
  %v4092 = vadd.f32 %v3213, %v3790
  %v4093 = vadd.f32 %v3218, %v3795
  %v4094 = vadd.f32 %v3223, %v3800
  %v4095 = vadd.f32 %v3228, %v3805
  %v4096 = vadd.f32 %v3233, %v3810
  %v4097 = vadd.f32 %v3238, %v3815
  %v4098 = vadd.f32 %v3243, %v3820
  %v4099 = vadd.f32 %v3248, %v3825
  %v4100 = vadd.f32 %v3253, %v3830
  %v4101 = vadd.f32 %v3258, %v3835
  %v4102 = vadd.f32 %v3263, %v3840
  %v4103 = vadd.f32 %v3268, %v3845
  %v4104 = vadd.f32 %v3273, %v3850
  %v4105 = vadd.f32 %v3278, %v3855
  %v4106 = vadd.f32 %v3283, %v3860
  %v4107 = vadd.f32 %v3288, %v3865
  %v4108 = vadd.f32 %v3293, %v3870
  %v4109 = vadd.f32 %v3298, %v3875
  %v4110 = vadd.f32 %v3303, %v3880
  %v4111 = vadd.f32 %v3308, %v3885
  %v4112 = vadd.f32 %v3313, %v3890
  %v4113 = vadd.f32 %v3318, %v3895
  %v4114 = vadd.f32 %v3323, %v3900
  %v4115 = vadd.f32 %v3328, %v3905
  %v4116 = vadd.f32 %v3333, %v3910
  %v4117 = vadd.f32 %v3338, %v3915
  %v4118 = vadd.f32 %v3343, %v3920
  %v4119 = vadd.f32 %v3348, %v3925
  %v4120 = vadd.f32 %v3353, %v3930
  %v4121 = vadd.f32 %v3358, %v3935
  %v4122 = vadd.f32 %v3363, %v3940
  %v4123 = vadd.f32 %v3368, %v3945
  %v4124 = vadd.f32 %v3373, %v3950
  %v4125 = vadd.f32 %v3378, %v3955
  %v4126 = vadd.f32 %v3383, %v3960
  %v4127 = vadd.f32 %v3388, %v3965
  %v4128 = vadd.f32 %v3393, %v3970
  %v4129 = vadd.f32 %v3398, %v3975
  %v4130 = vadd.f32 %v3403, %v3980
  %v4131 = vadd.f32 %v3408, %v3985
  %v4132 = vadd.f32 %v3413, %v3990
  %v4133 = vadd.f32 %v3418, %v3995
  %v4134 = vadd.f32 %v3423, %v4000
  %v4135 = vadd.f32 %v3428, %v4005
  %v4136 = vadd.f32 %v3433, %v4010
  %v4137 = vadd.f32 %v3438, %v4015
  %v4138 = vadd.f32 %v3443, %v4020
  %v4139 = vadd.f32 %v3448, %v4025
  %v4140 = vadd.f32 %v3453, %v4030
  %v4141 = vadd.f32 %v3458, %v4035
  %v4142 = vadd.f32 %v3463, %v4040
  %v4143 = vadd.f32 %v3468, %v4045
  %v4144 = vadd.f32 %v3473, %v4050
  %v4145 = vadd.f32 %v3478, %v4055
  %v4146 = vadd.f32 %v3483, %v4060
  %v4147 = vadd.f32 %v3488, %v4065
  %v4148 = vadd.f32 %v3493, %v4070
  %v4149 = vadd.f32 %v3498, %v4075
  %v4150 = vadd.f32 %v3503, %v4080
  %v4151 = vadd.f32 %v3508, %v4085
  %v4152 = vmax.f32 %v4088, 0.0
  %v4153 = vmax.f32 %v4089, 0.0
  %v4154 = vmax.f32 %v4090, 0.0
  %v4155 = vmax.f32 %v4091, 0.0
  %v4156 = vmax.f32 %v4092, 0.0
  %v4157 = vmax.f32 %v4093, 0.0
  %v4158 = vmax.f32 %v4094, 0.0
  %v4159 = vmax.f32 %v4095, 0.0
  %v4160 = vmax.f32 %v4096, 0.0
  %v4161 = vmax.f32 %v4097, 0.0
  %v4162 = vmax.f32 %v4098, 0.0
  %v4163 = vmax.f32 %v4099, 0.0
  %v4164 = vmax.f32 %v4100, 0.0
  %v4165 = vmax.f32 %v4101, 0.0
  %v4166 = vmax.f32 %v4102, 0.0
  %v4167 = vmax.f32 %v4103, 0.0
  %v4168 = vmax.f32 %v4104, 0.0
  %v4169 = vmax.f32 %v4105, 0.0
  %v4170 = vmax.f32 %v4106, 0.0
  %v4171 = vmax.f32 %v4107, 0.0
  %v4172 = vmax.f32 %v4108, 0.0
  %v4173 = vmax.f32 %v4109, 0.0
  %v4174 = vmax.f32 %v4110, 0.0
  %v4175 = vmax.f32 %v4111, 0.0
  %v4176 = vmax.f32 %v4112, 0.0
  %v4177 = vmax.f32 %v4113, 0.0
  %v4178 = vmax.f32 %v4114, 0.0
  %v4179 = vmax.f32 %v4115, 0.0
  %v4180 = vmax.f32 %v4116, 0.0
  %v4181 = vmax.f32 %v4117, 0.0
  %v4182 = vmax.f32 %v4118, 0.0
  %v4183 = vmax.f32 %v4119, 0.0
  %v4184 = vmax.f32 %v4120, 0.0
  %v4185 = vmax.f32 %v4121, 0.0
  %v4186 = vmax.f32 %v4122, 0.0
  %v4187 = vmax.f32 %v4123, 0.0
  %v4188 = vmax.f32 %v4124, 0.0
  %v4189 = vmax.f32 %v4125, 0.0
  %v4190 = vmax.f32 %v4126, 0.0
  %v4191 = vmax.f32 %v4127, 0.0
  %v4192 = vmax.f32 %v4128, 0.0
  %v4193 = vmax.f32 %v4129, 0.0
  %v4194 = vmax.f32 %v4130, 0.0
  %v4195 = vmax.f32 %v4131, 0.0
  %v4196 = vmax.f32 %v4132, 0.0
  %v4197 = vmax.f32 %v4133, 0.0
  %v4198 = vmax.f32 %v4134, 0.0
  %v4199 = vmax.f32 %v4135, 0.0
  %v4200 = vmax.f32 %v4136, 0.0
  %v4201 = vmax.f32 %v4137, 0.0
  %v4202 = vmax.f32 %v4138, 0.0
  %v4203 = vmax.f32 %v4139, 0.0
  %v4204 = vmax.f32 %v4140, 0.0
  %v4205 = vmax.f32 %v4141, 0.0
  %v4206 = vmax.f32 %v4142, 0.0
  %v4207 = vmax.f32 %v4143, 0.0
  %v4208 = vmax.f32 %v4144, 0.0
  %v4209 = vmax.f32 %v4145, 0.0
  %v4210 = vmax.f32 %v4146, 0.0
  %v4211 = vmax.f32 %v4147, 0.0
  %v4212 = vmax.f32 %v4148, 0.0
  %v4213 = vmax.f32 %v4149, 0.0
  %v4214 = vmax.f32 %v4150, 0.0
  %v4215 = vmax.f32 %v4151, 0.0
  %4216 = vst.msk [vmem:[%s18] sm:$0xff] %vm324, %v4152
  %4217 = vst.msk [vmem:[%s18 + $0x8] sm:$0xff] %vm324, %v4153
  %4218 = vst.msk [vmem:[%s18 + $0x10] sm:$0xff] %vm324, %v4154
  %4219 = vst.msk [vmem:[%s18 + $0x18] sm:$0xff] %vm324, %v4155
  %4220 = vst.msk [vmem:[%s18 + $0x20] sm:$0xff] %vm324, %v4156
  %4221 = vst.msk [vmem:[%s18 + $0x28] sm:$0xff] %vm324, %v4157
  %4222 = vst.msk [vmem:[%s18 + $0x30] sm:$0xff] %vm324, %v4158
  %4223 = vst.msk [vmem:[%s18 + $0x38] sm:$0xff] %vm324, %v4159
  %4224 = vst.msk [vmem:[%s18 + $0x40] sm:$0xff] %vm324, %v4160
  %4225 = vst.msk [vmem:[%s18 + $0x48] sm:$0xff] %vm324, %v4161
  %4226 = vst.msk [vmem:[%s18 + $0x50] sm:$0xff] %vm324, %v4162
  %4227 = vst.msk [vmem:[%s18 + $0x58] sm:$0xff] %vm324, %v4163
  %4228 = vst.msk [vmem:[%s18 + $0x60] sm:$0xff] %vm324, %v4164
  %4229 = vst.msk [vmem:[%s18 + $0x68] sm:$0xff] %vm324, %v4165
  %4230 = vst.msk [vmem:[%s18 + $0x70] sm:$0xff] %vm324, %v4166
  %4231 = vst.msk [vmem:[%s18 + $0x78] sm:$0xff] %vm324, %v4167
  %4232 = vst.msk [vmem:[%s18 + $0x80] sm:$0xff] %vm324, %v4168
  %4233 = vst.msk [vmem:[%s18 + $0x88] sm:$0xff] %vm324, %v4169
  %4234 = vst.msk [vmem:[%s18 + $0x90] sm:$0xff] %vm324, %v4170
  %4235 = vst.msk [vmem:[%s18 + $0x98] sm:$0xff] %vm324, %v4171
  %4236 = vst.msk [vmem:[%s18 + $0xa0] sm:$0xff] %vm324, %v4172
  %4237 = vst.msk [vmem:[%s18 + $0xa8] sm:$0xff] %vm324, %v4173
  %4238 = vst.msk [vmem:[%s18 + $0xb0] sm:$0xff] %vm324, %v4174
  %4239 = vst.msk [vmem:[%s18 + $0xb8] sm:$0xff] %vm324, %v4175
  %4240 = vst.msk [vmem:[%s18 + $0xc0] sm:$0xff] %vm324, %v4176
  %4241 = vst.msk [vmem:[%s18 + $0xc8] sm:$0xff] %vm324, %v4177
  %4242 = vst.msk [vmem:[%s18 + $0xd0] sm:$0xff] %vm324, %v4178
  %4243 = vst.msk [vmem:[%s18 + $0xd8] sm:$0xff] %vm324, %v4179
  %4244 = vst.msk [vmem:[%s18 + $0xe0] sm:$0xff] %vm324, %v4180
  %4245 = vst.msk [vmem:[%s18 + $0xe8] sm:$0xff] %vm324, %v4181
  %4246 = vst.msk [vmem:[%s18 + $0xf0] sm:$0xff] %vm324, %v4182
  %4247 = vst.msk [vmem:[%s18 + $0xf8] sm:$0xff] %vm324, %v4183
  %4248 = vst.msk [vmem:[%s18 + $0x100] sm:$0xff] %vm324, %v4184
  %4249 = vst.msk [vmem:[%s18 + $0x108] sm:$0xff] %vm324, %v4185
  %4250 = vst.msk [vmem:[%s18 + $0x110] sm:$0xff] %vm324, %v4186
  %4251 = vst.msk [vmem:[%s18 + $0x118] sm:$0xff] %vm324, %v4187
  %4252 = vst.msk [vmem:[%s18 + $0x120] sm:$0xff] %vm324, %v4188
  %4253 = vst.msk [vmem:[%s18 + $0x128] sm:$0xff] %vm324, %v4189
  %4254 = vst.msk [vmem:[%s18 + $0x130] sm:$0xff] %vm324, %v4190
  %4255 = vst.msk [vmem:[%s18 + $0x138] sm:$0xff] %vm324, %v4191
  %4256 = vst.msk [vmem:[%s18 + $0x140] sm:$0xff] %vm324, %v4192
  %4257 = vst.msk [vmem:[%s18 + $0x148] sm:$0xff] %vm324, %v4193
  %4258 = vst.msk [vmem:[%s18 + $0x150] sm:$0xff] %vm324, %v4194
  %4259 = vst.msk [vmem:[%s18 + $0x158] sm:$0xff] %vm324, %v4195
  %4260 = vst.msk [vmem:[%s18 + $0x160] sm:$0xff] %vm324, %v4196
  %4261 = vst.msk [vmem:[%s18 + $0x168] sm:$0xff] %vm324, %v4197
  %4262 = vst.msk [vmem:[%s18 + $0x170] sm:$0xff] %vm324, %v4198
  %4263 = vst.msk [vmem:[%s18 + $0x178] sm:$0xff] %vm324, %v4199
  %4264 = vst.msk [vmem:[%s18 + $0x180] sm:$0xff] %vm324, %v4200
  %4265 = vst.msk [vmem:[%s18 + $0x188] sm:$0xff] %vm324, %v4201
  %4266 = vst.msk [vmem:[%s18 + $0x190] sm:$0xff] %vm324, %v4202
  %4267 = vst.msk [vmem:[%s18 + $0x198] sm:$0xff] %vm324, %v4203
  %4268 = vst.msk [vmem:[%s18 + $0x1a0] sm:$0xff] %vm324, %v4204
  %4269 = vst.msk [vmem:[%s18 + $0x1a8] sm:$0xff] %vm324, %v4205
  %4270 = vst.msk [vmem:[%s18 + $0x1b0] sm:$0xff] %vm324, %v4206
  %4271 = vst.msk [vmem:[%s18 + $0x1b8] sm:$0xff] %vm324, %v4207
  %4272 = vst.msk [vmem:[%s18 + $0x1c0] sm:$0xff] %vm324, %v4208
  %4273 = vst.msk [vmem:[%s18 + $0x1c8] sm:$0xff] %vm324, %v4209
  %4274 = vst.msk [vmem:[%s18 + $0x1d0] sm:$0xff] %vm324, %v4210
  %4275 = vst.msk [vmem:[%s18 + $0x1d8] sm:$0xff] %vm324, %v4211
  %4276 = vst.msk [vmem:[%s18 + $0x1e0] sm:$0xff] %vm324, %v4212
  %4277 = vst.msk [vmem:[%s18 + $0x1e8] sm:$0xff] %vm324, %v4213
  %4278 = vst.msk [vmem:[%s18 + $0x1f0] sm:$0xff] %vm324, %v4214
  %4279 = vst.msk [vmem:[%s18 + $0x1f8] sm:$0xff] %vm324, %v4215
  // Predicated region
  $region74: #{model_forward.4} parent=0 // pred_check
    _
  $region75: #{model_forward.4} parent=0 // pred_check_branch
    %4281 = sbr.rel (0) target = $region77
  $region76: #{model_forward.4} parent=0 // pred_region
    _
  $region77: #{model_forward.4} parent=0 // pred_fallthru
    _
  // Predicated region
  $region78: #{model_forward.4} parent=0 // pred_check
    _
  $region79: #{model_forward.4} parent=0 // pred_check_branch
    %4283 = sbr.rel (0) target = $region81
  $region80: #{model_forward.4} parent=0 // pred_region
    _
  $region81: #{model_forward.4} parent=0 // pred_fallthru
    _

// kernel: model_forward.5
$region0: #{model_forward.5}
  #allocation0 [shape = 'u32[]', space=smem, size = 0x4, offset = 0x4, fixed_abs, tag = 'smem constant byte address 0x4 - core index']
  #allocation1 [shape = 'u32[144,128]{1,0:T(1,128)}', space=vmem, size = 0x12000, scoped, tag = 'internal scratch']
  %s0 = inlined_call_operand.vmem [shape: f32[2,32,256], index: 0, kind: input, shape index: {}]
  %s1 = inlined_call_operand.vmem [shape: f32[4,16,32], index: 1, kind: input, shape index: {}]
  %s2 = inlined_call_operand.vmem [shape: f32[16,1], index: 2, kind: input, shape index: {}]
  %s3 = inlined_call_operand.vmem [shape: f32[4,16,16], index: 3, kind: input, shape index: {}]
  %s4 = inlined_call_operand.vmem [shape: f32[16,1], index: 4, kind: input, shape index: {}]
  %s5 = inlined_call_operand.vmem [shape: bf16[16,250,32], index: 5, kind: input, shape index: {}]
  %s6 = inlined_call_operand.vmem [shape: f32[1,32], index: 6, kind: input, shape index: {}]
  %s7 = inlined_call_operand.vmem [shape: f32[2,1,5], index: 7, kind: input, shape index: {}]
  %s8 = inlined_call_operand.vmem [shape: f32[32,37], index: 8, kind: input, shape index: {}]
  %s9 = inlined_call_operand.vmem [shape: f32[5,37], index: 9, kind: input, shape index: {}]
  %s10 = inlined_call_operand.vmem [shape: f32[1,37], index: 10, kind: input, shape index: {}]
  %s11 = inlined_call_operand.vmem [shape: f32[37,3], index: 11, kind: input, shape index: {}]
  %s12 = inlined_call_operand.vmem [shape: f32[1,3], index: 12, kind: input, shape index: {}]
  %s13 = inlined_call_operand.hbm [shape: f32[2,1,3], index: 13, kind: output, shape index: {}]
  %s14 = sld [smem:[#allocation0]]
  $region85: #{model_forward.5} parent=0
    _
  %s16 = ssub.s32 1, %s14
  %s17 = scalar_select 0, %s16, %s14
  $region1: #{model_forward.5} parent=0
    #allocation2 [shape = 'u8[1024]{0}', space=vmem, size = 0x400, scoped, tag = 'output window, operand 0']
    #allocation3 [shape = 's32[2]{0}', space=sflag, size = 0x8, scoped, tag = 'scoped memory for model_forward.5']
    %18 = vsyncpa [#allocation3], 0
    %s19 = scalar_lea.sflag [#allocation3], 1
    %20 = vsyncpa %s19, 0
    loop: start=0, step=1, limit=4
    $region2: #{model_forward.5} parent=1 // loop_pre_header
      _
    $region3: #{model_forward.5} parent=1 // loop_header
      %s22 = sphi 0, %s26
      %p23 = scmp.ge.s32.totalorder %s22, 4
      %s32 = sphi 0, %s34
      %s35 = sphi 0, %s32
      %s36 = sphi 0, %s35
      %s52 = sphi 0, %s36
      %s56 = sphi 0, %s56
      %s58 = sphi 0, %s56
      %s59 = sphi 0, %s58
      %s73 = sphi 0, %s59
      %s77 = sphi 0, %s77
      %s79 = sphi 0, %s77
      %s80 = sphi 0, %s79
      %s94 = sphi 0, %s80
      %s98 = sphi 0, %s98
      %s100 = sphi 0, %s98
      %s101 = sphi 0, %s100
      %s115 = sphi 0, %s101
      %s119 = sphi 0, %s119
      %s121 = sphi 0, %s119
      %s122 = sphi 0, %s121
      %s136 = sphi 0, %s122
      %s140 = sphi 0, %s140
      %s142 = sphi 0, %s140
      %s143 = sphi 0, %s142
      %s157 = sphi 0, %s143
      %s161 = sphi 0, %s161
      %s163 = sphi 0, %s161
      %s164 = sphi 0, %s163
      %s178 = sphi 0, %s164
      %s184 = sphi 0, %s186
      %s187 = sphi 0, %s184
      %s188 = sphi 0, %s187
      %s204 = sphi 0, %s188
      %s208 = sphi 0, %s208
      %s210 = sphi 0, %s208
      %s211 = sphi 0, %s210
      %s225 = sphi 0, %s211
      %s229 = sphi 0, %s229
      %s231 = sphi 0, %s229
      %s232 = sphi 0, %s231
      %s246 = sphi 0, %s232
      %s250 = sphi 0, %s250
      %s252 = sphi 0, %s250
      %s253 = sphi 0, %s252
      %s267 = sphi 0, %s253
      %s271 = sphi 0, %s271
      %s273 = sphi 0, %s271
      %s274 = sphi 0, %s273
      %s288 = sphi 0, %s274
      %s292 = sphi 0, %s292
      %s294 = sphi 0, %s292
      %s295 = sphi 0, %s294
      %s309 = sphi 0, %s295
      %s315 = sphi 0, %s317
      %s318 = sphi 0, %s315
      %s319 = sphi 0, %s318
      %s335 = sphi 0, %s319
    $region4: #{model_forward.5} parent=1 // loop_header_branch
      %25 = sbr.rel (%p23) target = $region8
    $region5: #{model_forward.5} parent=1 // loop_body
      %s27 = ssub.s32 %s22, 1
      %s28 = ssub.s32 %s22, 2
      %s29 = sadd.s32 %s22, 1
      %s30 = ssub.s32 %s22, %s29
      %p31 = scmp.eq.s32.totalorder %s30, 0
      %s33 = sadd.s32 %s32, 1
      %s34 = scalar_select %p31, %s32, %s33
      %p37 = pneg %p31
      %p38 = scmp.eq.s32.totalorder %s22, 1
      %p39 = por %p37, %p38
      %p40 = scmp.ne.s32.totalorder %s32, %s35
      %p41 = scmp.eq.s32.totalorder %s22, 0
      %p42 = por %p40, %p41
      %p43 = scmp.ne.s32.totalorder %s32, %s35
      %p44 = scmp.eq.s32.totalorder %s27, 1
      %p45 = por %p43, %p44
      %p46 = scmp.ne.s32.totalorder %s35, %s36
      %p47 = scmp.eq.s32.totalorder %s27, 0
      %p48 = por %p46, %p47
      %p49 = scmp.ne.s32.totalorder %s35, %s36
      %p50 = scmp.eq.s32.totalorder %s28, 1
      %p51 = por %p49, %p50
      %p53 = scmp.ne.s32.totalorder %s36, %s52
      %p54 = scmp.eq.s32.totalorder %s28, 0
      %p55 = por %p53, %p54
      %s57 = sadd.s32 %s56, 1
      %p60 = scmp.eq.s32.totalorder %s22, 1
      %p61 = scmp.ne.s32.totalorder %s56, %s58
      %p62 = scmp.eq.s32.totalorder %s22, 0
      %p63 = por %p61, %p62
      %p64 = scmp.ne.s32.totalorder %s56, %s58
      %p65 = scmp.eq.s32.totalorder %s27, 1
      %p66 = por %p64, %p65
      %p67 = scmp.ne.s32.totalorder %s58, %s59
      %p68 = scmp.eq.s32.totalorder %s27, 0
      %p69 = por %p67, %p68
      %p70 = scmp.ne.s32.totalorder %s58, %s59
      %p71 = scmp.eq.s32.totalorder %s28, 1
      %p72 = por %p70, %p71
      %p74 = scmp.ne.s32.totalorder %s59, %s73
      %p75 = scmp.eq.s32.totalorder %s28, 0
      %p76 = por %p74, %p75
      %s78 = sadd.s32 %s77, 1
      %p81 = scmp.eq.s32.totalorder %s22, 1
      %p82 = scmp.ne.s32.totalorder %s77, %s79
      %p83 = scmp.eq.s32.totalorder %s22, 0
      %p84 = por %p82, %p83
      %p85 = scmp.ne.s32.totalorder %s77, %s79
      %p86 = scmp.eq.s32.totalorder %s27, 1
      %p87 = por %p85, %p86
      %p88 = scmp.ne.s32.totalorder %s79, %s80
      %p89 = scmp.eq.s32.totalorder %s27, 0
      %p90 = por %p88, %p89
      %p91 = scmp.ne.s32.totalorder %s79, %s80
      %p92 = scmp.eq.s32.totalorder %s28, 1
      %p93 = por %p91, %p92
      %p95 = scmp.ne.s32.totalorder %s80, %s94
      %p96 = scmp.eq.s32.totalorder %s28, 0
      %p97 = por %p95, %p96
      %s99 = sadd.s32 %s98, 1
      %p102 = scmp.eq.s32.totalorder %s22, 1
      %p103 = scmp.ne.s32.totalorder %s98, %s100
      %p104 = scmp.eq.s32.totalorder %s22, 0
      %p105 = por %p103, %p104
      %p106 = scmp.ne.s32.totalorder %s98, %s100
      %p107 = scmp.eq.s32.totalorder %s27, 1
      %p108 = por %p106, %p107
      %p109 = scmp.ne.s32.totalorder %s100, %s101
      %p110 = scmp.eq.s32.totalorder %s27, 0
      %p111 = por %p109, %p110
      %p112 = scmp.ne.s32.totalorder %s100, %s101
      %p113 = scmp.eq.s32.totalorder %s28, 1
      %p114 = por %p112, %p113
      %p116 = scmp.ne.s32.totalorder %s101, %s115
      %p117 = scmp.eq.s32.totalorder %s28, 0
      %p118 = por %p116, %p117
      %s120 = sadd.s32 %s119, 1
      %p123 = scmp.eq.s32.totalorder %s22, 1
      %p124 = scmp.ne.s32.totalorder %s119, %s121
      %p125 = scmp.eq.s32.totalorder %s22, 0
      %p126 = por %p124, %p125
      %p127 = scmp.ne.s32.totalorder %s119, %s121
      %p128 = scmp.eq.s32.totalorder %s27, 1
      %p129 = por %p127, %p128
      %p130 = scmp.ne.s32.totalorder %s121, %s122
      %p131 = scmp.eq.s32.totalorder %s27, 0
      %p132 = por %p130, %p131
      %p133 = scmp.ne.s32.totalorder %s121, %s122
      %p134 = scmp.eq.s32.totalorder %s28, 1
      %p135 = por %p133, %p134
      %p137 = scmp.ne.s32.totalorder %s122, %s136
      %p138 = scmp.eq.s32.totalorder %s28, 0
      %p139 = por %p137, %p138
      %s141 = sadd.s32 %s140, 1
      %p144 = scmp.eq.s32.totalorder %s22, 1
      %p145 = scmp.ne.s32.totalorder %s140, %s142
      %p146 = scmp.eq.s32.totalorder %s22, 0
      %p147 = por %p145, %p146
      %p148 = scmp.ne.s32.totalorder %s140, %s142
      %p149 = scmp.eq.s32.totalorder %s27, 1
      %p150 = por %p148, %p149
      %p151 = scmp.ne.s32.totalorder %s142, %s143
      %p152 = scmp.eq.s32.totalorder %s27, 0
      %p153 = por %p151, %p152
      %p154 = scmp.ne.s32.totalorder %s142, %s143
      %p155 = scmp.eq.s32.totalorder %s28, 1
      %p156 = por %p154, %p155
      %p158 = scmp.ne.s32.totalorder %s143, %s157
      %p159 = scmp.eq.s32.totalorder %s28, 0
      %p160 = por %p158, %p159
      %s162 = sadd.s32 %s161, 1
      %p165 = scmp.eq.s32.totalorder %s22, 1
      %p166 = scmp.ne.s32.totalorder %s161, %s163
      %p167 = scmp.eq.s32.totalorder %s22, 0
      %p168 = por %p166, %p167
      %p169 = scmp.ne.s32.totalorder %s161, %s163
      %p170 = scmp.eq.s32.totalorder %s27, 1
      %p171 = por %p169, %p170
      %p172 = scmp.ne.s32.totalorder %s163, %s164
      %p173 = scmp.eq.s32.totalorder %s27, 0
      %p174 = por %p172, %p173
      %p175 = scmp.ne.s32.totalorder %s163, %s164
      %p176 = scmp.eq.s32.totalorder %s28, 1
      %p177 = por %p175, %p176
      %p179 = scmp.ne.s32.totalorder %s164, %s178
      %p180 = scmp.eq.s32.totalorder %s28, 0
      %p181 = por %p179, %p180
      %s182 = ssub.s32 %s22, %s29
      %p183 = scmp.eq.s32.totalorder %s182, 0
      %s185 = sadd.s32 %s184, 1
      %s186 = scalar_select %p183, %s184, %s185
      %p189 = pneg %p183
      %p190 = scmp.eq.s32.totalorder %s22, 1
      %p191 = por %p189, %p190
      %p192 = scmp.ne.s32.totalorder %s184, %s187
      %p193 = scmp.eq.s32.totalorder %s22, 0
      %p194 = por %p192, %p193
      %p195 = scmp.ne.s32.totalorder %s184, %s187
      %p196 = scmp.eq.s32.totalorder %s27, 1
      %p197 = por %p195, %p196
      %p198 = scmp.ne.s32.totalorder %s187, %s188
      %p199 = scmp.eq.s32.totalorder %s27, 0
      %p200 = por %p198, %p199
      %p201 = scmp.ne.s32.totalorder %s187, %s188
      %p202 = scmp.eq.s32.totalorder %s28, 1
      %p203 = por %p201, %p202
      %p205 = scmp.ne.s32.totalorder %s188, %s204
      %p206 = scmp.eq.s32.totalorder %s28, 0
      %p207 = por %p205, %p206
      %s209 = sadd.s32 %s208, 1
      %p212 = scmp.eq.s32.totalorder %s22, 1
      %p213 = scmp.ne.s32.totalorder %s208, %s210
      %p214 = scmp.eq.s32.totalorder %s22, 0
      %p215 = por %p213, %p214
      %p216 = scmp.ne.s32.totalorder %s208, %s210
      %p217 = scmp.eq.s32.totalorder %s27, 1
      %p218 = por %p216, %p217
      %p219 = scmp.ne.s32.totalorder %s210, %s211
      %p220 = scmp.eq.s32.totalorder %s27, 0
      %p221 = por %p219, %p220
      %p222 = scmp.ne.s32.totalorder %s210, %s211
      %p223 = scmp.eq.s32.totalorder %s28, 1
      %p224 = por %p222, %p223
      %p226 = scmp.ne.s32.totalorder %s211, %s225
      %p227 = scmp.eq.s32.totalorder %s28, 0
      %p228 = por %p226, %p227
      %s230 = sadd.s32 %s229, 1
      %p233 = scmp.eq.s32.totalorder %s22, 1
      %p234 = scmp.ne.s32.totalorder %s229, %s231
      %p235 = scmp.eq.s32.totalorder %s22, 0
      %p236 = por %p234, %p235
      %p237 = scmp.ne.s32.totalorder %s229, %s231
      %p238 = scmp.eq.s32.totalorder %s27, 1
      %p239 = por %p237, %p238
      %p240 = scmp.ne.s32.totalorder %s231, %s232
      %p241 = scmp.eq.s32.totalorder %s27, 0
      %p242 = por %p240, %p241
      %p243 = scmp.ne.s32.totalorder %s231, %s232
      %p244 = scmp.eq.s32.totalorder %s28, 1
      %p245 = por %p243, %p244
      %p247 = scmp.ne.s32.totalorder %s232, %s246
      %p248 = scmp.eq.s32.totalorder %s28, 0
      %p249 = por %p247, %p248
      %s251 = sadd.s32 %s250, 1
      %p254 = scmp.eq.s32.totalorder %s22, 1
      %p255 = scmp.ne.s32.totalorder %s250, %s252
      %p256 = scmp.eq.s32.totalorder %s22, 0
      %p257 = por %p255, %p256
      %p258 = scmp.ne.s32.totalorder %s250, %s252
      %p259 = scmp.eq.s32.totalorder %s27, 1
      %p260 = por %p258, %p259
      %p261 = scmp.ne.s32.totalorder %s252, %s253
      %p262 = scmp.eq.s32.totalorder %s27, 0
      %p263 = por %p261, %p262
      %p264 = scmp.ne.s32.totalorder %s252, %s253
      %p265 = scmp.eq.s32.totalorder %s28, 1
      %p266 = por %p264, %p265
      %p268 = scmp.ne.s32.totalorder %s253, %s267
      %p269 = scmp.eq.s32.totalorder %s28, 0
      %p270 = por %p268, %p269
      %s272 = sadd.s32 %s271, 1
      %p275 = scmp.eq.s32.totalorder %s22, 1
      %p276 = scmp.ne.s32.totalorder %s271, %s273
      %p277 = scmp.eq.s32.totalorder %s22, 0
      %p278 = por %p276, %p277
      %p279 = scmp.ne.s32.totalorder %s271, %s273
      %p280 = scmp.eq.s32.totalorder %s27, 1
      %p281 = por %p279, %p280
      %p282 = scmp.ne.s32.totalorder %s273, %s274
      %p283 = scmp.eq.s32.totalorder %s27, 0
      %p284 = por %p282, %p283
      %p285 = scmp.ne.s32.totalorder %s273, %s274
      %p286 = scmp.eq.s32.totalorder %s28, 1
      %p287 = por %p285, %p286
      %p289 = scmp.ne.s32.totalorder %s274, %s288
      %p290 = scmp.eq.s32.totalorder %s28, 0
      %p291 = por %p289, %p290
      %s293 = sadd.s32 %s292, 1
      %p296 = scmp.eq.s32.totalorder %s22, 1
      %p297 = scmp.ne.s32.totalorder %s292, %s294
      %p298 = scmp.eq.s32.totalorder %s22, 0
      %p299 = por %p297, %p298
      %p300 = scmp.ne.s32.totalorder %s292, %s294
      %p301 = scmp.eq.s32.totalorder %s27, 1
      %p302 = por %p300, %p301
      %p303 = scmp.ne.s32.totalorder %s294, %s295
      %p304 = scmp.eq.s32.totalorder %s27, 0
      %p305 = por %p303, %p304
      %p306 = scmp.ne.s32.totalorder %s294, %s295
      %p307 = scmp.eq.s32.totalorder %s28, 1
      %p308 = por %p306, %p307
      %p310 = scmp.ne.s32.totalorder %s295, %s309
      %p311 = scmp.eq.s32.totalorder %s28, 0
      %p312 = por %p310, %p311
      %s313 = ssub.s32 %s22, %s29
      %p314 = scmp.eq.s32.totalorder %s313, 0
      %s316 = sadd.s32 %s315, 1
      %s317 = scalar_select %p314, %s315, %s316
      %p320 = pneg %p314
      %p321 = scmp.eq.s32.totalorder %s22, 1
      %p322 = por %p320, %p321
      %p323 = scmp.ne.s32.totalorder %s315, %s318
      %p324 = scmp.eq.s32.totalorder %s22, 0
      %p325 = por %p323, %p324
      %p326 = scmp.ne.s32.totalorder %s315, %s318
      %p327 = scmp.eq.s32.totalorder %s27, 1
      %p328 = por %p326, %p327
      %p329 = scmp.ne.s32.totalorder %s318, %s319
      %p330 = scmp.eq.s32.totalorder %s27, 0
      %p331 = por %p329, %p330
      %p332 = scmp.ne.s32.totalorder %s318, %s319
      %p333 = scmp.eq.s32.totalorder %s28, 1
      %p334 = por %p332, %p333
      %p336 = scmp.ne.s32.totalorder %s319, %s335
      %p337 = scmp.eq.s32.totalorder %s28, 0
      %p338 = por %p336, %p337
      %p339 = scmp.le.s32.totalorder 1, %s22
      %p340 = scmp.lt.s32.totalorder %s22, 3
      %p341 = pnand %p339, %p340
      %p342 = pneg %p341
      // Predicated region
      $region9: #{model_forward.5} parent=5 // pred_check
        _
      $region10: #{model_forward.5} parent=5 // pred_check_branch
        %344 = sbr.rel (%p341) target = $region12
      $region11: #{model_forward.5} parent=5 // pred_region
        %s345 = ssub.s32 %s22, 1
        // Predicated region
        $region13: #{model_forward.5} parent=11 // pred_check
          %p346 = pneg %p69
        $region14: #{model_forward.5} parent=11 // pred_check_branch
          %348 = sbr.rel (%p346) target = $region16
        $region15: #{model_forward.5} parent=11 // pred_region
          _
        $region16: #{model_forward.5} parent=11 // pred_fallthru
          _
        // Predicated region
        $region17: #{model_forward.5} parent=11 // pred_check
          %p349 = pneg %p90
        $region18: #{model_forward.5} parent=11 // pred_check_branch
          %351 = sbr.rel (%p349) target = $region20
        $region19: #{model_forward.5} parent=11 // pred_region
          _
        $region20: #{model_forward.5} parent=11 // pred_fallthru
          _
        // Predicated region
        $region21: #{model_forward.5} parent=11 // pred_check
          %p352 = pneg %p111
        $region22: #{model_forward.5} parent=11 // pred_check_branch
          %354 = sbr.rel (%p352) target = $region24
        $region23: #{model_forward.5} parent=11 // pred_region
          _
        $region24: #{model_forward.5} parent=11 // pred_fallthru
          _
        // Predicated region
        $region25: #{model_forward.5} parent=11 // pred_check
          %p355 = pneg %p132
        $region26: #{model_forward.5} parent=11 // pred_check_branch
          %357 = sbr.rel (%p355) target = $region28
        $region27: #{model_forward.5} parent=11 // pred_region
          _
        $region28: #{model_forward.5} parent=11 // pred_fallthru
          _
        // Predicated region
        $region29: #{model_forward.5} parent=11 // pred_check
          %p358 = pneg %p153
        $region30: #{model_forward.5} parent=11 // pred_check_branch
          %360 = sbr.rel (%p358) target = $region32
        $region31: #{model_forward.5} parent=11 // pred_region
          _
        $region32: #{model_forward.5} parent=11 // pred_fallthru
          _
        // Predicated region
        $region33: #{model_forward.5} parent=11 // pred_check
          %p361 = pneg %p174
        $region34: #{model_forward.5} parent=11 // pred_check_branch
          %363 = sbr.rel (%p361) target = $region36
        $region35: #{model_forward.5} parent=11 // pred_region
          _
        $region36: #{model_forward.5} parent=11 // pred_fallthru
          _
        // Predicated region
        $region37: #{model_forward.5} parent=11 // pred_check
          %p364 = pneg %p221
        $region38: #{model_forward.5} parent=11 // pred_check_branch
          %366 = sbr.rel (%p364) target = $region40
        $region39: #{model_forward.5} parent=11 // pred_region
          _
        $region40: #{model_forward.5} parent=11 // pred_fallthru
          _
        // Predicated region
        $region41: #{model_forward.5} parent=11 // pred_check
          %p367 = pneg %p242
        $region42: #{model_forward.5} parent=11 // pred_check_branch
          %369 = sbr.rel (%p367) target = $region44
        $region43: #{model_forward.5} parent=11 // pred_region
          _
        $region44: #{model_forward.5} parent=11 // pred_fallthru
          _
        // Predicated region
        $region45: #{model_forward.5} parent=11 // pred_check
          %p370 = pneg %p263
        $region46: #{model_forward.5} parent=11 // pred_check_branch
          %372 = sbr.rel (%p370) target = $region48
        $region47: #{model_forward.5} parent=11 // pred_region
          _
        $region48: #{model_forward.5} parent=11 // pred_fallthru
          _
        // Predicated region
        $region49: #{model_forward.5} parent=11 // pred_check
          %p373 = pneg %p284
        $region50: #{model_forward.5} parent=11 // pred_check_branch
          %375 = sbr.rel (%p373) target = $region52
        $region51: #{model_forward.5} parent=11 // pred_region
          _
        $region52: #{model_forward.5} parent=11 // pred_fallthru
          _
        // Predicated region
        $region53: #{model_forward.5} parent=11 // pred_check
          %p376 = pneg %p305
        $region54: #{model_forward.5} parent=11 // pred_check_branch
          %378 = sbr.rel (%p376) target = $region56
        $region55: #{model_forward.5} parent=11 // pred_region
          _
        $region56: #{model_forward.5} parent=11 // pred_fallthru
          _
      $region12: #{model_forward.5} parent=5 // pred_fallthru
        _
      %p379 = scmp.lt.s32.totalorder %s22, 2
      // Predicated region
      $region57: #{model_forward.5} parent=5 // pred_check
        %p380 = pneg %p379
      $region58: #{model_forward.5} parent=5 // pred_check_branch
        %382 = sbr.rel (%p380) target = $region60
      $region59: #{model_forward.5} parent=5 // pred_region
        // Predicated region
        $region61: #{model_forward.5} parent=59 // pred_check
          %p383 = pneg %p42
        $region62: #{model_forward.5} parent=59 // pred_check_branch
          %385 = sbr.rel (%p383) target = $region64
        $region63: #{model_forward.5} parent=59 // pred_region
          %p386 = scmp.lt.s32.totalorder %s22, 1
          %s387 = scalar_select %p386, %s22, 1
          %s388 = smul.addr %s387, 8
          %s389 = smul.addr %s388, 8
          %s390 = scalar_lea.vmem %s0, %s389
        $region64: #{model_forward.5} parent=59 // pred_fallthru
          _
        // Predicated region
        $region65: #{model_forward.5} parent=59 // pred_check
          %p391 = pneg %p194
        $region66: #{model_forward.5} parent=59 // pred_check_branch
          %393 = sbr.rel (%p391) target = $region68
        $region67: #{model_forward.5} parent=59 // pred_region
          %p394 = scmp.lt.s32.totalorder %s22, 1
          %s395 = scalar_select %p394, %s22, 1
          %s396 = scalar_lea.vmem %s7, %s395
        $region68: #{model_forward.5} parent=59 // pred_fallthru
          _
      $region60: #{model_forward.5} parent=5 // pred_fallthru
        _
      %p397 = scmp.le.s32.totalorder 1, %s22
      %p398 = scmp.lt.s32.totalorder %s22, 3
      %p399 = pnand %p397, %p398
      %p400 = pneg %p399
      // Predicated region
      $region69: #{model_forward.5} parent=5 // pred_check
        _
      $region70: #{model_forward.5} parent=5 // pred_check_branch
        %402 = sbr.rel (%p399) target = $region72
      $region71: #{model_forward.5} parent=5 // pred_region
        %s403 = ssub.s32 %s22, 1
        %p404 = scmp.lt.s32.totalorder %s27, 1
        %s405 = scalar_select %p404, %s27, 1
        %s406 = smul.addr %s405, 8
        %s407 = smul.addr %s406, 8
        %s408 = scalar_lea.vmem %s0, %s407
        %p409 = pneg %p48
        %p410 = pneg %p45
        %p411 = pneg %p69
        %p412 = pneg %p66
        %p413 = pneg %p90
        %p414 = pneg %p87
        %p415 = pneg %p111
        %p416 = pneg %p108
        %p417 = pneg %p132
        %p418 = pneg %p129
        %p419 = pneg %p153
        %p420 = pneg %p150
        %p421 = pneg %p174
        %p422 = pneg %p171
        %p423 = scmp.lt.s32.totalorder %s27, 1
        %s424 = scalar_select %p423, %s27, 1
        %s425 = scalar_lea.vmem %s7, %s424
        %p426 = pneg %p200
        %p427 = pneg %p197
        %p428 = pneg %p221
        %p429 = pneg %p218
        %p430 = pneg %p242
        %p431 = pneg %p239
        %p432 = pneg %p263
        %p433 = pneg %p260
        %p434 = pneg %p284
        %p435 = pneg %p281
        %p436 = pneg %p305
        %p437 = pneg %p302
        %p438 = pneg %p331
        %p439 = pneg %p328
        %s440 = sand.u32 %s318, 1
        %s441 = scalar_lea.sflag [#allocation3], %s440
        %s442 = sand.u32 %s318, 1
        %s443 = scalar_lea.vmem [#allocation2], %s442
        %p444 = scmp.lt.s32.totalorder %s27, 1
        %s445 = scalar_select %p444, %s27, 1
        %s446 = smul.addr %s445, 8
        %s447 = smul.addr %s446, 8
        %s448 = scalar_lea.vmem %s0, %s447
        %p449 = scmp.lt.s32.totalorder %s27, 1
        %s450 = scalar_select %p449, %s27, 1
        %s451 = scalar_lea.vmem %s7, %s450
        %v453 = vld [vmem:[%s448] sm:$0xff]
        %v454 = vld [vmem:[%s448 + $0x8] sm:$0xff]
        %v455 = vld [vmem:[%s448 + $0x10] sm:$0xff]
        %v456 = vld [vmem:[%s448 + $0x18] sm:$0xff]
        %v457 = vld [vmem:[%s448 + $0x20] sm:$0xff]
        %v458 = vld [vmem:[%s448 + $0x28] sm:$0xff]
        %v459 = vld [vmem:[%s448 + $0x30] sm:$0xff]
        %v460 = vld [vmem:[%s448 + $0x38] sm:$0xff]
        %v461 = vld [vmem:[%s2] sm:$0xff]
        %v462 = vld [vmem:[%s2 + $0x8] sm:$0xff]
        %v463 = vld [vmem:[%s1] sm:$0xff]
        %v464 = vld [vmem:[%s1 + $0x8] sm:$0xff]
        %s465 = scalar_lea.vmem %s1, 16
        %v466 = vld [vmem:[%s465] sm:$0xff]
        %v467 = vld [vmem:[%s465 + $0x8] sm:$0xff]
        %476 = vrot.lane.b32.xlu0 %v453, 127
        %v477 = vpop.permute.xlu0 %476
        %478 = vrot.lane.b32.xlu0 %v454, 127
        %v479 = vpop.permute.xlu0 %478
        %480 = vrot.lane.b32.xlu0 %v455, 127
        %v481 = vpop.permute.xlu0 %480
        %482 = vrot.lane.b32.xlu0 %v456, 127
        %v483 = vpop.permute.xlu0 %482
        %484 = vrot.lane.b32.xlu0 %v457, 127
        %v485 = vpop.permute.xlu0 %484
        %486 = vrot.lane.b32.xlu0 %v458, 127
        %v487 = vpop.permute.xlu0 %486
        %488 = vrot.lane.b32.xlu0 %v459, 127
        %v489 = vpop.permute.xlu0 %488
        %490 = vrot.lane.b32.xlu0 %v460, 127
        %v491 = vpop.permute.xlu0 %490
        %vm492 = vcmask 1039360
        %v493 = vsel %vm492, %v477, %v479
        %v494 = vsel %vm492, %v481, %v483
        %v495 = vsel %vm492, %v485, %v487
        %v496 = vsel %vm492, %v489, %v491
        %vm505 = vcmask 261120
        %v507 = vsel %vm505, %v466, 0
        %v510 = vsel %vm505, %v467, 0
        %512 = vmatprep.subr.mxu0 %v479
        %513 = vmatpush1.msra.mxu0 %v493
        %514 = vmatprep.subr.mxu0 %v483
        %515 = vmatpush1.msra.mxu0 %v494
        %516 = vmatprep.subr.mxu0 %v487
        %517 = vmatpush1.msra.mxu0 %v495
        %518 = vmatprep.subr.mxu0 %v491
        %519 = vmatpush1.msra.mxu0 %v496
        %520 = vmatprep.subr.mxu0 0.0
        %521 = vmatpush1.msra.mxu0 0.0
        %522 = vmatprep.subr.mxu0 0.0
        %523 = vmatpush1.msra.mxu0 0.0
        %524 = vmatprep.subr.mxu0 0.0
        %525 = vmatpush1.msra.mxu0 0.0
        %526 = vmatprep.subr.mxu0 0.0
        %527 = vmatpush1.msra.mxu0 0.0
        %528 = vmatprep.subr.mxu0 0.0
        %529 = vmatpush1.msra.mxu0 0.0
        %530 = vmatprep.subr.mxu0 0.0
        %531 = vmatpush1.msra.mxu0 0.0
        %532 = vmatprep.subr.mxu0 0.0
        %533 = vmatpush1.msra.mxu0 0.0
        %534 = vmatprep.subr.mxu0 0.0
        %535 = vmatpush1.msra.mxu0 0.0
        %536 = vmatprep.subr.mxu0 0.0
        %537 = vmatpush1.msra.mxu0 0.0
        %538 = vmatprep.subr.mxu0 0.0
        %539 = vmatpush1.msra.mxu0 0.0
        %540 = vmatprep.subr.mxu0 0.0
        %541 = vmatpush1.msra.mxu0 0.0
        %542 = vmatprep.subr.mxu0 0.0
        %543 = vmatpush1.msra.mxu0 0.0
        %544 = vmatprep.subr.mxu0 0.0
        %545 = vmatpush1.msra.mxu0 0.0
        %546 = vmatprep.subr.mxu0 0.0
        %547 = vmatpush1.msra.mxu0 0.0
        %548 = vmatprep.subr.mxu0 0.0
        %549 = vmatpush1.msra.mxu0 0.0
        %550 = vmatprep.subr.mxu0 0.0
        %551 = vmatpush1.msra.mxu0 0.0
        %552 = vmatprep.subr.mxu0 0.0
        %553 = vmatpush1.msra.mxu0 0.0
        %554 = vmatprep.subr.mxu0 0.0
        %555 = vmatpush1.msra.mxu0 0.0
        %556 = vmatprep.subr.mxu0 0.0
        %557 = vmatpush1.msra.mxu0 0.0
        %558 = vmatprep.subr.mxu0 0.0
        %559 = vmatpush1.msra.mxu0 0.0
        %560 = vmatprep.subr.mxu0 0.0
        %561 = vmatpush1.msra.mxu0 0.0
        %562 = vmatprep.subr.mxu0 0.0
        %563 = vmatpush1.msra.mxu0 0.0
        %564 = vmatprep.subr.mxu0 0.0
        %565 = vmatpush1.msra.mxu0 0.0
        %566 = vmatprep.subr.mxu0 0.0
        %567 = vmatpush1.msra.mxu0 0.0
        %568 = vmatprep.subr.mxu0 0.0
        %569 = vmatpush1.msra.mxu0 0.0
        %570 = vmatprep.subr.mxu0 0.0
        %571 = vmatpush1.msra.mxu0 0.0
        %572 = vmatprep.subr.mxu0 0.0
        %573 = vmatpush1.msra.mxu0 0.0
        %574 = vmatprep.subr.mxu0 0.0
        %575 = vmatpush1.msra.mxu0 0.0
        %576 = vmatprep.mubr.f32.mxu0 0.0
        %577 = vmatmul.mubr.f32.gmra.mrb[0].mxu0 %v507
        %v578 = vpop.f32.mrb[0].mxu0
        %v579 = vadd.f32 0.0, %v578
        %v580 = vpop.f32.mrb[0].mxu0
        %v581 = vadd.f32 0.0, %v580
        %582 = vmatprep.mubr.f32.mxu0 0.0
        %583 = vmatmul.mubr.f32.gmra.mrb[0].mxu0 %v510
        %v584 = vpop.f32.mrb[0].mxu0
        %v585 = vadd.f32 0.0, %v584
        %v586 = vpop.f32.mrb[0].mxu0
        %v587 = vadd.f32 0.0, %v586
        %588 = vdwg.mxu0
        %v590 = vsel %vm505, %v463, 0
        %v593 = vsel %vm505, %v464, 0
        %595 = vmatprep.subr.mxu0 %v454
        %596 = vmatpush1.msra.mxu0 %v453
        %597 = vmatprep.subr.mxu0 %v456
        %598 = vmatpush1.msra.mxu0 %v455
        %599 = vmatprep.subr.mxu0 %v458
        %600 = vmatpush1.msra.mxu0 %v457
        %601 = vmatprep.subr.mxu0 %v460
        %602 = vmatpush1.msra.mxu0 %v459
        %603 = vmatprep.subr.mxu0 0.0
        %604 = vmatpush1.msra.mxu0 0.0
        %605 = vmatprep.subr.mxu0 0.0
        %606 = vmatpush1.msra.mxu0 0.0
        %607 = vmatprep.subr.mxu0 0.0
        %608 = vmatpush1.msra.mxu0 0.0
        %609 = vmatprep.subr.mxu0 0.0
        %610 = vmatpush1.msra.mxu0 0.0
        %611 = vmatprep.subr.mxu0 0.0
        %612 = vmatpush1.msra.mxu0 0.0
        %613 = vmatprep.subr.mxu0 0.0
        %614 = vmatpush1.msra.mxu0 0.0
        %615 = vmatprep.subr.mxu0 0.0
        %616 = vmatpush1.msra.mxu0 0.0
        %617 = vmatprep.subr.mxu0 0.0
        %618 = vmatpush1.msra.mxu0 0.0
        %619 = vmatprep.subr.mxu0 0.0
        %620 = vmatpush1.msra.mxu0 0.0
        %621 = vmatprep.subr.mxu0 0.0
        %622 = vmatpush1.msra.mxu0 0.0
        %623 = vmatprep.subr.mxu0 0.0
        %624 = vmatpush1.msra.mxu0 0.0
        %625 = vmatprep.subr.mxu0 0.0
        %626 = vmatpush1.msra.mxu0 0.0
        %627 = vmatprep.subr.mxu0 0.0
        %628 = vmatpush1.msra.mxu0 0.0
        %629 = vmatprep.subr.mxu0 0.0
        %630 = vmatpush1.msra.mxu0 0.0
        %631 = vmatprep.subr.mxu0 0.0
        %632 = vmatpush1.msra.mxu0 0.0
        %633 = vmatprep.subr.mxu0 0.0
        %634 = vmatpush1.msra.mxu0 0.0
        %635 = vmatprep.subr.mxu0 0.0
        %636 = vmatpush1.msra.mxu0 0.0
        %637 = vmatprep.subr.mxu0 0.0
        %638 = vmatpush1.msra.mxu0 0.0
        %639 = vmatprep.subr.mxu0 0.0
        %640 = vmatpush1.msra.mxu0 0.0
        %641 = vmatprep.subr.mxu0 0.0
        %642 = vmatpush1.msra.mxu0 0.0
        %643 = vmatprep.subr.mxu0 0.0
        %644 = vmatpush1.msra.mxu0 0.0
        %645 = vmatprep.subr.mxu0 0.0
        %646 = vmatpush1.msra.mxu0 0.0
        %647 = vmatprep.subr.mxu0 0.0
        %648 = vmatpush1.msra.mxu0 0.0
        %649 = vmatprep.subr.mxu0 0.0
        %650 = vmatpush1.msra.mxu0 0.0
        %651 = vmatprep.subr.mxu0 0.0
        %652 = vmatpush1.msra.mxu0 0.0
        %653 = vmatprep.subr.mxu0 0.0
        %654 = vmatpush1.msra.mxu0 0.0
        %655 = vmatprep.subr.mxu0 0.0
        %656 = vmatpush1.msra.mxu0 0.0
        %657 = vmatprep.subr.mxu0 0.0
        %658 = vmatpush1.msra.mxu0 0.0
        %659 = vmatprep.mubr.f32.mxu0 0.0
        %660 = vmatmul.mubr.f32.gmra.mrb[0].mxu0 %v590
        %v661 = vpop.f32.mrb[0].mxu0
        %v662 = vadd.f32 %v579, %v661
        %v663 = vpop.f32.mrb[0].mxu0
        %v664 = vadd.f32 %v581, %v663
        %665 = vmatprep.mubr.f32.mxu0 0.0
        %666 = vmatmul.mubr.f32.gmra.mrb[0].mxu0 %v593
        %v667 = vpop.f32.mrb[0].mxu0
        %v668 = vadd.f32 %v585, %v667
        %v669 = vpop.f32.mrb[0].mxu0
        %v670 = vadd.f32 %v587, %v669
        %671 = vdwg.mxu0
        %s672 = scalar_lea.vmem %s1, 32
        %v673 = vld [vmem:[%s672] sm:$0xff]
        %v674 = vld [vmem:[%s672 + $0x8] sm:$0xff]
        %675 = vrot.lane.b32.xlu0 %v453, 126
        %v676 = vpop.permute.xlu0 %675
        %677 = vrot.lane.b32.xlu0 %v454, 126
        %v678 = vpop.permute.xlu0 %677
        %679 = vrot.lane.b32.xlu0 %v455, 126
        %v680 = vpop.permute.xlu0 %679
        %681 = vrot.lane.b32.xlu0 %v456, 126
        %v682 = vpop.permute.xlu0 %681
        %683 = vrot.lane.b32.xlu0 %v457, 126
        %v684 = vpop.permute.xlu0 %683
        %685 = vrot.lane.b32.xlu0 %v458, 126
        %v686 = vpop.permute.xlu0 %685
        %687 = vrot.lane.b32.xlu0 %v459, 126
        %v688 = vpop.permute.xlu0 %687
        %689 = vrot.lane.b32.xlu0 %v460, 126
        %v690 = vpop.permute.xlu0 %689
        %vm691 = vcmask 1031168
        %v692 = vsel %vm691, %v676, %v678
        %v693 = vsel %vm691, %v680, %v682
        %v694 = vsel %vm691, %v684, %v686
        %v695 = vsel %vm691, %v688, %v690
        %v705 = vsel %vm505, %v673, 0
        %v708 = vsel %vm505, %v674, 0
        %710 = vmatprep.subr.mxu0 %v678
        %711 = vmatpush1.msra.mxu0 %v692
        %712 = vmatprep.subr.mxu0 %v682
        %713 = vmatpush1.msra.mxu0 %v693
        %714 = vmatprep.subr.mxu0 %v686
        %715 = vmatpush1.msra.mxu0 %v694
        %716 = vmatprep.subr.mxu0 %v690
        %717 = vmatpush1.msra.mxu0 %v695
        %718 = vmatprep.subr.mxu0 0.0
        %719 = vmatpush1.msra.mxu0 0.0
        %720 = vmatprep.subr.mxu0 0.0
        %721 = vmatpush1.msra.mxu0 0.0
        %722 = vmatprep.subr.mxu0 0.0
        %723 = vmatpush1.msra.mxu0 0.0
        %724 = vmatprep.subr.mxu0 0.0
        %725 = vmatpush1.msra.mxu0 0.0
        %726 = vmatprep.subr.mxu0 0.0
        %727 = vmatpush1.msra.mxu0 0.0
        %728 = vmatprep.subr.mxu0 0.0
        %729 = vmatpush1.msra.mxu0 0.0
        %730 = vmatprep.subr.mxu0 0.0
        %731 = vmatpush1.msra.mxu0 0.0
        %732 = vmatprep.subr.mxu0 0.0
        %733 = vmatpush1.msra.mxu0 0.0
        %734 = vmatprep.subr.mxu0 0.0
        %735 = vmatpush1.msra.mxu0 0.0
        %736 = vmatprep.subr.mxu0 0.0
        %737 = vmatpush1.msra.mxu0 0.0
        %738 = vmatprep.subr.mxu0 0.0
        %739 = vmatpush1.msra.mxu0 0.0
        %740 = vmatprep.subr.mxu0 0.0
        %741 = vmatpush1.msra.mxu0 0.0
        %742 = vmatprep.subr.mxu0 0.0
        %743 = vmatpush1.msra.mxu0 0.0
        %744 = vmatprep.subr.mxu0 0.0
        %745 = vmatpush1.msra.mxu0 0.0
        %746 = vmatprep.subr.mxu0 0.0
        %747 = vmatpush1.msra.mxu0 0.0
        %748 = vmatprep.subr.mxu0 0.0
        %749 = vmatpush1.msra.mxu0 0.0
        %750 = vmatprep.subr.mxu0 0.0
        %751 = vmatpush1.msra.mxu0 0.0
        %752 = vmatprep.subr.mxu0 0.0
        %753 = vmatpush1.msra.mxu0 0.0
        %754 = vmatprep.subr.mxu0 0.0
        %755 = vmatpush1.msra.mxu0 0.0
        %756 = vmatprep.subr.mxu0 0.0
        %757 = vmatpush1.msra.mxu0 0.0
        %758 = vmatprep.subr.mxu0 0.0
        %759 = vmatpush1.msra.mxu0 0.0
        %760 = vmatprep.subr.mxu0 0.0
        %761 = vmatpush1.msra.mxu0 0.0
        %762 = vmatprep.subr.mxu0 0.0
        %763 = vmatpush1.msra.mxu0 0.0
        %764 = vmatprep.subr.mxu0 0.0
        %765 = vmatpush1.msra.mxu0 0.0
        %766 = vmatprep.subr.mxu0 0.0
        %767 = vmatpush1.msra.mxu0 0.0
        %768 = vmatprep.subr.mxu0 0.0
        %769 = vmatpush1.msra.mxu0 0.0
        %770 = vmatprep.subr.mxu0 0.0
        %771 = vmatpush1.msra.mxu0 0.0
        %772 = vmatprep.subr.mxu0 0.0
        %773 = vmatpush1.msra.mxu0 0.0
        %774 = vmatprep.mubr.f32.mxu0 0.0
        %775 = vmatmul.mubr.f32.gmra.mrb[0].mxu0 %v705
        %v776 = vpop.f32.mrb[0].mxu0
        %v777 = vadd.f32 0.0, %v776
        %v778 = vpop.f32.mrb[0].mxu0
        %v779 = vadd.f32 0.0, %v778
        %780 = vmatprep.mubr.f32.mxu0 0.0
        %781 = vmatmul.mubr.f32.gmra.mrb[0].mxu0 %v708
        %v782 = vpop.f32.mrb[0].mxu0
        %v783 = vadd.f32 0.0, %v782
        %v784 = vpop.f32.mrb[0].mxu0
        %v785 = vadd.f32 0.0, %v784
        %786 = vdwg.mxu0
        %v787 = vadd.f32 %v662, %v777
        %v788 = vadd.f32 %v664, %v779
        %v789 = vadd.f32 %v668, %v783
        %v790 = vadd.f32 %v670, %v785
        %s791 = scalar_lea.vmem %s1, 48
        %v792 = vld [vmem:[%s791] sm:$0xff]
        %v793 = vld [vmem:[%s791 + $0x8] sm:$0xff]
        %794 = vrot.lane.b32.xlu0 %v453, 125
        %v795 = vpop.permute.xlu0 %794
        %796 = vrot.lane.b32.xlu0 %v454, 125
        %v797 = vpop.permute.xlu0 %796
        %798 = vrot.lane.b32.xlu0 %v455, 125
        %v799 = vpop.permute.xlu0 %798
        %800 = vrot.lane.b32.xlu0 %v456, 125
        %v801 = vpop.permute.xlu0 %800
        %802 = vrot.lane.b32.xlu0 %v457, 125
        %v803 = vpop.permute.xlu0 %802
        %804 = vrot.lane.b32.xlu0 %v458, 125
        %v805 = vpop.permute.xlu0 %804
        %806 = vrot.lane.b32.xlu0 %v459, 125
        %v807 = vpop.permute.xlu0 %806
        %808 = vrot.lane.b32.xlu0 %v460, 125
        %v809 = vpop.permute.xlu0 %808
        %vm810 = vcmask 1022976
        %v811 = vsel %vm810, %v795, %v797
        %v812 = vsel %vm810, %v799, %v801
        %v813 = vsel %vm810, %v803, %v805
        %v814 = vsel %vm810, %v807, %v809
        %v824 = vsel %vm505, %v792, 0
        %v827 = vsel %vm505, %v793, 0
        %829 = vmatprep.subr.mxu0 %v797
        %830 = vmatpush1.msra.mxu0 %v811
        %831 = vmatprep.subr.mxu0 %v801
        %832 = vmatpush1.msra.mxu0 %v812
        %833 = vmatprep.subr.mxu0 %v805
        %834 = vmatpush1.msra.mxu0 %v813
        %835 = vmatprep.subr.mxu0 %v809
        %836 = vmatpush1.msra.mxu0 %v814
        %837 = vmatprep.subr.mxu0 0.0
        %838 = vmatpush1.msra.mxu0 0.0
        %839 = vmatprep.subr.mxu0 0.0
        %840 = vmatpush1.msra.mxu0 0.0
        %841 = vmatprep.subr.mxu0 0.0
        %842 = vmatpush1.msra.mxu0 0.0
        %843 = vmatprep.subr.mxu0 0.0
        %844 = vmatpush1.msra.mxu0 0.0
        %845 = vmatprep.subr.mxu0 0.0
        %846 = vmatpush1.msra.mxu0 0.0
        %847 = vmatprep.subr.mxu0 0.0
        %848 = vmatpush1.msra.mxu0 0.0
        %849 = vmatprep.subr.mxu0 0.0
        %850 = vmatpush1.msra.mxu0 0.0
        %851 = vmatprep.subr.mxu0 0.0
        %852 = vmatpush1.msra.mxu0 0.0
        %853 = vmatprep.subr.mxu0 0.0
        %854 = vmatpush1.msra.mxu0 0.0
        %855 = vmatprep.subr.mxu0 0.0
        %856 = vmatpush1.msra.mxu0 0.0
        %857 = vmatprep.subr.mxu0 0.0
        %858 = vmatpush1.msra.mxu0 0.0
        %859 = vmatprep.subr.mxu0 0.0
        %860 = vmatpush1.msra.mxu0 0.0
        %861 = vmatprep.subr.mxu0 0.0
        %862 = vmatpush1.msra.mxu0 0.0
        %863 = vmatprep.subr.mxu0 0.0
        %864 = vmatpush1.msra.mxu0 0.0
        %865 = vmatprep.subr.mxu0 0.0
        %866 = vmatpush1.msra.mxu0 0.0
        %867 = vmatprep.subr.mxu0 0.0
        %868 = vmatpush1.msra.mxu0 0.0
        %869 = vmatprep.subr.mxu0 0.0
        %870 = vmatpush1.msra.mxu0 0.0
        %871 = vmatprep.subr.mxu0 0.0
        %872 = vmatpush1.msra.mxu0 0.0
        %873 = vmatprep.subr.mxu0 0.0
        %874 = vmatpush1.msra.mxu0 0.0
        %875 = vmatprep.subr.mxu0 0.0
        %876 = vmatpush1.msra.mxu0 0.0
        %877 = vmatprep.subr.mxu0 0.0
        %878 = vmatpush1.msra.mxu0 0.0
        %879 = vmatprep.subr.mxu0 0.0
        %880 = vmatpush1.msra.mxu0 0.0
        %881 = vmatprep.subr.mxu0 0.0
        %882 = vmatpush1.msra.mxu0 0.0
        %883 = vmatprep.subr.mxu0 0.0
        %884 = vmatpush1.msra.mxu0 0.0
        %885 = vmatprep.subr.mxu0 0.0
        %886 = vmatpush1.msra.mxu0 0.0
        %887 = vmatprep.subr.mxu0 0.0
        %888 = vmatpush1.msra.mxu0 0.0
        %889 = vmatprep.subr.mxu0 0.0
        %890 = vmatpush1.msra.mxu0 0.0
        %891 = vmatprep.subr.mxu0 0.0
        %892 = vmatpush1.msra.mxu0 0.0
        %893 = vmatprep.mubr.f32.mxu0 0.0
        %894 = vmatmul.mubr.f32.gmra.mrb[0].mxu0 %v824
        %v895 = vpop.f32.mrb[0].mxu0
        %v896 = vadd.f32 0.0, %v895
        %v897 = vpop.f32.mrb[0].mxu0
        %v898 = vadd.f32 0.0, %v897
        %899 = vmatprep.mubr.f32.mxu0 0.0
        %900 = vmatmul.mubr.f32.gmra.mrb[0].mxu0 %v827
        %v901 = vpop.f32.mrb[0].mxu0
        %v902 = vadd.f32 0.0, %v901
        %v903 = vpop.f32.mrb[0].mxu0
        %v904 = vadd.f32 0.0, %v903
        %905 = vdwg.mxu0
        %v906 = vadd.f32 %v787, %v896
        %v907 = vadd.f32 %v788, %v898
        %v908 = vadd.f32 %v789, %v902
        %v909 = vadd.f32 %v790, %v904
        %911 = vset.pattern.permute.xlu0 0
        %912 = vperm.xlu0 %911, %v461
        %v913 = vpop.permute.xlu0 %912
        %916 = vset.pattern.permute.xlu0 0
        %917 = vperm.xlu0 %916, %v462
        %v918 = vpop.permute.xlu0 %917
        %v920 = vadd.f32 %v906, %v913
        %v921 = vadd.f32 %v907, %v913
        %v922 = vadd.f32 %v908, %v918
        %v923 = vadd.f32 %v909, %v918
        %v924 = vmax.f32 %v920, 0.0
        %v925 = vmax.f32 %v921, 0.0
        %v926 = vmax.f32 %v922, 0.0
        %v927 = vmax.f32 %v923, 0.0
        %v928 = vld [vmem:[%s4] sm:$0xff]
        %v929 = vld [vmem:[%s4 + $0x8] sm:$0xff]
        %v930 = vld [vmem:[%s3] sm:$0xff]
        %v931 = vld [vmem:[%s3 + $0x8] sm:$0xff]
        %s932 = scalar_lea.vmem %s3, 16
        %v933 = vld [vmem:[%s932] sm:$0xff]
        %v934 = vld [vmem:[%s932 + $0x8] sm:$0xff]
        %939 = vrot.lane.b32.xlu0 %v924, 127
        %v940 = vpop.permute.xlu0 %939
        %941 = vrot.lane.b32.xlu0 %v925, 127
        %v942 = vpop.permute.xlu0 %941
        %943 = vrot.lane.b32.xlu0 %v926, 127
        %v944 = vpop.permute.xlu0 %943
        %945 = vrot.lane.b32.xlu0 %v927, 127
        %v946 = vpop.permute.xlu0 %945
        %v947 = vsel %vm492, %v940, %v942
        %v948 = vsel %vm492, %v944, %v946
        %vm953 = vcmask 130048
        %v955 = vsel %vm953, %v933, 0
        %v958 = vsel %vm953, %v934, 0
        %960 = vmatprep.subr.mxu0 %v942
        %961 = vmatpush1.msra.mxu0 %v947
        %962 = vmatprep.subr.mxu0 %v946
        %963 = vmatpush1.msra.mxu0 %v948
        %964 = vmatprep.subr.mxu0 0.0
        %965 = vmatpush1.msra.mxu0 0.0
        %966 = vmatprep.subr.mxu0 0.0
        %967 = vmatpush1.msra.mxu0 0.0
        %968 = vmatprep.subr.mxu0 0.0
        %969 = vmatpush1.msra.mxu0 0.0
        %970 = vmatprep.subr.mxu0 0.0
        %971 = vmatpush1.msra.mxu0 0.0
        %972 = vmatprep.subr.mxu0 0.0
        %973 = vmatpush1.msra.mxu0 0.0
        %974 = vmatprep.subr.mxu0 0.0
        %975 = vmatpush1.msra.mxu0 0.0
        %976 = vmatprep.subr.mxu0 0.0
        %977 = vmatpush1.msra.mxu0 0.0
        %978 = vmatprep.subr.mxu0 0.0
        %979 = vmatpush1.msra.mxu0 0.0
        %980 = vmatprep.subr.mxu0 0.0
        %981 = vmatpush1.msra.mxu0 0.0
        %982 = vmatprep.subr.mxu0 0.0
        %983 = vmatpush1.msra.mxu0 0.0
        %984 = vmatprep.subr.mxu0 0.0
        %985 = vmatpush1.msra.mxu0 0.0
        %986 = vmatprep.subr.mxu0 0.0
        %987 = vmatpush1.msra.mxu0 0.0
        %988 = vmatprep.subr.mxu0 0.0
        %989 = vmatpush1.msra.mxu0 0.0
        %990 = vmatprep.subr.mxu0 0.0
        %991 = vmatpush1.msra.mxu0 0.0
        %992 = vmatprep.subr.mxu0 0.0
        %993 = vmatpush1.msra.mxu0 0.0
        %994 = vmatprep.subr.mxu0 0.0
        %995 = vmatpush1.msra.mxu0 0.0
        %996 = vmatprep.subr.mxu0 0.0
        %997 = vmatpush1.msra.mxu0 0.0
        %998 = vmatprep.subr.mxu0 0.0
        %999 = vmatpush1.msra.mxu0 0.0
        %1000 = vmatprep.subr.mxu0 0.0
        %1001 = vmatpush1.msra.mxu0 0.0
        %1002 = vmatprep.subr.mxu0 0.0
        %1003 = vmatpush1.msra.mxu0 0.0
        %1004 = vmatprep.subr.mxu0 0.0
        %1005 = vmatpush1.msra.mxu0 0.0
        %1006 = vmatprep.subr.mxu0 0.0
        %1007 = vmatpush1.msra.mxu0 0.0
        %1008 = vmatprep.subr.mxu0 0.0
        %1009 = vmatpush1.msra.mxu0 0.0
        %1010 = vmatprep.subr.mxu0 0.0
        %1011 = vmatpush1.msra.mxu0 0.0
        %1012 = vmatprep.subr.mxu0 0.0
        %1013 = vmatpush1.msra.mxu0 0.0
        %1014 = vmatprep.subr.mxu0 0.0
        %1015 = vmatpush1.msra.mxu0 0.0
        %1016 = vmatprep.subr.mxu0 0.0
        %1017 = vmatpush1.msra.mxu0 0.0
        %1018 = vmatprep.subr.mxu0 0.0
        %1019 = vmatpush1.msra.mxu0 0.0
        %1020 = vmatprep.subr.mxu0 0.0
        %1021 = vmatpush1.msra.mxu0 0.0
        %1022 = vmatprep.subr.mxu0 0.0
        %1023 = vmatpush1.msra.mxu0 0.0
        %1024 = vmatprep.mubr.f32.mxu0 0.0
        %1025 = vmatmul.mubr.f32.gmra.mrb[0].mxu0 %v955
        %v1026 = vpop.f32.mrb[0].mxu0
        %v1027 = vadd.f32 0.0, %v1026
        %v1028 = vpop.f32.mrb[0].mxu0
        %v1029 = vadd.f32 0.0, %v1028
        %1030 = vmatprep.mubr.f32.mxu0 0.0
        %1031 = vmatmul.mubr.f32.gmra.mrb[0].mxu0 %v958
        %v1032 = vpop.f32.mrb[0].mxu0
        %v1033 = vadd.f32 0.0, %v1032
        %v1034 = vpop.f32.mrb[0].mxu0
        %v1035 = vadd.f32 0.0, %v1034
        %1036 = vdwg.mxu0
        %v1038 = vsel %vm953, %v930, 0
        %v1041 = vsel %vm953, %v931, 0
        %1043 = vmatprep.subr.mxu0 %v925
        %1044 = vmatpush1.msra.mxu0 %v924
        %1045 = vmatprep.subr.mxu0 %v927
        %1046 = vmatpush1.msra.mxu0 %v926
        %1047 = vmatprep.subr.mxu0 0.0
        %1048 = vmatpush1.msra.mxu0 0.0
        %1049 = vmatprep.subr.mxu0 0.0
        %1050 = vmatpush1.msra.mxu0 0.0
        %1051 = vmatprep.subr.mxu0 0.0
        %1052 = vmatpush1.msra.mxu0 0.0
        %1053 = vmatprep.subr.mxu0 0.0
        %1054 = vmatpush1.msra.mxu0 0.0
        %1055 = vmatprep.subr.mxu0 0.0
        %1056 = vmatpush1.msra.mxu0 0.0
        %1057 = vmatprep.subr.mxu0 0.0
        %1058 = vmatpush1.msra.mxu0 0.0
        %1059 = vmatprep.subr.mxu0 0.0
        %1060 = vmatpush1.msra.mxu0 0.0
        %1061 = vmatprep.subr.mxu0 0.0
        %1062 = vmatpush1.msra.mxu0 0.0
        %1063 = vmatprep.subr.mxu0 0.0
        %1064 = vmatpush1.msra.mxu0 0.0
        %1065 = vmatprep.subr.mxu0 0.0
        %1066 = vmatpush1.msra.mxu0 0.0
        %1067 = vmatprep.subr.mxu0 0.0
        %1068 = vmatpush1.msra.mxu0 0.0
        %1069 = vmatprep.subr.mxu0 0.0
        %1070 = vmatpush1.msra.mxu0 0.0
        %1071 = vmatprep.subr.mxu0 0.0
        %1072 = vmatpush1.msra.mxu0 0.0
        %1073 = vmatprep.subr.mxu0 0.0
        %1074 = vmatpush1.msra.mxu0 0.0
        %1075 = vmatprep.subr.mxu0 0.0
        %1076 = vmatpush1.msra.mxu0 0.0
        %1077 = vmatprep.subr.mxu0 0.0
        %1078 = vmatpush1.msra.mxu0 0.0
        %1079 = vmatprep.subr.mxu0 0.0
        %1080 = vmatpush1.msra.mxu0 0.0
        %1081 = vmatprep.subr.mxu0 0.0
        %1082 = vmatpush1.msra.mxu0 0.0
        %1083 = vmatprep.subr.mxu0 0.0
        %1084 = vmatpush1.msra.mxu0 0.0
        %1085 = vmatprep.subr.mxu0 0.0
        %1086 = vmatpush1.msra.mxu0 0.0
        %1087 = vmatprep.subr.mxu0 0.0
        %1088 = vmatpush1.msra.mxu0 0.0
        %1089 = vmatprep.subr.mxu0 0.0
        %1090 = vmatpush1.msra.mxu0 0.0
        %1091 = vmatprep.subr.mxu0 0.0
        %1092 = vmatpush1.msra.mxu0 0.0
        %1093 = vmatprep.subr.mxu0 0.0
        %1094 = vmatpush1.msra.mxu0 0.0
        %1095 = vmatprep.subr.mxu0 0.0
        %1096 = vmatpush1.msra.mxu0 0.0
        %1097 = vmatprep.subr.mxu0 0.0
        %1098 = vmatpush1.msra.mxu0 0.0
        %1099 = vmatprep.subr.mxu0 0.0
        %1100 = vmatpush1.msra.mxu0 0.0
        %1101 = vmatprep.subr.mxu0 0.0
        %1102 = vmatpush1.msra.mxu0 0.0
        %1103 = vmatprep.subr.mxu0 0.0
        %1104 = vmatpush1.msra.mxu0 0.0
        %1105 = vmatprep.subr.mxu0 0.0
        %1106 = vmatpush1.msra.mxu0 0.0
        %1107 = vmatprep.mubr.f32.mxu0 0.0
        %1108 = vmatmul.mubr.f32.gmra.mrb[0].mxu0 %v1038
        %v1109 = vpop.f32.mrb[0].mxu0
        %v1110 = vadd.f32 %v1027, %v1109
        %v1111 = vpop.f32.mrb[0].mxu0
        %v1112 = vadd.f32 %v1029, %v1111
        %1113 = vmatprep.mubr.f32.mxu0 0.0
        %1114 = vmatmul.mubr.f32.gmra.mrb[0].mxu0 %v1041
        %v1115 = vpop.f32.mrb[0].mxu0
        %v1116 = vadd.f32 %v1033, %v1115
        %v1117 = vpop.f32.mrb[0].mxu0
        %v1118 = vadd.f32 %v1035, %v1117
        %1119 = vdwg.mxu0
        %s1120 = scalar_lea.vmem %s3, 32
        %v1121 = vld [vmem:[%s1120] sm:$0xff]
        %v1122 = vld [vmem:[%s1120 + $0x8] sm:$0xff]
        %1123 = vrot.lane.b32.xlu0 %v924, 126
        %v1124 = vpop.permute.xlu0 %1123
        %1125 = vrot.lane.b32.xlu0 %v925, 126
        %v1126 = vpop.permute.xlu0 %1125
        %1127 = vrot.lane.b32.xlu0 %v926, 126
        %v1128 = vpop.permute.xlu0 %1127
        %1129 = vrot.lane.b32.xlu0 %v927, 126
        %v1130 = vpop.permute.xlu0 %1129
        %v1131 = vsel %vm691, %v1124, %v1126
        %v1132 = vsel %vm691, %v1128, %v1130
        %v1138 = vsel %vm953, %v1121, 0
        %v1141 = vsel %vm953, %v1122, 0
        %1143 = vmatprep.subr.mxu0 %v1126
        %1144 = vmatpush1.msra.mxu0 %v1131
        %1145 = vmatprep.subr.mxu0 %v1130
        %1146 = vmatpush1.msra.mxu0 %v1132
        %1147 = vmatprep.subr.mxu0 0.0
        %1148 = vmatpush1.msra.mxu0 0.0
        %1149 = vmatprep.subr.mxu0 0.0
        %1150 = vmatpush1.msra.mxu0 0.0
        %1151 = vmatprep.subr.mxu0 0.0
        %1152 = vmatpush1.msra.mxu0 0.0
        %1153 = vmatprep.subr.mxu0 0.0
        %1154 = vmatpush1.msra.mxu0 0.0
        %1155 = vmatprep.subr.mxu0 0.0
        %1156 = vmatpush1.msra.mxu0 0.0
        %1157 = vmatprep.subr.mxu0 0.0
        %1158 = vmatpush1.msra.mxu0 0.0
        %1159 = vmatprep.subr.mxu0 0.0
        %1160 = vmatpush1.msra.mxu0 0.0
        %1161 = vmatprep.subr.mxu0 0.0
        %1162 = vmatpush1.msra.mxu0 0.0
        %1163 = vmatprep.subr.mxu0 0.0
        %1164 = vmatpush1.msra.mxu0 0.0
        %1165 = vmatprep.subr.mxu0 0.0
        %1166 = vmatpush1.msra.mxu0 0.0
        %1167 = vmatprep.subr.mxu0 0.0
        %1168 = vmatpush1.msra.mxu0 0.0
        %1169 = vmatprep.subr.mxu0 0.0
        %1170 = vmatpush1.msra.mxu0 0.0
        %1171 = vmatprep.subr.mxu0 0.0
        %1172 = vmatpush1.msra.mxu0 0.0
        %1173 = vmatprep.subr.mxu0 0.0
        %1174 = vmatpush1.msra.mxu0 0.0
        %1175 = vmatprep.subr.mxu0 0.0
        %1176 = vmatpush1.msra.mxu0 0.0
        %1177 = vmatprep.subr.mxu0 0.0
        %1178 = vmatpush1.msra.mxu0 0.0
        %1179 = vmatprep.subr.mxu0 0.0
        %1180 = vmatpush1.msra.mxu0 0.0
        %1181 = vmatprep.subr.mxu0 0.0
        %1182 = vmatpush1.msra.mxu0 0.0
        %1183 = vmatprep.subr.mxu0 0.0
        %1184 = vmatpush1.msra.mxu0 0.0
        %1185 = vmatprep.subr.mxu0 0.0
        %1186 = vmatpush1.msra.mxu0 0.0
        %1187 = vmatprep.subr.mxu0 0.0
        %1188 = vmatpush1.msra.mxu0 0.0
        %1189 = vmatprep.subr.mxu0 0.0
        %1190 = vmatpush1.msra.mxu0 0.0
        %1191 = vmatprep.subr.mxu0 0.0
        %1192 = vmatpush1.msra.mxu0 0.0
        %1193 = vmatprep.subr.mxu0 0.0
        %1194 = vmatpush1.msra.mxu0 0.0
        %1195 = vmatprep.subr.mxu0 0.0
        %1196 = vmatpush1.msra.mxu0 0.0
        %1197 = vmatprep.subr.mxu0 0.0
        %1198 = vmatpush1.msra.mxu0 0.0
        %1199 = vmatprep.subr.mxu0 0.0
        %1200 = vmatpush1.msra.mxu0 0.0
        %1201 = vmatprep.subr.mxu0 0.0
        %1202 = vmatpush1.msra.mxu0 0.0
        %1203 = vmatprep.subr.mxu0 0.0
        %1204 = vmatpush1.msra.mxu0 0.0
        %1205 = vmatprep.subr.mxu0 0.0
        %1206 = vmatpush1.msra.mxu0 0.0
        %1207 = vmatprep.mubr.f32.mxu0 0.0
        %1208 = vmatmul.mubr.f32.gmra.mrb[0].mxu0 %v1138
        %v1209 = vpop.f32.mrb[0].mxu0
        %v1210 = vadd.f32 0.0, %v1209
        %v1211 = vpop.f32.mrb[0].mxu0
        %v1212 = vadd.f32 0.0, %v1211
        %1213 = vmatprep.mubr.f32.mxu0 0.0
        %1214 = vmatmul.mubr.f32.gmra.mrb[0].mxu0 %v1141
        %v1215 = vpop.f32.mrb[0].mxu0
        %v1216 = vadd.f32 0.0, %v1215
        %v1217 = vpop.f32.mrb[0].mxu0
        %v1218 = vadd.f32 0.0, %v1217
        %1219 = vdwg.mxu0
        %v1220 = vadd.f32 %v1110, %v1210
        %v1221 = vadd.f32 %v1112, %v1212
        %v1222 = vadd.f32 %v1116, %v1216
        %v1223 = vadd.f32 %v1118, %v1218
        %s1224 = scalar_lea.vmem %s3, 48
        %v1225 = vld [vmem:[%s1224] sm:$0xff]
        %v1226 = vld [vmem:[%s1224 + $0x8] sm:$0xff]
        %1227 = vrot.lane.b32.xlu0 %v924, 125
        %v1228 = vpop.permute.xlu0 %1227
        %1229 = vrot.lane.b32.xlu0 %v925, 125
        %v1230 = vpop.permute.xlu0 %1229
        %1231 = vrot.lane.b32.xlu0 %v926, 125
        %v1232 = vpop.permute.xlu0 %1231
        %1233 = vrot.lane.b32.xlu0 %v927, 125
        %v1234 = vpop.permute.xlu0 %1233
        %v1235 = vsel %vm810, %v1228, %v1230
        %v1236 = vsel %vm810, %v1232, %v1234
        %v1242 = vsel %vm953, %v1225, 0
        %v1245 = vsel %vm953, %v1226, 0
        %1247 = vmatprep.subr.mxu0 %v1230
        %1248 = vmatpush1.msra.mxu0 %v1235
        %1249 = vmatprep.subr.mxu0 %v1234
        %1250 = vmatpush1.msra.mxu0 %v1236
        %1251 = vmatprep.subr.mxu0 0.0
        %1252 = vmatpush1.msra.mxu0 0.0
        %1253 = vmatprep.subr.mxu0 0.0
        %1254 = vmatpush1.msra.mxu0 0.0
        %1255 = vmatprep.subr.mxu0 0.0
        %1256 = vmatpush1.msra.mxu0 0.0
        %1257 = vmatprep.subr.mxu0 0.0
        %1258 = vmatpush1.msra.mxu0 0.0
        %1259 = vmatprep.subr.mxu0 0.0
        %1260 = vmatpush1.msra.mxu0 0.0
        %1261 = vmatprep.subr.mxu0 0.0
        %1262 = vmatpush1.msra.mxu0 0.0
        %1263 = vmatprep.subr.mxu0 0.0
        %1264 = vmatpush1.msra.mxu0 0.0
        %1265 = vmatprep.subr.mxu0 0.0
        %1266 = vmatpush1.msra.mxu0 0.0
        %1267 = vmatprep.subr.mxu0 0.0
        %1268 = vmatpush1.msra.mxu0 0.0
        %1269 = vmatprep.subr.mxu0 0.0
        %1270 = vmatpush1.msra.mxu0 0.0
        %1271 = vmatprep.subr.mxu0 0.0
        %1272 = vmatpush1.msra.mxu0 0.0
        %1273 = vmatprep.subr.mxu0 0.0
        %1274 = vmatpush1.msra.mxu0 0.0
        %1275 = vmatprep.subr.mxu0 0.0
        %1276 = vmatpush1.msra.mxu0 0.0
        %1277 = vmatprep.subr.mxu0 0.0
        %1278 = vmatpush1.msra.mxu0 0.0
        %1279 = vmatprep.subr.mxu0 0.0
        %1280 = vmatpush1.msra.mxu0 0.0
        %1281 = vmatprep.subr.mxu0 0.0
        %1282 = vmatpush1.msra.mxu0 0.0
        %1283 = vmatprep.subr.mxu0 0.0
        %1284 = vmatpush1.msra.mxu0 0.0
        %1285 = vmatprep.subr.mxu0 0.0
        %1286 = vmatpush1.msra.mxu0 0.0
        %1287 = vmatprep.subr.mxu0 0.0
        %1288 = vmatpush1.msra.mxu0 0.0
        %1289 = vmatprep.subr.mxu0 0.0
        %1290 = vmatpush1.msra.mxu0 0.0
        %1291 = vmatprep.subr.mxu0 0.0
        %1292 = vmatpush1.msra.mxu0 0.0
        %1293 = vmatprep.subr.mxu0 0.0
        %1294 = vmatpush1.msra.mxu0 0.0
        %1295 = vmatprep.subr.mxu0 0.0
        %1296 = vmatpush1.msra.mxu0 0.0
        %1297 = vmatprep.subr.mxu0 0.0
        %1298 = vmatpush1.msra.mxu0 0.0
        %1299 = vmatprep.subr.mxu0 0.0
        %1300 = vmatpush1.msra.mxu0 0.0
        %1301 = vmatprep.subr.mxu0 0.0
        %1302 = vmatpush1.msra.mxu0 0.0
        %1303 = vmatprep.subr.mxu0 0.0
        %1304 = vmatpush1.msra.mxu0 0.0
        %1305 = vmatprep.subr.mxu0 0.0
        %1306 = vmatpush1.msra.mxu0 0.0
        %1307 = vmatprep.subr.mxu0 0.0
        %1308 = vmatpush1.msra.mxu0 0.0
        %1309 = vmatprep.subr.mxu0 0.0
        %1310 = vmatpush1.msra.mxu0 0.0
        %1311 = vmatprep.mubr.f32.mxu0 0.0
        %1312 = vmatmul.mubr.f32.gmra.mrb[0].mxu0 %v1242
        %v1313 = vpop.f32.mrb[0].mxu0
        %v1314 = vadd.f32 0.0, %v1313
        %v1315 = vpop.f32.mrb[0].mxu0
        %v1316 = vadd.f32 0.0, %v1315
        %1317 = vmatprep.mubr.f32.mxu0 0.0
        %1318 = vmatmul.mubr.f32.gmra.mrb[0].mxu0 %v1245
        %v1319 = vpop.f32.mrb[0].mxu0
        %v1320 = vadd.f32 0.0, %v1319
        %v1321 = vpop.f32.mrb[0].mxu0
        %v1322 = vadd.f32 0.0, %v1321
        %1323 = vdwg.mxu0
        %v1324 = vadd.f32 %v1220, %v1314
        %v1325 = vadd.f32 %v1221, %v1316
        %v1326 = vadd.f32 %v1222, %v1320
        %v1327 = vadd.f32 %v1223, %v1322
        %1329 = vset.pattern.permute.xlu0 0
        %1330 = vperm.xlu0 %1329, %v928
        %v1331 = vpop.permute.xlu0 %1330
        %1334 = vset.pattern.permute.xlu0 0
        %1335 = vperm.xlu0 %1334, %v929
        %v1336 = vpop.permute.xlu0 %1335
        %v1338 = vadd.f32 %v1324, %v1331
        %v1339 = vadd.f32 %v1325, %v1331
        %v1340 = vadd.f32 %v1326, %v1336
        %v1341 = vadd.f32 %v1327, %v1336
        %v1342 = vmax.f32 %v1338, 0.0
        %v1343 = vmax.f32 %v1339, 0.0
        %v1344 = vmax.f32 %v1340, 0.0
        %v1345 = vmax.f32 %v1341, 0.0
        %v1346 = vld [vmem:[%s6] sm:$0x1]
        %v1347 = vpack.c.bf16 %v1342, %v1342
        %v1348 = vpack.c.bf16 %v1343, %v1343
        %v1349 = vld [vmem:[%s5] sm:$0xf]
        %v1350 = vld [vmem:[%s5 + $0x4] sm:$0xf]
        %v1351 = vld [vmem:[%s5 + $0x8] sm:$0xf]
        %v1352 = vld [vmem:[%s5 + $0xc] sm:$0xf]
        %v1353 = vld [vmem:[%s5 + $0x10] sm:$0xf]
        %v1354 = vld [vmem:[%s5 + $0x14] sm:$0xf]
        %v1355 = vld [vmem:[%s5 + $0x18] sm:$0xf]
        %v1356 = vld [vmem:[%s5 + $0x1c] sm:$0xf]
        %v1357 = vld [vmem:[%s5 + $0x20] sm:$0xf]
        %v1358 = vld [vmem:[%s5 + $0x24] sm:$0xf]
        %v1359 = vld [vmem:[%s5 + $0x28] sm:$0xf]
        %v1360 = vld [vmem:[%s5 + $0x2c] sm:$0xf]
        %v1361 = vld [vmem:[%s5 + $0x30] sm:$0xf]
        %v1362 = vld [vmem:[%s5 + $0x34] sm:$0xf]
        %v1363 = vld [vmem:[%s5 + $0x38] sm:$0xf]
        %v1364 = vld [vmem:[%s5 + $0x3c] sm:$0xf]
        %v1365 = vld [vmem:[%s5 + $0x40] sm:$0xf]
        %v1366 = vld [vmem:[%s5 + $0x44] sm:$0xf]
        %v1367 = vld [vmem:[%s5 + $0x48] sm:$0xf]
        %v1368 = vld [vmem:[%s5 + $0x4c] sm:$0xf]
        %v1369 = vld [vmem:[%s5 + $0x50] sm:$0xf]
        %v1370 = vld [vmem:[%s5 + $0x54] sm:$0xf]
        %v1371 = vld [vmem:[%s5 + $0x58] sm:$0xf]
        %v1372 = vld [vmem:[%s5 + $0x5c] sm:$0xf]
        %v1373 = vld [vmem:[%s5 + $0x60] sm:$0xf]
        %v1374 = vld [vmem:[%s5 + $0x64] sm:$0xf]
        %v1375 = vld [vmem:[%s5 + $0x68] sm:$0xf]
        %v1376 = vld [vmem:[%s5 + $0x6c] sm:$0xf]
        %v1377 = vld [vmem:[%s5 + $0x70] sm:$0xf]
        %v1378 = vld [vmem:[%s5 + $0x74] sm:$0xf]
        %v1379 = vld [vmem:[%s5 + $0x78] sm:$0xf]
        %v1380 = vld [vmem:[%s5 + $0x7c] sm:$0x1]
        %v1413 = vunpack.c.l.b16 %v1349
        %v1414 = vunpack.c.l.b16 %v1350
        %v1415 = vunpack.c.l.b16 %v1351
        %v1416 = vunpack.c.l.b16 %v1352
        %v1417 = vunpack.c.l.b16 %v1353
        %v1418 = vunpack.c.l.b16 %v1354
        %v1419 = vunpack.c.l.b16 %v1355
        %v1420 = vunpack.c.l.b16 %v1356
        %v1421 = vunpack.c.l.b16 %v1357
        %v1422 = vunpack.c.l.b16 %v1358
        %v1423 = vunpack.c.l.b16 %v1359
        %v1424 = vunpack.c.l.b16 %v1360
        %v1425 = vunpack.c.l.b16 %v1361
        %v1426 = vunpack.c.l.b16 %v1362
        %v1427 = vunpack.c.l.b16 %v1363
        %v1428 = vunpack.c.l.b16 %v1364
        %v1429 = vunpack.c.l.b16 %v1365
        %v1430 = vunpack.c.l.b16 %v1366
        %v1431 = vunpack.c.l.b16 %v1367
        %v1432 = vunpack.c.l.b16 %v1368
        %v1433 = vunpack.c.l.b16 %v1369
        %v1434 = vunpack.c.l.b16 %v1370
        %v1435 = vunpack.c.l.b16 %v1371
        %v1436 = vunpack.c.l.b16 %v1372
        %v1437 = vunpack.c.l.b16 %v1373
        %v1438 = vunpack.c.l.b16 %v1374
        %v1439 = vunpack.c.l.b16 %v1375
        %v1440 = vunpack.c.l.b16 %v1376
        %v1441 = vunpack.c.l.b16 %v1377
        %v1442 = vunpack.c.l.b16 %v1378
        %v1443 = vunpack.c.l.b16 %v1379
        %v1444 = vunpack.c.l.b16 %v1380
        %v1445 = vpack.c.b16 %v1414, %v1413
        %v1446 = vpack.c.b16 %v1416, %v1415
        %v1447 = vpack.c.b16 %v1418, %v1417
        %v1448 = vpack.c.b16 %v1420, %v1419
        %v1449 = vpack.c.b16 %v1422, %v1421
        %v1450 = vpack.c.b16 %v1424, %v1423
        %v1451 = vpack.c.b16 %v1426, %v1425
        %v1452 = vpack.c.b16 %v1428, %v1427
        %v1453 = vpack.c.b16 %v1430, %v1429
        %v1454 = vpack.c.b16 %v1432, %v1431
        %v1455 = vpack.c.b16 %v1434, %v1433
        %v1456 = vpack.c.b16 %v1436, %v1435
        %v1457 = vpack.c.b16 %v1438, %v1437
        %v1458 = vpack.c.b16 %v1440, %v1439
        %v1459 = vpack.c.b16 %v1442, %v1441
        %v1460 = vpack.c.b16 %v1444, %v1443
        %vm1476 = vcmask 998400
        %v1478 = vsel %vm1476, %v1348, 0
        %vm1480 = vcmask 1044480
        %v1482 = vsel %vm1480, %v1460, 0
        %1484 = vmatprep.subr.bf16.mxu0 0
        %1485 = vmatpush1.bf16.msra.mxu0 %v1445
        %1486 = vmatprep.subr.bf16.mxu0 0
        %1487 = vmatpush1.bf16.msra.mxu0 %v1446
        %1488 = vmatprep.subr.bf16.mxu0 0
        %1489 = vmatpush1.bf16.msra.mxu0 %v1447
        %1490 = vmatprep.subr.bf16.mxu0 0
        %1491 = vmatpush1.bf16.msra.mxu0 %v1448
        %1492 = vmatprep.subr.bf16.mxu0 0
        %1493 = vmatpush1.bf16.msra.mxu0 %v1449
        %1494 = vmatprep.subr.bf16.mxu0 0
        %1495 = vmatpush1.bf16.msra.mxu0 %v1450
        %1496 = vmatprep.subr.bf16.mxu0 0
        %1497 = vmatpush1.bf16.msra.mxu0 %v1451
        %1498 = vmatprep.subr.bf16.mxu0 0
        %1499 = vmatpush1.bf16.msra.mxu0 %v1452
        %1500 = vmatprep.subr.bf16.mxu0 0
        %1501 = vmatpush1.bf16.msra.mxu0 %v1453
        %1502 = vmatprep.subr.bf16.mxu0 0
        %1503 = vmatpush1.bf16.msra.mxu0 %v1454
        %1504 = vmatprep.subr.bf16.mxu0 0
        %1505 = vmatpush1.bf16.msra.mxu0 %v1455
        %1506 = vmatprep.subr.bf16.mxu0 0
        %1507 = vmatpush1.bf16.msra.mxu0 %v1456
        %1508 = vmatprep.subr.bf16.mxu0 0
        %1509 = vmatpush1.bf16.msra.mxu0 %v1457
        %1510 = vmatprep.subr.bf16.mxu0 0
        %1511 = vmatpush1.bf16.msra.mxu0 %v1458
        %1512 = vmatprep.subr.bf16.mxu0 0
        %1513 = vmatpush1.bf16.msra.mxu0 %v1459
        %1514 = vmatprep.subr.bf16.mxu0 0
        %1515 = vmatpush1.bf16.msra.mxu0 %v1482
        %1516 = vmatprep.mubr.bf16.mxu0 %v1478
        %1517 = vmatmul.mubr.bf16.gmra.mrb[0].mxu0 %v1347
        %v1518 = vpop.f32.mrb[0].mxu0
        %v1519 = vadd.f32 0.0, %v1518
        %v1520 = vpop.f32.mrb[0].mxu0
        %v1521 = vpop.f32.mrb[0].mxu0
        %v1522 = vpop.f32.mrb[0].mxu0
        %1523 = vdwg.mxu0
        %v1524 = vadd.f32 %v1346, %v1519
        %s1525 = scalar_lea.vmem %s5, 128
        %v1526 = vld [vmem:[%s1525] sm:$0xf]
        %v1527 = vld [vmem:[%s1525 + $0x4] sm:$0xf]
        %v1528 = vld [vmem:[%s1525 + $0x8] sm:$0xf]
        %v1529 = vld [vmem:[%s1525 + $0xc] sm:$0xf]
        %v1530 = vld [vmem:[%s1525 + $0x10] sm:$0xf]
        %v1531 = vld [vmem:[%s1525 + $0x14] sm:$0xf]
        %v1532 = vld [vmem:[%s1525 + $0x18] sm:$0xf]
        %v1533 = vld [vmem:[%s1525 + $0x1c] sm:$0xf]
        %v1534 = vld [vmem:[%s1525 + $0x20] sm:$0xf]
        %v1535 = vld [vmem:[%s1525 + $0x24] sm:$0xf]
        %v1536 = vld [vmem:[%s1525 + $0x28] sm:$0xf]
        %v1537 = vld [vmem:[%s1525 + $0x2c] sm:$0xf]
        %v1538 = vld [vmem:[%s1525 + $0x30] sm:$0xf]
        %v1539 = vld [vmem:[%s1525 + $0x34] sm:$0xf]
        %v1540 = vld [vmem:[%s1525 + $0x38] sm:$0xf]
        %v1541 = vld [vmem:[%s1525 + $0x3c] sm:$0xf]
        %v1542 = vld [vmem:[%s1525 + $0x40] sm:$0xf]
        %v1543 = vld [vmem:[%s1525 + $0x44] sm:$0xf]
        %v1544 = vld [vmem:[%s1525 + $0x48] sm:$0xf]
        %v1545 = vld [vmem:[%s1525 + $0x4c] sm:$0xf]
        %v1546 = vld [vmem:[%s1525 + $0x50] sm:$0xf]
        %v1547 = vld [vmem:[%s1525 + $0x54] sm:$0xf]
        %v1548 = vld [vmem:[%s1525 + $0x58] sm:$0xf]
        %v1549 = vld [vmem:[%s1525 + $0x5c] sm:$0xf]
        %v1550 = vld [vmem:[%s1525 + $0x60] sm:$0xf]
        %v1551 = vld [vmem:[%s1525 + $0x64] sm:$0xf]
        %v1552 = vld [vmem:[%s1525 + $0x68] sm:$0xf]
        %v1553 = vld [vmem:[%s1525 + $0x6c] sm:$0xf]
        %v1554 = vld [vmem:[%s1525 + $0x70] sm:$0xf]
        %v1555 = vld [vmem:[%s1525 + $0x74] sm:$0xf]
        %v1556 = vld [vmem:[%s1525 + $0x78] sm:$0xf]
        %v1557 = vld [vmem:[%s1525 + $0x7c] sm:$0x1]
        %v1559 = vshrl.u32 %v1347, 16
        %v1561 = vshrl.u32 %v1348, 16
        %v1596 = vunpack.c.l.b16 %v1526
        %v1597 = vunpack.c.l.b16 %v1527
        %v1598 = vunpack.c.l.b16 %v1528
        %v1599 = vunpack.c.l.b16 %v1529
        %v1600 = vunpack.c.l.b16 %v1530
        %v1601 = vunpack.c.l.b16 %v1531
        %v1602 = vunpack.c.l.b16 %v1532
        %v1603 = vunpack.c.l.b16 %v1533
        %v1604 = vunpack.c.l.b16 %v1534
        %v1605 = vunpack.c.l.b16 %v1535
        %v1606 = vunpack.c.l.b16 %v1536
        %v1607 = vunpack.c.l.b16 %v1537
        %v1608 = vunpack.c.l.b16 %v1538
        %v1609 = vunpack.c.l.b16 %v1539
        %v1610 = vunpack.c.l.b16 %v1540
        %v1611 = vunpack.c.l.b16 %v1541
        %v1612 = vunpack.c.l.b16 %v1542
        %v1613 = vunpack.c.l.b16 %v1543
        %v1614 = vunpack.c.l.b16 %v1544
        %v1615 = vunpack.c.l.b16 %v1545
        %v1616 = vunpack.c.l.b16 %v1546
        %v1617 = vunpack.c.l.b16 %v1547
        %v1618 = vunpack.c.l.b16 %v1548
        %v1619 = vunpack.c.l.b16 %v1549
        %v1620 = vunpack.c.l.b16 %v1550
        %v1621 = vunpack.c.l.b16 %v1551
        %v1622 = vunpack.c.l.b16 %v1552
        %v1623 = vunpack.c.l.b16 %v1553
        %v1624 = vunpack.c.l.b16 %v1554
        %v1625 = vunpack.c.l.b16 %v1555
        %v1626 = vunpack.c.l.b16 %v1556
        %v1627 = vunpack.c.l.b16 %v1557
        %v1628 = vpack.c.b16 %v1597, %v1596
        %v1629 = vpack.c.b16 %v1599, %v1598
        %v1630 = vpack.c.b16 %v1601, %v1600
        %v1631 = vpack.c.b16 %v1603, %v1602
        %v1632 = vpack.c.b16 %v1605, %v1604
        %v1633 = vpack.c.b16 %v1607, %v1606
        %v1634 = vpack.c.b16 %v1609, %v1608
        %v1635 = vpack.c.b16 %v1611, %v1610
        %v1636 = vpack.c.b16 %v1613, %v1612
        %v1637 = vpack.c.b16 %v1615, %v1614
        %v1638 = vpack.c.b16 %v1617, %v1616
        %v1639 = vpack.c.b16 %v1619, %v1618
        %v1640 = vpack.c.b16 %v1621, %v1620
        %v1641 = vpack.c.b16 %v1623, %v1622
        %v1642 = vpack.c.b16 %v1625, %v1624
        %v1643 = vpack.c.b16 %v1627, %v1626
        %v1660 = vsel %vm1476, %v1561, 0
        %v1663 = vsel %vm1480, %v1643, 0
        %1665 = vmatprep.subr.bf16.mxu0 0
        %1666 = vmatpush1.bf16.msra.mxu0 %v1628
        %1667 = vmatprep.subr.bf16.mxu0 0
        %1668 = vmatpush1.bf16.msra.mxu0 %v1629
        %1669 = vmatprep.subr.bf16.mxu0 0
        %1670 = vmatpush1.bf16.msra.mxu0 %v1630
        %1671 = vmatprep.subr.bf16.mxu0 0
        %1672 = vmatpush1.bf16.msra.mxu0 %v1631
        %1673 = vmatprep.subr.bf16.mxu0 0
        %1674 = vmatpush1.bf16.msra.mxu0 %v1632
        %1675 = vmatprep.subr.bf16.mxu0 0
        %1676 = vmatpush1.bf16.msra.mxu0 %v1633
        %1677 = vmatprep.subr.bf16.mxu0 0
        %1678 = vmatpush1.bf16.msra.mxu0 %v1634
        %1679 = vmatprep.subr.bf16.mxu0 0
        %1680 = vmatpush1.bf16.msra.mxu0 %v1635
        %1681 = vmatprep.subr.bf16.mxu0 0
        %1682 = vmatpush1.bf16.msra.mxu0 %v1636
        %1683 = vmatprep.subr.bf16.mxu0 0
        %1684 = vmatpush1.bf16.msra.mxu0 %v1637
        %1685 = vmatprep.subr.bf16.mxu0 0
        %1686 = vmatpush1.bf16.msra.mxu0 %v1638
        %1687 = vmatprep.subr.bf16.mxu0 0
        %1688 = vmatpush1.bf16.msra.mxu0 %v1639
        %1689 = vmatprep.subr.bf16.mxu0 0
        %1690 = vmatpush1.bf16.msra.mxu0 %v1640
        %1691 = vmatprep.subr.bf16.mxu0 0
        %1692 = vmatpush1.bf16.msra.mxu0 %v1641
        %1693 = vmatprep.subr.bf16.mxu0 0
        %1694 = vmatpush1.bf16.msra.mxu0 %v1642
        %1695 = vmatprep.subr.bf16.mxu0 0
        %1696 = vmatpush1.bf16.msra.mxu0 %v1663
        %1697 = vmatprep.mubr.bf16.mxu0 %v1660
        %1698 = vmatmul.mubr.bf16.gmra.mrb[0].mxu0 %v1559
        %v1699 = vpop.f32.mrb[0].mxu0
        %v1700 = vadd.f32 0.0, %v1699
        %v1701 = vpop.f32.mrb[0].mxu0
        %v1702 = vpop.f32.mrb[0].mxu0
        %v1703 = vpop.f32.mrb[0].mxu0
        %1704 = vdwg.mxu0
        %v1705 = vadd.f32 %v1524, %v1700
        %s1706 = scalar_lea.vmem %s5, 256
        %v1707 = vld [vmem:[%s1706] sm:$0xf]
        %v1708 = vld [vmem:[%s1706 + $0x4] sm:$0xf]
        %v1709 = vld [vmem:[%s1706 + $0x8] sm:$0xf]
        %v1710 = vld [vmem:[%s1706 + $0xc] sm:$0xf]
        %v1711 = vld [vmem:[%s1706 + $0x10] sm:$0xf]
        %v1712 = vld [vmem:[%s1706 + $0x14] sm:$0xf]
        %v1713 = vld [vmem:[%s1706 + $0x18] sm:$0xf]
        %v1714 = vld [vmem:[%s1706 + $0x1c] sm:$0xf]
        %v1715 = vld [vmem:[%s1706 + $0x20] sm:$0xf]
        %v1716 = vld [vmem:[%s1706 + $0x24] sm:$0xf]
        %v1717 = vld [vmem:[%s1706 + $0x28] sm:$0xf]
        %v1718 = vld [vmem:[%s1706 + $0x2c] sm:$0xf]
        %v1719 = vld [vmem:[%s1706 + $0x30] sm:$0xf]
        %v1720 = vld [vmem:[%s1706 + $0x34] sm:$0xf]
        %v1721 = vld [vmem:[%s1706 + $0x38] sm:$0xf]
        %v1722 = vld [vmem:[%s1706 + $0x3c] sm:$0xf]
        %v1723 = vld [vmem:[%s1706 + $0x40] sm:$0xf]
        %v1724 = vld [vmem:[%s1706 + $0x44] sm:$0xf]
        %v1725 = vld [vmem:[%s1706 + $0x48] sm:$0xf]
        %v1726 = vld [vmem:[%s1706 + $0x4c] sm:$0xf]
        %v1727 = vld [vmem:[%s1706 + $0x50] sm:$0xf]
        %v1728 = vld [vmem:[%s1706 + $0x54] sm:$0xf]
        %v1729 = vld [vmem:[%s1706 + $0x58] sm:$0xf]
        %v1730 = vld [vmem:[%s1706 + $0x5c] sm:$0xf]
        %v1731 = vld [vmem:[%s1706 + $0x60] sm:$0xf]
        %v1732 = vld [vmem:[%s1706 + $0x64] sm:$0xf]
        %v1733 = vld [vmem:[%s1706 + $0x68] sm:$0xf]
        %v1734 = vld [vmem:[%s1706 + $0x6c] sm:$0xf]
        %v1735 = vld [vmem:[%s1706 + $0x70] sm:$0xf]
        %v1736 = vld [vmem:[%s1706 + $0x74] sm:$0xf]
        %v1737 = vld [vmem:[%s1706 + $0x78] sm:$0xf]
        %v1738 = vld [vmem:[%s1706 + $0x7c] sm:$0x1]
        %v1741 = vrot.slane %v1347, 1
        %v1742 = vrot.slane %v1348, 1
        %v1776 = vunpack.c.l.b16 %v1707
        %v1777 = vunpack.c.l.b16 %v1708
        %v1778 = vunpack.c.l.b16 %v1709
        %v1779 = vunpack.c.l.b16 %v1710
        %v1780 = vunpack.c.l.b16 %v1711
        %v1781 = vunpack.c.l.b16 %v1712
        %v1782 = vunpack.c.l.b16 %v1713
        %v1783 = vunpack.c.l.b16 %v1714
        %v1784 = vunpack.c.l.b16 %v1715
        %v1785 = vunpack.c.l.b16 %v1716
        %v1786 = vunpack.c.l.b16 %v1717
        %v1787 = vunpack.c.l.b16 %v1718
        %v1788 = vunpack.c.l.b16 %v1719
        %v1789 = vunpack.c.l.b16 %v1720
        %v1790 = vunpack.c.l.b16 %v1721
        %v1791 = vunpack.c.l.b16 %v1722
        %v1792 = vunpack.c.l.b16 %v1723
        %v1793 = vunpack.c.l.b16 %v1724
        %v1794 = vunpack.c.l.b16 %v1725
        %v1795 = vunpack.c.l.b16 %v1726
        %v1796 = vunpack.c.l.b16 %v1727
        %v1797 = vunpack.c.l.b16 %v1728
        %v1798 = vunpack.c.l.b16 %v1729
        %v1799 = vunpack.c.l.b16 %v1730
        %v1800 = vunpack.c.l.b16 %v1731
        %v1801 = vunpack.c.l.b16 %v1732
        %v1802 = vunpack.c.l.b16 %v1733
        %v1803 = vunpack.c.l.b16 %v1734
        %v1804 = vunpack.c.l.b16 %v1735
        %v1805 = vunpack.c.l.b16 %v1736
        %v1806 = vunpack.c.l.b16 %v1737
        %v1807 = vunpack.c.l.b16 %v1738
        %v1808 = vpack.c.b16 %v1777, %v1776
        %v1809 = vpack.c.b16 %v1779, %v1778
        %v1810 = vpack.c.b16 %v1781, %v1780
        %v1811 = vpack.c.b16 %v1783, %v1782
        %v1812 = vpack.c.b16 %v1785, %v1784
        %v1813 = vpack.c.b16 %v1787, %v1786
        %v1814 = vpack.c.b16 %v1789, %v1788
        %v1815 = vpack.c.b16 %v1791, %v1790
        %v1816 = vpack.c.b16 %v1793, %v1792
        %v1817 = vpack.c.b16 %v1795, %v1794
        %v1818 = vpack.c.b16 %v1797, %v1796
        %v1819 = vpack.c.b16 %v1799, %v1798
        %v1820 = vpack.c.b16 %v1801, %v1800
        %v1821 = vpack.c.b16 %v1803, %v1802
        %v1822 = vpack.c.b16 %v1805, %v1804
        %v1823 = vpack.c.b16 %v1807, %v1806
        %v1840 = vsel %vm1476, %v1742, 0
        %v1843 = vsel %vm1480, %v1823, 0
        %1845 = vmatprep.subr.bf16.mxu0 0
        %1846 = vmatpush1.bf16.msra.mxu0 %v1808
        %1847 = vmatprep.subr.bf16.mxu0 0
        %1848 = vmatpush1.bf16.msra.mxu0 %v1809
        %1849 = vmatprep.subr.bf16.mxu0 0
        %1850 = vmatpush1.bf16.msra.mxu0 %v1810
        %1851 = vmatprep.subr.bf16.mxu0 0
        %1852 = vmatpush1.bf16.msra.mxu0 %v1811
        %1853 = vmatprep.subr.bf16.mxu0 0
        %1854 = vmatpush1.bf16.msra.mxu0 %v1812
        %1855 = vmatprep.subr.bf16.mxu0 0
        %1856 = vmatpush1.bf16.msra.mxu0 %v1813
        %1857 = vmatprep.subr.bf16.mxu0 0
        %1858 = vmatpush1.bf16.msra.mxu0 %v1814
        %1859 = vmatprep.subr.bf16.mxu0 0
        %1860 = vmatpush1.bf16.msra.mxu0 %v1815
        %1861 = vmatprep.subr.bf16.mxu0 0
        %1862 = vmatpush1.bf16.msra.mxu0 %v1816
        %1863 = vmatprep.subr.bf16.mxu0 0
        %1864 = vmatpush1.bf16.msra.mxu0 %v1817
        %1865 = vmatprep.subr.bf16.mxu0 0
        %1866 = vmatpush1.bf16.msra.mxu0 %v1818
        %1867 = vmatprep.subr.bf16.mxu0 0
        %1868 = vmatpush1.bf16.msra.mxu0 %v1819
        %1869 = vmatprep.subr.bf16.mxu0 0
        %1870 = vmatpush1.bf16.msra.mxu0 %v1820
        %1871 = vmatprep.subr.bf16.mxu0 0
        %1872 = vmatpush1.bf16.msra.mxu0 %v1821
        %1873 = vmatprep.subr.bf16.mxu0 0
        %1874 = vmatpush1.bf16.msra.mxu0 %v1822
        %1875 = vmatprep.subr.bf16.mxu0 0
        %1876 = vmatpush1.bf16.msra.mxu0 %v1843
        %1877 = vmatprep.mubr.bf16.mxu0 %v1840
        %1878 = vmatmul.mubr.bf16.gmra.mrb[0].mxu0 %v1741
        %v1879 = vpop.f32.mrb[0].mxu0
        %v1880 = vadd.f32 0.0, %v1879
        %v1881 = vpop.f32.mrb[0].mxu0
        %v1882 = vpop.f32.mrb[0].mxu0
        %v1883 = vpop.f32.mrb[0].mxu0
        %1884 = vdwg.mxu0
        %v1885 = vadd.f32 %v1705, %v1880
        %s1886 = scalar_lea.vmem %s5, 384
        %v1887 = vld [vmem:[%s1886] sm:$0xf]
        %v1888 = vld [vmem:[%s1886 + $0x4] sm:$0xf]
        %v1889 = vld [vmem:[%s1886 + $0x8] sm:$0xf]
        %v1890 = vld [vmem:[%s1886 + $0xc] sm:$0xf]
        %v1891 = vld [vmem:[%s1886 + $0x10] sm:$0xf]
        %v1892 = vld [vmem:[%s1886 + $0x14] sm:$0xf]
        %v1893 = vld [vmem:[%s1886 + $0x18] sm:$0xf]
        %v1894 = vld [vmem:[%s1886 + $0x1c] sm:$0xf]
        %v1895 = vld [vmem:[%s1886 + $0x20] sm:$0xf]
        %v1896 = vld [vmem:[%s1886 + $0x24] sm:$0xf]
        %v1897 = vld [vmem:[%s1886 + $0x28] sm:$0xf]
        %v1898 = vld [vmem:[%s1886 + $0x2c] sm:$0xf]
        %v1899 = vld [vmem:[%s1886 + $0x30] sm:$0xf]
        %v1900 = vld [vmem:[%s1886 + $0x34] sm:$0xf]
        %v1901 = vld [vmem:[%s1886 + $0x38] sm:$0xf]
        %v1902 = vld [vmem:[%s1886 + $0x3c] sm:$0xf]
        %v1903 = vld [vmem:[%s1886 + $0x40] sm:$0xf]
        %v1904 = vld [vmem:[%s1886 + $0x44] sm:$0xf]
        %v1905 = vld [vmem:[%s1886 + $0x48] sm:$0xf]
        %v1906 = vld [vmem:[%s1886 + $0x4c] sm:$0xf]
        %v1907 = vld [vmem:[%s1886 + $0x50] sm:$0xf]
        %v1908 = vld [vmem:[%s1886 + $0x54] sm:$0xf]
        %v1909 = vld [vmem:[%s1886 + $0x58] sm:$0xf]
        %v1910 = vld [vmem:[%s1886 + $0x5c] sm:$0xf]
        %v1911 = vld [vmem:[%s1886 + $0x60] sm:$0xf]
        %v1912 = vld [vmem:[%s1886 + $0x64] sm:$0xf]
        %v1913 = vld [vmem:[%s1886 + $0x68] sm:$0xf]
        %v1914 = vld [vmem:[%s1886 + $0x6c] sm:$0xf]
        %v1915 = vld [vmem:[%s1886 + $0x70] sm:$0xf]
        %v1916 = vld [vmem:[%s1886 + $0x74] sm:$0xf]
        %v1917 = vld [vmem:[%s1886 + $0x78] sm:$0xf]
        %v1918 = vld [vmem:[%s1886 + $0x7c] sm:$0x1]
        %v1919 = vrot.slane %v1559, 1
        %v1920 = vrot.slane %v1561, 1
        %v1954 = vunpack.c.l.b16 %v1887
        %v1955 = vunpack.c.l.b16 %v1888
        %v1956 = vunpack.c.l.b16 %v1889
        %v1957 = vunpack.c.l.b16 %v1890
        %v1958 = vunpack.c.l.b16 %v1891
        %v1959 = vunpack.c.l.b16 %v1892
        %v1960 = vunpack.c.l.b16 %v1893
        %v1961 = vunpack.c.l.b16 %v1894
        %v1962 = vunpack.c.l.b16 %v1895
        %v1963 = vunpack.c.l.b16 %v1896
        %v1964 = vunpack.c.l.b16 %v1897
        %v1965 = vunpack.c.l.b16 %v1898
        %v1966 = vunpack.c.l.b16 %v1899
        %v1967 = vunpack.c.l.b16 %v1900
        %v1968 = vunpack.c.l.b16 %v1901
        %v1969 = vunpack.c.l.b16 %v1902
        %v1970 = vunpack.c.l.b16 %v1903
        %v1971 = vunpack.c.l.b16 %v1904
        %v1972 = vunpack.c.l.b16 %v1905
        %v1973 = vunpack.c.l.b16 %v1906
        %v1974 = vunpack.c.l.b16 %v1907
        %v1975 = vunpack.c.l.b16 %v1908
        %v1976 = vunpack.c.l.b16 %v1909
        %v1977 = vunpack.c.l.b16 %v1910
        %v1978 = vunpack.c.l.b16 %v1911
        %v1979 = vunpack.c.l.b16 %v1912
        %v1980 = vunpack.c.l.b16 %v1913
        %v1981 = vunpack.c.l.b16 %v1914
        %v1982 = vunpack.c.l.b16 %v1915
        %v1983 = vunpack.c.l.b16 %v1916
        %v1984 = vunpack.c.l.b16 %v1917
        %v1985 = vunpack.c.l.b16 %v1918
        %v1986 = vpack.c.b16 %v1955, %v1954
        %v1987 = vpack.c.b16 %v1957, %v1956
        %v1988 = vpack.c.b16 %v1959, %v1958
        %v1989 = vpack.c.b16 %v1961, %v1960
        %v1990 = vpack.c.b16 %v1963, %v1962
        %v1991 = vpack.c.b16 %v1965, %v1964
        %v1992 = vpack.c.b16 %v1967, %v1966
        %v1993 = vpack.c.b16 %v1969, %v1968
        %v1994 = vpack.c.b16 %v1971, %v1970
        %v1995 = vpack.c.b16 %v1973, %v1972
        %v1996 = vpack.c.b16 %v1975, %v1974
        %v1997 = vpack.c.b16 %v1977, %v1976
        %v1998 = vpack.c.b16 %v1979, %v1978
        %v1999 = vpack.c.b16 %v1981, %v1980
        %v2000 = vpack.c.b16 %v1983, %v1982
        %v2001 = vpack.c.b16 %v1985, %v1984
        %v2018 = vsel %vm1476, %v1920, 0
        %v2021 = vsel %vm1480, %v2001, 0
        %2023 = vmatprep.subr.bf16.mxu0 0
        %2024 = vmatpush1.bf16.msra.mxu0 %v1986
        %2025 = vmatprep.subr.bf16.mxu0 0
        %2026 = vmatpush1.bf16.msra.mxu0 %v1987
        %2027 = vmatprep.subr.bf16.mxu0 0
        %2028 = vmatpush1.bf16.msra.mxu0 %v1988
        %2029 = vmatprep.subr.bf16.mxu0 0
        %2030 = vmatpush1.bf16.msra.mxu0 %v1989
        %2031 = vmatprep.subr.bf16.mxu0 0
        %2032 = vmatpush1.bf16.msra.mxu0 %v1990
        %2033 = vmatprep.subr.bf16.mxu0 0
        %2034 = vmatpush1.bf16.msra.mxu0 %v1991
        %2035 = vmatprep.subr.bf16.mxu0 0
        %2036 = vmatpush1.bf16.msra.mxu0 %v1992
        %2037 = vmatprep.subr.bf16.mxu0 0
        %2038 = vmatpush1.bf16.msra.mxu0 %v1993
        %2039 = vmatprep.subr.bf16.mxu0 0
        %2040 = vmatpush1.bf16.msra.mxu0 %v1994
        %2041 = vmatprep.subr.bf16.mxu0 0
        %2042 = vmatpush1.bf16.msra.mxu0 %v1995
        %2043 = vmatprep.subr.bf16.mxu0 0
        %2044 = vmatpush1.bf16.msra.mxu0 %v1996
        %2045 = vmatprep.subr.bf16.mxu0 0
        %2046 = vmatpush1.bf16.msra.mxu0 %v1997
        %2047 = vmatprep.subr.bf16.mxu0 0
        %2048 = vmatpush1.bf16.msra.mxu0 %v1998
        %2049 = vmatprep.subr.bf16.mxu0 0
        %2050 = vmatpush1.bf16.msra.mxu0 %v1999
        %2051 = vmatprep.subr.bf16.mxu0 0
        %2052 = vmatpush1.bf16.msra.mxu0 %v2000
        %2053 = vmatprep.subr.bf16.mxu0 0
        %2054 = vmatpush1.bf16.msra.mxu0 %v2021
        %2055 = vmatprep.mubr.bf16.mxu0 %v2018
        %2056 = vmatmul.mubr.bf16.gmra.mrb[0].mxu0 %v1919
        %v2057 = vpop.f32.mrb[0].mxu0
        %v2058 = vadd.f32 0.0, %v2057
        %v2059 = vpop.f32.mrb[0].mxu0
        %v2060 = vpop.f32.mrb[0].mxu0
        %v2061 = vpop.f32.mrb[0].mxu0
        %2062 = vdwg.mxu0
        %v2063 = vadd.f32 %v1885, %v2058
        %s2064 = scalar_lea.vmem %s5, 512
        %v2065 = vld [vmem:[%s2064] sm:$0xf]
        %v2066 = vld [vmem:[%s2064 + $0x4] sm:$0xf]
        %v2067 = vld [vmem:[%s2064 + $0x8] sm:$0xf]
        %v2068 = vld [vmem:[%s2064 + $0xc] sm:$0xf]
        %v2069 = vld [vmem:[%s2064 + $0x10] sm:$0xf]
        %v2070 = vld [vmem:[%s2064 + $0x14] sm:$0xf]
        %v2071 = vld [vmem:[%s2064 + $0x18] sm:$0xf]
        %v2072 = vld [vmem:[%s2064 + $0x1c] sm:$0xf]
        %v2073 = vld [vmem:[%s2064 + $0x20] sm:$0xf]
        %v2074 = vld [vmem:[%s2064 + $0x24] sm:$0xf]
        %v2075 = vld [vmem:[%s2064 + $0x28] sm:$0xf]
        %v2076 = vld [vmem:[%s2064 + $0x2c] sm:$0xf]
        %v2077 = vld [vmem:[%s2064 + $0x30] sm:$0xf]
        %v2078 = vld [vmem:[%s2064 + $0x34] sm:$0xf]
        %v2079 = vld [vmem:[%s2064 + $0x38] sm:$0xf]
        %v2080 = vld [vmem:[%s2064 + $0x3c] sm:$0xf]
        %v2081 = vld [vmem:[%s2064 + $0x40] sm:$0xf]
        %v2082 = vld [vmem:[%s2064 + $0x44] sm:$0xf]
        %v2083 = vld [vmem:[%s2064 + $0x48] sm:$0xf]
        %v2084 = vld [vmem:[%s2064 + $0x4c] sm:$0xf]
        %v2085 = vld [vmem:[%s2064 + $0x50] sm:$0xf]
        %v2086 = vld [vmem:[%s2064 + $0x54] sm:$0xf]
        %v2087 = vld [vmem:[%s2064 + $0x58] sm:$0xf]
        %v2088 = vld [vmem:[%s2064 + $0x5c] sm:$0xf]
        %v2089 = vld [vmem:[%s2064 + $0x60] sm:$0xf]
        %v2090 = vld [vmem:[%s2064 + $0x64] sm:$0xf]
        %v2091 = vld [vmem:[%s2064 + $0x68] sm:$0xf]
        %v2092 = vld [vmem:[%s2064 + $0x6c] sm:$0xf]
        %v2093 = vld [vmem:[%s2064 + $0x70] sm:$0xf]
        %v2094 = vld [vmem:[%s2064 + $0x74] sm:$0xf]
        %v2095 = vld [vmem:[%s2064 + $0x78] sm:$0xf]
        %v2096 = vld [vmem:[%s2064 + $0x7c] sm:$0x1]
        %v2097 = vrot.slane %v1347, 2
        %v2098 = vrot.slane %v1348, 2
        %v2132 = vunpack.c.l.b16 %v2065
        %v2133 = vunpack.c.l.b16 %v2066
        %v2134 = vunpack.c.l.b16 %v2067
        %v2135 = vunpack.c.l.b16 %v2068
        %v2136 = vunpack.c.l.b16 %v2069
        %v2137 = vunpack.c.l.b16 %v2070
        %v2138 = vunpack.c.l.b16 %v2071
        %v2139 = vunpack.c.l.b16 %v2072
        %v2140 = vunpack.c.l.b16 %v2073
        %v2141 = vunpack.c.l.b16 %v2074
        %v2142 = vunpack.c.l.b16 %v2075
        %v2143 = vunpack.c.l.b16 %v2076
        %v2144 = vunpack.c.l.b16 %v2077
        %v2145 = vunpack.c.l.b16 %v2078
        %v2146 = vunpack.c.l.b16 %v2079
        %v2147 = vunpack.c.l.b16 %v2080
        %v2148 = vunpack.c.l.b16 %v2081
        %v2149 = vunpack.c.l.b16 %v2082
        %v2150 = vunpack.c.l.b16 %v2083
        %v2151 = vunpack.c.l.b16 %v2084
        %v2152 = vunpack.c.l.b16 %v2085
        %v2153 = vunpack.c.l.b16 %v2086
        %v2154 = vunpack.c.l.b16 %v2087
        %v2155 = vunpack.c.l.b16 %v2088
        %v2156 = vunpack.c.l.b16 %v2089
        %v2157 = vunpack.c.l.b16 %v2090
        %v2158 = vunpack.c.l.b16 %v2091
        %v2159 = vunpack.c.l.b16 %v2092
        %v2160 = vunpack.c.l.b16 %v2093
        %v2161 = vunpack.c.l.b16 %v2094
        %v2162 = vunpack.c.l.b16 %v2095
        %v2163 = vunpack.c.l.b16 %v2096
        %v2164 = vpack.c.b16 %v2133, %v2132
        %v2165 = vpack.c.b16 %v2135, %v2134
        %v2166 = vpack.c.b16 %v2137, %v2136
        %v2167 = vpack.c.b16 %v2139, %v2138
        %v2168 = vpack.c.b16 %v2141, %v2140
        %v2169 = vpack.c.b16 %v2143, %v2142
        %v2170 = vpack.c.b16 %v2145, %v2144
        %v2171 = vpack.c.b16 %v2147, %v2146
        %v2172 = vpack.c.b16 %v2149, %v2148
        %v2173 = vpack.c.b16 %v2151, %v2150
        %v2174 = vpack.c.b16 %v2153, %v2152
        %v2175 = vpack.c.b16 %v2155, %v2154
        %v2176 = vpack.c.b16 %v2157, %v2156
        %v2177 = vpack.c.b16 %v2159, %v2158
        %v2178 = vpack.c.b16 %v2161, %v2160
        %v2179 = vpack.c.b16 %v2163, %v2162
        %v2196 = vsel %vm1476, %v2098, 0
        %v2199 = vsel %vm1480, %v2179, 0
        %2201 = vmatprep.subr.bf16.mxu0 0
        %2202 = vmatpush1.bf16.msra.mxu0 %v2164
        %2203 = vmatprep.subr.bf16.mxu0 0
        %2204 = vmatpush1.bf16.msra.mxu0 %v2165
        %2205 = vmatprep.subr.bf16.mxu0 0
        %2206 = vmatpush1.bf16.msra.mxu0 %v2166
        %2207 = vmatprep.subr.bf16.mxu0 0
        %2208 = vmatpush1.bf16.msra.mxu0 %v2167
        %2209 = vmatprep.subr.bf16.mxu0 0
        %2210 = vmatpush1.bf16.msra.mxu0 %v2168
        %2211 = vmatprep.subr.bf16.mxu0 0
        %2212 = vmatpush1.bf16.msra.mxu0 %v2169
        %2213 = vmatprep.subr.bf16.mxu0 0
        %2214 = vmatpush1.bf16.msra.mxu0 %v2170
        %2215 = vmatprep.subr.bf16.mxu0 0
        %2216 = vmatpush1.bf16.msra.mxu0 %v2171
        %2217 = vmatprep.subr.bf16.mxu0 0
        %2218 = vmatpush1.bf16.msra.mxu0 %v2172
        %2219 = vmatprep.subr.bf16.mxu0 0
        %2220 = vmatpush1.bf16.msra.mxu0 %v2173
        %2221 = vmatprep.subr.bf16.mxu0 0
        %2222 = vmatpush1.bf16.msra.mxu0 %v2174
        %2223 = vmatprep.subr.bf16.mxu0 0
        %2224 = vmatpush1.bf16.msra.mxu0 %v2175
        %2225 = vmatprep.subr.bf16.mxu0 0
        %2226 = vmatpush1.bf16.msra.mxu0 %v2176
        %2227 = vmatprep.subr.bf16.mxu0 0
        %2228 = vmatpush1.bf16.msra.mxu0 %v2177
        %2229 = vmatprep.subr.bf16.mxu0 0
        %2230 = vmatpush1.bf16.msra.mxu0 %v2178
        %2231 = vmatprep.subr.bf16.mxu0 0
        %2232 = vmatpush1.bf16.msra.mxu0 %v2199
        %2233 = vmatprep.mubr.bf16.mxu0 %v2196
        %2234 = vmatmul.mubr.bf16.gmra.mrb[0].mxu0 %v2097
        %v2235 = vpop.f32.mrb[0].mxu0
        %v2236 = vadd.f32 0.0, %v2235
        %v2237 = vpop.f32.mrb[0].mxu0
        %v2238 = vpop.f32.mrb[0].mxu0
        %v2239 = vpop.f32.mrb[0].mxu0
        %2240 = vdwg.mxu0
        %v2241 = vadd.f32 %v2063, %v2236
        %s2242 = scalar_lea.vmem %s5, 640
        %v2243 = vld [vmem:[%s2242] sm:$0xf]
        %v2244 = vld [vmem:[%s2242 + $0x4] sm:$0xf]
        %v2245 = vld [vmem:[%s2242 + $0x8] sm:$0xf]
        %v2246 = vld [vmem:[%s2242 + $0xc] sm:$0xf]
        %v2247 = vld [vmem:[%s2242 + $0x10] sm:$0xf]
        %v2248 = vld [vmem:[%s2242 + $0x14] sm:$0xf]
        %v2249 = vld [vmem:[%s2242 + $0x18] sm:$0xf]
        %v2250 = vld [vmem:[%s2242 + $0x1c] sm:$0xf]
        %v2251 = vld [vmem:[%s2242 + $0x20] sm:$0xf]
        %v2252 = vld [vmem:[%s2242 + $0x24] sm:$0xf]
        %v2253 = vld [vmem:[%s2242 + $0x28] sm:$0xf]
        %v2254 = vld [vmem:[%s2242 + $0x2c] sm:$0xf]
        %v2255 = vld [vmem:[%s2242 + $0x30] sm:$0xf]
        %v2256 = vld [vmem:[%s2242 + $0x34] sm:$0xf]
        %v2257 = vld [vmem:[%s2242 + $0x38] sm:$0xf]
        %v2258 = vld [vmem:[%s2242 + $0x3c] sm:$0xf]
        %v2259 = vld [vmem:[%s2242 + $0x40] sm:$0xf]
        %v2260 = vld [vmem:[%s2242 + $0x44] sm:$0xf]
        %v2261 = vld [vmem:[%s2242 + $0x48] sm:$0xf]
        %v2262 = vld [vmem:[%s2242 + $0x4c] sm:$0xf]
        %v2263 = vld [vmem:[%s2242 + $0x50] sm:$0xf]
        %v2264 = vld [vmem:[%s2242 + $0x54] sm:$0xf]
        %v2265 = vld [vmem:[%s2242 + $0x58] sm:$0xf]
        %v2266 = vld [vmem:[%s2242 + $0x5c] sm:$0xf]
        %v2267 = vld [vmem:[%s2242 + $0x60] sm:$0xf]
        %v2268 = vld [vmem:[%s2242 + $0x64] sm:$0xf]
        %v2269 = vld [vmem:[%s2242 + $0x68] sm:$0xf]
        %v2270 = vld [vmem:[%s2242 + $0x6c] sm:$0xf]
        %v2271 = vld [vmem:[%s2242 + $0x70] sm:$0xf]
        %v2272 = vld [vmem:[%s2242 + $0x74] sm:$0xf]
        %v2273 = vld [vmem:[%s2242 + $0x78] sm:$0xf]
        %v2274 = vld [vmem:[%s2242 + $0x7c] sm:$0x1]
        %v2275 = vrot.slane %v1559, 2
        %v2276 = vrot.slane %v1561, 2
        %v2310 = vunpack.c.l.b16 %v2243
        %v2311 = vunpack.c.l.b16 %v2244
        %v2312 = vunpack.c.l.b16 %v2245
        %v2313 = vunpack.c.l.b16 %v2246
        %v2314 = vunpack.c.l.b16 %v2247
        %v2315 = vunpack.c.l.b16 %v2248
        %v2316 = vunpack.c.l.b16 %v2249
        %v2317 = vunpack.c.l.b16 %v2250
        %v2318 = vunpack.c.l.b16 %v2251
        %v2319 = vunpack.c.l.b16 %v2252
        %v2320 = vunpack.c.l.b16 %v2253
        %v2321 = vunpack.c.l.b16 %v2254
        %v2322 = vunpack.c.l.b16 %v2255
        %v2323 = vunpack.c.l.b16 %v2256
        %v2324 = vunpack.c.l.b16 %v2257
        %v2325 = vunpack.c.l.b16 %v2258
        %v2326 = vunpack.c.l.b16 %v2259
        %v2327 = vunpack.c.l.b16 %v2260
        %v2328 = vunpack.c.l.b16 %v2261
        %v2329 = vunpack.c.l.b16 %v2262
        %v2330 = vunpack.c.l.b16 %v2263
        %v2331 = vunpack.c.l.b16 %v2264
        %v2332 = vunpack.c.l.b16 %v2265
        %v2333 = vunpack.c.l.b16 %v2266
        %v2334 = vunpack.c.l.b16 %v2267
        %v2335 = vunpack.c.l.b16 %v2268
        %v2336 = vunpack.c.l.b16 %v2269
        %v2337 = vunpack.c.l.b16 %v2270
        %v2338 = vunpack.c.l.b16 %v2271
        %v2339 = vunpack.c.l.b16 %v2272
        %v2340 = vunpack.c.l.b16 %v2273
        %v2341 = vunpack.c.l.b16 %v2274
        %v2342 = vpack.c.b16 %v2311, %v2310
        %v2343 = vpack.c.b16 %v2313, %v2312
        %v2344 = vpack.c.b16 %v2315, %v2314
        %v2345 = vpack.c.b16 %v2317, %v2316
        %v2346 = vpack.c.b16 %v2319, %v2318
        %v2347 = vpack.c.b16 %v2321, %v2320
        %v2348 = vpack.c.b16 %v2323, %v2322
        %v2349 = vpack.c.b16 %v2325, %v2324
        %v2350 = vpack.c.b16 %v2327, %v2326
        %v2351 = vpack.c.b16 %v2329, %v2328
        %v2352 = vpack.c.b16 %v2331, %v2330
        %v2353 = vpack.c.b16 %v2333, %v2332
        %v2354 = vpack.c.b16 %v2335, %v2334
        %v2355 = vpack.c.b16 %v2337, %v2336
        %v2356 = vpack.c.b16 %v2339, %v2338
        %v2357 = vpack.c.b16 %v2341, %v2340
        %v2374 = vsel %vm1476, %v2276, 0
        %v2377 = vsel %vm1480, %v2357, 0
        %2379 = vmatprep.subr.bf16.mxu0 0
        %2380 = vmatpush1.bf16.msra.mxu0 %v2342
        %2381 = vmatprep.subr.bf16.mxu0 0
        %2382 = vmatpush1.bf16.msra.mxu0 %v2343
        %2383 = vmatprep.subr.bf16.mxu0 0
        %2384 = vmatpush1.bf16.msra.mxu0 %v2344
        %2385 = vmatprep.subr.bf16.mxu0 0
        %2386 = vmatpush1.bf16.msra.mxu0 %v2345
        %2387 = vmatprep.subr.bf16.mxu0 0
        %2388 = vmatpush1.bf16.msra.mxu0 %v2346
        %2389 = vmatprep.subr.bf16.mxu0 0
        %2390 = vmatpush1.bf16.msra.mxu0 %v2347
        %2391 = vmatprep.subr.bf16.mxu0 0
        %2392 = vmatpush1.bf16.msra.mxu0 %v2348
        %2393 = vmatprep.subr.bf16.mxu0 0
        %2394 = vmatpush1.bf16.msra.mxu0 %v2349
        %2395 = vmatprep.subr.bf16.mxu0 0
        %2396 = vmatpush1.bf16.msra.mxu0 %v2350
        %2397 = vmatprep.subr.bf16.mxu0 0
        %2398 = vmatpush1.bf16.msra.mxu0 %v2351
        %2399 = vmatprep.subr.bf16.mxu0 0
        %2400 = vmatpush1.bf16.msra.mxu0 %v2352
        %2401 = vmatprep.subr.bf16.mxu0 0
        %2402 = vmatpush1.bf16.msra.mxu0 %v2353
        %2403 = vmatprep.subr.bf16.mxu0 0
        %2404 = vmatpush1.bf16.msra.mxu0 %v2354
        %2405 = vmatprep.subr.bf16.mxu0 0
        %2406 = vmatpush1.bf16.msra.mxu0 %v2355
        %2407 = vmatprep.subr.bf16.mxu0 0
        %2408 = vmatpush1.bf16.msra.mxu0 %v2356
        %2409 = vmatprep.subr.bf16.mxu0 0
        %2410 = vmatpush1.bf16.msra.mxu0 %v2377
        %2411 = vmatprep.mubr.bf16.mxu0 %v2374
        %2412 = vmatmul.mubr.bf16.gmra.mrb[0].mxu0 %v2275
        %v2413 = vpop.f32.mrb[0].mxu0
        %v2414 = vadd.f32 0.0, %v2413
        %v2415 = vpop.f32.mrb[0].mxu0
        %v2416 = vpop.f32.mrb[0].mxu0
        %v2417 = vpop.f32.mrb[0].mxu0
        %2418 = vdwg.mxu0
        %v2419 = vadd.f32 %v2241, %v2414
        %s2420 = scalar_lea.vmem %s5, 768
        %v2421 = vld [vmem:[%s2420] sm:$0xf]
        %v2422 = vld [vmem:[%s2420 + $0x4] sm:$0xf]
        %v2423 = vld [vmem:[%s2420 + $0x8] sm:$0xf]
        %v2424 = vld [vmem:[%s2420 + $0xc] sm:$0xf]
        %v2425 = vld [vmem:[%s2420 + $0x10] sm:$0xf]
        %v2426 = vld [vmem:[%s2420 + $0x14] sm:$0xf]
        %v2427 = vld [vmem:[%s2420 + $0x18] sm:$0xf]
        %v2428 = vld [vmem:[%s2420 + $0x1c] sm:$0xf]
        %v2429 = vld [vmem:[%s2420 + $0x20] sm:$0xf]
        %v2430 = vld [vmem:[%s2420 + $0x24] sm:$0xf]
        %v2431 = vld [vmem:[%s2420 + $0x28] sm:$0xf]
        %v2432 = vld [vmem:[%s2420 + $0x2c] sm:$0xf]
        %v2433 = vld [vmem:[%s2420 + $0x30] sm:$0xf]
        %v2434 = vld [vmem:[%s2420 + $0x34] sm:$0xf]
        %v2435 = vld [vmem:[%s2420 + $0x38] sm:$0xf]
        %v2436 = vld [vmem:[%s2420 + $0x3c] sm:$0xf]
        %v2437 = vld [vmem:[%s2420 + $0x40] sm:$0xf]
        %v2438 = vld [vmem:[%s2420 + $0x44] sm:$0xf]
        %v2439 = vld [vmem:[%s2420 + $0x48] sm:$0xf]
        %v2440 = vld [vmem:[%s2420 + $0x4c] sm:$0xf]
        %v2441 = vld [vmem:[%s2420 + $0x50] sm:$0xf]
        %v2442 = vld [vmem:[%s2420 + $0x54] sm:$0xf]
        %v2443 = vld [vmem:[%s2420 + $0x58] sm:$0xf]
        %v2444 = vld [vmem:[%s2420 + $0x5c] sm:$0xf]
        %v2445 = vld [vmem:[%s2420 + $0x60] sm:$0xf]
        %v2446 = vld [vmem:[%s2420 + $0x64] sm:$0xf]
        %v2447 = vld [vmem:[%s2420 + $0x68] sm:$0xf]
        %v2448 = vld [vmem:[%s2420 + $0x6c] sm:$0xf]
        %v2449 = vld [vmem:[%s2420 + $0x70] sm:$0xf]
        %v2450 = vld [vmem:[%s2420 + $0x74] sm:$0xf]
        %v2451 = vld [vmem:[%s2420 + $0x78] sm:$0xf]
        %v2452 = vld [vmem:[%s2420 + $0x7c] sm:$0x1]
        %v2453 = vrot.slane %v1347, 3
        %v2454 = vrot.slane %v1348, 3
        %v2488 = vunpack.c.l.b16 %v2421
        %v2489 = vunpack.c.l.b16 %v2422
        %v2490 = vunpack.c.l.b16 %v2423
        %v2491 = vunpack.c.l.b16 %v2424
        %v2492 = vunpack.c.l.b16 %v2425
        %v2493 = vunpack.c.l.b16 %v2426
        %v2494 = vunpack.c.l.b16 %v2427
        %v2495 = vunpack.c.l.b16 %v2428
        %v2496 = vunpack.c.l.b16 %v2429
        %v2497 = vunpack.c.l.b16 %v2430
        %v2498 = vunpack.c.l.b16 %v2431
        %v2499 = vunpack.c.l.b16 %v2432
        %v2500 = vunpack.c.l.b16 %v2433
        %v2501 = vunpack.c.l.b16 %v2434
        %v2502 = vunpack.c.l.b16 %v2435
        %v2503 = vunpack.c.l.b16 %v2436
        %v2504 = vunpack.c.l.b16 %v2437
        %v2505 = vunpack.c.l.b16 %v2438
        %v2506 = vunpack.c.l.b16 %v2439
        %v2507 = vunpack.c.l.b16 %v2440
        %v2508 = vunpack.c.l.b16 %v2441
        %v2509 = vunpack.c.l.b16 %v2442
        %v2510 = vunpack.c.l.b16 %v2443
        %v2511 = vunpack.c.l.b16 %v2444
        %v2512 = vunpack.c.l.b16 %v2445
        %v2513 = vunpack.c.l.b16 %v2446
        %v2514 = vunpack.c.l.b16 %v2447
        %v2515 = vunpack.c.l.b16 %v2448
        %v2516 = vunpack.c.l.b16 %v2449
        %v2517 = vunpack.c.l.b16 %v2450
        %v2518 = vunpack.c.l.b16 %v2451
        %v2519 = vunpack.c.l.b16 %v2452
        %v2520 = vpack.c.b16 %v2489, %v2488
        %v2521 = vpack.c.b16 %v2491, %v2490
        %v2522 = vpack.c.b16 %v2493, %v2492
        %v2523 = vpack.c.b16 %v2495, %v2494
        %v2524 = vpack.c.b16 %v2497, %v2496
        %v2525 = vpack.c.b16 %v2499, %v2498
        %v2526 = vpack.c.b16 %v2501, %v2500
        %v2527 = vpack.c.b16 %v2503, %v2502
        %v2528 = vpack.c.b16 %v2505, %v2504
        %v2529 = vpack.c.b16 %v2507, %v2506
        %v2530 = vpack.c.b16 %v2509, %v2508
        %v2531 = vpack.c.b16 %v2511, %v2510
        %v2532 = vpack.c.b16 %v2513, %v2512
        %v2533 = vpack.c.b16 %v2515, %v2514
        %v2534 = vpack.c.b16 %v2517, %v2516
        %v2535 = vpack.c.b16 %v2519, %v2518
        %v2552 = vsel %vm1476, %v2454, 0
        %v2555 = vsel %vm1480, %v2535, 0
        %2557 = vmatprep.subr.bf16.mxu0 0
        %2558 = vmatpush1.bf16.msra.mxu0 %v2520
        %2559 = vmatprep.subr.bf16.mxu0 0
        %2560 = vmatpush1.bf16.msra.mxu0 %v2521
        %2561 = vmatprep.subr.bf16.mxu0 0
        %2562 = vmatpush1.bf16.msra.mxu0 %v2522
        %2563 = vmatprep.subr.bf16.mxu0 0
        %2564 = vmatpush1.bf16.msra.mxu0 %v2523
        %2565 = vmatprep.subr.bf16.mxu0 0
        %2566 = vmatpush1.bf16.msra.mxu0 %v2524
        %2567 = vmatprep.subr.bf16.mxu0 0
        %2568 = vmatpush1.bf16.msra.mxu0 %v2525
        %2569 = vmatprep.subr.bf16.mxu0 0
        %2570 = vmatpush1.bf16.msra.mxu0 %v2526
        %2571 = vmatprep.subr.bf16.mxu0 0
        %2572 = vmatpush1.bf16.msra.mxu0 %v2527
        %2573 = vmatprep.subr.bf16.mxu0 0
        %2574 = vmatpush1.bf16.msra.mxu0 %v2528
        %2575 = vmatprep.subr.bf16.mxu0 0
        %2576 = vmatpush1.bf16.msra.mxu0 %v2529
        %2577 = vmatprep.subr.bf16.mxu0 0
        %2578 = vmatpush1.bf16.msra.mxu0 %v2530
        %2579 = vmatprep.subr.bf16.mxu0 0
        %2580 = vmatpush1.bf16.msra.mxu0 %v2531
        %2581 = vmatprep.subr.bf16.mxu0 0
        %2582 = vmatpush1.bf16.msra.mxu0 %v2532
        %2583 = vmatprep.subr.bf16.mxu0 0
        %2584 = vmatpush1.bf16.msra.mxu0 %v2533
        %2585 = vmatprep.subr.bf16.mxu0 0
        %2586 = vmatpush1.bf16.msra.mxu0 %v2534
        %2587 = vmatprep.subr.bf16.mxu0 0
        %2588 = vmatpush1.bf16.msra.mxu0 %v2555
        %2589 = vmatprep.mubr.bf16.mxu0 %v2552
        %2590 = vmatmul.mubr.bf16.gmra.mrb[0].mxu0 %v2453
        %v2591 = vpop.f32.mrb[0].mxu0
        %v2592 = vadd.f32 0.0, %v2591
        %v2593 = vpop.f32.mrb[0].mxu0
        %v2594 = vpop.f32.mrb[0].mxu0
        %v2595 = vpop.f32.mrb[0].mxu0
        %2596 = vdwg.mxu0
        %v2597 = vadd.f32 %v2419, %v2592
        %s2598 = scalar_lea.vmem %s5, 896
        %v2599 = vld [vmem:[%s2598] sm:$0xf]
        %v2600 = vld [vmem:[%s2598 + $0x4] sm:$0xf]
        %v2601 = vld [vmem:[%s2598 + $0x8] sm:$0xf]
        %v2602 = vld [vmem:[%s2598 + $0xc] sm:$0xf]
        %v2603 = vld [vmem:[%s2598 + $0x10] sm:$0xf]
        %v2604 = vld [vmem:[%s2598 + $0x14] sm:$0xf]
        %v2605 = vld [vmem:[%s2598 + $0x18] sm:$0xf]
        %v2606 = vld [vmem:[%s2598 + $0x1c] sm:$0xf]
        %v2607 = vld [vmem:[%s2598 + $0x20] sm:$0xf]
        %v2608 = vld [vmem:[%s2598 + $0x24] sm:$0xf]
        %v2609 = vld [vmem:[%s2598 + $0x28] sm:$0xf]
        %v2610 = vld [vmem:[%s2598 + $0x2c] sm:$0xf]
        %v2611 = vld [vmem:[%s2598 + $0x30] sm:$0xf]
        %v2612 = vld [vmem:[%s2598 + $0x34] sm:$0xf]
        %v2613 = vld [vmem:[%s2598 + $0x38] sm:$0xf]
        %v2614 = vld [vmem:[%s2598 + $0x3c] sm:$0xf]
        %v2615 = vld [vmem:[%s2598 + $0x40] sm:$0xf]
        %v2616 = vld [vmem:[%s2598 + $0x44] sm:$0xf]
        %v2617 = vld [vmem:[%s2598 + $0x48] sm:$0xf]
        %v2618 = vld [vmem:[%s2598 + $0x4c] sm:$0xf]
        %v2619 = vld [vmem:[%s2598 + $0x50] sm:$0xf]
        %v2620 = vld [vmem:[%s2598 + $0x54] sm:$0xf]
        %v2621 = vld [vmem:[%s2598 + $0x58] sm:$0xf]
        %v2622 = vld [vmem:[%s2598 + $0x5c] sm:$0xf]
        %v2623 = vld [vmem:[%s2598 + $0x60] sm:$0xf]
        %v2624 = vld [vmem:[%s2598 + $0x64] sm:$0xf]
        %v2625 = vld [vmem:[%s2598 + $0x68] sm:$0xf]
        %v2626 = vld [vmem:[%s2598 + $0x6c] sm:$0xf]
        %v2627 = vld [vmem:[%s2598 + $0x70] sm:$0xf]
        %v2628 = vld [vmem:[%s2598 + $0x74] sm:$0xf]
        %v2629 = vld [vmem:[%s2598 + $0x78] sm:$0xf]
        %v2630 = vld [vmem:[%s2598 + $0x7c] sm:$0x1]
        %v2631 = vrot.slane %v1559, 3
        %v2632 = vrot.slane %v1561, 3
        %v2666 = vunpack.c.l.b16 %v2599
        %v2667 = vunpack.c.l.b16 %v2600
        %v2668 = vunpack.c.l.b16 %v2601
        %v2669 = vunpack.c.l.b16 %v2602
        %v2670 = vunpack.c.l.b16 %v2603
        %v2671 = vunpack.c.l.b16 %v2604
        %v2672 = vunpack.c.l.b16 %v2605
        %v2673 = vunpack.c.l.b16 %v2606
        %v2674 = vunpack.c.l.b16 %v2607
        %v2675 = vunpack.c.l.b16 %v2608
        %v2676 = vunpack.c.l.b16 %v2609
        %v2677 = vunpack.c.l.b16 %v2610
        %v2678 = vunpack.c.l.b16 %v2611
        %v2679 = vunpack.c.l.b16 %v2612
        %v2680 = vunpack.c.l.b16 %v2613
        %v2681 = vunpack.c.l.b16 %v2614
        %v2682 = vunpack.c.l.b16 %v2615
        %v2683 = vunpack.c.l.b16 %v2616
        %v2684 = vunpack.c.l.b16 %v2617
        %v2685 = vunpack.c.l.b16 %v2618
        %v2686 = vunpack.c.l.b16 %v2619
        %v2687 = vunpack.c.l.b16 %v2620
        %v2688 = vunpack.c.l.b16 %v2621
        %v2689 = vunpack.c.l.b16 %v2622
        %v2690 = vunpack.c.l.b16 %v2623
        %v2691 = vunpack.c.l.b16 %v2624
        %v2692 = vunpack.c.l.b16 %v2625
        %v2693 = vunpack.c.l.b16 %v2626
        %v2694 = vunpack.c.l.b16 %v2627
        %v2695 = vunpack.c.l.b16 %v2628
        %v2696 = vunpack.c.l.b16 %v2629
        %v2697 = vunpack.c.l.b16 %v2630
        %v2698 = vpack.c.b16 %v2667, %v2666
        %v2699 = vpack.c.b16 %v2669, %v2668
        %v2700 = vpack.c.b16 %v2671, %v2670
        %v2701 = vpack.c.b16 %v2673, %v2672
        %v2702 = vpack.c.b16 %v2675, %v2674
        %v2703 = vpack.c.b16 %v2677, %v2676
        %v2704 = vpack.c.b16 %v2679, %v2678
        %v2705 = vpack.c.b16 %v2681, %v2680
        %v2706 = vpack.c.b16 %v2683, %v2682
        %v2707 = vpack.c.b16 %v2685, %v2684
        %v2708 = vpack.c.b16 %v2687, %v2686
        %v2709 = vpack.c.b16 %v2689, %v2688
        %v2710 = vpack.c.b16 %v2691, %v2690
        %v2711 = vpack.c.b16 %v2693, %v2692
        %v2712 = vpack.c.b16 %v2695, %v2694
        %v2713 = vpack.c.b16 %v2697, %v2696
        %v2730 = vsel %vm1476, %v2632, 0
        %v2733 = vsel %vm1480, %v2713, 0
        %2735 = vmatprep.subr.bf16.mxu0 0
        %2736 = vmatpush1.bf16.msra.mxu0 %v2698
        %2737 = vmatprep.subr.bf16.mxu0 0
        %2738 = vmatpush1.bf16.msra.mxu0 %v2699
        %2739 = vmatprep.subr.bf16.mxu0 0
        %2740 = vmatpush1.bf16.msra.mxu0 %v2700
        %2741 = vmatprep.subr.bf16.mxu0 0
        %2742 = vmatpush1.bf16.msra.mxu0 %v2701
        %2743 = vmatprep.subr.bf16.mxu0 0
        %2744 = vmatpush1.bf16.msra.mxu0 %v2702
        %2745 = vmatprep.subr.bf16.mxu0 0
        %2746 = vmatpush1.bf16.msra.mxu0 %v2703
        %2747 = vmatprep.subr.bf16.mxu0 0
        %2748 = vmatpush1.bf16.msra.mxu0 %v2704
        %2749 = vmatprep.subr.bf16.mxu0 0
        %2750 = vmatpush1.bf16.msra.mxu0 %v2705
        %2751 = vmatprep.subr.bf16.mxu0 0
        %2752 = vmatpush1.bf16.msra.mxu0 %v2706
        %2753 = vmatprep.subr.bf16.mxu0 0
        %2754 = vmatpush1.bf16.msra.mxu0 %v2707
        %2755 = vmatprep.subr.bf16.mxu0 0
        %2756 = vmatpush1.bf16.msra.mxu0 %v2708
        %2757 = vmatprep.subr.bf16.mxu0 0
        %2758 = vmatpush1.bf16.msra.mxu0 %v2709
        %2759 = vmatprep.subr.bf16.mxu0 0
        %2760 = vmatpush1.bf16.msra.mxu0 %v2710
        %2761 = vmatprep.subr.bf16.mxu0 0
        %2762 = vmatpush1.bf16.msra.mxu0 %v2711
        %2763 = vmatprep.subr.bf16.mxu0 0
        %2764 = vmatpush1.bf16.msra.mxu0 %v2712
        %2765 = vmatprep.subr.bf16.mxu0 0
        %2766 = vmatpush1.bf16.msra.mxu0 %v2733
        %2767 = vmatprep.mubr.bf16.mxu0 %v2730
        %2768 = vmatmul.mubr.bf16.gmra.mrb[0].mxu0 %v2631
        %v2769 = vpop.f32.mrb[0].mxu0
        %v2770 = vadd.f32 0.0, %v2769
        %v2771 = vpop.f32.mrb[0].mxu0
        %v2772 = vpop.f32.mrb[0].mxu0
        %v2773 = vpop.f32.mrb[0].mxu0
        %2774 = vdwg.mxu0
        %v2775 = vadd.f32 %v2597, %v2770
        %v2776 = vpack.c.bf16 %v1344, %v1344
        %v2777 = vpack.c.bf16 %v1345, %v1345
        %s2778 = scalar_lea.vmem %s5, 1024
        %v2779 = vld [vmem:[%s2778] sm:$0xf]
        %v2780 = vld [vmem:[%s2778 + $0x4] sm:$0xf]
        %v2781 = vld [vmem:[%s2778 + $0x8] sm:$0xf]
        %v2782 = vld [vmem:[%s2778 + $0xc] sm:$0xf]
        %v2783 = vld [vmem:[%s2778 + $0x10] sm:$0xf]
        %v2784 = vld [vmem:[%s2778 + $0x14] sm:$0xf]
        %v2785 = vld [vmem:[%s2778 + $0x18] sm:$0xf]
        %v2786 = vld [vmem:[%s2778 + $0x1c] sm:$0xf]
        %v2787 = vld [vmem:[%s2778 + $0x20] sm:$0xf]
        %v2788 = vld [vmem:[%s2778 + $0x24] sm:$0xf]
        %v2789 = vld [vmem:[%s2778 + $0x28] sm:$0xf]
        %v2790 = vld [vmem:[%s2778 + $0x2c] sm:$0xf]
        %v2791 = vld [vmem:[%s2778 + $0x30] sm:$0xf]
        %v2792 = vld [vmem:[%s2778 + $0x34] sm:$0xf]
        %v2793 = vld [vmem:[%s2778 + $0x38] sm:$0xf]
        %v2794 = vld [vmem:[%s2778 + $0x3c] sm:$0xf]
        %v2795 = vld [vmem:[%s2778 + $0x40] sm:$0xf]
        %v2796 = vld [vmem:[%s2778 + $0x44] sm:$0xf]
        %v2797 = vld [vmem:[%s2778 + $0x48] sm:$0xf]
        %v2798 = vld [vmem:[%s2778 + $0x4c] sm:$0xf]
        %v2799 = vld [vmem:[%s2778 + $0x50] sm:$0xf]
        %v2800 = vld [vmem:[%s2778 + $0x54] sm:$0xf]
        %v2801 = vld [vmem:[%s2778 + $0x58] sm:$0xf]
        %v2802 = vld [vmem:[%s2778 + $0x5c] sm:$0xf]
        %v2803 = vld [vmem:[%s2778 + $0x60] sm:$0xf]
        %v2804 = vld [vmem:[%s2778 + $0x64] sm:$0xf]
        %v2805 = vld [vmem:[%s2778 + $0x68] sm:$0xf]
        %v2806 = vld [vmem:[%s2778 + $0x6c] sm:$0xf]
        %v2807 = vld [vmem:[%s2778 + $0x70] sm:$0xf]
        %v2808 = vld [vmem:[%s2778 + $0x74] sm:$0xf]
        %v2809 = vld [vmem:[%s2778 + $0x78] sm:$0xf]
        %v2810 = vld [vmem:[%s2778 + $0x7c] sm:$0x1]
        %v2843 = vunpack.c.l.b16 %v2779
        %v2844 = vunpack.c.l.b16 %v2780
        %v2845 = vunpack.c.l.b16 %v2781
        %v2846 = vunpack.c.l.b16 %v2782
        %v2847 = vunpack.c.l.b16 %v2783
        %v2848 = vunpack.c.l.b16 %v2784
        %v2849 = vunpack.c.l.b16 %v2785
        %v2850 = vunpack.c.l.b16 %v2786
        %v2851 = vunpack.c.l.b16 %v2787
        %v2852 = vunpack.c.l.b16 %v2788
        %v2853 = vunpack.c.l.b16 %v2789
        %v2854 = vunpack.c.l.b16 %v2790
        %v2855 = vunpack.c.l.b16 %v2791
        %v2856 = vunpack.c.l.b16 %v2792
        %v2857 = vunpack.c.l.b16 %v2793
        %v2858 = vunpack.c.l.b16 %v2794
        %v2859 = vunpack.c.l.b16 %v2795
        %v2860 = vunpack.c.l.b16 %v2796
        %v2861 = vunpack.c.l.b16 %v2797
        %v2862 = vunpack.c.l.b16 %v2798
        %v2863 = vunpack.c.l.b16 %v2799
        %v2864 = vunpack.c.l.b16 %v2800
        %v2865 = vunpack.c.l.b16 %v2801
        %v2866 = vunpack.c.l.b16 %v2802
        %v2867 = vunpack.c.l.b16 %v2803
        %v2868 = vunpack.c.l.b16 %v2804
        %v2869 = vunpack.c.l.b16 %v2805
        %v2870 = vunpack.c.l.b16 %v2806
        %v2871 = vunpack.c.l.b16 %v2807
        %v2872 = vunpack.c.l.b16 %v2808
        %v2873 = vunpack.c.l.b16 %v2809
        %v2874 = vunpack.c.l.b16 %v2810
        %v2875 = vpack.c.b16 %v2844, %v2843
        %v2876 = vpack.c.b16 %v2846, %v2845
        %v2877 = vpack.c.b16 %v2848, %v2847
        %v2878 = vpack.c.b16 %v2850, %v2849
        %v2879 = vpack.c.b16 %v2852, %v2851
        %v2880 = vpack.c.b16 %v2854, %v2853
        %v2881 = vpack.c.b16 %v2856, %v2855
        %v2882 = vpack.c.b16 %v2858, %v2857
        %v2883 = vpack.c.b16 %v2860, %v2859
        %v2884 = vpack.c.b16 %v2862, %v2861
        %v2885 = vpack.c.b16 %v2864, %v2863
        %v2886 = vpack.c.b16 %v2866, %v2865
        %v2887 = vpack.c.b16 %v2868, %v2867
        %v2888 = vpack.c.b16 %v2870, %v2869
        %v2889 = vpack.c.b16 %v2872, %v2871
        %v2890 = vpack.c.b16 %v2874, %v2873
        %v2907 = vsel %vm1476, %v2777, 0
        %v2910 = vsel %vm1480, %v2890, 0
        %2912 = vmatprep.subr.bf16.mxu0 0
        %2913 = vmatpush1.bf16.msra.mxu0 %v2875
        %2914 = vmatprep.subr.bf16.mxu0 0
        %2915 = vmatpush1.bf16.msra.mxu0 %v2876
        %2916 = vmatprep.subr.bf16.mxu0 0
        %2917 = vmatpush1.bf16.msra.mxu0 %v2877
        %2918 = vmatprep.subr.bf16.mxu0 0
        %2919 = vmatpush1.bf16.msra.mxu0 %v2878
        %2920 = vmatprep.subr.bf16.mxu0 0
        %2921 = vmatpush1.bf16.msra.mxu0 %v2879
        %2922 = vmatprep.subr.bf16.mxu0 0
        %2923 = vmatpush1.bf16.msra.mxu0 %v2880
        %2924 = vmatprep.subr.bf16.mxu0 0
        %2925 = vmatpush1.bf16.msra.mxu0 %v2881
        %2926 = vmatprep.subr.bf16.mxu0 0
        %2927 = vmatpush1.bf16.msra.mxu0 %v2882
        %2928 = vmatprep.subr.bf16.mxu0 0
        %2929 = vmatpush1.bf16.msra.mxu0 %v2883
        %2930 = vmatprep.subr.bf16.mxu0 0
        %2931 = vmatpush1.bf16.msra.mxu0 %v2884
        %2932 = vmatprep.subr.bf16.mxu0 0
        %2933 = vmatpush1.bf16.msra.mxu0 %v2885
        %2934 = vmatprep.subr.bf16.mxu0 0
        %2935 = vmatpush1.bf16.msra.mxu0 %v2886
        %2936 = vmatprep.subr.bf16.mxu0 0
        %2937 = vmatpush1.bf16.msra.mxu0 %v2887
        %2938 = vmatprep.subr.bf16.mxu0 0
        %2939 = vmatpush1.bf16.msra.mxu0 %v2888
        %2940 = vmatprep.subr.bf16.mxu0 0
        %2941 = vmatpush1.bf16.msra.mxu0 %v2889
        %2942 = vmatprep.subr.bf16.mxu0 0
        %2943 = vmatpush1.bf16.msra.mxu0 %v2910
        %2944 = vmatprep.mubr.bf16.mxu0 %v2907
        %2945 = vmatmul.mubr.bf16.gmra.mrb[0].mxu0 %v2776
        %v2946 = vpop.f32.mrb[0].mxu0
        %v2947 = vadd.f32 0.0, %v2946
        %v2948 = vpop.f32.mrb[0].mxu0
        %v2949 = vpop.f32.mrb[0].mxu0
        %v2950 = vpop.f32.mrb[0].mxu0
        %2951 = vdwg.mxu0
        %v2952 = vadd.f32 %v2775, %v2947
        %s2953 = scalar_lea.vmem %s5, 1152
        %v2954 = vld [vmem:[%s2953] sm:$0xf]
        %v2955 = vld [vmem:[%s2953 + $0x4] sm:$0xf]
        %v2956 = vld [vmem:[%s2953 + $0x8] sm:$0xf]
        %v2957 = vld [vmem:[%s2953 + $0xc] sm:$0xf]
        %v2958 = vld [vmem:[%s2953 + $0x10] sm:$0xf]
        %v2959 = vld [vmem:[%s2953 + $0x14] sm:$0xf]
        %v2960 = vld [vmem:[%s2953 + $0x18] sm:$0xf]
        %v2961 = vld [vmem:[%s2953 + $0x1c] sm:$0xf]
        %v2962 = vld [vmem:[%s2953 + $0x20] sm:$0xf]
        %v2963 = vld [vmem:[%s2953 + $0x24] sm:$0xf]
        %v2964 = vld [vmem:[%s2953 + $0x28] sm:$0xf]
        %v2965 = vld [vmem:[%s2953 + $0x2c] sm:$0xf]
        %v2966 = vld [vmem:[%s2953 + $0x30] sm:$0xf]
        %v2967 = vld [vmem:[%s2953 + $0x34] sm:$0xf]
        %v2968 = vld [vmem:[%s2953 + $0x38] sm:$0xf]
        %v2969 = vld [vmem:[%s2953 + $0x3c] sm:$0xf]
        %v2970 = vld [vmem:[%s2953 + $0x40] sm:$0xf]
        %v2971 = vld [vmem:[%s2953 + $0x44] sm:$0xf]
        %v2972 = vld [vmem:[%s2953 + $0x48] sm:$0xf]
        %v2973 = vld [vmem:[%s2953 + $0x4c] sm:$0xf]
        %v2974 = vld [vmem:[%s2953 + $0x50] sm:$0xf]
        %v2975 = vld [vmem:[%s2953 + $0x54] sm:$0xf]
        %v2976 = vld [vmem:[%s2953 + $0x58] sm:$0xf]
        %v2977 = vld [vmem:[%s2953 + $0x5c] sm:$0xf]
        %v2978 = vld [vmem:[%s2953 + $0x60] sm:$0xf]
        %v2979 = vld [vmem:[%s2953 + $0x64] sm:$0xf]
        %v2980 = vld [vmem:[%s2953 + $0x68] sm:$0xf]
        %v2981 = vld [vmem:[%s2953 + $0x6c] sm:$0xf]
        %v2982 = vld [vmem:[%s2953 + $0x70] sm:$0xf]
        %v2983 = vld [vmem:[%s2953 + $0x74] sm:$0xf]
        %v2984 = vld [vmem:[%s2953 + $0x78] sm:$0xf]
        %v2985 = vld [vmem:[%s2953 + $0x7c] sm:$0x1]
        %v2987 = vshrl.u32 %v2776, 16
        %v2989 = vshrl.u32 %v2777, 16
        %v3024 = vunpack.c.l.b16 %v2954
        %v3025 = vunpack.c.l.b16 %v2955
        %v3026 = vunpack.c.l.b16 %v2956
        %v3027 = vunpack.c.l.b16 %v2957
        %v3028 = vunpack.c.l.b16 %v2958
        %v3029 = vunpack.c.l.b16 %v2959
        %v3030 = vunpack.c.l.b16 %v2960
        %v3031 = vunpack.c.l.b16 %v2961
        %v3032 = vunpack.c.l.b16 %v2962
        %v3033 = vunpack.c.l.b16 %v2963
        %v3034 = vunpack.c.l.b16 %v2964
        %v3035 = vunpack.c.l.b16 %v2965
        %v3036 = vunpack.c.l.b16 %v2966
        %v3037 = vunpack.c.l.b16 %v2967
        %v3038 = vunpack.c.l.b16 %v2968
        %v3039 = vunpack.c.l.b16 %v2969
        %v3040 = vunpack.c.l.b16 %v2970
        %v3041 = vunpack.c.l.b16 %v2971
        %v3042 = vunpack.c.l.b16 %v2972
        %v3043 = vunpack.c.l.b16 %v2973
        %v3044 = vunpack.c.l.b16 %v2974
        %v3045 = vunpack.c.l.b16 %v2975
        %v3046 = vunpack.c.l.b16 %v2976
        %v3047 = vunpack.c.l.b16 %v2977
        %v3048 = vunpack.c.l.b16 %v2978
        %v3049 = vunpack.c.l.b16 %v2979
        %v3050 = vunpack.c.l.b16 %v2980
        %v3051 = vunpack.c.l.b16 %v2981
        %v3052 = vunpack.c.l.b16 %v2982
        %v3053 = vunpack.c.l.b16 %v2983
        %v3054 = vunpack.c.l.b16 %v2984
        %v3055 = vunpack.c.l.b16 %v2985
        %v3056 = vpack.c.b16 %v3025, %v3024
        %v3057 = vpack.c.b16 %v3027, %v3026
        %v3058 = vpack.c.b16 %v3029, %v3028
        %v3059 = vpack.c.b16 %v3031, %v3030
        %v3060 = vpack.c.b16 %v3033, %v3032
        %v3061 = vpack.c.b16 %v3035, %v3034
        %v3062 = vpack.c.b16 %v3037, %v3036
        %v3063 = vpack.c.b16 %v3039, %v3038
        %v3064 = vpack.c.b16 %v3041, %v3040
        %v3065 = vpack.c.b16 %v3043, %v3042
        %v3066 = vpack.c.b16 %v3045, %v3044
        %v3067 = vpack.c.b16 %v3047, %v3046
        %v3068 = vpack.c.b16 %v3049, %v3048
        %v3069 = vpack.c.b16 %v3051, %v3050
        %v3070 = vpack.c.b16 %v3053, %v3052
        %v3071 = vpack.c.b16 %v3055, %v3054
        %v3088 = vsel %vm1476, %v2989, 0
        %v3091 = vsel %vm1480, %v3071, 0
        %3093 = vmatprep.subr.bf16.mxu0 0
        %3094 = vmatpush1.bf16.msra.mxu0 %v3056
        %3095 = vmatprep.subr.bf16.mxu0 0
        %3096 = vmatpush1.bf16.msra.mxu0 %v3057
        %3097 = vmatprep.subr.bf16.mxu0 0
        %3098 = vmatpush1.bf16.msra.mxu0 %v3058
        %3099 = vmatprep.subr.bf16.mxu0 0
        %3100 = vmatpush1.bf16.msra.mxu0 %v3059
        %3101 = vmatprep.subr.bf16.mxu0 0
        %3102 = vmatpush1.bf16.msra.mxu0 %v3060
        %3103 = vmatprep.subr.bf16.mxu0 0
        %3104 = vmatpush1.bf16.msra.mxu0 %v3061
        %3105 = vmatprep.subr.bf16.mxu0 0
        %3106 = vmatpush1.bf16.msra.mxu0 %v3062
        %3107 = vmatprep.subr.bf16.mxu0 0
        %3108 = vmatpush1.bf16.msra.mxu0 %v3063
        %3109 = vmatprep.subr.bf16.mxu0 0
        %3110 = vmatpush1.bf16.msra.mxu0 %v3064
        %3111 = vmatprep.subr.bf16.mxu0 0
        %3112 = vmatpush1.bf16.msra.mxu0 %v3065
        %3113 = vmatprep.subr.bf16.mxu0 0
        %3114 = vmatpush1.bf16.msra.mxu0 %v3066
        %3115 = vmatprep.subr.bf16.mxu0 0
        %3116 = vmatpush1.bf16.msra.mxu0 %v3067
        %3117 = vmatprep.subr.bf16.mxu0 0
        %3118 = vmatpush1.bf16.msra.mxu0 %v3068
        %3119 = vmatprep.subr.bf16.mxu0 0
        %3120 = vmatpush1.bf16.msra.mxu0 %v3069
        %3121 = vmatprep.subr.bf16.mxu0 0
        %3122 = vmatpush1.bf16.msra.mxu0 %v3070
        %3123 = vmatprep.subr.bf16.mxu0 0
        %3124 = vmatpush1.bf16.msra.mxu0 %v3091
        %3125 = vmatprep.mubr.bf16.mxu0 %v3088
        %3126 = vmatmul.mubr.bf16.gmra.mrb[0].mxu0 %v2987
        %v3127 = vpop.f32.mrb[0].mxu0
        %v3128 = vadd.f32 0.0, %v3127
        %v3129 = vpop.f32.mrb[0].mxu0
        %v3130 = vpop.f32.mrb[0].mxu0
        %v3131 = vpop.f32.mrb[0].mxu0
        %3132 = vdwg.mxu0
        %v3133 = vadd.f32 %v2952, %v3128
        %s3134 = scalar_lea.vmem %s5, 1280
        %v3135 = vld [vmem:[%s3134] sm:$0xf]
        %v3136 = vld [vmem:[%s3134 + $0x4] sm:$0xf]
        %v3137 = vld [vmem:[%s3134 + $0x8] sm:$0xf]
        %v3138 = vld [vmem:[%s3134 + $0xc] sm:$0xf]
        %v3139 = vld [vmem:[%s3134 + $0x10] sm:$0xf]
        %v3140 = vld [vmem:[%s3134 + $0x14] sm:$0xf]
        %v3141 = vld [vmem:[%s3134 + $0x18] sm:$0xf]
        %v3142 = vld [vmem:[%s3134 + $0x1c] sm:$0xf]
        %v3143 = vld [vmem:[%s3134 + $0x20] sm:$0xf]
        %v3144 = vld [vmem:[%s3134 + $0x24] sm:$0xf]
        %v3145 = vld [vmem:[%s3134 + $0x28] sm:$0xf]
        %v3146 = vld [vmem:[%s3134 + $0x2c] sm:$0xf]
        %v3147 = vld [vmem:[%s3134 + $0x30] sm:$0xf]
        %v3148 = vld [vmem:[%s3134 + $0x34] sm:$0xf]
        %v3149 = vld [vmem:[%s3134 + $0x38] sm:$0xf]
        %v3150 = vld [vmem:[%s3134 + $0x3c] sm:$0xf]
        %v3151 = vld [vmem:[%s3134 + $0x40] sm:$0xf]
        %v3152 = vld [vmem:[%s3134 + $0x44] sm:$0xf]
        %v3153 = vld [vmem:[%s3134 + $0x48] sm:$0xf]
        %v3154 = vld [vmem:[%s3134 + $0x4c] sm:$0xf]
        %v3155 = vld [vmem:[%s3134 + $0x50] sm:$0xf]
        %v3156 = vld [vmem:[%s3134 + $0x54] sm:$0xf]
        %v3157 = vld [vmem:[%s3134 + $0x58] sm:$0xf]
        %v3158 = vld [vmem:[%s3134 + $0x5c] sm:$0xf]
        %v3159 = vld [vmem:[%s3134 + $0x60] sm:$0xf]
        %v3160 = vld [vmem:[%s3134 + $0x64] sm:$0xf]
        %v3161 = vld [vmem:[%s3134 + $0x68] sm:$0xf]
        %v3162 = vld [vmem:[%s3134 + $0x6c] sm:$0xf]
        %v3163 = vld [vmem:[%s3134 + $0x70] sm:$0xf]
        %v3164 = vld [vmem:[%s3134 + $0x74] sm:$0xf]
        %v3165 = vld [vmem:[%s3134 + $0x78] sm:$0xf]
        %v3166 = vld [vmem:[%s3134 + $0x7c] sm:$0x1]
        %v3169 = vrot.slane %v2776, 1
        %v3170 = vrot.slane %v2777, 1
        %v3204 = vunpack.c.l.b16 %v3135
        %v3205 = vunpack.c.l.b16 %v3136
        %v3206 = vunpack.c.l.b16 %v3137
        %v3207 = vunpack.c.l.b16 %v3138
        %v3208 = vunpack.c.l.b16 %v3139
        %v3209 = vunpack.c.l.b16 %v3140
        %v3210 = vunpack.c.l.b16 %v3141
        %v3211 = vunpack.c.l.b16 %v3142
        %v3212 = vunpack.c.l.b16 %v3143
        %v3213 = vunpack.c.l.b16 %v3144
        %v3214 = vunpack.c.l.b16 %v3145
        %v3215 = vunpack.c.l.b16 %v3146
        %v3216 = vunpack.c.l.b16 %v3147
        %v3217 = vunpack.c.l.b16 %v3148
        %v3218 = vunpack.c.l.b16 %v3149
        %v3219 = vunpack.c.l.b16 %v3150
        %v3220 = vunpack.c.l.b16 %v3151
        %v3221 = vunpack.c.l.b16 %v3152
        %v3222 = vunpack.c.l.b16 %v3153
        %v3223 = vunpack.c.l.b16 %v3154
        %v3224 = vunpack.c.l.b16 %v3155
        %v3225 = vunpack.c.l.b16 %v3156
        %v3226 = vunpack.c.l.b16 %v3157
        %v3227 = vunpack.c.l.b16 %v3158
        %v3228 = vunpack.c.l.b16 %v3159
        %v3229 = vunpack.c.l.b16 %v3160
        %v3230 = vunpack.c.l.b16 %v3161
        %v3231 = vunpack.c.l.b16 %v3162
        %v3232 = vunpack.c.l.b16 %v3163
        %v3233 = vunpack.c.l.b16 %v3164
        %v3234 = vunpack.c.l.b16 %v3165
        %v3235 = vunpack.c.l.b16 %v3166
        %v3236 = vpack.c.b16 %v3205, %v3204
        %v3237 = vpack.c.b16 %v3207, %v3206
        %v3238 = vpack.c.b16 %v3209, %v3208
        %v3239 = vpack.c.b16 %v3211, %v3210
        %v3240 = vpack.c.b16 %v3213, %v3212
        %v3241 = vpack.c.b16 %v3215, %v3214
        %v3242 = vpack.c.b16 %v3217, %v3216
        %v3243 = vpack.c.b16 %v3219, %v3218
        %v3244 = vpack.c.b16 %v3221, %v3220
        %v3245 = vpack.c.b16 %v3223, %v3222
        %v3246 = vpack.c.b16 %v3225, %v3224
        %v3247 = vpack.c.b16 %v3227, %v3226
        %v3248 = vpack.c.b16 %v3229, %v3228
        %v3249 = vpack.c.b16 %v3231, %v3230
        %v3250 = vpack.c.b16 %v3233, %v3232
        %v3251 = vpack.c.b16 %v3235, %v3234
        %v3268 = vsel %vm1476, %v3170, 0
        %v3271 = vsel %vm1480, %v3251, 0
        %3273 = vmatprep.subr.bf16.mxu0 0
        %3274 = vmatpush1.bf16.msra.mxu0 %v3236
        %3275 = vmatprep.subr.bf16.mxu0 0
        %3276 = vmatpush1.bf16.msra.mxu0 %v3237
        %3277 = vmatprep.subr.bf16.mxu0 0
        %3278 = vmatpush1.bf16.msra.mxu0 %v3238
        %3279 = vmatprep.subr.bf16.mxu0 0
        %3280 = vmatpush1.bf16.msra.mxu0 %v3239
        %3281 = vmatprep.subr.bf16.mxu0 0
        %3282 = vmatpush1.bf16.msra.mxu0 %v3240
        %3283 = vmatprep.subr.bf16.mxu0 0
        %3284 = vmatpush1.bf16.msra.mxu0 %v3241
        %3285 = vmatprep.subr.bf16.mxu0 0
        %3286 = vmatpush1.bf16.msra.mxu0 %v3242
        %3287 = vmatprep.subr.bf16.mxu0 0
        %3288 = vmatpush1.bf16.msra.mxu0 %v3243
        %3289 = vmatprep.subr.bf16.mxu0 0
        %3290 = vmatpush1.bf16.msra.mxu0 %v3244
        %3291 = vmatprep.subr.bf16.mxu0 0
        %3292 = vmatpush1.bf16.msra.mxu0 %v3245
        %3293 = vmatprep.subr.bf16.mxu0 0
        %3294 = vmatpush1.bf16.msra.mxu0 %v3246
        %3295 = vmatprep.subr.bf16.mxu0 0
        %3296 = vmatpush1.bf16.msra.mxu0 %v3247
        %3297 = vmatprep.subr.bf16.mxu0 0
        %3298 = vmatpush1.bf16.msra.mxu0 %v3248
        %3299 = vmatprep.subr.bf16.mxu0 0
        %3300 = vmatpush1.bf16.msra.mxu0 %v3249
        %3301 = vmatprep.subr.bf16.mxu0 0
        %3302 = vmatpush1.bf16.msra.mxu0 %v3250
        %3303 = vmatprep.subr.bf16.mxu0 0
        %3304 = vmatpush1.bf16.msra.mxu0 %v3271
        %3305 = vmatprep.mubr.bf16.mxu0 %v3268
        %3306 = vmatmul.mubr.bf16.gmra.mrb[0].mxu0 %v3169
        %v3307 = vpop.f32.mrb[0].mxu0
        %v3308 = vadd.f32 0.0, %v3307
        %v3309 = vpop.f32.mrb[0].mxu0
        %v3310 = vpop.f32.mrb[0].mxu0
        %v3311 = vpop.f32.mrb[0].mxu0
        %3312 = vdwg.mxu0
        %v3313 = vadd.f32 %v3133, %v3308
        %s3314 = scalar_lea.vmem %s5, 1408
        %v3315 = vld [vmem:[%s3314] sm:$0xf]
        %v3316 = vld [vmem:[%s3314 + $0x4] sm:$0xf]
        %v3317 = vld [vmem:[%s3314 + $0x8] sm:$0xf]
        %v3318 = vld [vmem:[%s3314 + $0xc] sm:$0xf]
        %v3319 = vld [vmem:[%s3314 + $0x10] sm:$0xf]
        %v3320 = vld [vmem:[%s3314 + $0x14] sm:$0xf]
        %v3321 = vld [vmem:[%s3314 + $0x18] sm:$0xf]
        %v3322 = vld [vmem:[%s3314 + $0x1c] sm:$0xf]
        %v3323 = vld [vmem:[%s3314 + $0x20] sm:$0xf]
        %v3324 = vld [vmem:[%s3314 + $0x24] sm:$0xf]
        %v3325 = vld [vmem:[%s3314 + $0x28] sm:$0xf]
        %v3326 = vld [vmem:[%s3314 + $0x2c] sm:$0xf]
        %v3327 = vld [vmem:[%s3314 + $0x30] sm:$0xf]
        %v3328 = vld [vmem:[%s3314 + $0x34] sm:$0xf]
        %v3329 = vld [vmem:[%s3314 + $0x38] sm:$0xf]
        %v3330 = vld [vmem:[%s3314 + $0x3c] sm:$0xf]
        %v3331 = vld [vmem:[%s3314 + $0x40] sm:$0xf]
        %v3332 = vld [vmem:[%s3314 + $0x44] sm:$0xf]
        %v3333 = vld [vmem:[%s3314 + $0x48] sm:$0xf]
        %v3334 = vld [vmem:[%s3314 + $0x4c] sm:$0xf]
        %v3335 = vld [vmem:[%s3314 + $0x50] sm:$0xf]
        %v3336 = vld [vmem:[%s3314 + $0x54] sm:$0xf]
        %v3337 = vld [vmem:[%s3314 + $0x58] sm:$0xf]
        %v3338 = vld [vmem:[%s3314 + $0x5c] sm:$0xf]
        %v3339 = vld [vmem:[%s3314 + $0x60] sm:$0xf]
        %v3340 = vld [vmem:[%s3314 + $0x64] sm:$0xf]
        %v3341 = vld [vmem:[%s3314 + $0x68] sm:$0xf]
        %v3342 = vld [vmem:[%s3314 + $0x6c] sm:$0xf]
        %v3343 = vld [vmem:[%s3314 + $0x70] sm:$0xf]
        %v3344 = vld [vmem:[%s3314 + $0x74] sm:$0xf]
        %v3345 = vld [vmem:[%s3314 + $0x78] sm:$0xf]
        %v3346 = vld [vmem:[%s3314 + $0x7c] sm:$0x1]
        %v3347 = vrot.slane %v2987, 1
        %v3348 = vrot.slane %v2989, 1
        %v3382 = vunpack.c.l.b16 %v3315
        %v3383 = vunpack.c.l.b16 %v3316
        %v3384 = vunpack.c.l.b16 %v3317
        %v3385 = vunpack.c.l.b16 %v3318
        %v3386 = vunpack.c.l.b16 %v3319
        %v3387 = vunpack.c.l.b16 %v3320
        %v3388 = vunpack.c.l.b16 %v3321
        %v3389 = vunpack.c.l.b16 %v3322
        %v3390 = vunpack.c.l.b16 %v3323
        %v3391 = vunpack.c.l.b16 %v3324
        %v3392 = vunpack.c.l.b16 %v3325
        %v3393 = vunpack.c.l.b16 %v3326
        %v3394 = vunpack.c.l.b16 %v3327
        %v3395 = vunpack.c.l.b16 %v3328
        %v3396 = vunpack.c.l.b16 %v3329
        %v3397 = vunpack.c.l.b16 %v3330
        %v3398 = vunpack.c.l.b16 %v3331
        %v3399 = vunpack.c.l.b16 %v3332
        %v3400 = vunpack.c.l.b16 %v3333
        %v3401 = vunpack.c.l.b16 %v3334
        %v3402 = vunpack.c.l.b16 %v3335
        %v3403 = vunpack.c.l.b16 %v3336
        %v3404 = vunpack.c.l.b16 %v3337
        %v3405 = vunpack.c.l.b16 %v3338
        %v3406 = vunpack.c.l.b16 %v3339
        %v3407 = vunpack.c.l.b16 %v3340
        %v3408 = vunpack.c.l.b16 %v3341
        %v3409 = vunpack.c.l.b16 %v3342
        %v3410 = vunpack.c.l.b16 %v3343
        %v3411 = vunpack.c.l.b16 %v3344
        %v3412 = vunpack.c.l.b16 %v3345
        %v3413 = vunpack.c.l.b16 %v3346
        %v3414 = vpack.c.b16 %v3383, %v3382
        %v3415 = vpack.c.b16 %v3385, %v3384
        %v3416 = vpack.c.b16 %v3387, %v3386
        %v3417 = vpack.c.b16 %v3389, %v3388
        %v3418 = vpack.c.b16 %v3391, %v3390
        %v3419 = vpack.c.b16 %v3393, %v3392
        %v3420 = vpack.c.b16 %v3395, %v3394
        %v3421 = vpack.c.b16 %v3397, %v3396
        %v3422 = vpack.c.b16 %v3399, %v3398
        %v3423 = vpack.c.b16 %v3401, %v3400
        %v3424 = vpack.c.b16 %v3403, %v3402
        %v3425 = vpack.c.b16 %v3405, %v3404
        %v3426 = vpack.c.b16 %v3407, %v3406
        %v3427 = vpack.c.b16 %v3409, %v3408
        %v3428 = vpack.c.b16 %v3411, %v3410
        %v3429 = vpack.c.b16 %v3413, %v3412
        %v3446 = vsel %vm1476, %v3348, 0
        %v3449 = vsel %vm1480, %v3429, 0
        %3451 = vmatprep.subr.bf16.mxu0 0
        %3452 = vmatpush1.bf16.msra.mxu0 %v3414
        %3453 = vmatprep.subr.bf16.mxu0 0
        %3454 = vmatpush1.bf16.msra.mxu0 %v3415
        %3455 = vmatprep.subr.bf16.mxu0 0
        %3456 = vmatpush1.bf16.msra.mxu0 %v3416
        %3457 = vmatprep.subr.bf16.mxu0 0
        %3458 = vmatpush1.bf16.msra.mxu0 %v3417
        %3459 = vmatprep.subr.bf16.mxu0 0
        %3460 = vmatpush1.bf16.msra.mxu0 %v3418
        %3461 = vmatprep.subr.bf16.mxu0 0
        %3462 = vmatpush1.bf16.msra.mxu0 %v3419
        %3463 = vmatprep.subr.bf16.mxu0 0
        %3464 = vmatpush1.bf16.msra.mxu0 %v3420
        %3465 = vmatprep.subr.bf16.mxu0 0
        %3466 = vmatpush1.bf16.msra.mxu0 %v3421
        %3467 = vmatprep.subr.bf16.mxu0 0
        %3468 = vmatpush1.bf16.msra.mxu0 %v3422
        %3469 = vmatprep.subr.bf16.mxu0 0
        %3470 = vmatpush1.bf16.msra.mxu0 %v3423
        %3471 = vmatprep.subr.bf16.mxu0 0
        %3472 = vmatpush1.bf16.msra.mxu0 %v3424
        %3473 = vmatprep.subr.bf16.mxu0 0
        %3474 = vmatpush1.bf16.msra.mxu0 %v3425
        %3475 = vmatprep.subr.bf16.mxu0 0
        %3476 = vmatpush1.bf16.msra.mxu0 %v3426
        %3477 = vmatprep.subr.bf16.mxu0 0
        %3478 = vmatpush1.bf16.msra.mxu0 %v3427
        %3479 = vmatprep.subr.bf16.mxu0 0
        %3480 = vmatpush1.bf16.msra.mxu0 %v3428
        %3481 = vmatprep.subr.bf16.mxu0 0
        %3482 = vmatpush1.bf16.msra.mxu0 %v3449
        %3483 = vmatprep.mubr.bf16.mxu0 %v3446
        %3484 = vmatmul.mubr.bf16.gmra.mrb[0].mxu0 %v3347
        %v3485 = vpop.f32.mrb[0].mxu0
        %v3486 = vadd.f32 0.0, %v3485
        %v3487 = vpop.f32.mrb[0].mxu0
        %v3488 = vpop.f32.mrb[0].mxu0
        %v3489 = vpop.f32.mrb[0].mxu0
        %3490 = vdwg.mxu0
        %v3491 = vadd.f32 %v3313, %v3486
        %s3492 = scalar_lea.vmem %s5, 1536
        %v3493 = vld [vmem:[%s3492] sm:$0xf]
        %v3494 = vld [vmem:[%s3492 + $0x4] sm:$0xf]
        %v3495 = vld [vmem:[%s3492 + $0x8] sm:$0xf]
        %v3496 = vld [vmem:[%s3492 + $0xc] sm:$0xf]
        %v3497 = vld [vmem:[%s3492 + $0x10] sm:$0xf]
        %v3498 = vld [vmem:[%s3492 + $0x14] sm:$0xf]
        %v3499 = vld [vmem:[%s3492 + $0x18] sm:$0xf]
        %v3500 = vld [vmem:[%s3492 + $0x1c] sm:$0xf]
        %v3501 = vld [vmem:[%s3492 + $0x20] sm:$0xf]
        %v3502 = vld [vmem:[%s3492 + $0x24] sm:$0xf]
        %v3503 = vld [vmem:[%s3492 + $0x28] sm:$0xf]
        %v3504 = vld [vmem:[%s3492 + $0x2c] sm:$0xf]
        %v3505 = vld [vmem:[%s3492 + $0x30] sm:$0xf]
        %v3506 = vld [vmem:[%s3492 + $0x34] sm:$0xf]
        %v3507 = vld [vmem:[%s3492 + $0x38] sm:$0xf]
        %v3508 = vld [vmem:[%s3492 + $0x3c] sm:$0xf]
        %v3509 = vld [vmem:[%s3492 + $0x40] sm:$0xf]
        %v3510 = vld [vmem:[%s3492 + $0x44] sm:$0xf]
        %v3511 = vld [vmem:[%s3492 + $0x48] sm:$0xf]
        %v3512 = vld [vmem:[%s3492 + $0x4c] sm:$0xf]
        %v3513 = vld [vmem:[%s3492 + $0x50] sm:$0xf]
        %v3514 = vld [vmem:[%s3492 + $0x54] sm:$0xf]
        %v3515 = vld [vmem:[%s3492 + $0x58] sm:$0xf]
        %v3516 = vld [vmem:[%s3492 + $0x5c] sm:$0xf]
        %v3517 = vld [vmem:[%s3492 + $0x60] sm:$0xf]
        %v3518 = vld [vmem:[%s3492 + $0x64] sm:$0xf]
        %v3519 = vld [vmem:[%s3492 + $0x68] sm:$0xf]
        %v3520 = vld [vmem:[%s3492 + $0x6c] sm:$0xf]
        %v3521 = vld [vmem:[%s3492 + $0x70] sm:$0xf]
        %v3522 = vld [vmem:[%s3492 + $0x74] sm:$0xf]
        %v3523 = vld [vmem:[%s3492 + $0x78] sm:$0xf]
        %v3524 = vld [vmem:[%s3492 + $0x7c] sm:$0x1]
        %v3525 = vrot.slane %v2776, 2
        %v3526 = vrot.slane %v2777, 2
        %v3560 = vunpack.c.l.b16 %v3493
        %v3561 = vunpack.c.l.b16 %v3494
        %v3562 = vunpack.c.l.b16 %v3495
        %v3563 = vunpack.c.l.b16 %v3496
        %v3564 = vunpack.c.l.b16 %v3497
        %v3565 = vunpack.c.l.b16 %v3498
        %v3566 = vunpack.c.l.b16 %v3499
        %v3567 = vunpack.c.l.b16 %v3500
        %v3568 = vunpack.c.l.b16 %v3501
        %v3569 = vunpack.c.l.b16 %v3502
        %v3570 = vunpack.c.l.b16 %v3503
        %v3571 = vunpack.c.l.b16 %v3504
        %v3572 = vunpack.c.l.b16 %v3505
        %v3573 = vunpack.c.l.b16 %v3506
        %v3574 = vunpack.c.l.b16 %v3507
        %v3575 = vunpack.c.l.b16 %v3508
        %v3576 = vunpack.c.l.b16 %v3509
        %v3577 = vunpack.c.l.b16 %v3510
        %v3578 = vunpack.c.l.b16 %v3511
        %v3579 = vunpack.c.l.b16 %v3512
        %v3580 = vunpack.c.l.b16 %v3513
        %v3581 = vunpack.c.l.b16 %v3514
        %v3582 = vunpack.c.l.b16 %v3515
        %v3583 = vunpack.c.l.b16 %v3516
        %v3584 = vunpack.c.l.b16 %v3517
        %v3585 = vunpack.c.l.b16 %v3518
        %v3586 = vunpack.c.l.b16 %v3519
        %v3587 = vunpack.c.l.b16 %v3520
        %v3588 = vunpack.c.l.b16 %v3521
        %v3589 = vunpack.c.l.b16 %v3522
        %v3590 = vunpack.c.l.b16 %v3523
        %v3591 = vunpack.c.l.b16 %v3524
        %v3592 = vpack.c.b16 %v3561, %v3560
        %v3593 = vpack.c.b16 %v3563, %v3562
        %v3594 = vpack.c.b16 %v3565, %v3564
        %v3595 = vpack.c.b16 %v3567, %v3566
        %v3596 = vpack.c.b16 %v3569, %v3568
        %v3597 = vpack.c.b16 %v3571, %v3570
        %v3598 = vpack.c.b16 %v3573, %v3572
        %v3599 = vpack.c.b16 %v3575, %v3574
        %v3600 = vpack.c.b16 %v3577, %v3576
        %v3601 = vpack.c.b16 %v3579, %v3578
        %v3602 = vpack.c.b16 %v3581, %v3580
        %v3603 = vpack.c.b16 %v3583, %v3582
        %v3604 = vpack.c.b16 %v3585, %v3584
        %v3605 = vpack.c.b16 %v3587, %v3586
        %v3606 = vpack.c.b16 %v3589, %v3588
        %v3607 = vpack.c.b16 %v3591, %v3590
        %v3624 = vsel %vm1476, %v3526, 0
        %v3627 = vsel %vm1480, %v3607, 0
        %3629 = vmatprep.subr.bf16.mxu0 0
        %3630 = vmatpush1.bf16.msra.mxu0 %v3592
        %3631 = vmatprep.subr.bf16.mxu0 0
        %3632 = vmatpush1.bf16.msra.mxu0 %v3593
        %3633 = vmatprep.subr.bf16.mxu0 0
        %3634 = vmatpush1.bf16.msra.mxu0 %v3594
        %3635 = vmatprep.subr.bf16.mxu0 0
        %3636 = vmatpush1.bf16.msra.mxu0 %v3595
        %3637 = vmatprep.subr.bf16.mxu0 0
        %3638 = vmatpush1.bf16.msra.mxu0 %v3596
        %3639 = vmatprep.subr.bf16.mxu0 0
        %3640 = vmatpush1.bf16.msra.mxu0 %v3597
        %3641 = vmatprep.subr.bf16.mxu0 0
        %3642 = vmatpush1.bf16.msra.mxu0 %v3598
        %3643 = vmatprep.subr.bf16.mxu0 0
        %3644 = vmatpush1.bf16.msra.mxu0 %v3599
        %3645 = vmatprep.subr.bf16.mxu0 0
        %3646 = vmatpush1.bf16.msra.mxu0 %v3600
        %3647 = vmatprep.subr.bf16.mxu0 0
        %3648 = vmatpush1.bf16.msra.mxu0 %v3601
        %3649 = vmatprep.subr.bf16.mxu0 0
        %3650 = vmatpush1.bf16.msra.mxu0 %v3602
        %3651 = vmatprep.subr.bf16.mxu0 0
        %3652 = vmatpush1.bf16.msra.mxu0 %v3603
        %3653 = vmatprep.subr.bf16.mxu0 0
        %3654 = vmatpush1.bf16.msra.mxu0 %v3604
        %3655 = vmatprep.subr.bf16.mxu0 0
        %3656 = vmatpush1.bf16.msra.mxu0 %v3605
        %3657 = vmatprep.subr.bf16.mxu0 0
        %3658 = vmatpush1.bf16.msra.mxu0 %v3606
        %3659 = vmatprep.subr.bf16.mxu0 0
        %3660 = vmatpush1.bf16.msra.mxu0 %v3627
        %3661 = vmatprep.mubr.bf16.mxu0 %v3624
        %3662 = vmatmul.mubr.bf16.gmra.mrb[0].mxu0 %v3525
        %v3663 = vpop.f32.mrb[0].mxu0
        %v3664 = vadd.f32 0.0, %v3663
        %v3665 = vpop.f32.mrb[0].mxu0
        %v3666 = vpop.f32.mrb[0].mxu0
        %v3667 = vpop.f32.mrb[0].mxu0
        %3668 = vdwg.mxu0
        %v3669 = vadd.f32 %v3491, %v3664
        %s3670 = scalar_lea.vmem %s5, 1664
        %v3671 = vld [vmem:[%s3670] sm:$0xf]
        %v3672 = vld [vmem:[%s3670 + $0x4] sm:$0xf]
        %v3673 = vld [vmem:[%s3670 + $0x8] sm:$0xf]
        %v3674 = vld [vmem:[%s3670 + $0xc] sm:$0xf]
        %v3675 = vld [vmem:[%s3670 + $0x10] sm:$0xf]
        %v3676 = vld [vmem:[%s3670 + $0x14] sm:$0xf]
        %v3677 = vld [vmem:[%s3670 + $0x18] sm:$0xf]
        %v3678 = vld [vmem:[%s3670 + $0x1c] sm:$0xf]
        %v3679 = vld [vmem:[%s3670 + $0x20] sm:$0xf]
        %v3680 = vld [vmem:[%s3670 + $0x24] sm:$0xf]
        %v3681 = vld [vmem:[%s3670 + $0x28] sm:$0xf]
        %v3682 = vld [vmem:[%s3670 + $0x2c] sm:$0xf]
        %v3683 = vld [vmem:[%s3670 + $0x30] sm:$0xf]
        %v3684 = vld [vmem:[%s3670 + $0x34] sm:$0xf]
        %v3685 = vld [vmem:[%s3670 + $0x38] sm:$0xf]
        %v3686 = vld [vmem:[%s3670 + $0x3c] sm:$0xf]
        %v3687 = vld [vmem:[%s3670 + $0x40] sm:$0xf]
        %v3688 = vld [vmem:[%s3670 + $0x44] sm:$0xf]
        %v3689 = vld [vmem:[%s3670 + $0x48] sm:$0xf]
        %v3690 = vld [vmem:[%s3670 + $0x4c] sm:$0xf]
        %v3691 = vld [vmem:[%s3670 + $0x50] sm:$0xf]
        %v3692 = vld [vmem:[%s3670 + $0x54] sm:$0xf]
        %v3693 = vld [vmem:[%s3670 + $0x58] sm:$0xf]
        %v3694 = vld [vmem:[%s3670 + $0x5c] sm:$0xf]
        %v3695 = vld [vmem:[%s3670 + $0x60] sm:$0xf]
        %v3696 = vld [vmem:[%s3670 + $0x64] sm:$0xf]
        %v3697 = vld [vmem:[%s3670 + $0x68] sm:$0xf]
        %v3698 = vld [vmem:[%s3670 + $0x6c] sm:$0xf]
        %v3699 = vld [vmem:[%s3670 + $0x70] sm:$0xf]
        %v3700 = vld [vmem:[%s3670 + $0x74] sm:$0xf]
        %v3701 = vld [vmem:[%s3670 + $0x78] sm:$0xf]
        %v3702 = vld [vmem:[%s3670 + $0x7c] sm:$0x1]
        %v3703 = vrot.slane %v2987, 2
        %v3704 = vrot.slane %v2989, 2
        %v3738 = vunpack.c.l.b16 %v3671
        %v3739 = vunpack.c.l.b16 %v3672
        %v3740 = vunpack.c.l.b16 %v3673
        %v3741 = vunpack.c.l.b16 %v3674
        %v3742 = vunpack.c.l.b16 %v3675
        %v3743 = vunpack.c.l.b16 %v3676
        %v3744 = vunpack.c.l.b16 %v3677
        %v3745 = vunpack.c.l.b16 %v3678
        %v3746 = vunpack.c.l.b16 %v3679
        %v3747 = vunpack.c.l.b16 %v3680
        %v3748 = vunpack.c.l.b16 %v3681
        %v3749 = vunpack.c.l.b16 %v3682
        %v3750 = vunpack.c.l.b16 %v3683
        %v3751 = vunpack.c.l.b16 %v3684
        %v3752 = vunpack.c.l.b16 %v3685
        %v3753 = vunpack.c.l.b16 %v3686
        %v3754 = vunpack.c.l.b16 %v3687
        %v3755 = vunpack.c.l.b16 %v3688
        %v3756 = vunpack.c.l.b16 %v3689
        %v3757 = vunpack.c.l.b16 %v3690
        %v3758 = vunpack.c.l.b16 %v3691
        %v3759 = vunpack.c.l.b16 %v3692
        %v3760 = vunpack.c.l.b16 %v3693
        %v3761 = vunpack.c.l.b16 %v3694
        %v3762 = vunpack.c.l.b16 %v3695
        %v3763 = vunpack.c.l.b16 %v3696
        %v3764 = vunpack.c.l.b16 %v3697
        %v3765 = vunpack.c.l.b16 %v3698
        %v3766 = vunpack.c.l.b16 %v3699
        %v3767 = vunpack.c.l.b16 %v3700
        %v3768 = vunpack.c.l.b16 %v3701
        %v3769 = vunpack.c.l.b16 %v3702
        %v3770 = vpack.c.b16 %v3739, %v3738
        %v3771 = vpack.c.b16 %v3741, %v3740
        %v3772 = vpack.c.b16 %v3743, %v3742
        %v3773 = vpack.c.b16 %v3745, %v3744
        %v3774 = vpack.c.b16 %v3747, %v3746
        %v3775 = vpack.c.b16 %v3749, %v3748
        %v3776 = vpack.c.b16 %v3751, %v3750
        %v3777 = vpack.c.b16 %v3753, %v3752
        %v3778 = vpack.c.b16 %v3755, %v3754
        %v3779 = vpack.c.b16 %v3757, %v3756
        %v3780 = vpack.c.b16 %v3759, %v3758
        %v3781 = vpack.c.b16 %v3761, %v3760
        %v3782 = vpack.c.b16 %v3763, %v3762
        %v3783 = vpack.c.b16 %v3765, %v3764
        %v3784 = vpack.c.b16 %v3767, %v3766
        %v3785 = vpack.c.b16 %v3769, %v3768
        %v3802 = vsel %vm1476, %v3704, 0
        %v3805 = vsel %vm1480, %v3785, 0
        %3807 = vmatprep.subr.bf16.mxu0 0
        %3808 = vmatpush1.bf16.msra.mxu0 %v3770
        %3809 = vmatprep.subr.bf16.mxu0 0
        %3810 = vmatpush1.bf16.msra.mxu0 %v3771
        %3811 = vmatprep.subr.bf16.mxu0 0
        %3812 = vmatpush1.bf16.msra.mxu0 %v3772
        %3813 = vmatprep.subr.bf16.mxu0 0
        %3814 = vmatpush1.bf16.msra.mxu0 %v3773
        %3815 = vmatprep.subr.bf16.mxu0 0
        %3816 = vmatpush1.bf16.msra.mxu0 %v3774
        %3817 = vmatprep.subr.bf16.mxu0 0
        %3818 = vmatpush1.bf16.msra.mxu0 %v3775
        %3819 = vmatprep.subr.bf16.mxu0 0
        %3820 = vmatpush1.bf16.msra.mxu0 %v3776
        %3821 = vmatprep.subr.bf16.mxu0 0
        %3822 = vmatpush1.bf16.msra.mxu0 %v3777
        %3823 = vmatprep.subr.bf16.mxu0 0
        %3824 = vmatpush1.bf16.msra.mxu0 %v3778
        %3825 = vmatprep.subr.bf16.mxu0 0
        %3826 = vmatpush1.bf16.msra.mxu0 %v3779
        %3827 = vmatprep.subr.bf16.mxu0 0
        %3828 = vmatpush1.bf16.msra.mxu0 %v3780
        %3829 = vmatprep.subr.bf16.mxu0 0
        %3830 = vmatpush1.bf16.msra.mxu0 %v3781
        %3831 = vmatprep.subr.bf16.mxu0 0
        %3832 = vmatpush1.bf16.msra.mxu0 %v3782
        %3833 = vmatprep.subr.bf16.mxu0 0
        %3834 = vmatpush1.bf16.msra.mxu0 %v3783
        %3835 = vmatprep.subr.bf16.mxu0 0
        %3836 = vmatpush1.bf16.msra.mxu0 %v3784
        %3837 = vmatprep.subr.bf16.mxu0 0
        %3838 = vmatpush1.bf16.msra.mxu0 %v3805
        %3839 = vmatprep.mubr.bf16.mxu0 %v3802
        %3840 = vmatmul.mubr.bf16.gmra.mrb[0].mxu0 %v3703
        %v3841 = vpop.f32.mrb[0].mxu0
        %v3842 = vadd.f32 0.0, %v3841
        %v3843 = vpop.f32.mrb[0].mxu0
        %v3844 = vpop.f32.mrb[0].mxu0
        %v3845 = vpop.f32.mrb[0].mxu0
        %3846 = vdwg.mxu0
        %v3847 = vadd.f32 %v3669, %v3842
        %s3848 = scalar_lea.vmem %s5, 1792
        %v3849 = vld [vmem:[%s3848] sm:$0xf]
        %v3850 = vld [vmem:[%s3848 + $0x4] sm:$0xf]
        %v3851 = vld [vmem:[%s3848 + $0x8] sm:$0xf]
        %v3852 = vld [vmem:[%s3848 + $0xc] sm:$0xf]
        %v3853 = vld [vmem:[%s3848 + $0x10] sm:$0xf]
        %v3854 = vld [vmem:[%s3848 + $0x14] sm:$0xf]
        %v3855 = vld [vmem:[%s3848 + $0x18] sm:$0xf]
        %v3856 = vld [vmem:[%s3848 + $0x1c] sm:$0xf]
        %v3857 = vld [vmem:[%s3848 + $0x20] sm:$0xf]
        %v3858 = vld [vmem:[%s3848 + $0x24] sm:$0xf]
        %v3859 = vld [vmem:[%s3848 + $0x28] sm:$0xf]
        %v3860 = vld [vmem:[%s3848 + $0x2c] sm:$0xf]
        %v3861 = vld [vmem:[%s3848 + $0x30] sm:$0xf]
        %v3862 = vld [vmem:[%s3848 + $0x34] sm:$0xf]
        %v3863 = vld [vmem:[%s3848 + $0x38] sm:$0xf]
        %v3864 = vld [vmem:[%s3848 + $0x3c] sm:$0xf]
        %v3865 = vld [vmem:[%s3848 + $0x40] sm:$0xf]
        %v3866 = vld [vmem:[%s3848 + $0x44] sm:$0xf]
        %v3867 = vld [vmem:[%s3848 + $0x48] sm:$0xf]
        %v3868 = vld [vmem:[%s3848 + $0x4c] sm:$0xf]
        %v3869 = vld [vmem:[%s3848 + $0x50] sm:$0xf]
        %v3870 = vld [vmem:[%s3848 + $0x54] sm:$0xf]
        %v3871 = vld [vmem:[%s3848 + $0x58] sm:$0xf]
        %v3872 = vld [vmem:[%s3848 + $0x5c] sm:$0xf]
        %v3873 = vld [vmem:[%s3848 + $0x60] sm:$0xf]
        %v3874 = vld [vmem:[%s3848 + $0x64] sm:$0xf]
        %v3875 = vld [vmem:[%s3848 + $0x68] sm:$0xf]
        %v3876 = vld [vmem:[%s3848 + $0x6c] sm:$0xf]
        %v3877 = vld [vmem:[%s3848 + $0x70] sm:$0xf]
        %v3878 = vld [vmem:[%s3848 + $0x74] sm:$0xf]
        %v3879 = vld [vmem:[%s3848 + $0x78] sm:$0xf]
        %v3880 = vld [vmem:[%s3848 + $0x7c] sm:$0x1]
        %v3881 = vrot.slane %v2776, 3
        %v3882 = vrot.slane %v2777, 3
        %v3916 = vunpack.c.l.b16 %v3849
        %v3917 = vunpack.c.l.b16 %v3850
        %v3918 = vunpack.c.l.b16 %v3851
        %v3919 = vunpack.c.l.b16 %v3852
        %v3920 = vunpack.c.l.b16 %v3853
        %v3921 = vunpack.c.l.b16 %v3854
        %v3922 = vunpack.c.l.b16 %v3855
        %v3923 = vunpack.c.l.b16 %v3856
        %v3924 = vunpack.c.l.b16 %v3857
        %v3925 = vunpack.c.l.b16 %v3858
        %v3926 = vunpack.c.l.b16 %v3859
        %v3927 = vunpack.c.l.b16 %v3860
        %v3928 = vunpack.c.l.b16 %v3861
        %v3929 = vunpack.c.l.b16 %v3862
        %v3930 = vunpack.c.l.b16 %v3863
        %v3931 = vunpack.c.l.b16 %v3864
        %v3932 = vunpack.c.l.b16 %v3865
        %v3933 = vunpack.c.l.b16 %v3866
        %v3934 = vunpack.c.l.b16 %v3867
        %v3935 = vunpack.c.l.b16 %v3868
        %v3936 = vunpack.c.l.b16 %v3869
        %v3937 = vunpack.c.l.b16 %v3870
        %v3938 = vunpack.c.l.b16 %v3871
        %v3939 = vunpack.c.l.b16 %v3872
        %v3940 = vunpack.c.l.b16 %v3873
        %v3941 = vunpack.c.l.b16 %v3874
        %v3942 = vunpack.c.l.b16 %v3875
        %v3943 = vunpack.c.l.b16 %v3876
        %v3944 = vunpack.c.l.b16 %v3877
        %v3945 = vunpack.c.l.b16 %v3878
        %v3946 = vunpack.c.l.b16 %v3879
        %v3947 = vunpack.c.l.b16 %v3880
        %v3948 = vpack.c.b16 %v3917, %v3916
        %v3949 = vpack.c.b16 %v3919, %v3918
        %v3950 = vpack.c.b16 %v3921, %v3920
        %v3951 = vpack.c.b16 %v3923, %v3922
        %v3952 = vpack.c.b16 %v3925, %v3924
        %v3953 = vpack.c.b16 %v3927, %v3926
        %v3954 = vpack.c.b16 %v3929, %v3928
        %v3955 = vpack.c.b16 %v3931, %v3930
        %v3956 = vpack.c.b16 %v3933, %v3932
        %v3957 = vpack.c.b16 %v3935, %v3934
        %v3958 = vpack.c.b16 %v3937, %v3936
        %v3959 = vpack.c.b16 %v3939, %v3938
        %v3960 = vpack.c.b16 %v3941, %v3940
        %v3961 = vpack.c.b16 %v3943, %v3942
        %v3962 = vpack.c.b16 %v3945, %v3944
        %v3963 = vpack.c.b16 %v3947, %v3946
        %v3980 = vsel %vm1476, %v3882, 0
        %v3983 = vsel %vm1480, %v3963, 0
        %3985 = vmatprep.subr.bf16.mxu0 0
        %3986 = vmatpush1.bf16.msra.mxu0 %v3948
        %3987 = vmatprep.subr.bf16.mxu0 0
        %3988 = vmatpush1.bf16.msra.mxu0 %v3949
        %3989 = vmatprep.subr.bf16.mxu0 0
        %3990 = vmatpush1.bf16.msra.mxu0 %v3950
        %3991 = vmatprep.subr.bf16.mxu0 0
        %3992 = vmatpush1.bf16.msra.mxu0 %v3951
        %3993 = vmatprep.subr.bf16.mxu0 0
        %3994 = vmatpush1.bf16.msra.mxu0 %v3952
        %3995 = vmatprep.subr.bf16.mxu0 0
        %3996 = vmatpush1.bf16.msra.mxu0 %v3953
        %3997 = vmatprep.subr.bf16.mxu0 0
        %3998 = vmatpush1.bf16.msra.mxu0 %v3954
        %3999 = vmatprep.subr.bf16.mxu0 0
        %4000 = vmatpush1.bf16.msra.mxu0 %v3955
        %4001 = vmatprep.subr.bf16.mxu0 0
        %4002 = vmatpush1.bf16.msra.mxu0 %v3956
        %4003 = vmatprep.subr.bf16.mxu0 0
        %4004 = vmatpush1.bf16.msra.mxu0 %v3957
        %4005 = vmatprep.subr.bf16.mxu0 0
        %4006 = vmatpush1.bf16.msra.mxu0 %v3958
        %4007 = vmatprep.subr.bf16.mxu0 0
        %4008 = vmatpush1.bf16.msra.mxu0 %v3959
        %4009 = vmatprep.subr.bf16.mxu0 0
        %4010 = vmatpush1.bf16.msra.mxu0 %v3960
        %4011 = vmatprep.subr.bf16.mxu0 0
        %4012 = vmatpush1.bf16.msra.mxu0 %v3961
        %4013 = vmatprep.subr.bf16.mxu0 0
        %4014 = vmatpush1.bf16.msra.mxu0 %v3962
        %4015 = vmatprep.subr.bf16.mxu0 0
        %4016 = vmatpush1.bf16.msra.mxu0 %v3983
        %4017 = vmatprep.mubr.bf16.mxu0 %v3980
        %4018 = vmatmul.mubr.bf16.gmra.mrb[0].mxu0 %v3881
        %v4019 = vpop.f32.mrb[0].mxu0
        %v4020 = vadd.f32 0.0, %v4019
        %v4021 = vpop.f32.mrb[0].mxu0
        %v4022 = vpop.f32.mrb[0].mxu0
        %v4023 = vpop.f32.mrb[0].mxu0
        %4024 = vdwg.mxu0
        %v4025 = vadd.f32 %v3847, %v4020
        %s4026 = scalar_lea.vmem %s5, 1920
        %v4027 = vld [vmem:[%s4026] sm:$0xf]
        %v4028 = vld [vmem:[%s4026 + $0x4] sm:$0xf]
        %v4029 = vld [vmem:[%s4026 + $0x8] sm:$0xf]
        %v4030 = vld [vmem:[%s4026 + $0xc] sm:$0xf]
        %v4031 = vld [vmem:[%s4026 + $0x10] sm:$0xf]
        %v4032 = vld [vmem:[%s4026 + $0x14] sm:$0xf]
        %v4033 = vld [vmem:[%s4026 + $0x18] sm:$0xf]
        %v4034 = vld [vmem:[%s4026 + $0x1c] sm:$0xf]
        %v4035 = vld [vmem:[%s4026 + $0x20] sm:$0xf]
        %v4036 = vld [vmem:[%s4026 + $0x24] sm:$0xf]
        %v4037 = vld [vmem:[%s4026 + $0x28] sm:$0xf]
        %v4038 = vld [vmem:[%s4026 + $0x2c] sm:$0xf]
        %v4039 = vld [vmem:[%s4026 + $0x30] sm:$0xf]
        %v4040 = vld [vmem:[%s4026 + $0x34] sm:$0xf]
        %v4041 = vld [vmem:[%s4026 + $0x38] sm:$0xf]
        %v4042 = vld [vmem:[%s4026 + $0x3c] sm:$0xf]
        %v4043 = vld [vmem:[%s4026 + $0x40] sm:$0xf]
        %v4044 = vld [vmem:[%s4026 + $0x44] sm:$0xf]
        %v4045 = vld [vmem:[%s4026 + $0x48] sm:$0xf]
        %v4046 = vld [vmem:[%s4026 + $0x4c] sm:$0xf]
        %v4047 = vld [vmem:[%s4026 + $0x50] sm:$0xf]
        %v4048 = vld [vmem:[%s4026 + $0x54] sm:$0xf]
        %v4049 = vld [vmem:[%s4026 + $0x58] sm:$0xf]
        %v4050 = vld [vmem:[%s4026 + $0x5c] sm:$0xf]
        %v4051 = vld [vmem:[%s4026 + $0x60] sm:$0xf]
        %v4052 = vld [vmem:[%s4026 + $0x64] sm:$0xf]
        %v4053 = vld [vmem:[%s4026 + $0x68] sm:$0xf]
        %v4054 = vld [vmem:[%s4026 + $0x6c] sm:$0xf]
        %v4055 = vld [vmem:[%s4026 + $0x70] sm:$0xf]
        %v4056 = vld [vmem:[%s4026 + $0x74] sm:$0xf]
        %v4057 = vld [vmem:[%s4026 + $0x78] sm:$0xf]
        %v4058 = vld [vmem:[%s4026 + $0x7c] sm:$0x1]
        %v4059 = vrot.slane %v2987, 3
        %v4060 = vrot.slane %v2989, 3
        %v4094 = vunpack.c.l.b16 %v4027
        %v4095 = vunpack.c.l.b16 %v4028
        %v4096 = vunpack.c.l.b16 %v4029
        %v4097 = vunpack.c.l.b16 %v4030
        %v4098 = vunpack.c.l.b16 %v4031
        %v4099 = vunpack.c.l.b16 %v4032
        %v4100 = vunpack.c.l.b16 %v4033
        %v4101 = vunpack.c.l.b16 %v4034
        %v4102 = vunpack.c.l.b16 %v4035
        %v4103 = vunpack.c.l.b16 %v4036
        %v4104 = vunpack.c.l.b16 %v4037
        %v4105 = vunpack.c.l.b16 %v4038
        %v4106 = vunpack.c.l.b16 %v4039
        %v4107 = vunpack.c.l.b16 %v4040
        %v4108 = vunpack.c.l.b16 %v4041
        %v4109 = vunpack.c.l.b16 %v4042
        %v4110 = vunpack.c.l.b16 %v4043
        %v4111 = vunpack.c.l.b16 %v4044
        %v4112 = vunpack.c.l.b16 %v4045
        %v4113 = vunpack.c.l.b16 %v4046
        %v4114 = vunpack.c.l.b16 %v4047
        %v4115 = vunpack.c.l.b16 %v4048
        %v4116 = vunpack.c.l.b16 %v4049
        %v4117 = vunpack.c.l.b16 %v4050
        %v4118 = vunpack.c.l.b16 %v4051
        %v4119 = vunpack.c.l.b16 %v4052
        %v4120 = vunpack.c.l.b16 %v4053
        %v4121 = vunpack.c.l.b16 %v4054
        %v4122 = vunpack.c.l.b16 %v4055
        %v4123 = vunpack.c.l.b16 %v4056
        %v4124 = vunpack.c.l.b16 %v4057
        %v4125 = vunpack.c.l.b16 %v4058
        %v4126 = vpack.c.b16 %v4095, %v4094
        %v4127 = vpack.c.b16 %v4097, %v4096
        %v4128 = vpack.c.b16 %v4099, %v4098
        %v4129 = vpack.c.b16 %v4101, %v4100
        %v4130 = vpack.c.b16 %v4103, %v4102
        %v4131 = vpack.c.b16 %v4105, %v4104
        %v4132 = vpack.c.b16 %v4107, %v4106
        %v4133 = vpack.c.b16 %v4109, %v4108
        %v4134 = vpack.c.b16 %v4111, %v4110
        %v4135 = vpack.c.b16 %v4113, %v4112
        %v4136 = vpack.c.b16 %v4115, %v4114
        %v4137 = vpack.c.b16 %v4117, %v4116
        %v4138 = vpack.c.b16 %v4119, %v4118
        %v4139 = vpack.c.b16 %v4121, %v4120
        %v4140 = vpack.c.b16 %v4123, %v4122
        %v4141 = vpack.c.b16 %v4125, %v4124
        %v4158 = vsel %vm1476, %v4060, 0
        %v4161 = vsel %vm1480, %v4141, 0
        %4163 = vmatprep.subr.bf16.mxu0 0
        %4164 = vmatpush1.bf16.msra.mxu0 %v4126
        %4165 = vmatprep.subr.bf16.mxu0 0
        %4166 = vmatpush1.bf16.msra.mxu0 %v4127
        %4167 = vmatprep.subr.bf16.mxu0 0
        %4168 = vmatpush1.bf16.msra.mxu0 %v4128
        %4169 = vmatprep.subr.bf16.mxu0 0
        %4170 = vmatpush1.bf16.msra.mxu0 %v4129
        %4171 = vmatprep.subr.bf16.mxu0 0
        %4172 = vmatpush1.bf16.msra.mxu0 %v4130
        %4173 = vmatprep.subr.bf16.mxu0 0
        %4174 = vmatpush1.bf16.msra.mxu0 %v4131
        %4175 = vmatprep.subr.bf16.mxu0 0
        %4176 = vmatpush1.bf16.msra.mxu0 %v4132
        %4177 = vmatprep.subr.bf16.mxu0 0
        %4178 = vmatpush1.bf16.msra.mxu0 %v4133
        %4179 = vmatprep.subr.bf16.mxu0 0
        %4180 = vmatpush1.bf16.msra.mxu0 %v4134
        %4181 = vmatprep.subr.bf16.mxu0 0
        %4182 = vmatpush1.bf16.msra.mxu0 %v4135
        %4183 = vmatprep.subr.bf16.mxu0 0
        %4184 = vmatpush1.bf16.msra.mxu0 %v4136
        %4185 = vmatprep.subr.bf16.mxu0 0
        %4186 = vmatpush1.bf16.msra.mxu0 %v4137
        %4187 = vmatprep.subr.bf16.mxu0 0
        %4188 = vmatpush1.bf16.msra.mxu0 %v4138
        %4189 = vmatprep.subr.bf16.mxu0 0
        %4190 = vmatpush1.bf16.msra.mxu0 %v4139
        %4191 = vmatprep.subr.bf16.mxu0 0
        %4192 = vmatpush1.bf16.msra.mxu0 %v4140
        %4193 = vmatprep.subr.bf16.mxu0 0
        %4194 = vmatpush1.bf16.msra.mxu0 %v4161
        %4195 = vmatprep.mubr.bf16.mxu0 %v4158
        %4196 = vmatmul.mubr.bf16.gmra.mrb[0].mxu0 %v4059
        %v4197 = vpop.f32.mrb[0].mxu0
        %v4198 = vadd.f32 0.0, %v4197
        %v4199 = vpop.f32.mrb[0].mxu0
        %v4200 = vpop.f32.mrb[0].mxu0
        %v4201 = vpop.f32.mrb[0].mxu0
        %4202 = vdwg.mxu0
        %v4203 = vadd.f32 %v4025, %v4198
        %v4204 = vmax.f32 %v4203, 0.0
        %v4205 = vld [vmem:[%s451] sm:$0x1]
        %v4206 = vld [vmem:[%s8] sm:$0xff]
        %v4207 = vld [vmem:[%s8 + $0x8] sm:$0xff]
        %v4208 = vld [vmem:[%s8 + $0x10] sm:$0xff]
        %v4209 = vld [vmem:[%s8 + $0x18] sm:$0xff]
        %v4210 = vld [vmem:[%s9] sm:$0x1f]
        %vm4211 = vcmask 39936
        %v4213 = vsel %vm4211, %v4205, 0
        %v4216 = vsel %vm1480, %v4210, 0
        %4218 = vmatprep.subr.mxu0 0.0
        %4219 = vmatpush1.msra.mxu0 %v4216
        %4220 = vmatprep.subr.mxu0 0.0
        %4221 = vmatpush1.msra.mxu0 0.0
        %4222 = vmatprep.subr.mxu0 0.0
        %4223 = vmatpush1.msra.mxu0 0.0
        %4224 = vmatprep.subr.mxu0 0.0
        %4225 = vmatpush1.msra.mxu0 0.0
        %4226 = vmatprep.subr.mxu0 0.0
        %4227 = vmatpush1.msra.mxu0 0.0
        %4228 = vmatprep.subr.mxu0 0.0
        %4229 = vmatpush1.msra.mxu0 0.0
        %4230 = vmatprep.subr.mxu0 0.0
        %4231 = vmatpush1.msra.mxu0 0.0
        %4232 = vmatprep.subr.mxu0 0.0
        %4233 = vmatpush1.msra.mxu0 0.0
        %4234 = vmatprep.subr.mxu0 0.0
        %4235 = vmatpush1.msra.mxu0 0.0
        %4236 = vmatprep.subr.mxu0 0.0
        %4237 = vmatpush1.msra.mxu0 0.0
        %4238 = vmatprep.subr.mxu0 0.0
        %4239 = vmatpush1.msra.mxu0 0.0
        %4240 = vmatprep.subr.mxu0 0.0
        %4241 = vmatpush1.msra.mxu0 0.0
        %4242 = vmatprep.subr.mxu0 0.0
        %4243 = vmatpush1.msra.mxu0 0.0
        %4244 = vmatprep.subr.mxu0 0.0
        %4245 = vmatpush1.msra.mxu0 0.0
        %4246 = vmatprep.subr.mxu0 0.0
        %4247 = vmatpush1.msra.mxu0 0.0
        %4248 = vmatprep.subr.mxu0 0.0
        %4249 = vmatpush1.msra.mxu0 0.0
        %4250 = vmatprep.subr.mxu0 0.0
        %4251 = vmatpush1.msra.mxu0 0.0
        %4252 = vmatprep.subr.mxu0 0.0
        %4253 = vmatpush1.msra.mxu0 0.0
        %4254 = vmatprep.subr.mxu0 0.0
        %4255 = vmatpush1.msra.mxu0 0.0
        %4256 = vmatprep.subr.mxu0 0.0
        %4257 = vmatpush1.msra.mxu0 0.0
        %4258 = vmatprep.subr.mxu0 0.0
        %4259 = vmatpush1.msra.mxu0 0.0
        %4260 = vmatprep.subr.mxu0 0.0
        %4261 = vmatpush1.msra.mxu0 0.0
        %4262 = vmatprep.subr.mxu0 0.0
        %4263 = vmatpush1.msra.mxu0 0.0
        %4264 = vmatprep.subr.mxu0 0.0
        %4265 = vmatpush1.msra.mxu0 0.0
        %4266 = vmatprep.subr.mxu0 0.0
        %4267 = vmatpush1.msra.mxu0 0.0
        %4268 = vmatprep.subr.mxu0 0.0
        %4269 = vmatpush1.msra.mxu0 0.0
        %4270 = vmatprep.subr.mxu0 0.0
        %4271 = vmatpush1.msra.mxu0 0.0
        %4272 = vmatprep.subr.mxu0 0.0
        %4273 = vmatpush1.msra.mxu0 0.0
        %4274 = vmatprep.subr.mxu0 0.0
        %4275 = vmatpush1.msra.mxu0 0.0
        %4276 = vmatprep.subr.mxu0 0.0
        %4277 = vmatpush1.msra.mxu0 0.0
        %4278 = vmatprep.subr.mxu0 0.0
        %4279 = vmatpush1.msra.mxu0 0.0
        %4280 = vmatprep.subr.mxu0 0.0
        %4281 = vmatpush1.msra.mxu0 0.0
        %4282 = vmatprep.mubr.f32.mxu0 0.0
        %4283 = vmatmul.mubr.f32.gmra.mrb[0].mxu0 %v4213
        %v4284 = vpop.f32.mrb[0].mxu0
        %v4285 = vadd.f32 0.0, %v4284
        %v4286 = vpop.f32.mrb[0].mxu0
        %4287 = vdwg.mxu0
        %v4289 = vsel %vm505, %v4204, 0
        %4291 = vmatprep.subr.mxu0 0.0
        %4292 = vmatpush1.msra.mxu0 %v4206
        %4293 = vmatprep.subr.mxu0 0.0
        %4294 = vmatpush1.msra.mxu0 %v4207
        %4295 = vmatprep.subr.mxu0 0.0
        %4296 = vmatpush1.msra.mxu0 %v4208
        %4297 = vmatprep.subr.mxu0 0.0
        %4298 = vmatpush1.msra.mxu0 %v4209
        %4299 = vmatprep.subr.mxu0 0.0
        %4300 = vmatpush1.msra.mxu0 0.0
        %4301 = vmatprep.subr.mxu0 0.0
        %4302 = vmatpush1.msra.mxu0 0.0
        %4303 = vmatprep.subr.mxu0 0.0
        %4304 = vmatpush1.msra.mxu0 0.0
        %4305 = vmatprep.subr.mxu0 0.0
        %4306 = vmatpush1.msra.mxu0 0.0
        %4307 = vmatprep.subr.mxu0 0.0
        %4308 = vmatpush1.msra.mxu0 0.0
        %4309 = vmatprep.subr.mxu0 0.0
        %4310 = vmatpush1.msra.mxu0 0.0
        %4311 = vmatprep.subr.mxu0 0.0
        %4312 = vmatpush1.msra.mxu0 0.0
        %4313 = vmatprep.subr.mxu0 0.0
        %4314 = vmatpush1.msra.mxu0 0.0
        %4315 = vmatprep.subr.mxu0 0.0
        %4316 = vmatpush1.msra.mxu0 0.0
        %4317 = vmatprep.subr.mxu0 0.0
        %4318 = vmatpush1.msra.mxu0 0.0
        %4319 = vmatprep.subr.mxu0 0.0
        %4320 = vmatpush1.msra.mxu0 0.0
        %4321 = vmatprep.subr.mxu0 0.0
        %4322 = vmatpush1.msra.mxu0 0.0
        %4323 = vmatprep.subr.mxu0 0.0
        %4324 = vmatpush1.msra.mxu0 0.0
        %4325 = vmatprep.subr.mxu0 0.0
        %4326 = vmatpush1.msra.mxu0 0.0
        %4327 = vmatprep.subr.mxu0 0.0
        %4328 = vmatpush1.msra.mxu0 0.0
        %4329 = vmatprep.subr.mxu0 0.0
        %4330 = vmatpush1.msra.mxu0 0.0
        %4331 = vmatprep.subr.mxu0 0.0
        %4332 = vmatpush1.msra.mxu0 0.0
        %4333 = vmatprep.subr.mxu0 0.0
        %4334 = vmatpush1.msra.mxu0 0.0
        %4335 = vmatprep.subr.mxu0 0.0
        %4336 = vmatpush1.msra.mxu0 0.0
        %4337 = vmatprep.subr.mxu0 0.0
        %4338 = vmatpush1.msra.mxu0 0.0
        %4339 = vmatprep.subr.mxu0 0.0
        %4340 = vmatpush1.msra.mxu0 0.0
        %4341 = vmatprep.subr.mxu0 0.0
        %4342 = vmatpush1.msra.mxu0 0.0
        %4343 = vmatprep.subr.mxu0 0.0
        %4344 = vmatpush1.msra.mxu0 0.0
        %4345 = vmatprep.subr.mxu0 0.0
        %4346 = vmatpush1.msra.mxu0 0.0
        %4347 = vmatprep.subr.mxu0 0.0
        %4348 = vmatpush1.msra.mxu0 0.0
        %4349 = vmatprep.subr.mxu0 0.0
        %4350 = vmatpush1.msra.mxu0 0.0
        %4351 = vmatprep.subr.mxu0 0.0
        %4352 = vmatpush1.msra.mxu0 0.0
        %4353 = vmatprep.subr.mxu0 0.0
        %4354 = vmatpush1.msra.mxu0 0.0
        %4355 = vmatprep.mubr.f32.mxu0 0.0
        %4356 = vmatmul.mubr.f32.gmra.mrb[0].mxu0 %v4289
        %v4357 = vpop.f32.mrb[0].mxu0
        %v4358 = vadd.f32 %v4285, %v4357
        %v4359 = vpop.f32.mrb[0].mxu0
        %4360 = vdwg.mxu0
        %v4361 = vld [vmem:[%s10] sm:$0x1]
        %v4362 = vadd.f32 %v4358, %v4361
        %v4363 = vmax.f32 %v4362, 0.0
        %v4364 = vld [vmem:[%s11] sm:$0xff]
        %v4365 = vld [vmem:[%s11 + $0x8] sm:$0xff]
        %v4366 = vld [vmem:[%s11 + $0x10] sm:$0xff]
        %v4367 = vld [vmem:[%s11 + $0x18] sm:$0xff]
        %v4368 = vld [vmem:[%s11 + $0x20] sm:$0x1f]
        %v4369 = vld [vmem:[%s12] sm:$0x1]
        %vm4370 = vcmask 302080
        %v4372 = vsel %vm4370, %v4363, 0
        %v4375 = vsel %vm1480, %v4368, 0
        %4377 = vmatprep.subr.mxu0 0.0
        %4378 = vmatpush1.msra.mxu0 %v4364
        %4379 = vmatprep.subr.mxu0 0.0
        %4380 = vmatpush1.msra.mxu0 %v4365
        %4381 = vmatprep.subr.mxu0 0.0
        %4382 = vmatpush1.msra.mxu0 %v4366
        %4383 = vmatprep.subr.mxu0 0.0
        %4384 = vmatpush1.msra.mxu0 %v4367
        %4385 = vmatprep.subr.mxu0 0.0
        %4386 = vmatpush1.msra.mxu0 %v4375
        %4387 = vmatprep.subr.mxu0 0.0
        %4388 = vmatpush1.msra.mxu0 0.0
        %4389 = vmatprep.subr.mxu0 0.0
        %4390 = vmatpush1.msra.mxu0 0.0
        %4391 = vmatprep.subr.mxu0 0.0
        %4392 = vmatpush1.msra.mxu0 0.0
        %4393 = vmatprep.subr.mxu0 0.0
        %4394 = vmatpush1.msra.mxu0 0.0
        %4395 = vmatprep.subr.mxu0 0.0
        %4396 = vmatpush1.msra.mxu0 0.0
        %4397 = vmatprep.subr.mxu0 0.0
        %4398 = vmatpush1.msra.mxu0 0.0
        %4399 = vmatprep.subr.mxu0 0.0
        %4400 = vmatpush1.msra.mxu0 0.0
        %4401 = vmatprep.subr.mxu0 0.0
        %4402 = vmatpush1.msra.mxu0 0.0
        %4403 = vmatprep.subr.mxu0 0.0
        %4404 = vmatpush1.msra.mxu0 0.0
        %4405 = vmatprep.subr.mxu0 0.0
        %4406 = vmatpush1.msra.mxu0 0.0
        %4407 = vmatprep.subr.mxu0 0.0
        %4408 = vmatpush1.msra.mxu0 0.0
        %4409 = vmatprep.subr.mxu0 0.0
        %4410 = vmatpush1.msra.mxu0 0.0
        %4411 = vmatprep.subr.mxu0 0.0
        %4412 = vmatpush1.msra.mxu0 0.0
        %4413 = vmatprep.subr.mxu0 0.0
        %4414 = vmatpush1.msra.mxu0 0.0
        %4415 = vmatprep.subr.mxu0 0.0
        %4416 = vmatpush1.msra.mxu0 0.0
        %4417 = vmatprep.subr.mxu0 0.0
        %4418 = vmatpush1.msra.mxu0 0.0
        %4419 = vmatprep.subr.mxu0 0.0
        %4420 = vmatpush1.msra.mxu0 0.0
        %4421 = vmatprep.subr.mxu0 0.0
        %4422 = vmatpush1.msra.mxu0 0.0
        %4423 = vmatprep.subr.mxu0 0.0
        %4424 = vmatpush1.msra.mxu0 0.0
        %4425 = vmatprep.subr.mxu0 0.0
        %4426 = vmatpush1.msra.mxu0 0.0
        %4427 = vmatprep.subr.mxu0 0.0
        %4428 = vmatpush1.msra.mxu0 0.0
        %4429 = vmatprep.subr.mxu0 0.0
        %4430 = vmatpush1.msra.mxu0 0.0
        %4431 = vmatprep.subr.mxu0 0.0
        %4432 = vmatpush1.msra.mxu0 0.0
        %4433 = vmatprep.subr.mxu0 0.0
        %4434 = vmatpush1.msra.mxu0 0.0
        %4435 = vmatprep.subr.mxu0 0.0
        %4436 = vmatpush1.msra.mxu0 0.0
        %4437 = vmatprep.subr.mxu0 0.0
        %4438 = vmatpush1.msra.mxu0 0.0
        %4439 = vmatprep.subr.mxu0 0.0
        %4440 = vmatpush1.msra.mxu0 0.0
        %4441 = vmatprep.mubr.f32.mxu0 0.0
        %4442 = vmatmul.mubr.f32.gmra.mrb[0].mxu0 %v4372
        %v4443 = vpop.f32.mrb[0].mxu0
        %v4444 = vadd.f32 %v4369, %v4443
        %v4445 = vpop.f32.mrb[0].mxu0
        %4446 = vdwg.mxu0
        %vm4447 = vcmask 16384
        %v4448 = vsel %vm4447, %v4444, -inf
        %4449 = vmax.xlane.f32.xlu0 %v4448
        %v4450 = vpop.xlane.xlu0 %4449
        %v4451 = vsub.f32 %v4444, %v4450
        %v4452 = vmul.f32 %v4451, 1.442695
        %v4453 = vpow.pop %v4452
        %v4454 = vsel %vm4447, %v4453, 0.0
        %4455 = vadd.xlane.f32.xlu0 %v4454
        %v4456 = vpop.xlane.xlu0 %4455
        %v4457 = vrcp.pop %v4456
        %v4458 = vmul.f32 %v4453, %v4457
        %4459 = vst.msk [vmem:[%s443] sm:$0x1] %vm4447, %v4458
        %s4460 = sand.u32 %s318, 1
        %s4461 = scalar_lea.sflag [#allocation3], %s4460
        %s4462 = sand.u32 %s318, 1
        %s4463 = scalar_lea.vmem [#allocation2], %s4462
        // Predicated region
        $region73: #{model_forward.5} parent=71 // pred_check
          %p4464 = pneg %p328
        $region74: #{model_forward.5} parent=71 // pred_check_branch
          %4466 = sbr.rel (%p4464) target = $region76
        $region75: #{model_forward.5} parent=71 // pred_region
          %s4468 = ssub.s32 16, 16
          %4469 = vsyncadd %s4461, %s4468
          %s4470 = smul.addr %s27, 16
          %s4471 = scalar_lea.hbm %s13, %s4470
          %s4473 = sshll.u32 %s4463, 4
          %s4474 = int_to_ptr.vmem [resolvable:$true] %s4473
          %4476 = dma.vmem_to_hbm [thread:$0]  %s4474, 16, %s4471, %s4461
        $region76: #{model_forward.5} parent=71 // pred_fallthru
          _
      $region72: #{model_forward.5} parent=5 // pred_fallthru
        _
      %p4477 = scmp.le.s32.totalorder 2, %s22
      // Predicated region
      $region77: #{model_forward.5} parent=5 // pred_check
        %p4478 = pneg %p4477
      $region78: #{model_forward.5} parent=5 // pred_check_branch
        %4480 = sbr.rel (%p4478) target = $region80
      $region79: #{model_forward.5} parent=5 // pred_region
        %s4481 = ssub.s32 %s22, 2
        // Predicated region
        $region81: #{model_forward.5} parent=79 // pred_check
          %p4482 = pneg %p334
        $region82: #{model_forward.5} parent=79 // pred_check_branch
          %4484 = sbr.rel (%p4482) target = $region84
        $region83: #{model_forward.5} parent=79 // pred_region
          %s4485 = sand.u32 %s319, 1
          %s4486 = scalar_lea.sflag [#allocation3], %s4485
          %s4487 = sand.u32 %s319, 1
          %s4488 = scalar_lea.vmem [#allocation2], %s4487
          %4489 = dma.done %s4486, 16
        $region84: #{model_forward.5} parent=79 // pred_fallthru
          _
      $region80: #{model_forward.5} parent=5 // pred_fallthru
        _
    $region6: #{model_forward.5} parent=1 // loop_footer
      %s26 = sadd.s32 1, %s22
    $region7: #{model_forward.5} parent=1 // loop_footer_branch
      %21 = sbr.rel target = $region3
    $region8: #{model_forward.5} parent=1 // loop_exit
      _
    %4490 = vsyncpa [#allocation3], 1
    %s4491 = scalar_lea.sflag [#allocation3], 1
    %4492 = vsyncpa %s4491, 1

</llo_original>
